<compile_context>
chip_gen: v5e
topology: v5e:2x2
jax: 0.10.0
libtpu: 0.0.40
codegen_flags: <defaults>
</compile_context>

<pallas_src>
import math
from functools import partial

import jax
import jax.numpy as jnp
from jax.experimental import pallas as pl
from jax.experimental.pallas import tpu as pltpu  # noqa: F401  (imported per convention)


# ----------------------------- in-kernel helpers ------------------------------

def _mm(x, w):
    """bf16 MXU matmul with f32 accumulation (w is pre-cast to bf16)."""
    return jnp.dot(x.astype(jnp.bfloat16), w, preferred_element_type=jnp.float32)


def _softmax(x):
    m = jnp.max(x, axis=-1, keepdims=True)
    e = jnp.exp(x - m)
    return e * pl.reciprocal(jnp.sum(e, axis=-1, keepdims=True), approx=True)


def _layernorm(x, g, b, eps=1e-5):
    mu = jnp.mean(x, axis=-1, keepdims=True)
    var = jnp.mean((x - mu) ** 2, axis=-1, keepdims=True)
    return (x - mu) * jax.lax.rsqrt(var + eps) * g + b


def _attend(q, k, v, num_heads, B, Sq, Skv):
    """Scaled dot-product attention on batch-folded operands.

    q: [B*Sq, H], k/v: [B*Skv, H].  Batch handled with static sublane slices,
    heads with static lane slices (all Python ints -> fully unrolled).
    """
    H = q.shape[-1]
    hd = H // num_heads
    scale = 1.0 / math.sqrt(hd)
    rows = []
    for b in range(B):
        qb = q[b * Sq:(b + 1) * Sq, :] * scale
        kb = k[b * Skv:(b + 1) * Skv, :]
        vb = v[b * Skv:(b + 1) * Skv, :]
        heads = []
        for h in range(num_heads):
            sl = slice(h * hd, (h + 1) * hd)
            s = jnp.dot(qb[:, sl].astype(jnp.bfloat16),
                        kb[:, sl].T.astype(jnp.bfloat16),
                        preferred_element_type=jnp.float32)
            p = _softmax(s)
            heads.append(jnp.dot(p.astype(jnp.bfloat16),
                                 vb[:, sl].astype(jnp.bfloat16),
                                 preferred_element_type=jnp.float32))
        rows.append(jnp.concatenate(heads, axis=-1))
    return jnp.concatenate(rows, axis=0)          # [B*Sq, H]


def _self_attn(x, wqkv, bqkv, wo, bo, num_heads, B, S):
    H = x.shape[-1]
    qkv = _mm(x, wqkv) + bqkv                     # fused QKV: [rows,H] @ [H,3H]
    q, k, v = qkv[:, :H], qkv[:, H:2 * H], qkv[:, 2 * H:]
    return _mm(_attend(q, k, v, num_heads, B, S, S), wo) + bo


def _cross_attn(x, mem, wq, bq, wkv, bkv, wo, bo, num_heads, B, T, S):
    H = x.shape[-1]
    q = _mm(x, wq) + bq                           # [B*T, H]
    kv = _mm(mem, wkv) + bkv                      # fused KV: [B*S, 2H]
    k, v = kv[:, :H], kv[:, H:]
    return _mm(_attend(q, k, v, num_heads, B, T, S), wo) + bo


def _ffn(x, w1, b1, w2, b2):
    h = jnp.maximum(_mm(x, w1) + b1, 0.0)
    return _mm(h, w2) + b2


# ----------------------------- fused forward kernel ---------------------------

def _forward_kernel(
        x_ref, pe_ref, emb_w, emb_b,
        e_wqkv, e_bqkv, e_wo, e_bo, e_g1, e_be1,
        e_w1, e_b1, e_w2, e_b2, e_g2, e_be2,
        d_wqkv, d_bqkv, d_wo, d_bo, d_g1, d_be1,
        d_wq_c, d_bq_c, d_wkv_c, d_bkv_c, d_wo_c, d_bo_c, d_g2, d_be2,
        d_w1, d_b1, d_w2, d_b2, d_g3, d_be3,
        out_w, out_b,
        o_ref, *, num_heads, num_layers, B, S, T):
    H = emb_w.shape[1]

    # ---- input embedding + positional encoding (batch folded into rows) ----
    h = _mm(x_ref[...], emb_w[...]) + emb_b[...] + pe_ref[...]        # [B*S, H]

    # ---- encoder stack (post-norm TransformerEncoderLayer) ----
    for l in range(num_layers):
        sa = _self_attn(h, e_wqkv[l], e_bqkv[l], e_wo[l], e_bo[l], num_heads, B, S)
        h = _layernorm(h + sa, e_g1[l], e_be1[l])
        ff = _ffn(h, e_w1[l], e_b1[l], e_w2[l], e_b2[l])
        h = _layernorm(h + ff, e_g2[l], e_be2[l])
    memory = h                                                        # [B*S, H]

    # ---- decoder stack (post-norm TransformerDecoderLayer), target = zeros ----
    d = jnp.zeros((B * T, H), jnp.float32)
    for l in range(num_layers):
        sa = _self_attn(d, d_wqkv[l], d_bqkv[l], d_wo[l], d_bo[l], num_heads, B, T)
        d = _layernorm(d + sa, d_g1[l], d_be1[l])
        ca = _cross_attn(d, memory, d_wq_c[l], d_bq_c[l], d_wkv_c[l], d_bkv_c[l],
                         d_wo_c[l], d_bo_c[l], num_heads, B, T, S)
        d = _layernorm(d + ca, d_g2[l], d_be2[l])
        ff = _ffn(d, d_w1[l], d_b1[l], d_w2[l], d_b2[l])
        d = _layernorm(d + ff, d_g3[l], d_be3[l])

    # ---- output projection: lane-dense 128-wide store (zero-padded weights) ----
    o_ref[...] = _mm(d, out_w[...]) + out_b[...]


# ------------------------------ host-side wrapper ------------------------------

def transformer_forward(x, params, *, num_heads, target_len):
    # TODO(synk): dropout is treated as identity (eval-mode forward).
    B, S, Din = x.shape
    H = params["embed_w"].shape[1]
    O = params["out_w"].shape[1]
    T = target_len
    L = params["enc"]["wqkv"].shape[0]
    OP = 128                                       # lane-dense padded output width
    bf = jnp.bfloat16

    x2 = x.reshape(B * S, Din)
    # PyTorch PE quirk: pe buffer is [max_len, 1, H]; pe[:B, :S, :] -> [B, 1, H],
    # i.e. indexed by the batch axis and broadcast over the sequence axis.
    pe_add = jnp.broadcast_to(params["pe"][:B][:, None, :], (B, S, H)).reshape(B * S, H)

    out_w_p = jnp.zeros((H, OP), jnp.float32).at[:, :O].set(params["out_w"]).astype(bf)
    out_b_p = jnp.zeros((1, OP), jnp.float32).at[:, :O].set(params["out_b"])

    e, dd = params["enc"], params["dec"]
    args = [
        x2, pe_add, params["embed_w"].astype(bf), params["embed_b"],
        e["wqkv"].astype(bf), e["bqkv"], e["wo"].astype(bf), e["bo"], e["g1"], e["be1"],
        e["w1"].astype(bf), e["b1"], e["w2"].astype(bf), e["b2"], e["g2"], e["be2"],
        dd["wqkv"].astype(bf), dd["bqkv"], dd["wo"].astype(bf), dd["bo"], dd["g1"], dd["be1"],
        dd["wq_c"].astype(bf), dd["bq_c"], dd["wkv_c"].astype(bf), dd["bkv_c"],
        dd["wo_c"].astype(bf), dd["bo_c"], dd["g2"], dd["be2"],
        dd["w1"].astype(bf), dd["b1"], dd["w2"].astype(bf), dd["b2"], dd["g3"], dd["be3"],
        out_w_p, out_b_p,
    ]

    out_padded = pl.pallas_call(
        partial(_forward_kernel, num_heads=num_heads, num_layers=int(L), B=B, S=S, T=T),
        out_shape=jax.ShapeDtypeStruct((B * T, OP), jnp.float32),
    )(*args)
    return out_padded[:, :O].reshape(B, T, O)


# --------------------------- parameters (random init) --------------------------

def _positional_encoding(max_len, d_model):
    position = jnp.arange(max_len, dtype=jnp.float32)[:, None]
    div_term = jnp.exp(jnp.arange(0, d_model, 2, dtype=jnp.float32)
                       * (-math.log(10000.0) / d_model))
    pe = jnp.zeros((max_len, d_model), dtype=jnp.float32)
    pe = pe.at[:, 0::2].set(jnp.sin(position * div_term))
    pe = pe.at[:, 1::2].set(jnp.cos(position * div_term))
    return pe                                      # [max_len, d_model]


def init_params(key, input_dim, hidden_dim, output_dim, num_layers, ff_dim, max_len=64):
    H, F = hidden_dim, ff_dim
    it = iter(jax.random.split(key, 4 + 22 * num_layers))

    def dense(shape, scale=0.05):
        return scale * jax.random.normal(next(it), shape, dtype=jnp.float32)

    ones = lambda: jnp.ones((1, H), jnp.float32)
    zeros = lambda: jnp.zeros((1, H), jnp.float32)

    def enc_layer():
        return {"wqkv": dense((H, 3 * H)), "bqkv": dense((1, 3 * H)),
                "wo": dense((H, H)), "bo": dense((1, H)),
                "g1": ones(), "be1": zeros(),
                "w1": dense((H, F)), "b1": dense((1, F)),
                "w2": dense((F, H)), "b2": dense((1, H)),
                "g2": ones(), "be2": zeros()}

    def dec_layer():
        return {"wqkv": dense((H, 3 * H)), "bqkv": dense((1, 3 * H)),
                "wo": dense((H, H)), "bo": dense((1, H)),
                "g1": ones(), "be1": zeros(),
                "wq_c": dense((H, H)), "bq_c": dense((1, H)),
                "wkv_c": dense((H, 2 * H)), "bkv_c": dense((1, 2 * H)),
                "wo_c": dense((H, H)), "bo_c": dense((1, H)),
                "g2": ones(), "be2": zeros(),
                "w1": dense((H, F)), "b1": dense((1, F)),
                "w2": dense((F, H)), "b2": dense((1, H)),
                "g3": ones(), "be3": zeros()}

    enc_list = [enc_layer() for _ in range(num_layers)]
    dec_list = [dec_layer() for _ in range(num_layers)]
    enc = {k: jnp.stack([lp[k] for lp in enc_list]) for k in enc_list[0]}
    dec = {k: jnp.stack([lp[k] for lp in dec_list]) for k in dec_list[0]}

    return {"embed_w": dense((input_dim, H)), "embed_b": dense((1, H)),
            "out_w": dense((H, output_dim)), "out_b": dense((1, output_dim)),
            "pe": _positional_encoding(max_len, H),
            "enc": enc, "dec": dec}


# ----------------------------------- main ---------------------------------------

if __name__ == "__main__":
    B, S = 2, 8
    input_dim, hidden_dim, output_dim = 4, 32, 4
    num_layers, num_heads, ff_dim, dropout, target_len = 2, 4, 64, 0.1, 8

    key = jax.random.PRNGKey(0)
    kx, kp = jax.random.split(key)
    x = jax.random.normal(kx, (B, S, input_dim), dtype=jnp.float32)
    params = init_params(kp, input_dim, hidden_dim, output_dim, num_layers, ff_dim)

    fwd = jax.jit(partial(transformer_forward,
                          num_heads=num_heads, target_len=target_len))
    out = jax.block_until_ready(fwd(x, params))
    assert out.shape == (B, target_len, output_dim), out.shape
    assert bool(jnp.all(jnp.isfinite(out)))
    print("KERNEL_OK")
</pallas_src>

<mosaic_0001>
module attributes {stable_mosaic.version = 11 : i64} {
  func.func @_forward_kernel(%arg0: memref<16x4xf32, #tpu.memory_space<vmem>>, %arg1: memref<16x32xf32, #tpu.memory_space<vmem>>, %arg2: memref<4x32xbf16, #tpu.memory_space<vmem>>, %arg3: memref<1x32xf32, #tpu.memory_space<vmem>>, %arg4: memref<2x32x96xbf16, #tpu.memory_space<vmem>>, %arg5: memref<2x1x96xf32, #tpu.memory_space<vmem>>, %arg6: memref<2x32x32xbf16, #tpu.memory_space<vmem>>, %arg7: memref<2x1x32xf32, #tpu.memory_space<vmem>>, %arg8: memref<2x1x32xf32, #tpu.memory_space<vmem>>, %arg9: memref<2x1x32xf32, #tpu.memory_space<vmem>>, %arg10: memref<2x32x64xbf16, #tpu.memory_space<vmem>>, %arg11: memref<2x1x64xf32, #tpu.memory_space<vmem>>, %arg12: memref<2x64x32xbf16, #tpu.memory_space<vmem>>, %arg13: memref<2x1x32xf32, #tpu.memory_space<vmem>>, %arg14: memref<2x1x32xf32, #tpu.memory_space<vmem>>, %arg15: memref<2x1x32xf32, #tpu.memory_space<vmem>>, %arg16: memref<2x32x96xbf16, #tpu.memory_space<vmem>>, %arg17: memref<2x1x96xf32, #tpu.memory_space<vmem>>, %arg18: memref<2x32x32xbf16, #tpu.memory_space<vmem>>, %arg19: memref<2x1x32xf32, #tpu.memory_space<vmem>>, %arg20: memref<2x1x32xf32, #tpu.memory_space<vmem>>, %arg21: memref<2x1x32xf32, #tpu.memory_space<vmem>>, %arg22: memref<2x32x32xbf16, #tpu.memory_space<vmem>>, %arg23: memref<2x1x32xf32, #tpu.memory_space<vmem>>, %arg24: memref<2x32x64xbf16, #tpu.memory_space<vmem>>, %arg25: memref<2x1x64xf32, #tpu.memory_space<vmem>>, %arg26: memref<2x32x32xbf16, #tpu.memory_space<vmem>>, %arg27: memref<2x1x32xf32, #tpu.memory_space<vmem>>, %arg28: memref<2x1x32xf32, #tpu.memory_space<vmem>>, %arg29: memref<2x1x32xf32, #tpu.memory_space<vmem>>, %arg30: memref<2x32x64xbf16, #tpu.memory_space<vmem>>, %arg31: memref<2x1x64xf32, #tpu.memory_space<vmem>>, %arg32: memref<2x64x32xbf16, #tpu.memory_space<vmem>>, %arg33: memref<2x1x32xf32, #tpu.memory_space<vmem>>, %arg34: memref<2x1x32xf32, #tpu.memory_space<vmem>>, %arg35: memref<2x1x32xf32, #tpu.memory_space<vmem>>, %arg36: memref<32x128xbf16, #tpu.memory_space<vmem>>, %arg37: memref<1x128xf32, #tpu.memory_space<vmem>>, %arg38: memref<16x128xf32, #tpu.memory_space<vmem>>) attributes {dimension_semantics = [], scalar_prefetch = 0 : i64, scratch_operands = 0 : i64, tpu.core_type = #tpu.core_type<tc>} {
    %c0 = arith.constant 0 : index
    %c0_0 = arith.constant 0 : index
    %0 = vector.load %arg0[%c0, %c0_0] : memref<16x4xf32, #tpu.memory_space<vmem>>, vector<16x4xf32>
    %c0_1 = arith.constant 0 : index
    %c0_2 = arith.constant 0 : index
    %1 = vector.load %arg2[%c0_1, %c0_2] : memref<4x32xbf16, #tpu.memory_space<vmem>>, vector<4x32xbf16>
    %2 = arith.truncf %0 : vector<16x4xf32> to vector<16x4xbf16>
    %cst = arith.constant dense<0.000000e+00> : vector<16x32xf32>
    %3 = tpu.matmul %2, %1, %cst {dimension_numbers = #tpu.dot_dimension_numbers<[1], [0], [0], [1], [0, 0, 1, 1], [], []>} : vector<16x4xbf16>, vector<4x32xbf16>, vector<16x32xf32> -> vector<16x32xf32>
    %c0_3 = arith.constant 0 : index
    %c0_4 = arith.constant 0 : index
    %4 = vector.load %arg3[%c0_3, %c0_4] : memref<1x32xf32, #tpu.memory_space<vmem>>, vector<1x32xf32>
    %5 = vector.broadcast %4 : vector<1x32xf32> to vector<16x32xf32>
    %6 = arith.addf %3, %5 : vector<16x32xf32>
    %c0_5 = arith.constant 0 : index
    %c0_6 = arith.constant 0 : index
    %7 = vector.load %arg1[%c0_5, %c0_6] : memref<16x32xf32, #tpu.memory_space<vmem>>, vector<16x32xf32>
    %8 = arith.addf %6, %7 : vector<16x32xf32>
    %c0_7 = arith.constant 0 : index
    %c0_8 = arith.constant 0 : index
    %c0_9 = arith.constant 0 : index
    %9 = vector.load %arg4[%c0_7, %c0_8, %c0_9] : memref<2x32x96xbf16, #tpu.memory_space<vmem>>, vector<1x32x96xbf16>
    %10 = vector.shape_cast %9 : vector<1x32x96xbf16> to vector<32x96xbf16>
    %c0_10 = arith.constant 0 : index
    %c0_11 = arith.constant 0 : index
    %c0_12 = arith.constant 0 : index
    %11 = vector.load %arg5[%c0_10, %c0_11, %c0_12] : memref<2x1x96xf32, #tpu.memory_space<vmem>>, vector<1x1x96xf32>
    %12 = vector.shape_cast %11 : vector<1x1x96xf32> to vector<1x96xf32>
    %c0_13 = arith.constant 0 : index
    %c0_14 = arith.constant 0 : index
    %c0_15 = arith.constant 0 : index
    %13 = vector.load %arg6[%c0_13, %c0_14, %c0_15] : memref<2x32x32xbf16, #tpu.memory_space<vmem>>, vector<1x32x32xbf16>
    %14 = vector.shape_cast %13 : vector<1x32x32xbf16> to vector<32x32xbf16>
    %c0_16 = arith.constant 0 : index
    %c0_17 = arith.constant 0 : index
    %c0_18 = arith.constant 0 : index
    %15 = vector.load %arg7[%c0_16, %c0_17, %c0_18] : memref<2x1x32xf32, #tpu.memory_space<vmem>>, vector<1x1x32xf32>
    %16 = vector.shape_cast %15 : vector<1x1x32xf32> to vector<1x32xf32>
    %17 = arith.truncf %8 : vector<16x32xf32> to vector<16x32xbf16>
    %cst_19 = arith.constant dense<0.000000e+00> : vector<16x96xf32>
    %18 = tpu.matmul %17, %10, %cst_19 {dimension_numbers = #tpu.dot_dimension_numbers<[1], [0], [0], [1], [0, 0, 1, 1], [], []>} : vector<16x32xbf16>, vector<32x96xbf16>, vector<16x96xf32> -> vector<16x96xf32>
    %19 = vector.broadcast %12 : vector<1x96xf32> to vector<16x96xf32>
    %20 = arith.addf %18, %19 : vector<16x96xf32>
    %21 = vector.extract_strided_slice %20 {offsets = [0, 0], sizes = [16, 32], strides = [1, 1]} : vector<16x96xf32> to vector<16x32xf32>
    %22 = vector.extract_strided_slice %20 {offsets = [0, 32], sizes = [16, 32], strides = [1, 1]} : vector<16x96xf32> to vector<16x32xf32>
    %23 = vector.extract_strided_slice %20 {offsets = [0, 64], sizes = [16, 32], strides = [1, 1]} : vector<16x96xf32> to vector<16x32xf32>
    %24 = vector.extract_strided_slice %21 {offsets = [0, 0], sizes = [8, 32], strides = [1, 1]} : vector<16x32xf32> to vector<8x32xf32>
    %cst_20 = arith.constant 0.353553385 : f32
    %25 = vector.broadcast %cst_20 : f32 to vector<8x32xf32>
    %26 = arith.mulf %24, %25 : vector<8x32xf32>
    %27 = vector.extract_strided_slice %22 {offsets = [0, 0], sizes = [8, 32], strides = [1, 1]} : vector<16x32xf32> to vector<8x32xf32>
    %28 = vector.extract_strided_slice %23 {offsets = [0, 0], sizes = [8, 32], strides = [1, 1]} : vector<16x32xf32> to vector<8x32xf32>
    %29 = vector.extract_strided_slice %26 {offsets = [0, 0], sizes = [8, 8], strides = [1, 1]} : vector<8x32xf32> to vector<8x8xf32>
    %30 = arith.truncf %29 : vector<8x8xf32> to vector<8x8xbf16>
    %31 = vector.extract_strided_slice %27 {offsets = [0, 0], sizes = [8, 8], strides = [1, 1]} : vector<8x32xf32> to vector<8x8xf32>
    %32 = tpu.transpose %31, [1, 0] : vector<8x8xf32> -> vector<8x8xf32>
    %33 = arith.truncf %32 : vector<8x8xf32> to vector<8x8xbf16>
    %cst_21 = arith.constant dense<0.000000e+00> : vector<8x8xf32>
    %34 = tpu.matmul %30, %33, %cst_21 {dimension_numbers = #tpu.dot_dimension_numbers<[1], [0], [0], [1], [0, 0, 1, 1], [], []>} : vector<8x8xbf16>, vector<8x8xbf16>, vector<8x8xf32> -> vector<8x8xf32>
    %cst_22 = arith.constant dense<0xFF800000> : vector<8xf32>
    %35 = vector.multi_reduction <maximumf>, %34, %cst_22 [1] : vector<8x8xf32> to vector<8xf32>
    %36 = vector.shape_cast %35 : vector<8xf32> to vector<8x1xf32>
    %37 = vector.broadcast %36 : vector<8x1xf32> to vector<8x8xf32>
    %38 = arith.subf %34, %37 : vector<8x8xf32>
    %39 = math.exp %38 : vector<8x8xf32>
    %cst_23 = arith.constant dense<0.000000e+00> : vector<8xf32>
    %40 = vector.multi_reduction <add>, %39, %cst_23 [1] : vector<8x8xf32> to vector<8xf32>
    %41 = vector.shape_cast %40 : vector<8xf32> to vector<8x1xf32>
    %42 = tpu.reciprocal %41 {approx = true} : vector<8x1xf32> -> vector<8x1xf32>
    %43 = vector.broadcast %42 : vector<8x1xf32> to vector<8x8xf32>
    %44 = arith.mulf %39, %43 : vector<8x8xf32>
    %45 = arith.truncf %44 : vector<8x8xf32> to vector<8x8xbf16>
    %46 = vector.extract_strided_slice %28 {offsets = [0, 0], sizes = [8, 8], strides = [1, 1]} : vector<8x32xf32> to vector<8x8xf32>
    %47 = arith.truncf %46 : vector<8x8xf32> to vector<8x8xbf16>
    %cst_24 = arith.constant dense<0.000000e+00> : vector<8x8xf32>
    %48 = tpu.matmul %45, %47, %cst_24 {dimension_numbers = #tpu.dot_dimension_numbers<[1], [0], [0], [1], [0, 0, 1, 1], [], []>} : vector<8x8xbf16>, vector<8x8xbf16>, vector<8x8xf32> -> vector<8x8xf32>
    %49 = vector.extract_strided_slice %26 {offsets = [0, 8], sizes = [8, 8], strides = [1, 1]} : vector<8x32xf32> to vector<8x8xf32>
    %50 = arith.truncf %49 : vector<8x8xf32> to vector<8x8xbf16>
    %51 = vector.extract_strided_slice %27 {offsets = [0, 8], sizes = [8, 8], strides = [1, 1]} : vector<8x32xf32> to vector<8x8xf32>
    %52 = tpu.transpose %51, [1, 0] : vector<8x8xf32> -> vector<8x8xf32>
    %53 = arith.truncf %52 : vector<8x8xf32> to vector<8x8xbf16>
    %cst_25 = arith.constant dense<0.000000e+00> : vector<8x8xf32>
    %54 = tpu.matmul %50, %53, %cst_25 {dimension_numbers = #tpu.dot_dimension_numbers<[1], [0], [0], [1], [0, 0, 1, 1], [], []>} : vector<8x8xbf16>, vector<8x8xbf16>, vector<8x8xf32> -> vector<8x8xf32>
    %cst_26 = arith.constant dense<0xFF800000> : vector<8xf32>
    %55 = vector.multi_reduction <maximumf>, %54, %cst_26 [1] : vector<8x8xf32> to vector<8xf32>
    %56 = vector.shape_cast %55 : vector<8xf32> to vector<8x1xf32>
    %57 = vector.broadcast %56 : vector<8x1xf32> to vector<8x8xf32>
    %58 = arith.subf %54, %57 : vector<8x8xf32>
    %59 = math.exp %58 : vector<8x8xf32>
    %cst_27 = arith.constant dense<0.000000e+00> : vector<8xf32>
    %60 = vector.multi_reduction <add>, %59, %cst_27 [1] : vector<8x8xf32> to vector<8xf32>
    %61 = vector.shape_cast %60 : vector<8xf32> to vector<8x1xf32>
    %62 = tpu.reciprocal %61 {approx = true} : vector<8x1xf32> -> vector<8x1xf32>
    %63 = vector.broadcast %62 : vector<8x1xf32> to vector<8x8xf32>
    %64 = arith.mulf %59, %63 : vector<8x8xf32>
    %65 = arith.truncf %64 : vector<8x8xf32> to vector<8x8xbf16>
    %66 = vector.extract_strided_slice %28 {offsets = [0, 8], sizes = [8, 8], strides = [1, 1]} : vector<8x32xf32> to vector<8x8xf32>
    %67 = arith.truncf %66 : vector<8x8xf32> to vector<8x8xbf16>
    %cst_28 = arith.constant dense<0.000000e+00> : vector<8x8xf32>
    %68 = tpu.matmul %65, %67, %cst_28 {dimension_numbers = #tpu.dot_dimension_numbers<[1], [0], [0], [1], [0, 0, 1, 1], [], []>} : vector<8x8xbf16>, vector<8x8xbf16>, vector<8x8xf32> -> vector<8x8xf32>
    %69 = vector.extract_strided_slice %26 {offsets = [0, 16], sizes = [8, 8], strides = [1, 1]} : vector<8x32xf32> to vector<8x8xf32>
    %70 = arith.truncf %69 : vector<8x8xf32> to vector<8x8xbf16>
    %71 = vector.extract_strided_slice %27 {offsets = [0, 16], sizes = [8, 8], strides = [1, 1]} : vector<8x32xf32> to vector<8x8xf32>
    %72 = tpu.transpose %71, [1, 0] : vector<8x8xf32> -> vector<8x8xf32>
    %73 = arith.truncf %72 : vector<8x8xf32> to vector<8x8xbf16>
    %cst_29 = arith.constant dense<0.000000e+00> : vector<8x8xf32>
    %74 = tpu.matmul %70, %73, %cst_29 {dimension_numbers = #tpu.dot_dimension_numbers<[1], [0], [0], [1], [0, 0, 1, 1], [], []>} : vector<8x8xbf16>, vector<8x8xbf16>, vector<8x8xf32> -> vector<8x8xf32>
    %cst_30 = arith.constant dense<0xFF800000> : vector<8xf32>
    %75 = vector.multi_reduction <maximumf>, %74, %cst_30 [1] : vector<8x8xf32> to vector<8xf32>
    %76 = vector.shape_cast %75 : vector<8xf32> to vector<8x1xf32>
    %77 = vector.broadcast %76 : vector<8x1xf32> to vector<8x8xf32>
    %78 = arith.subf %74, %77 : vector<8x8xf32>
    %79 = math.exp %78 : vector<8x8xf32>
    %cst_31 = arith.constant dense<0.000000e+00> : vector<8xf32>
    %80 = vector.multi_reduction <add>, %79, %cst_31 [1] : vector<8x8xf32> to vector<8xf32>
    %81 = vector.shape_cast %80 : vector<8xf32> to vector<8x1xf32>
    %82 = tpu.reciprocal %81 {approx = true} : vector<8x1xf32> -> vector<8x1xf32>
    %83 = vector.broadcast %82 : vector<8x1xf32> to vector<8x8xf32>
    %84 = arith.mulf %79, %83 : vector<8x8xf32>
    %85 = arith.truncf %84 : vector<8x8xf32> to vector<8x8xbf16>
    %86 = vector.extract_strided_slice %28 {offsets = [0, 16], sizes = [8, 8], strides = [1, 1]} : vector<8x32xf32> to vector<8x8xf32>
    %87 = arith.truncf %86 : vector<8x8xf32> to vector<8x8xbf16>
    %cst_32 = arith.constant dense<0.000000e+00> : vector<8x8xf32>
    %88 = tpu.matmul %85, %87, %cst_32 {dimension_numbers = #tpu.dot_dimension_numbers<[1], [0], [0], [1], [0, 0, 1, 1], [], []>} : vector<8x8xbf16>, vector<8x8xbf16>, vector<8x8xf32> -> vector<8x8xf32>
    %89 = vector.extract_strided_slice %26 {offsets = [0, 24], sizes = [8, 8], strides = [1, 1]} : vector<8x32xf32> to vector<8x8xf32>
    %90 = arith.truncf %89 : vector<8x8xf32> to vector<8x8xbf16>
    %91 = vector.extract_strided_slice %27 {offsets = [0, 24], sizes = [8, 8], strides = [1, 1]} : vector<8x32xf32> to vector<8x8xf32>
    %92 = tpu.transpose %91, [1, 0] : vector<8x8xf32> -> vector<8x8xf32>
    %93 = arith.truncf %92 : vector<8x8xf32> to vector<8x8xbf16>
    %cst_33 = arith.constant dense<0.000000e+00> : vector<8x8xf32>
    %94 = tpu.matmul %90, %93, %cst_33 {dimension_numbers = #tpu.dot_dimension_numbers<[1], [0], [0], [1], [0, 0, 1, 1], [], []>} : vector<8x8xbf16>, vector<8x8xbf16>, vector<8x8xf32> -> vector<8x8xf32>
    %cst_34 = arith.constant dense<0xFF800000> : vector<8xf32>
    %95 = vector.multi_reduction <maximumf>, %94, %cst_34 [1] : vector<8x8xf32> to vector<8xf32>
    %96 = vector.shape_cast %95 : vector<8xf32> to vector<8x1xf32>
    %97 = vector.broadcast %96 : vector<8x1xf32> to vector<8x8xf32>
    %98 = arith.subf %94, %97 : vector<8x8xf32>
    %99 = math.exp %98 : vector<8x8xf32>
    %cst_35 = arith.constant dense<0.000000e+00> : vector<8xf32>
    %100 = vector.multi_reduction <add>, %99, %cst_35 [1] : vector<8x8xf32> to vector<8xf32>
    %101 = vector.shape_cast %100 : vector<8xf32> to vector<8x1xf32>
    %102 = tpu.reciprocal %101 {approx = true} : vector<8x1xf32> -> vector<8x1xf32>
    %103 = vector.broadcast %102 : vector<8x1xf32> to vector<8x8xf32>
    %104 = arith.mulf %99, %103 : vector<8x8xf32>
    %105 = arith.truncf %104 : vector<8x8xf32> to vector<8x8xbf16>
    %106 = vector.extract_strided_slice %28 {offsets = [0, 24], sizes = [8, 8], strides = [1, 1]} : vector<8x32xf32> to vector<8x8xf32>
    %107 = arith.truncf %106 : vector<8x8xf32> to vector<8x8xbf16>
    %cst_36 = arith.constant dense<0.000000e+00> : vector<8x8xf32>
    %108 = tpu.matmul %105, %107, %cst_36 {dimension_numbers = #tpu.dot_dimension_numbers<[1], [0], [0], [1], [0, 0, 1, 1], [], []>} : vector<8x8xbf16>, vector<8x8xbf16>, vector<8x8xf32> -> vector<8x8xf32>
    %109 = tpu.concatenate %48, %68, %88, %108 in 1 : vector<8x8xf32>, vector<8x8xf32>, vector<8x8xf32>, vector<8x8xf32> -> vector<8x32xf32>
    %110 = vector.extract_strided_slice %21 {offsets = [8, 0], sizes = [8, 32], strides = [1, 1]} : vector<16x32xf32> to vector<8x32xf32>
    %cst_37 = arith.constant 0.353553385 : f32
    %111 = vector.broadcast %cst_37 : f32 to vector<8x32xf32>
    %112 = arith.mulf %110, %111 : vector<8x32xf32>
    %113 = vector.extract_strided_slice %22 {offsets = [8, 0], sizes = [8, 32], strides = [1, 1]} : vector<16x32xf32> to vector<8x32xf32>
    %114 = vector.extract_strided_slice %23 {offsets = [8, 0], sizes = [8, 32], strides = [1, 1]} : vector<16x32xf32> to vector<8x32xf32>
    %115 = vector.extract_strided_slice %112 {offsets = [0, 0], sizes = [8, 8], strides = [1, 1]} : vector<8x32xf32> to vector<8x8xf32>
    %116 = arith.truncf %115 : vector<8x8xf32> to vector<8x8xbf16>
    %117 = vector.extract_strided_slice %113 {offsets = [0, 0], sizes = [8, 8], strides = [1, 1]} : vector<8x32xf32> to vector<8x8xf32>
    %118 = tpu.transpose %117, [1, 0] : vector<8x8xf32> -> vector<8x8xf32>
    %119 = arith.truncf %118 : vector<8x8xf32> to vector<8x8xbf16>
    %cst_38 = arith.constant dense<0.000000e+00> : vector<8x8xf32>
    %120 = tpu.matmul %116, %119, %cst_38 {dimension_numbers = #tpu.dot_dimension_numbers<[1], [0], [0], [1], [0, 0, 1, 1], [], []>} : vector<8x8xbf16>, vector<8x8xbf16>, vector<8x8xf32> -> vector<8x8xf32>
    %cst_39 = arith.constant dense<0xFF800000> : vector<8xf32>
    %121 = vector.multi_reduction <maximumf>, %120, %cst_39 [1] : vector<8x8xf32> to vector<8xf32>
    %122 = vector.shape_cast %121 : vector<8xf32> to vector<8x1xf32>
    %123 = vector.broadcast %122 : vector<8x1xf32> to vector<8x8xf32>
    %124 = arith.subf %120, %123 : vector<8x8xf32>
    %125 = math.exp %124 : vector<8x8xf32>
    %cst_40 = arith.constant dense<0.000000e+00> : vector<8xf32>
    %126 = vector.multi_reduction <add>, %125, %cst_40 [1] : vector<8x8xf32> to vector<8xf32>
    %127 = vector.shape_cast %126 : vector<8xf32> to vector<8x1xf32>
    %128 = tpu.reciprocal %127 {approx = true} : vector<8x1xf32> -> vector<8x1xf32>
    %129 = vector.broadcast %128 : vector<8x1xf32> to vector<8x8xf32>
    %130 = arith.mulf %125, %129 : vector<8x8xf32>
    %131 = arith.truncf %130 : vector<8x8xf32> to vector<8x8xbf16>
    %132 = vector.extract_strided_slice %114 {offsets = [0, 0], sizes = [8, 8], strides = [1, 1]} : vector<8x32xf32> to vector<8x8xf32>
    %133 = arith.truncf %132 : vector<8x8xf32> to vector<8x8xbf16>
    %cst_41 = arith.constant dense<0.000000e+00> : vector<8x8xf32>
    %134 = tpu.matmul %131, %133, %cst_41 {dimension_numbers = #tpu.dot_dimension_numbers<[1], [0], [0], [1], [0, 0, 1, 1], [], []>} : vector<8x8xbf16>, vector<8x8xbf16>, vector<8x8xf32> -> vector<8x8xf32>
    %135 = vector.extract_strided_slice %112 {offsets = [0, 8], sizes = [8, 8], strides = [1, 1]} : vector<8x32xf32> to vector<8x8xf32>
    %136 = arith.truncf %135 : vector<8x8xf32> to vector<8x8xbf16>
    %137 = vector.extract_strided_slice %113 {offsets = [0, 8], sizes = [8, 8], strides = [1, 1]} : vector<8x32xf32> to vector<8x8xf32>
    %138 = tpu.transpose %137, [1, 0] : vector<8x8xf32> -> vector<8x8xf32>
    %139 = arith.truncf %138 : vector<8x8xf32> to vector<8x8xbf16>
    %cst_42 = arith.constant dense<0.000000e+00> : vector<8x8xf32>
    %140 = tpu.matmul %136, %139, %cst_42 {dimension_numbers = #tpu.dot_dimension_numbers<[1], [0], [0], [1], [0, 0, 1, 1], [], []>} : vector<8x8xbf16>, vector<8x8xbf16>, vector<8x8xf32> -> vector<8x8xf32>
    %cst_43 = arith.constant dense<0xFF800000> : vector<8xf32>
    %141 = vector.multi_reduction <maximumf>, %140, %cst_43 [1] : vector<8x8xf32> to vector<8xf32>
    %142 = vector.shape_cast %141 : vector<8xf32> to vector<8x1xf32>
    %143 = vector.broadcast %142 : vector<8x1xf32> to vector<8x8xf32>
    %144 = arith.subf %140, %143 : vector<8x8xf32>
    %145 = math.exp %144 : vector<8x8xf32>
    %cst_44 = arith.constant dense<0.000000e+00> : vector<8xf32>
    %146 = vector.multi_reduction <add>, %145, %cst_44 [1] : vector<8x8xf32> to vector<8xf32>
    %147 = vector.shape_cast %146 : vector<8xf32> to vector<8x1xf32>
    %148 = tpu.reciprocal %147 {approx = true} : vector<8x1xf32> -> vector<8x1xf32>
    %149 = vector.broadcast %148 : vector<8x1xf32> to vector<8x8xf32>
    %150 = arith.mulf %145, %149 : vector<8x8xf32>
    %151 = arith.truncf %150 : vector<8x8xf32> to vector<8x8xbf16>
    %152 = vector.extract_strided_slice %114 {offsets = [0, 8], sizes = [8, 8], strides = [1, 1]} : vector<8x32xf32> to vector<8x8xf32>
    %153 = arith.truncf %152 : vector<8x8xf32> to vector<8x8xbf16>
    %cst_45 = arith.constant dense<0.000000e+00> : vector<8x8xf32>
    %154 = tpu.matmul %151, %153, %cst_45 {dimension_numbers = #tpu.dot_dimension_numbers<[1], [0], [0], [1], [0, 0, 1, 1], [], []>} : vector<8x8xbf16>, vector<8x8xbf16>, vector<8x8xf32> -> vector<8x8xf32>
    %155 = vector.extract_strided_slice %112 {offsets = [0, 16], sizes = [8, 8], strides = [1, 1]} : vector<8x32xf32> to vector<8x8xf32>
    %156 = arith.truncf %155 : vector<8x8xf32> to vector<8x8xbf16>
    %157 = vector.extract_strided_slice %113 {offsets = [0, 16], sizes = [8, 8], strides = [1, 1]} : vector<8x32xf32> to vector<8x8xf32>
    %158 = tpu.transpose %157, [1, 0] : vector<8x8xf32> -> vector<8x8xf32>
    %159 = arith.truncf %158 : vector<8x8xf32> to vector<8x8xbf16>
    %cst_46 = arith.constant dense<0.000000e+00> : vector<8x8xf32>
    %160 = tpu.matmul %156, %159, %cst_46 {dimension_numbers = #tpu.dot_dimension_numbers<[1], [0], [0], [1], [0, 0, 1, 1], [], []>} : vector<8x8xbf16>, vector<8x8xbf16>, vector<8x8xf32> -> vector<8x8xf32>
    %cst_47 = arith.constant dense<0xFF800000> : vector<8xf32>
    %161 = vector.multi_reduction <maximumf>, %160, %cst_47 [1] : vector<8x8xf32> to vector<8xf32>
    %162 = vector.shape_cast %161 : vector<8xf32> to vector<8x1xf32>
    %163 = vector.broadcast %162 : vector<8x1xf32> to vector<8x8xf32>
    %164 = arith.subf %160, %163 : vector<8x8xf32>
    %165 = math.exp %164 : vector<8x8xf32>
    %cst_48 = arith.constant dense<0.000000e+00> : vector<8xf32>
    %166 = vector.multi_reduction <add>, %165, %cst_48 [1] : vector<8x8xf32> to vector<8xf32>
    %167 = vector.shape_cast %166 : vector<8xf32> to vector<8x1xf32>
    %168 = tpu.reciprocal %167 {approx = true} : vector<8x1xf32> -> vector<8x1xf32>
    %169 = vector.broadcast %168 : vector<8x1xf32> to vector<8x8xf32>
    %170 = arith.mulf %165, %169 : vector<8x8xf32>
    %171 = arith.truncf %170 : vector<8x8xf32> to vector<8x8xbf16>
    %172 = vector.extract_strided_slice %114 {offsets = [0, 16], sizes = [8, 8], strides = [1, 1]} : vector<8x32xf32> to vector<8x8xf32>
    %173 = arith.truncf %172 : vector<8x8xf32> to vector<8x8xbf16>
    %cst_49 = arith.constant dense<0.000000e+00> : vector<8x8xf32>
    %174 = tpu.matmul %171, %173, %cst_49 {dimension_numbers = #tpu.dot_dimension_numbers<[1], [0], [0], [1], [0, 0, 1, 1], [], []>} : vector<8x8xbf16>, vector<8x8xbf16>, vector<8x8xf32> -> vector<8x8xf32>
    %175 = vector.extract_strided_slice %112 {offsets = [0, 24], sizes = [8, 8], strides = [1, 1]} : vector<8x32xf32> to vector<8x8xf32>
    %176 = arith.truncf %175 : vector<8x8xf32> to vector<8x8xbf16>
    %177 = vector.extract_strided_slice %113 {offsets = [0, 24], sizes = [8, 8], strides = [1, 1]} : vector<8x32xf32> to vector<8x8xf32>
    %178 = tpu.transpose %177, [1, 0] : vector<8x8xf32> -> vector<8x8xf32>
    %179 = arith.truncf %178 : vector<8x8xf32> to vector<8x8xbf16>
    %cst_50 = arith.constant dense<0.000000e+00> : vector<8x8xf32>
    %180 = tpu.matmul %176, %179, %cst_50 {dimension_numbers = #tpu.dot_dimension_numbers<[1], [0], [0], [1], [0, 0, 1, 1], [], []>} : vector<8x8xbf16>, vector<8x8xbf16>, vector<8x8xf32> -> vector<8x8xf32>
    %cst_51 = arith.constant dense<0xFF800000> : vector<8xf32>
    %181 = vector.multi_reduction <maximumf>, %180, %cst_51 [1] : vector<8x8xf32> to vector<8xf32>
    %182 = vector.shape_cast %181 : vector<8xf32> to vector<8x1xf32>
    %183 = vector.broadcast %182 : vector<8x1xf32> to vector<8x8xf32>
    %184 = arith.subf %180, %183 : vector<8x8xf32>
    %185 = math.exp %184 : vector<8x8xf32>
    %cst_52 = arith.constant dense<0.000000e+00> : vector<8xf32>
    %186 = vector.multi_reduction <add>, %185, %cst_52 [1] : vector<8x8xf32> to vector<8xf32>
    %187 = vector.shape_cast %186 : vector<8xf32> to vector<8x1xf32>
    %188 = tpu.reciprocal %187 {approx = true} : vector<8x1xf32> -> vector<8x1xf32>
    %189 = vector.broadcast %188 : vector<8x1xf32> to vector<8x8xf32>
    %190 = arith.mulf %185, %189 : vector<8x8xf32>
    %191 = arith.truncf %190 : vector<8x8xf32> to vector<8x8xbf16>
    %192 = vector.extract_strided_slice %114 {offsets = [0, 24], sizes = [8, 8], strides = [1, 1]} : vector<8x32xf32> to vector<8x8xf32>
    %193 = arith.truncf %192 : vector<8x8xf32> to vector<8x8xbf16>
    %cst_53 = arith.constant dense<0.000000e+00> : vector<8x8xf32>
    %194 = tpu.matmul %191, %193, %cst_53 {dimension_numbers = #tpu.dot_dimension_numbers<[1], [0], [0], [1], [0, 0, 1, 1], [], []>} : vector<8x8xbf16>, vector<8x8xbf16>, vector<8x8xf32> -> vector<8x8xf32>
    %195 = tpu.concatenate %134, %154, %174, %194 in 1 : vector<8x8xf32>, vector<8x8xf32>, vector<8x8xf32>, vector<8x8xf32> -> vector<8x32xf32>
    %196 = tpu.concatenate %109, %195 in 0 : vector<8x32xf32>, vector<8x32xf32> -> vector<16x32xf32>
    %197 = arith.truncf %196 : vector<16x32xf32> to vector<16x32xbf16>
    %cst_54 = arith.constant dense<0.000000e+00> : vector<16x32xf32>
    %198 = tpu.matmul %197, %14, %cst_54 {dimension_numbers = #tpu.dot_dimension_numbers<[1], [0], [0], [1], [0, 0, 1, 1], [], []>} : vector<16x32xbf16>, vector<32x32xbf16>, vector<16x32xf32> -> vector<16x32xf32>
    %199 = vector.broadcast %16 : vector<1x32xf32> to vector<16x32xf32>
    %200 = arith.addf %198, %199 : vector<16x32xf32>
    %201 = arith.addf %8, %200 : vector<16x32xf32>
    %c0_55 = arith.constant 0 : index
    %c0_56 = arith.constant 0 : index
    %c0_57 = arith.constant 0 : index
    %202 = vector.load %arg8[%c0_55, %c0_56, %c0_57] : memref<2x1x32xf32, #tpu.memory_space<vmem>>, vector<1x1x32xf32>
    %203 = vector.shape_cast %202 : vector<1x1x32xf32> to vector<1x32xf32>
    %c0_58 = arith.constant 0 : index
    %c0_59 = arith.constant 0 : index
    %c0_60 = arith.constant 0 : index
    %204 = vector.load %arg9[%c0_58, %c0_59, %c0_60] : memref<2x1x32xf32, #tpu.memory_space<vmem>>, vector<1x1x32xf32>
    %205 = vector.shape_cast %204 : vector<1x1x32xf32> to vector<1x32xf32>
    %cst_61 = arith.constant dense<0.000000e+00> : vector<16xf32>
    %206 = vector.multi_reduction <add>, %201, %cst_61 [1] : vector<16x32xf32> to vector<16xf32>
    %207 = vector.shape_cast %206 : vector<16xf32> to vector<16x1xf32>
    %cst_62 = arith.constant 3.200000e+01 : f32
    %208 = vector.broadcast %cst_62 : f32 to vector<16x1xf32>
    %209 = arith.divf %207, %208 : vector<16x1xf32>
    %210 = vector.broadcast %209 : vector<16x1xf32> to vector<16x32xf32>
    %211 = arith.subf %201, %210 : vector<16x32xf32>
    %212 = arith.mulf %211, %211 : vector<16x32xf32>
    %cst_63 = arith.constant dense<0.000000e+00> : vector<16xf32>
    %213 = vector.multi_reduction <add>, %212, %cst_63 [1] : vector<16x32xf32> to vector<16xf32>
    %214 = vector.shape_cast %213 : vector<16xf32> to vector<16x1xf32>
    %cst_64 = arith.constant 3.200000e+01 : f32
    %215 = vector.broadcast %cst_64 : f32 to vector<16x1xf32>
    %216 = arith.divf %214, %215 : vector<16x1xf32>
    %217 = vector.broadcast %209 : vector<16x1xf32> to vector<16x32xf32>
    %218 = arith.subf %201, %217 : vector<16x32xf32>
    %cst_65 = arith.constant 9.99999974E-6 : f32
    %219 = vector.broadcast %cst_65 : f32 to vector<16x1xf32>
    %220 = arith.addf %216, %219 : vector<16x1xf32>
    %221 = math.rsqrt %220 : vector<16x1xf32>
    %222 = vector.broadcast %221 : vector<16x1xf32> to vector<16x32xf32>
    %223 = arith.mulf %218, %222 : vector<16x32xf32>
    %224 = vector.broadcast %203 : vector<1x32xf32> to vector<16x32xf32>
    %225 = arith.mulf %223, %224 : vector<16x32xf32>
    %226 = vector.broadcast %205 : vector<1x32xf32> to vector<16x32xf32>
    %227 = arith.addf %225, %226 : vector<16x32xf32>
    %c0_66 = arith.constant 0 : index
    %c0_67 = arith.constant 0 : index
    %c0_68 = arith.constant 0 : index
    %228 = vector.load %arg10[%c0_66, %c0_67, %c0_68] : memref<2x32x64xbf16, #tpu.memory_space<vmem>>, vector<1x32x64xbf16>
    %229 = vector.shape_cast %228 : vector<1x32x64xbf16> to vector<32x64xbf16>
    %c0_69 = arith.constant 0 : index
    %c0_70 = arith.constant 0 : index
    %c0_71 = arith.constant 0 : index
    %230 = vector.load %arg11[%c0_69, %c0_70, %c0_71] : memref<2x1x64xf32, #tpu.memory_space<vmem>>, vector<1x1x64xf32>
    %231 = vector.shape_cast %230 : vector<1x1x64xf32> to vector<1x64xf32>
    %c0_72 = arith.constant 0 : index
    %c0_73 = arith.constant 0 : index
    %c0_74 = arith.constant 0 : index
    %232 = vector.load %arg12[%c0_72, %c0_73, %c0_74] : memref<2x64x32xbf16, #tpu.memory_space<vmem>>, vector<1x64x32xbf16>
    %233 = vector.shape_cast %232 : vector<1x64x32xbf16> to vector<64x32xbf16>
    %c0_75 = arith.constant 0 : index
    %c0_76 = arith.constant 0 : index
    %c0_77 = arith.constant 0 : index
    %234 = vector.load %arg13[%c0_75, %c0_76, %c0_77] : memref<2x1x32xf32, #tpu.memory_space<vmem>>, vector<1x1x32xf32>
    %235 = vector.shape_cast %234 : vector<1x1x32xf32> to vector<1x32xf32>
    %236 = arith.truncf %227 : vector<16x32xf32> to vector<16x32xbf16>
    %cst_78 = arith.constant dense<0.000000e+00> : vector<16x64xf32>
    %237 = tpu.matmul %236, %229, %cst_78 {dimension_numbers = #tpu.dot_dimension_numbers<[1], [0], [0], [1], [0, 0, 1, 1], [], []>} : vector<16x32xbf16>, vector<32x64xbf16>, vector<16x64xf32> -> vector<16x64xf32>
    %238 = vector.broadcast %231 : vector<1x64xf32> to vector<16x64xf32>
    %239 = arith.addf %237, %238 : vector<16x64xf32>
    %cst_79 = arith.constant 0.000000e+00 : f32
    %240 = vector.broadcast %cst_79 : f32 to vector<16x64xf32>
    %241 = arith.maximumf %239, %240 : vector<16x64xf32>
    %242 = arith.truncf %241 : vector<16x64xf32> to vector<16x64xbf16>
    %cst_80 = arith.constant dense<0.000000e+00> : vector<16x32xf32>
    %243 = tpu.matmul %242, %233, %cst_80 {dimension_numbers = #tpu.dot_dimension_numbers<[1], [0], [0], [1], [0, 0, 1, 1], [], []>} : vector<16x64xbf16>, vector<64x32xbf16>, vector<16x32xf32> -> vector<16x32xf32>
    %244 = vector.broadcast %235 : vector<1x32xf32> to vector<16x32xf32>
    %245 = arith.addf %243, %244 : vector<16x32xf32>
    %246 = arith.addf %227, %245 : vector<16x32xf32>
    %c0_81 = arith.constant 0 : index
    %c0_82 = arith.constant 0 : index
    %c0_83 = arith.constant 0 : index
    %247 = vector.load %arg14[%c0_81, %c0_82, %c0_83] : memref<2x1x32xf32, #tpu.memory_space<vmem>>, vector<1x1x32xf32>
    %248 = vector.shape_cast %247 : vector<1x1x32xf32> to vector<1x32xf32>
    %c0_84 = arith.constant 0 : index
    %c0_85 = arith.constant 0 : index
    %c0_86 = arith.constant 0 : index
    %249 = vector.load %arg15[%c0_84, %c0_85, %c0_86] : memref<2x1x32xf32, #tpu.memory_space<vmem>>, vector<1x1x32xf32>
    %250 = vector.shape_cast %249 : vector<1x1x32xf32> to vector<1x32xf32>
    %cst_87 = arith.constant dense<0.000000e+00> : vector<16xf32>
    %251 = vector.multi_reduction <add>, %246, %cst_87 [1] : vector<16x32xf32> to vector<16xf32>
    %252 = vector.shape_cast %251 : vector<16xf32> to vector<16x1xf32>
    %cst_88 = arith.constant 3.200000e+01 : f32
    %253 = vector.broadcast %cst_88 : f32 to vector<16x1xf32>
    %254 = arith.divf %252, %253 : vector<16x1xf32>
    %255 = vector.broadcast %254 : vector<16x1xf32> to vector<16x32xf32>
    %256 = arith.subf %246, %255 : vector<16x32xf32>
    %257 = arith.mulf %256, %256 : vector<16x32xf32>
    %cst_89 = arith.constant dense<0.000000e+00> : vector<16xf32>
    %258 = vector.multi_reduction <add>, %257, %cst_89 [1] : vector<16x32xf32> to vector<16xf32>
    %259 = vector.shape_cast %258 : vector<16xf32> to vector<16x1xf32>
    %cst_90 = arith.constant 3.200000e+01 : f32
    %260 = vector.broadcast %cst_90 : f32 to vector<16x1xf32>
    %261 = arith.divf %259, %260 : vector<16x1xf32>
    %262 = vector.broadcast %254 : vector<16x1xf32> to vector<16x32xf32>
    %263 = arith.subf %246, %262 : vector<16x32xf32>
    %cst_91 = arith.constant 9.99999974E-6 : f32
    %264 = vector.broadcast %cst_91 : f32 to vector<16x1xf32>
    %265 = arith.addf %261, %264 : vector<16x1xf32>
    %266 = math.rsqrt %265 : vector<16x1xf32>
    %267 = vector.broadcast %266 : vector<16x1xf32> to vector<16x32xf32>
    %268 = arith.mulf %263, %267 : vector<16x32xf32>
    %269 = vector.broadcast %248 : vector<1x32xf32> to vector<16x32xf32>
    %270 = arith.mulf %268, %269 : vector<16x32xf32>
    %271 = vector.broadcast %250 : vector<1x32xf32> to vector<16x32xf32>
    %272 = arith.addf %270, %271 : vector<16x32xf32>
    %c1 = arith.constant 1 : index
    %c0_92 = arith.constant 0 : index
    %c0_93 = arith.constant 0 : index
    %273 = vector.load %arg4[%c1, %c0_92, %c0_93] : memref<2x32x96xbf16, #tpu.memory_space<vmem>>, vector<1x32x96xbf16>
    %274 = vector.shape_cast %273 : vector<1x32x96xbf16> to vector<32x96xbf16>
    %c1_94 = arith.constant 1 : index
    %c0_95 = arith.constant 0 : index
    %c0_96 = arith.constant 0 : index
    %275 = vector.load %arg5[%c1_94, %c0_95, %c0_96] : memref<2x1x96xf32, #tpu.memory_space<vmem>>, vector<1x1x96xf32>
    %276 = vector.shape_cast %275 : vector<1x1x96xf32> to vector<1x96xf32>
    %c1_97 = arith.constant 1 : index
    %c0_98 = arith.constant 0 : index
    %c0_99 = arith.constant 0 : index
    %277 = vector.load %arg6[%c1_97, %c0_98, %c0_99] : memref<2x32x32xbf16, #tpu.memory_space<vmem>>, vector<1x32x32xbf16>
    %278 = vector.shape_cast %277 : vector<1x32x32xbf16> to vector<32x32xbf16>
    %c1_100 = arith.constant 1 : index
    %c0_101 = arith.constant 0 : index
    %c0_102 = arith.constant 0 : index
    %279 = vector.load %arg7[%c1_100, %c0_101, %c0_102] : memref<2x1x32xf32, #tpu.memory_space<vmem>>, vector<1x1x32xf32>
    %280 = vector.shape_cast %279 : vector<1x1x32xf32> to vector<1x32xf32>
    %281 = arith.truncf %272 : vector<16x32xf32> to vector<16x32xbf16>
    %cst_103 = arith.constant dense<0.000000e+00> : vector<16x96xf32>
    %282 = tpu.matmul %281, %274, %cst_103 {dimension_numbers = #tpu.dot_dimension_numbers<[1], [0], [0], [1], [0, 0, 1, 1], [], []>} : vector<16x32xbf16>, vector<32x96xbf16>, vector<16x96xf32> -> vector<16x96xf32>
    %283 = vector.broadcast %276 : vector<1x96xf32> to vector<16x96xf32>
    %284 = arith.addf %282, %283 : vector<16x96xf32>
    %285 = vector.extract_strided_slice %284 {offsets = [0, 0], sizes = [16, 32], strides = [1, 1]} : vector<16x96xf32> to vector<16x32xf32>
    %286 = vector.extract_strided_slice %284 {offsets = [0, 32], sizes = [16, 32], strides = [1, 1]} : vector<16x96xf32> to vector<16x32xf32>
    %287 = vector.extract_strided_slice %284 {offsets = [0, 64], sizes = [16, 32], strides = [1, 1]} : vector<16x96xf32> to vector<16x32xf32>
    %288 = vector.extract_strided_slice %285 {offsets = [0, 0], sizes = [8, 32], strides = [1, 1]} : vector<16x32xf32> to vector<8x32xf32>
    %cst_104 = arith.constant 0.353553385 : f32
    %289 = vector.broadcast %cst_104 : f32 to vector<8x32xf32>
    %290 = arith.mulf %288, %289 : vector<8x32xf32>
    %291 = vector.extract_strided_slice %286 {offsets = [0, 0], sizes = [8, 32], strides = [1, 1]} : vector<16x32xf32> to vector<8x32xf32>
    %292 = vector.extract_strided_slice %287 {offsets = [0, 0], sizes = [8, 32], strides = [1, 1]} : vector<16x32xf32> to vector<8x32xf32>
    %293 = vector.extract_strided_slice %290 {offsets = [0, 0], sizes = [8, 8], strides = [1, 1]} : vector<8x32xf32> to vector<8x8xf32>
    %294 = arith.truncf %293 : vector<8x8xf32> to vector<8x8xbf16>
    %295 = vector.extract_strided_slice %291 {offsets = [0, 0], sizes = [8, 8], strides = [1, 1]} : vector<8x32xf32> to vector<8x8xf32>
    %296 = tpu.transpose %295, [1, 0] : vector<8x8xf32> -> vector<8x8xf32>
    %297 = arith.truncf %296 : vector<8x8xf32> to vector<8x8xbf16>
    %cst_105 = arith.constant dense<0.000000e+00> : vector<8x8xf32>
    %298 = tpu.matmul %294, %297, %cst_105 {dimension_numbers = #tpu.dot_dimension_numbers<[1], [0], [0], [1], [0, 0, 1, 1], [], []>} : vector<8x8xbf16>, vector<8x8xbf16>, vector<8x8xf32> -> vector<8x8xf32>
    %cst_106 = arith.constant dense<0xFF800000> : vector<8xf32>
    %299 = vector.multi_reduction <maximumf>, %298, %cst_106 [1] : vector<8x8xf32> to vector<8xf32>
    %300 = vector.shape_cast %299 : vector<8xf32> to vector<8x1xf32>
    %301 = vector.broadcast %300 : vector<8x1xf32> to vector<8x8xf32>
    %302 = arith.subf %298, %301 : vector<8x8xf32>
    %303 = math.exp %302 : vector<8x8xf32>
    %cst_107 = arith.constant dense<0.000000e+00> : vector<8xf32>
    %304 = vector.multi_reduction <add>, %303, %cst_107 [1] : vector<8x8xf32> to vector<8xf32>
    %305 = vector.shape_cast %304 : vector<8xf32> to vector<8x1xf32>
    %306 = tpu.reciprocal %305 {approx = true} : vector<8x1xf32> -> vector<8x1xf32>
    %307 = vector.broadcast %306 : vector<8x1xf32> to vector<8x8xf32>
    %308 = arith.mulf %303, %307 : vector<8x8xf32>
    %309 = arith.truncf %308 : vector<8x8xf32> to vector<8x8xbf16>
    %310 = vector.extract_strided_slice %292 {offsets = [0, 0], sizes = [8, 8], strides = [1, 1]} : vector<8x32xf32> to vector<8x8xf32>
    %311 = arith.truncf %310 : vector<8x8xf32> to vector<8x8xbf16>
    %cst_108 = arith.constant dense<0.000000e+00> : vector<8x8xf32>
    %312 = tpu.matmul %309, %311, %cst_108 {dimension_numbers = #tpu.dot_dimension_numbers<[1], [0], [0], [1], [0, 0, 1, 1], [], []>} : vector<8x8xbf16>, vector<8x8xbf16>, vector<8x8xf32> -> vector<8x8xf32>
    %313 = vector.extract_strided_slice %290 {offsets = [0, 8], sizes = [8, 8], strides = [1, 1]} : vector<8x32xf32> to vector<8x8xf32>
    %314 = arith.truncf %313 : vector<8x8xf32> to vector<8x8xbf16>
    %315 = vector.extract_strided_slice %291 {offsets = [0, 8], sizes = [8, 8], strides = [1, 1]} : vector<8x32xf32> to vector<8x8xf32>
    %316 = tpu.transpose %315, [1, 0] : vector<8x8xf32> -> vector<8x8xf32>
    %317 = arith.truncf %316 : vector<8x8xf32> to vector<8x8xbf16>
    %cst_109 = arith.constant dense<0.000000e+00> : vector<8x8xf32>
    %318 = tpu.matmul %314, %317, %cst_109 {dimension_numbers = #tpu.dot_dimension_numbers<[1], [0], [0], [1], [0, 0, 1, 1], [], []>} : vector<8x8xbf16>, vector<8x8xbf16>, vector<8x8xf32> -> vector<8x8xf32>
    %cst_110 = arith.constant dense<0xFF800000> : vector<8xf32>
    %319 = vector.multi_reduction <maximumf>, %318, %cst_110 [1] : vector<8x8xf32> to vector<8xf32>
    %320 = vector.shape_cast %319 : vector<8xf32> to vector<8x1xf32>
    %321 = vector.broadcast %320 : vector<8x1xf32> to vector<8x8xf32>
    %322 = arith.subf %318, %321 : vector<8x8xf32>
    %323 = math.exp %322 : vector<8x8xf32>
    %cst_111 = arith.constant dense<0.000000e+00> : vector<8xf32>
    %324 = vector.multi_reduction <add>, %323, %cst_111 [1] : vector<8x8xf32> to vector<8xf32>
    %325 = vector.shape_cast %324 : vector<8xf32> to vector<8x1xf32>
    %326 = tpu.reciprocal %325 {approx = true} : vector<8x1xf32> -> vector<8x1xf32>
    %327 = vector.broadcast %326 : vector<8x1xf32> to vector<8x8xf32>
    %328 = arith.mulf %323, %327 : vector<8x8xf32>
    %329 = arith.truncf %328 : vector<8x8xf32> to vector<8x8xbf16>
    %330 = vector.extract_strided_slice %292 {offsets = [0, 8], sizes = [8, 8], strides = [1, 1]} : vector<8x32xf32> to vector<8x8xf32>
    %331 = arith.truncf %330 : vector<8x8xf32> to vector<8x8xbf16>
    %cst_112 = arith.constant dense<0.000000e+00> : vector<8x8xf32>
    %332 = tpu.matmul %329, %331, %cst_112 {dimension_numbers = #tpu.dot_dimension_numbers<[1], [0], [0], [1], [0, 0, 1, 1], [], []>} : vector<8x8xbf16>, vector<8x8xbf16>, vector<8x8xf32> -> vector<8x8xf32>
    %333 = vector.extract_strided_slice %290 {offsets = [0, 16], sizes = [8, 8], strides = [1, 1]} : vector<8x32xf32> to vector<8x8xf32>
    %334 = arith.truncf %333 : vector<8x8xf32> to vector<8x8xbf16>
    %335 = vector.extract_strided_slice %291 {offsets = [0, 16], sizes = [8, 8], strides = [1, 1]} : vector<8x32xf32> to vector<8x8xf32>
    %336 = tpu.transpose %335, [1, 0] : vector<8x8xf32> -> vector<8x8xf32>
    %337 = arith.truncf %336 : vector<8x8xf32> to vector<8x8xbf16>
    %cst_113 = arith.constant dense<0.000000e+00> : vector<8x8xf32>
    %338 = tpu.matmul %334, %337, %cst_113 {dimension_numbers = #tpu.dot_dimension_numbers<[1], [0], [0], [1], [0, 0, 1, 1], [], []>} : vector<8x8xbf16>, vector<8x8xbf16>, vector<8x8xf32> -> vector<8x8xf32>
    %cst_114 = arith.constant dense<0xFF800000> : vector<8xf32>
    %339 = vector.multi_reduction <maximumf>, %338, %cst_114 [1] : vector<8x8xf32> to vector<8xf32>
    %340 = vector.shape_cast %339 : vector<8xf32> to vector<8x1xf32>
    %341 = vector.broadcast %340 : vector<8x1xf32> to vector<8x8xf32>
    %342 = arith.subf %338, %341 : vector<8x8xf32>
    %343 = math.exp %342 : vector<8x8xf32>
    %cst_115 = arith.constant dense<0.000000e+00> : vector<8xf32>
    %344 = vector.multi_reduction <add>, %343, %cst_115 [1] : vector<8x8xf32> to vector<8xf32>
    %345 = vector.shape_cast %344 : vector<8xf32> to vector<8x1xf32>
    %346 = tpu.reciprocal %345 {approx = true} : vector<8x1xf32> -> vector<8x1xf32>
    %347 = vector.broadcast %346 : vector<8x1xf32> to vector<8x8xf32>
    %348 = arith.mulf %343, %347 : vector<8x8xf32>
    %349 = arith.truncf %348 : vector<8x8xf32> to vector<8x8xbf16>
    %350 = vector.extract_strided_slice %292 {offsets = [0, 16], sizes = [8, 8], strides = [1, 1]} : vector<8x32xf32> to vector<8x8xf32>
    %351 = arith.truncf %350 : vector<8x8xf32> to vector<8x8xbf16>
    %cst_116 = arith.constant dense<0.000000e+00> : vector<8x8xf32>
    %352 = tpu.matmul %349, %351, %cst_116 {dimension_numbers = #tpu.dot_dimension_numbers<[1], [0], [0], [1], [0, 0, 1, 1], [], []>} : vector<8x8xbf16>, vector<8x8xbf16>, vector<8x8xf32> -> vector<8x8xf32>
    %353 = vector.extract_strided_slice %290 {offsets = [0, 24], sizes = [8, 8], strides = [1, 1]} : vector<8x32xf32> to vector<8x8xf32>
    %354 = arith.truncf %353 : vector<8x8xf32> to vector<8x8xbf16>
    %355 = vector.extract_strided_slice %291 {offsets = [0, 24], sizes = [8, 8], strides = [1, 1]} : vector<8x32xf32> to vector<8x8xf32>
    %356 = tpu.transpose %355, [1, 0] : vector<8x8xf32> -> vector<8x8xf32>
    %357 = arith.truncf %356 : vector<8x8xf32> to vector<8x8xbf16>
    %cst_117 = arith.constant dense<0.000000e+00> : vector<8x8xf32>
    %358 = tpu.matmul %354, %357, %cst_117 {dimension_numbers = #tpu.dot_dimension_numbers<[1], [0], [0], [1], [0, 0, 1, 1], [], []>} : vector<8x8xbf16>, vector<8x8xbf16>, vector<8x8xf32> -> vector<8x8xf32>
    %cst_118 = arith.constant dense<0xFF800000> : vector<8xf32>
    %359 = vector.multi_reduction <maximumf>, %358, %cst_118 [1] : vector<8x8xf32> to vector<8xf32>
    %360 = vector.shape_cast %359 : vector<8xf32> to vector<8x1xf32>
    %361 = vector.broadcast %360 : vector<8x1xf32> to vector<8x8xf32>
    %362 = arith.subf %358, %361 : vector<8x8xf32>
    %363 = math.exp %362 : vector<8x8xf32>
    %cst_119 = arith.constant dense<0.000000e+00> : vector<8xf32>
    %364 = vector.multi_reduction <add>, %363, %cst_119 [1] : vector<8x8xf32> to vector<8xf32>
    %365 = vector.shape_cast %364 : vector<8xf32> to vector<8x1xf32>
    %366 = tpu.reciprocal %365 {approx = true} : vector<8x1xf32> -> vector<8x1xf32>
    %367 = vector.broadcast %366 : vector<8x1xf32> to vector<8x8xf32>
    %368 = arith.mulf %363, %367 : vector<8x8xf32>
    %369 = arith.truncf %368 : vector<8x8xf32> to vector<8x8xbf16>
    %370 = vector.extract_strided_slice %292 {offsets = [0, 24], sizes = [8, 8], strides = [1, 1]} : vector<8x32xf32> to vector<8x8xf32>
    %371 = arith.truncf %370 : vector<8x8xf32> to vector<8x8xbf16>
    %cst_120 = arith.constant dense<0.000000e+00> : vector<8x8xf32>
    %372 = tpu.matmul %369, %371, %cst_120 {dimension_numbers = #tpu.dot_dimension_numbers<[1], [0], [0], [1], [0, 0, 1, 1], [], []>} : vector<8x8xbf16>, vector<8x8xbf16>, vector<8x8xf32> -> vector<8x8xf32>
    %373 = tpu.concatenate %312, %332, %352, %372 in 1 : vector<8x8xf32>, vector<8x8xf32>, vector<8x8xf32>, vector<8x8xf32> -> vector<8x32xf32>
    %374 = vector.extract_strided_slice %285 {offsets = [8, 0], sizes = [8, 32], strides = [1, 1]} : vector<16x32xf32> to vector<8x32xf32>
    %cst_121 = arith.constant 0.353553385 : f32
    %375 = vector.broadcast %cst_121 : f32 to vector<8x32xf32>
    %376 = arith.mulf %374, %375 : vector<8x32xf32>
    %377 = vector.extract_strided_slice %286 {offsets = [8, 0], sizes = [8, 32], strides = [1, 1]} : vector<16x32xf32> to vector<8x32xf32>
    %378 = vector.extract_strided_slice %287 {offsets = [8, 0], sizes = [8, 32], strides = [1, 1]} : vector<16x32xf32> to vector<8x32xf32>
    %379 = vector.extract_strided_slice %376 {offsets = [0, 0], sizes = [8, 8], strides = [1, 1]} : vector<8x32xf32> to vector<8x8xf32>
    %380 = arith.truncf %379 : vector<8x8xf32> to vector<8x8xbf16>
    %381 = vector.extract_strided_slice %377 {offsets = [0, 0], sizes = [8, 8], strides = [1, 1]} : vector<8x32xf32> to vector<8x8xf32>
    %382 = tpu.transpose %381, [1, 0] : vector<8x8xf32> -> vector<8x8xf32>
    %383 = arith.truncf %382 : vector<8x8xf32> to vector<8x8xbf16>
    %cst_122 = arith.constant dense<0.000000e+00> : vector<8x8xf32>
    %384 = tpu.matmul %380, %383, %cst_122 {dimension_numbers = #tpu.dot_dimension_numbers<[1], [0], [0], [1], [0, 0, 1, 1], [], []>} : vector<8x8xbf16>, vector<8x8xbf16>, vector<8x8xf32> -> vector<8x8xf32>
    %cst_123 = arith.constant dense<0xFF800000> : vector<8xf32>
    %385 = vector.multi_reduction <maximumf>, %384, %cst_123 [1] : vector<8x8xf32> to vector<8xf32>
    %386 = vector.shape_cast %385 : vector<8xf32> to vector<8x1xf32>
    %387 = vector.broadcast %386 : vector<8x1xf32> to vector<8x8xf32>
    %388 = arith.subf %384, %387 : vector<8x8xf32>
    %389 = math.exp %388 : vector<8x8xf32>
    %cst_124 = arith.constant dense<0.000000e+00> : vector<8xf32>
    %390 = vector.multi_reduction <add>, %389, %cst_124 [1] : vector<8x8xf32> to vector<8xf32>
    %391 = vector.shape_cast %390 : vector<8xf32> to vector<8x1xf32>
    %392 = tpu.reciprocal %391 {approx = true} : vector<8x1xf32> -> vector<8x1xf32>
    %393 = vector.broadcast %392 : vector<8x1xf32> to vector<8x8xf32>
    %394 = arith.mulf %389, %393 : vector<8x8xf32>
    %395 = arith.truncf %394 : vector<8x8xf32> to vector<8x8xbf16>
    %396 = vector.extract_strided_slice %378 {offsets = [0, 0], sizes = [8, 8], strides = [1, 1]} : vector<8x32xf32> to vector<8x8xf32>
    %397 = arith.truncf %396 : vector<8x8xf32> to vector<8x8xbf16>
    %cst_125 = arith.constant dense<0.000000e+00> : vector<8x8xf32>
    %398 = tpu.matmul %395, %397, %cst_125 {dimension_numbers = #tpu.dot_dimension_numbers<[1], [0], [0], [1], [0, 0, 1, 1], [], []>} : vector<8x8xbf16>, vector<8x8xbf16>, vector<8x8xf32> -> vector<8x8xf32>
    %399 = vector.extract_strided_slice %376 {offsets = [0, 8], sizes = [8, 8], strides = [1, 1]} : vector<8x32xf32> to vector<8x8xf32>
    %400 = arith.truncf %399 : vector<8x8xf32> to vector<8x8xbf16>
    %401 = vector.extract_strided_slice %377 {offsets = [0, 8], sizes = [8, 8], strides = [1, 1]} : vector<8x32xf32> to vector<8x8xf32>
    %402 = tpu.transpose %401, [1, 0] : vector<8x8xf32> -> vector<8x8xf32>
    %403 = arith.truncf %402 : vector<8x8xf32> to vector<8x8xbf16>
    %cst_126 = arith.constant dense<0.000000e+00> : vector<8x8xf32>
    %404 = tpu.matmul %400, %403, %cst_126 {dimension_numbers = #tpu.dot_dimension_numbers<[1], [0], [0], [1], [0, 0, 1, 1], [], []>} : vector<8x8xbf16>, vector<8x8xbf16>, vector<8x8xf32> -> vector<8x8xf32>
    %cst_127 = arith.constant dense<0xFF800000> : vector<8xf32>
    %405 = vector.multi_reduction <maximumf>, %404, %cst_127 [1] : vector<8x8xf32> to vector<8xf32>
    %406 = vector.shape_cast %405 : vector<8xf32> to vector<8x1xf32>
    %407 = vector.broadcast %406 : vector<8x1xf32> to vector<8x8xf32>
    %408 = arith.subf %404, %407 : vector<8x8xf32>
    %409 = math.exp %408 : vector<8x8xf32>
    %cst_128 = arith.constant dense<0.000000e+00> : vector<8xf32>
    %410 = vector.multi_reduction <add>, %409, %cst_128 [1] : vector<8x8xf32> to vector<8xf32>
    %411 = vector.shape_cast %410 : vector<8xf32> to vector<8x1xf32>
    %412 = tpu.reciprocal %411 {approx = true} : vector<8x1xf32> -> vector<8x1xf32>
    %413 = vector.broadcast %412 : vector<8x1xf32> to vector<8x8xf32>
    %414 = arith.mulf %409, %413 : vector<8x8xf32>
    %415 = arith.truncf %414 : vector<8x8xf32> to vector<8x8xbf16>
    %416 = vector.extract_strided_slice %378 {offsets = [0, 8], sizes = [8, 8], strides = [1, 1]} : vector<8x32xf32> to vector<8x8xf32>
    %417 = arith.truncf %416 : vector<8x8xf32> to vector<8x8xbf16>
    %cst_129 = arith.constant dense<0.000000e+00> : vector<8x8xf32>
    %418 = tpu.matmul %415, %417, %cst_129 {dimension_numbers = #tpu.dot_dimension_numbers<[1], [0], [0], [1], [0, 0, 1, 1], [], []>} : vector<8x8xbf16>, vector<8x8xbf16>, vector<8x8xf32> -> vector<8x8xf32>
    %419 = vector.extract_strided_slice %376 {offsets = [0, 16], sizes = [8, 8], strides = [1, 1]} : vector<8x32xf32> to vector<8x8xf32>
    %420 = arith.truncf %419 : vector<8x8xf32> to vector<8x8xbf16>
    %421 = vector.extract_strided_slice %377 {offsets = [0, 16], sizes = [8, 8], strides = [1, 1]} : vector<8x32xf32> to vector<8x8xf32>
    %422 = tpu.transpose %421, [1, 0] : vector<8x8xf32> -> vector<8x8xf32>
    %423 = arith.truncf %422 : vector<8x8xf32> to vector<8x8xbf16>
    %cst_130 = arith.constant dense<0.000000e+00> : vector<8x8xf32>
    %424 = tpu.matmul %420, %423, %cst_130 {dimension_numbers = #tpu.dot_dimension_numbers<[1], [0], [0], [1], [0, 0, 1, 1], [], []>} : vector<8x8xbf16>, vector<8x8xbf16>, vector<8x8xf32> -> vector<8x8xf32>
    %cst_131 = arith.constant dense<0xFF800000> : vector<8xf32>
    %425 = vector.multi_reduction <maximumf>, %424, %cst_131 [1] : vector<8x8xf32> to vector<8xf32>
    %426 = vector.shape_cast %425 : vector<8xf32> to vector<8x1xf32>
    %427 = vector.broadcast %426 : vector<8x1xf32> to vector<8x8xf32>
    %428 = arith.subf %424, %427 : vector<8x8xf32>
    %429 = math.exp %428 : vector<8x8xf32>
    %cst_132 = arith.constant dense<0.000000e+00> : vector<8xf32>
    %430 = vector.multi_reduction <add>, %429, %cst_132 [1] : vector<8x8xf32> to vector<8xf32>
    %431 = vector.shape_cast %430 : vector<8xf32> to vector<8x1xf32>
    %432 = tpu.reciprocal %431 {approx = true} : vector<8x1xf32> -> vector<8x1xf32>
    %433 = vector.broadcast %432 : vector<8x1xf32> to vector<8x8xf32>
    %434 = arith.mulf %429, %433 : vector<8x8xf32>
    %435 = arith.truncf %434 : vector<8x8xf32> to vector<8x8xbf16>
    %436 = vector.extract_strided_slice %378 {offsets = [0, 16], sizes = [8, 8], strides = [1, 1]} : vector<8x32xf32> to vector<8x8xf32>
    %437 = arith.truncf %436 : vector<8x8xf32> to vector<8x8xbf16>
    %cst_133 = arith.constant dense<0.000000e+00> : vector<8x8xf32>
    %438 = tpu.matmul %435, %437, %cst_133 {dimension_numbers = #tpu.dot_dimension_numbers<[1], [0], [0], [1], [0, 0, 1, 1], [], []>} : vector<8x8xbf16>, vector<8x8xbf16>, vector<8x8xf32> -> vector<8x8xf32>
    %439 = vector.extract_strided_slice %376 {offsets = [0, 24], sizes = [8, 8], strides = [1, 1]} : vector<8x32xf32> to vector<8x8xf32>
    %440 = arith.truncf %439 : vector<8x8xf32> to vector<8x8xbf16>
    %441 = vector.extract_strided_slice %377 {offsets = [0, 24], sizes = [8, 8], strides = [1, 1]} : vector<8x32xf32> to vector<8x8xf32>
    %442 = tpu.transpose %441, [1, 0] : vector<8x8xf32> -> vector<8x8xf32>
    %443 = arith.truncf %442 : vector<8x8xf32> to vector<8x8xbf16>
    %cst_134 = arith.constant dense<0.000000e+00> : vector<8x8xf32>
    %444 = tpu.matmul %440, %443, %cst_134 {dimension_numbers = #tpu.dot_dimension_numbers<[1], [0], [0], [1], [0, 0, 1, 1], [], []>} : vector<8x8xbf16>, vector<8x8xbf16>, vector<8x8xf32> -> vector<8x8xf32>
    %cst_135 = arith.constant dense<0xFF800000> : vector<8xf32>
    %445 = vector.multi_reduction <maximumf>, %444, %cst_135 [1] : vector<8x8xf32> to vector<8xf32>
    %446 = vector.shape_cast %445 : vector<8xf32> to vector<8x1xf32>
    %447 = vector.broadcast %446 : vector<8x1xf32> to vector<8x8xf32>
    %448 = arith.subf %444, %447 : vector<8x8xf32>
    %449 = math.exp %448 : vector<8x8xf32>
    %cst_136 = arith.constant dense<0.000000e+00> : vector<8xf32>
    %450 = vector.multi_reduction <add>, %449, %cst_136 [1] : vector<8x8xf32> to vector<8xf32>
    %451 = vector.shape_cast %450 : vector<8xf32> to vector<8x1xf32>
    %452 = tpu.reciprocal %451 {approx = true} : vector<8x1xf32> -> vector<8x1xf32>
    %453 = vector.broadcast %452 : vector<8x1xf32> to vector<8x8xf32>
    %454 = arith.mulf %449, %453 : vector<8x8xf32>
    %455 = arith.truncf %454 : vector<8x8xf32> to vector<8x8xbf16>
    %456 = vector.extract_strided_slice %378 {offsets = [0, 24], sizes = [8, 8], strides = [1, 1]} : vector<8x32xf32> to vector<8x8xf32>
    %457 = arith.truncf %456 : vector<8x8xf32> to vector<8x8xbf16>
    %cst_137 = arith.constant dense<0.000000e+00> : vector<8x8xf32>
    %458 = tpu.matmul %455, %457, %cst_137 {dimension_numbers = #tpu.dot_dimension_numbers<[1], [0], [0], [1], [0, 0, 1, 1], [], []>} : vector<8x8xbf16>, vector<8x8xbf16>, vector<8x8xf32> -> vector<8x8xf32>
    %459 = tpu.concatenate %398, %418, %438, %458 in 1 : vector<8x8xf32>, vector<8x8xf32>, vector<8x8xf32>, vector<8x8xf32> -> vector<8x32xf32>
    %460 = tpu.concatenate %373, %459 in 0 : vector<8x32xf32>, vector<8x32xf32> -> vector<16x32xf32>
    %461 = arith.truncf %460 : vector<16x32xf32> to vector<16x32xbf16>
    %cst_138 = arith.constant dense<0.000000e+00> : vector<16x32xf32>
    %462 = tpu.matmul %461, %278, %cst_138 {dimension_numbers = #tpu.dot_dimension_numbers<[1], [0], [0], [1], [0, 0, 1, 1], [], []>} : vector<16x32xbf16>, vector<32x32xbf16>, vector<16x32xf32> -> vector<16x32xf32>
    %463 = vector.broadcast %280 : vector<1x32xf32> to vector<16x32xf32>
    %464 = arith.addf %462, %463 : vector<16x32xf32>
    %465 = arith.addf %272, %464 : vector<16x32xf32>
    %c1_139 = arith.constant 1 : index
    %c0_140 = arith.constant 0 : index
    %c0_141 = arith.constant 0 : index
    %466 = vector.load %arg8[%c1_139, %c0_140, %c0_141] : memref<2x1x32xf32, #tpu.memory_space<vmem>>, vector<1x1x32xf32>
    %467 = vector.shape_cast %466 : vector<1x1x32xf32> to vector<1x32xf32>
    %c1_142 = arith.constant 1 : index
    %c0_143 = arith.constant 0 : index
    %c0_144 = arith.constant 0 : index
    %468 = vector.load %arg9[%c1_142, %c0_143, %c0_144] : memref<2x1x32xf32, #tpu.memory_space<vmem>>, vector<1x1x32xf32>
    %469 = vector.shape_cast %468 : vector<1x1x32xf32> to vector<1x32xf32>
    %cst_145 = arith.constant dense<0.000000e+00> : vector<16xf32>
    %470 = vector.multi_reduction <add>, %465, %cst_145 [1] : vector<16x32xf32> to vector<16xf32>
    %471 = vector.shape_cast %470 : vector<16xf32> to vector<16x1xf32>
    %cst_146 = arith.constant 3.200000e+01 : f32
    %472 = vector.broadcast %cst_146 : f32 to vector<16x1xf32>
    %473 = arith.divf %471, %472 : vector<16x1xf32>
    %474 = vector.broadcast %473 : vector<16x1xf32> to vector<16x32xf32>
    %475 = arith.subf %465, %474 : vector<16x32xf32>
    %476 = arith.mulf %475, %475 : vector<16x32xf32>
    %cst_147 = arith.constant dense<0.000000e+00> : vector<16xf32>
    %477 = vector.multi_reduction <add>, %476, %cst_147 [1] : vector<16x32xf32> to vector<16xf32>
    %478 = vector.shape_cast %477 : vector<16xf32> to vector<16x1xf32>
    %cst_148 = arith.constant 3.200000e+01 : f32
    %479 = vector.broadcast %cst_148 : f32 to vector<16x1xf32>
    %480 = arith.divf %478, %479 : vector<16x1xf32>
    %481 = vector.broadcast %473 : vector<16x1xf32> to vector<16x32xf32>
    %482 = arith.subf %465, %481 : vector<16x32xf32>
    %cst_149 = arith.constant 9.99999974E-6 : f32
    %483 = vector.broadcast %cst_149 : f32 to vector<16x1xf32>
    %484 = arith.addf %480, %483 : vector<16x1xf32>
    %485 = math.rsqrt %484 : vector<16x1xf32>
    %486 = vector.broadcast %485 : vector<16x1xf32> to vector<16x32xf32>
    %487 = arith.mulf %482, %486 : vector<16x32xf32>
    %488 = vector.broadcast %467 : vector<1x32xf32> to vector<16x32xf32>
    %489 = arith.mulf %487, %488 : vector<16x32xf32>
    %490 = vector.broadcast %469 : vector<1x32xf32> to vector<16x32xf32>
    %491 = arith.addf %489, %490 : vector<16x32xf32>
    %c1_150 = arith.constant 1 : index
    %c0_151 = arith.constant 0 : index
    %c0_152 = arith.constant 0 : index
    %492 = vector.load %arg10[%c1_150, %c0_151, %c0_152] : memref<2x32x64xbf16, #tpu.memory_space<vmem>>, vector<1x32x64xbf16>
    %493 = vector.shape_cast %492 : vector<1x32x64xbf16> to vector<32x64xbf16>
    %c1_153 = arith.constant 1 : index
    %c0_154 = arith.constant 0 : index
    %c0_155 = arith.constant 0 : index
    %494 = vector.load %arg11[%c1_153, %c0_154, %c0_155] : memref<2x1x64xf32, #tpu.memory_space<vmem>>, vector<1x1x64xf32>
    %495 = vector.shape_cast %494 : vector<1x1x64xf32> to vector<1x64xf32>
    %c1_156 = arith.constant 1 : index
    %c0_157 = arith.constant 0 : index
    %c0_158 = arith.constant 0 : index
    %496 = vector.load %arg12[%c1_156, %c0_157, %c0_158] : memref<2x64x32xbf16, #tpu.memory_space<vmem>>, vector<1x64x32xbf16>
    %497 = vector.shape_cast %496 : vector<1x64x32xbf16> to vector<64x32xbf16>
    %c1_159 = arith.constant 1 : index
    %c0_160 = arith.constant 0 : index
    %c0_161 = arith.constant 0 : index
    %498 = vector.load %arg13[%c1_159, %c0_160, %c0_161] : memref<2x1x32xf32, #tpu.memory_space<vmem>>, vector<1x1x32xf32>
    %499 = vector.shape_cast %498 : vector<1x1x32xf32> to vector<1x32xf32>
    %500 = arith.truncf %491 : vector<16x32xf32> to vector<16x32xbf16>
    %cst_162 = arith.constant dense<0.000000e+00> : vector<16x64xf32>
    %501 = tpu.matmul %500, %493, %cst_162 {dimension_numbers = #tpu.dot_dimension_numbers<[1], [0], [0], [1], [0, 0, 1, 1], [], []>} : vector<16x32xbf16>, vector<32x64xbf16>, vector<16x64xf32> -> vector<16x64xf32>
    %502 = vector.broadcast %495 : vector<1x64xf32> to vector<16x64xf32>
    %503 = arith.addf %501, %502 : vector<16x64xf32>
    %cst_163 = arith.constant 0.000000e+00 : f32
    %504 = vector.broadcast %cst_163 : f32 to vector<16x64xf32>
    %505 = arith.maximumf %503, %504 : vector<16x64xf32>
    %506 = arith.truncf %505 : vector<16x64xf32> to vector<16x64xbf16>
    %cst_164 = arith.constant dense<0.000000e+00> : vector<16x32xf32>
    %507 = tpu.matmul %506, %497, %cst_164 {dimension_numbers = #tpu.dot_dimension_numbers<[1], [0], [0], [1], [0, 0, 1, 1], [], []>} : vector<16x64xbf16>, vector<64x32xbf16>, vector<16x32xf32> -> vector<16x32xf32>
    %508 = vector.broadcast %499 : vector<1x32xf32> to vector<16x32xf32>
    %509 = arith.addf %507, %508 : vector<16x32xf32>
    %510 = arith.addf %491, %509 : vector<16x32xf32>
    %c1_165 = arith.constant 1 : index
    %c0_166 = arith.constant 0 : index
    %c0_167 = arith.constant 0 : index
    %511 = vector.load %arg14[%c1_165, %c0_166, %c0_167] : memref<2x1x32xf32, #tpu.memory_space<vmem>>, vector<1x1x32xf32>
    %512 = vector.shape_cast %511 : vector<1x1x32xf32> to vector<1x32xf32>
    %c1_168 = arith.constant 1 : index
    %c0_169 = arith.constant 0 : index
    %c0_170 = arith.constant 0 : index
    %513 = vector.load %arg15[%c1_168, %c0_169, %c0_170] : memref<2x1x32xf32, #tpu.memory_space<vmem>>, vector<1x1x32xf32>
    %514 = vector.shape_cast %513 : vector<1x1x32xf32> to vector<1x32xf32>
    %cst_171 = arith.constant dense<0.000000e+00> : vector<16xf32>
    %515 = vector.multi_reduction <add>, %510, %cst_171 [1] : vector<16x32xf32> to vector<16xf32>
    %516 = vector.shape_cast %515 : vector<16xf32> to vector<16x1xf32>
    %cst_172 = arith.constant 3.200000e+01 : f32
    %517 = vector.broadcast %cst_172 : f32 to vector<16x1xf32>
    %518 = arith.divf %516, %517 : vector<16x1xf32>
    %519 = vector.broadcast %518 : vector<16x1xf32> to vector<16x32xf32>
    %520 = arith.subf %510, %519 : vector<16x32xf32>
    %521 = arith.mulf %520, %520 : vector<16x32xf32>
    %cst_173 = arith.constant dense<0.000000e+00> : vector<16xf32>
    %522 = vector.multi_reduction <add>, %521, %cst_173 [1] : vector<16x32xf32> to vector<16xf32>
    %523 = vector.shape_cast %522 : vector<16xf32> to vector<16x1xf32>
    %cst_174 = arith.constant 3.200000e+01 : f32
    %524 = vector.broadcast %cst_174 : f32 to vector<16x1xf32>
    %525 = arith.divf %523, %524 : vector<16x1xf32>
    %526 = vector.broadcast %518 : vector<16x1xf32> to vector<16x32xf32>
    %527 = arith.subf %510, %526 : vector<16x32xf32>
    %cst_175 = arith.constant 9.99999974E-6 : f32
    %528 = vector.broadcast %cst_175 : f32 to vector<16x1xf32>
    %529 = arith.addf %525, %528 : vector<16x1xf32>
    %530 = math.rsqrt %529 : vector<16x1xf32>
    %531 = vector.broadcast %530 : vector<16x1xf32> to vector<16x32xf32>
    %532 = arith.mulf %527, %531 : vector<16x32xf32>
    %533 = vector.broadcast %512 : vector<1x32xf32> to vector<16x32xf32>
    %534 = arith.mulf %532, %533 : vector<16x32xf32>
    %535 = vector.broadcast %514 : vector<1x32xf32> to vector<16x32xf32>
    %536 = arith.addf %534, %535 : vector<16x32xf32>
    %cst_176 = arith.constant 0.000000e+00 : f32
    %537 = vector.broadcast %cst_176 : f32 to vector<16x32xf32>
    %c0_177 = arith.constant 0 : index
    %c0_178 = arith.constant 0 : index
    %c0_179 = arith.constant 0 : index
    %538 = vector.load %arg16[%c0_177, %c0_178, %c0_179] : memref<2x32x96xbf16, #tpu.memory_space<vmem>>, vector<1x32x96xbf16>
    %539 = vector.shape_cast %538 : vector<1x32x96xbf16> to vector<32x96xbf16>
    %c0_180 = arith.constant 0 : index
    %c0_181 = arith.constant 0 : index
    %c0_182 = arith.constant 0 : index
    %540 = vector.load %arg17[%c0_180, %c0_181, %c0_182] : memref<2x1x96xf32, #tpu.memory_space<vmem>>, vector<1x1x96xf32>
    %541 = vector.shape_cast %540 : vector<1x1x96xf32> to vector<1x96xf32>
    %c0_183 = arith.constant 0 : index
    %c0_184 = arith.constant 0 : index
    %c0_185 = arith.constant 0 : index
    %542 = vector.load %arg18[%c0_183, %c0_184, %c0_185] : memref<2x32x32xbf16, #tpu.memory_space<vmem>>, vector<1x32x32xbf16>
    %543 = vector.shape_cast %542 : vector<1x32x32xbf16> to vector<32x32xbf16>
    %c0_186 = arith.constant 0 : index
    %c0_187 = arith.constant 0 : index
    %c0_188 = arith.constant 0 : index
    %544 = vector.load %arg19[%c0_186, %c0_187, %c0_188] : memref<2x1x32xf32, #tpu.memory_space<vmem>>, vector<1x1x32xf32>
    %545 = vector.shape_cast %544 : vector<1x1x32xf32> to vector<1x32xf32>
    %546 = arith.truncf %537 : vector<16x32xf32> to vector<16x32xbf16>
    %cst_189 = arith.constant dense<0.000000e+00> : vector<16x96xf32>
    %547 = tpu.matmul %546, %539, %cst_189 {dimension_numbers = #tpu.dot_dimension_numbers<[1], [0], [0], [1], [0, 0, 1, 1], [], []>} : vector<16x32xbf16>, vector<32x96xbf16>, vector<16x96xf32> -> vector<16x96xf32>
    %548 = vector.broadcast %541 : vector<1x96xf32> to vector<16x96xf32>
    %549 = arith.addf %547, %548 : vector<16x96xf32>
    %550 = vector.extract_strided_slice %549 {offsets = [0, 0], sizes = [16, 32], strides = [1, 1]} : vector<16x96xf32> to vector<16x32xf32>
    %551 = vector.extract_strided_slice %549 {offsets = [0, 32], sizes = [16, 32], strides = [1, 1]} : vector<16x96xf32> to vector<16x32xf32>
    %552 = vector.extract_strided_slice %549 {offsets = [0, 64], sizes = [16, 32], strides = [1, 1]} : vector<16x96xf32> to vector<16x32xf32>
    %553 = vector.extract_strided_slice %550 {offsets = [0, 0], sizes = [8, 32], strides = [1, 1]} : vector<16x32xf32> to vector<8x32xf32>
    %cst_190 = arith.constant 0.353553385 : f32
    %554 = vector.broadcast %cst_190 : f32 to vector<8x32xf32>
    %555 = arith.mulf %553, %554 : vector<8x32xf32>
    %556 = vector.extract_strided_slice %551 {offsets = [0, 0], sizes = [8, 32], strides = [1, 1]} : vector<16x32xf32> to vector<8x32xf32>
    %557 = vector.extract_strided_slice %552 {offsets = [0, 0], sizes = [8, 32], strides = [1, 1]} : vector<16x32xf32> to vector<8x32xf32>
    %558 = vector.extract_strided_slice %555 {offsets = [0, 0], sizes = [8, 8], strides = [1, 1]} : vector<8x32xf32> to vector<8x8xf32>
    %559 = arith.truncf %558 : vector<8x8xf32> to vector<8x8xbf16>
    %560 = vector.extract_strided_slice %556 {offsets = [0, 0], sizes = [8, 8], strides = [1, 1]} : vector<8x32xf32> to vector<8x8xf32>
    %561 = tpu.transpose %560, [1, 0] : vector<8x8xf32> -> vector<8x8xf32>
    %562 = arith.truncf %561 : vector<8x8xf32> to vector<8x8xbf16>
    %cst_191 = arith.constant dense<0.000000e+00> : vector<8x8xf32>
    %563 = tpu.matmul %559, %562, %cst_191 {dimension_numbers = #tpu.dot_dimension_numbers<[1], [0], [0], [1], [0, 0, 1, 1], [], []>} : vector<8x8xbf16>, vector<8x8xbf16>, vector<8x8xf32> -> vector<8x8xf32>
    %cst_192 = arith.constant dense<0xFF800000> : vector<8xf32>
    %564 = vector.multi_reduction <maximumf>, %563, %cst_192 [1] : vector<8x8xf32> to vector<8xf32>
    %565 = vector.shape_cast %564 : vector<8xf32> to vector<8x1xf32>
    %566 = vector.broadcast %565 : vector<8x1xf32> to vector<8x8xf32>
    %567 = arith.subf %563, %566 : vector<8x8xf32>
    %568 = math.exp %567 : vector<8x8xf32>
    %cst_193 = arith.constant dense<0.000000e+00> : vector<8xf32>
    %569 = vector.multi_reduction <add>, %568, %cst_193 [1] : vector<8x8xf32> to vector<8xf32>
    %570 = vector.shape_cast %569 : vector<8xf32> to vector<8x1xf32>
    %571 = tpu.reciprocal %570 {approx = true} : vector<8x1xf32> -> vector<8x1xf32>
    %572 = vector.broadcast %571 : vector<8x1xf32> to vector<8x8xf32>
    %573 = arith.mulf %568, %572 : vector<8x8xf32>
    %574 = arith.truncf %573 : vector<8x8xf32> to vector<8x8xbf16>
    %575 = vector.extract_strided_slice %557 {offsets = [0, 0], sizes = [8, 8], strides = [1, 1]} : vector<8x32xf32> to vector<8x8xf32>
    %576 = arith.truncf %575 : vector<8x8xf32> to vector<8x8xbf16>
    %cst_194 = arith.constant dense<0.000000e+00> : vector<8x8xf32>
    %577 = tpu.matmul %574, %576, %cst_194 {dimension_numbers = #tpu.dot_dimension_numbers<[1], [0], [0], [1], [0, 0, 1, 1], [], []>} : vector<8x8xbf16>, vector<8x8xbf16>, vector<8x8xf32> -> vector<8x8xf32>
    %578 = vector.extract_strided_slice %555 {offsets = [0, 8], sizes = [8, 8], strides = [1, 1]} : vector<8x32xf32> to vector<8x8xf32>
    %579 = arith.truncf %578 : vector<8x8xf32> to vector<8x8xbf16>
    %580 = vector.extract_strided_slice %556 {offsets = [0, 8], sizes = [8, 8], strides = [1, 1]} : vector<8x32xf32> to vector<8x8xf32>
    %581 = tpu.transpose %580, [1, 0] : vector<8x8xf32> -> vector<8x8xf32>
    %582 = arith.truncf %581 : vector<8x8xf32> to vector<8x8xbf16>
    %cst_195 = arith.constant dense<0.000000e+00> : vector<8x8xf32>
    %583 = tpu.matmul %579, %582, %cst_195 {dimension_numbers = #tpu.dot_dimension_numbers<[1], [0], [0], [1], [0, 0, 1, 1], [], []>} : vector<8x8xbf16>, vector<8x8xbf16>, vector<8x8xf32> -> vector<8x8xf32>
    %cst_196 = arith.constant dense<0xFF800000> : vector<8xf32>
    %584 = vector.multi_reduction <maximumf>, %583, %cst_196 [1] : vector<8x8xf32> to vector<8xf32>
    %585 = vector.shape_cast %584 : vector<8xf32> to vector<8x1xf32>
    %586 = vector.broadcast %585 : vector<8x1xf32> to vector<8x8xf32>
    %587 = arith.subf %583, %586 : vector<8x8xf32>
    %588 = math.exp %587 : vector<8x8xf32>
    %cst_197 = arith.constant dense<0.000000e+00> : vector<8xf32>
    %589 = vector.multi_reduction <add>, %588, %cst_197 [1] : vector<8x8xf32> to vector<8xf32>
    %590 = vector.shape_cast %589 : vector<8xf32> to vector<8x1xf32>
    %591 = tpu.reciprocal %590 {approx = true} : vector<8x1xf32> -> vector<8x1xf32>
    %592 = vector.broadcast %591 : vector<8x1xf32> to vector<8x8xf32>
    %593 = arith.mulf %588, %592 : vector<8x8xf32>
    %594 = arith.truncf %593 : vector<8x8xf32> to vector<8x8xbf16>
    %595 = vector.extract_strided_slice %557 {offsets = [0, 8], sizes = [8, 8], strides = [1, 1]} : vector<8x32xf32> to vector<8x8xf32>
    %596 = arith.truncf %595 : vector<8x8xf32> to vector<8x8xbf16>
    %cst_198 = arith.constant dense<0.000000e+00> : vector<8x8xf32>
    %597 = tpu.matmul %594, %596, %cst_198 {dimension_numbers = #tpu.dot_dimension_numbers<[1], [0], [0], [1], [0, 0, 1, 1], [], []>} : vector<8x8xbf16>, vector<8x8xbf16>, vector<8x8xf32> -> vector<8x8xf32>
    %598 = vector.extract_strided_slice %555 {offsets = [0, 16], sizes = [8, 8], strides = [1, 1]} : vector<8x32xf32> to vector<8x8xf32>
    %599 = arith.truncf %598 : vector<8x8xf32> to vector<8x8xbf16>
    %600 = vector.extract_strided_slice %556 {offsets = [0, 16], sizes = [8, 8], strides = [1, 1]} : vector<8x32xf32> to vector<8x8xf32>
    %601 = tpu.transpose %600, [1, 0] : vector<8x8xf32> -> vector<8x8xf32>
    %602 = arith.truncf %601 : vector<8x8xf32> to vector<8x8xbf16>
    %cst_199 = arith.constant dense<0.000000e+00> : vector<8x8xf32>
    %603 = tpu.matmul %599, %602, %cst_199 {dimension_numbers = #tpu.dot_dimension_numbers<[1], [0], [0], [1], [0, 0, 1, 1], [], []>} : vector<8x8xbf16>, vector<8x8xbf16>, vector<8x8xf32> -> vector<8x8xf32>
    %cst_200 = arith.constant dense<0xFF800000> : vector<8xf32>
    %604 = vector.multi_reduction <maximumf>, %603, %cst_200 [1] : vector<8x8xf32> to vector<8xf32>
    %605 = vector.shape_cast %604 : vector<8xf32> to vector<8x1xf32>
    %606 = vector.broadcast %605 : vector<8x1xf32> to vector<8x8xf32>
    %607 = arith.subf %603, %606 : vector<8x8xf32>
    %608 = math.exp %607 : vector<8x8xf32>
    %cst_201 = arith.constant dense<0.000000e+00> : vector<8xf32>
    %609 = vector.multi_reduction <add>, %608, %cst_201 [1] : vector<8x8xf32> to vector<8xf32>
    %610 = vector.shape_cast %609 : vector<8xf32> to vector<8x1xf32>
    %611 = tpu.reciprocal %610 {approx = true} : vector<8x1xf32> -> vector<8x1xf32>
    %612 = vector.broadcast %611 : vector<8x1xf32> to vector<8x8xf32>
    %613 = arith.mulf %608, %612 : vector<8x8xf32>
    %614 = arith.truncf %613 : vector<8x8xf32> to vector<8x8xbf16>
    %615 = vector.extract_strided_slice %557 {offsets = [0, 16], sizes = [8, 8], strides = [1, 1]} : vector<8x32xf32> to vector<8x8xf32>
    %616 = arith.truncf %615 : vector<8x8xf32> to vector<8x8xbf16>
    %cst_202 = arith.constant dense<0.000000e+00> : vector<8x8xf32>
    %617 = tpu.matmul %614, %616, %cst_202 {dimension_numbers = #tpu.dot_dimension_numbers<[1], [0], [0], [1], [0, 0, 1, 1], [], []>} : vector<8x8xbf16>, vector<8x8xbf16>, vector<8x8xf32> -> vector<8x8xf32>
    %618 = vector.extract_strided_slice %555 {offsets = [0, 24], sizes = [8, 8], strides = [1, 1]} : vector<8x32xf32> to vector<8x8xf32>
    %619 = arith.truncf %618 : vector<8x8xf32> to vector<8x8xbf16>
    %620 = vector.extract_strided_slice %556 {offsets = [0, 24], sizes = [8, 8], strides = [1, 1]} : vector<8x32xf32> to vector<8x8xf32>
    %621 = tpu.transpose %620, [1, 0] : vector<8x8xf32> -> vector<8x8xf32>
    %622 = arith.truncf %621 : vector<8x8xf32> to vector<8x8xbf16>
    %cst_203 = arith.constant dense<0.000000e+00> : vector<8x8xf32>
    %623 = tpu.matmul %619, %622, %cst_203 {dimension_numbers = #tpu.dot_dimension_numbers<[1], [0], [0], [1], [0, 0, 1, 1], [], []>} : vector<8x8xbf16>, vector<8x8xbf16>, vector<8x8xf32> -> vector<8x8xf32>
    %cst_204 = arith.constant dense<0xFF800000> : vector<8xf32>
    %624 = vector.multi_reduction <maximumf>, %623, %cst_204 [1] : vector<8x8xf32> to vector<8xf32>
    %625 = vector.shape_cast %624 : vector<8xf32> to vector<8x1xf32>
    %626 = vector.broadcast %625 : vector<8x1xf32> to vector<8x8xf32>
    %627 = arith.subf %623, %626 : vector<8x8xf32>
    %628 = math.exp %627 : vector<8x8xf32>
    %cst_205 = arith.constant dense<0.000000e+00> : vector<8xf32>
    %629 = vector.multi_reduction <add>, %628, %cst_205 [1] : vector<8x8xf32> to vector<8xf32>
    %630 = vector.shape_cast %629 : vector<8xf32> to vector<8x1xf32>
    %631 = tpu.reciprocal %630 {approx = true} : vector<8x1xf32> -> vector<8x1xf32>
    %632 = vector.broadcast %631 : vector<8x1xf32> to vector<8x8xf32>
    %633 = arith.mulf %628, %632 : vector<8x8xf32>
    %634 = arith.truncf %633 : vector<8x8xf32> to vector<8x8xbf16>
    %635 = vector.extract_strided_slice %557 {offsets = [0, 24], sizes = [8, 8], strides = [1, 1]} : vector<8x32xf32> to vector<8x8xf32>
    %636 = arith.truncf %635 : vector<8x8xf32> to vector<8x8xbf16>
    %cst_206 = arith.constant dense<0.000000e+00> : vector<8x8xf32>
    %637 = tpu.matmul %634, %636, %cst_206 {dimension_numbers = #tpu.dot_dimension_numbers<[1], [0], [0], [1], [0, 0, 1, 1], [], []>} : vector<8x8xbf16>, vector<8x8xbf16>, vector<8x8xf32> -> vector<8x8xf32>
    %638 = tpu.concatenate %577, %597, %617, %637 in 1 : vector<8x8xf32>, vector<8x8xf32>, vector<8x8xf32>, vector<8x8xf32> -> vector<8x32xf32>
    %639 = vector.extract_strided_slice %550 {offsets = [8, 0], sizes = [8, 32], strides = [1, 1]} : vector<16x32xf32> to vector<8x32xf32>
    %cst_207 = arith.constant 0.353553385 : f32
    %640 = vector.broadcast %cst_207 : f32 to vector<8x32xf32>
    %641 = arith.mulf %639, %640 : vector<8x32xf32>
    %642 = vector.extract_strided_slice %551 {offsets = [8, 0], sizes = [8, 32], strides = [1, 1]} : vector<16x32xf32> to vector<8x32xf32>
    %643 = vector.extract_strided_slice %552 {offsets = [8, 0], sizes = [8, 32], strides = [1, 1]} : vector<16x32xf32> to vector<8x32xf32>
    %644 = vector.extract_strided_slice %641 {offsets = [0, 0], sizes = [8, 8], strides = [1, 1]} : vector<8x32xf32> to vector<8x8xf32>
    %645 = arith.truncf %644 : vector<8x8xf32> to vector<8x8xbf16>
    %646 = vector.extract_strided_slice %642 {offsets = [0, 0], sizes = [8, 8], strides = [1, 1]} : vector<8x32xf32> to vector<8x8xf32>
    %647 = tpu.transpose %646, [1, 0] : vector<8x8xf32> -> vector<8x8xf32>
    %648 = arith.truncf %647 : vector<8x8xf32> to vector<8x8xbf16>
    %cst_208 = arith.constant dense<0.000000e+00> : vector<8x8xf32>
    %649 = tpu.matmul %645, %648, %cst_208 {dimension_numbers = #tpu.dot_dimension_numbers<[1], [0], [0], [1], [0, 0, 1, 1], [], []>} : vector<8x8xbf16>, vector<8x8xbf16>, vector<8x8xf32> -> vector<8x8xf32>
    %cst_209 = arith.constant dense<0xFF800000> : vector<8xf32>
    %650 = vector.multi_reduction <maximumf>, %649, %cst_209 [1] : vector<8x8xf32> to vector<8xf32>
    %651 = vector.shape_cast %650 : vector<8xf32> to vector<8x1xf32>
    %652 = vector.broadcast %651 : vector<8x1xf32> to vector<8x8xf32>
    %653 = arith.subf %649, %652 : vector<8x8xf32>
    %654 = math.exp %653 : vector<8x8xf32>
    %cst_210 = arith.constant dense<0.000000e+00> : vector<8xf32>
    %655 = vector.multi_reduction <add>, %654, %cst_210 [1] : vector<8x8xf32> to vector<8xf32>
    %656 = vector.shape_cast %655 : vector<8xf32> to vector<8x1xf32>
    %657 = tpu.reciprocal %656 {approx = true} : vector<8x1xf32> -> vector<8x1xf32>
    %658 = vector.broadcast %657 : vector<8x1xf32> to vector<8x8xf32>
    %659 = arith.mulf %654, %658 : vector<8x8xf32>
    %660 = arith.truncf %659 : vector<8x8xf32> to vector<8x8xbf16>
    %661 = vector.extract_strided_slice %643 {offsets = [0, 0], sizes = [8, 8], strides = [1, 1]} : vector<8x32xf32> to vector<8x8xf32>
    %662 = arith.truncf %661 : vector<8x8xf32> to vector<8x8xbf16>
    %cst_211 = arith.constant dense<0.000000e+00> : vector<8x8xf32>
    %663 = tpu.matmul %660, %662, %cst_211 {dimension_numbers = #tpu.dot_dimension_numbers<[1], [0], [0], [1], [0, 0, 1, 1], [], []>} : vector<8x8xbf16>, vector<8x8xbf16>, vector<8x8xf32> -> vector<8x8xf32>
    %664 = vector.extract_strided_slice %641 {offsets = [0, 8], sizes = [8, 8], strides = [1, 1]} : vector<8x32xf32> to vector<8x8xf32>
    %665 = arith.truncf %664 : vector<8x8xf32> to vector<8x8xbf16>
    %666 = vector.extract_strided_slice %642 {offsets = [0, 8], sizes = [8, 8], strides = [1, 1]} : vector<8x32xf32> to vector<8x8xf32>
    %667 = tpu.transpose %666, [1, 0] : vector<8x8xf32> -> vector<8x8xf32>
    %668 = arith.truncf %667 : vector<8x8xf32> to vector<8x8xbf16>
    %cst_212 = arith.constant dense<0.000000e+00> : vector<8x8xf32>
    %669 = tpu.matmul %665, %668, %cst_212 {dimension_numbers = #tpu.dot_dimension_numbers<[1], [0], [0], [1], [0, 0, 1, 1], [], []>} : vector<8x8xbf16>, vector<8x8xbf16>, vector<8x8xf32> -> vector<8x8xf32>
    %cst_213 = arith.constant dense<0xFF800000> : vector<8xf32>
    %670 = vector.multi_reduction <maximumf>, %669, %cst_213 [1] : vector<8x8xf32> to vector<8xf32>
    %671 = vector.shape_cast %670 : vector<8xf32> to vector<8x1xf32>
    %672 = vector.broadcast %671 : vector<8x1xf32> to vector<8x8xf32>
    %673 = arith.subf %669, %672 : vector<8x8xf32>
    %674 = math.exp %673 : vector<8x8xf32>
    %cst_214 = arith.constant dense<0.000000e+00> : vector<8xf32>
    %675 = vector.multi_reduction <add>, %674, %cst_214 [1] : vector<8x8xf32> to vector<8xf32>
    %676 = vector.shape_cast %675 : vector<8xf32> to vector<8x1xf32>
    %677 = tpu.reciprocal %676 {approx = true} : vector<8x1xf32> -> vector<8x1xf32>
    %678 = vector.broadcast %677 : vector<8x1xf32> to vector<8x8xf32>
    %679 = arith.mulf %674, %678 : vector<8x8xf32>
    %680 = arith.truncf %679 : vector<8x8xf32> to vector<8x8xbf16>
    %681 = vector.extract_strided_slice %643 {offsets = [0, 8], sizes = [8, 8], strides = [1, 1]} : vector<8x32xf32> to vector<8x8xf32>
    %682 = arith.truncf %681 : vector<8x8xf32> to vector<8x8xbf16>
    %cst_215 = arith.constant dense<0.000000e+00> : vector<8x8xf32>
    %683 = tpu.matmul %680, %682, %cst_215 {dimension_numbers = #tpu.dot_dimension_numbers<[1], [0], [0], [1], [0, 0, 1, 1], [], []>} : vector<8x8xbf16>, vector<8x8xbf16>, vector<8x8xf32> -> vector<8x8xf32>
    %684 = vector.extract_strided_slice %641 {offsets = [0, 16], sizes = [8, 8], strides = [1, 1]} : vector<8x32xf32> to vector<8x8xf32>
    %685 = arith.truncf %684 : vector<8x8xf32> to vector<8x8xbf16>
    %686 = vector.extract_strided_slice %642 {offsets = [0, 16], sizes = [8, 8], strides = [1, 1]} : vector<8x32xf32> to vector<8x8xf32>
    %687 = tpu.transpose %686, [1, 0] : vector<8x8xf32> -> vector<8x8xf32>
    %688 = arith.truncf %687 : vector<8x8xf32> to vector<8x8xbf16>
    %cst_216 = arith.constant dense<0.000000e+00> : vector<8x8xf32>
    %689 = tpu.matmul %685, %688, %cst_216 {dimension_numbers = #tpu.dot_dimension_numbers<[1], [0], [0], [1], [0, 0, 1, 1], [], []>} : vector<8x8xbf16>, vector<8x8xbf16>, vector<8x8xf32> -> vector<8x8xf32>
    %cst_217 = arith.constant dense<0xFF800000> : vector<8xf32>
    %690 = vector.multi_reduction <maximumf>, %689, %cst_217 [1] : vector<8x8xf32> to vector<8xf32>
    %691 = vector.shape_cast %690 : vector<8xf32> to vector<8x1xf32>
    %692 = vector.broadcast %691 : vector<8x1xf32> to vector<8x8xf32>
    %693 = arith.subf %689, %692 : vector<8x8xf32>
    %694 = math.exp %693 : vector<8x8xf32>
    %cst_218 = arith.constant dense<0.000000e+00> : vector<8xf32>
    %695 = vector.multi_reduction <add>, %694, %cst_218 [1] : vector<8x8xf32> to vector<8xf32>
    %696 = vector.shape_cast %695 : vector<8xf32> to vector<8x1xf32>
    %697 = tpu.reciprocal %696 {approx = true} : vector<8x1xf32> -> vector<8x1xf32>
    %698 = vector.broadcast %697 : vector<8x1xf32> to vector<8x8xf32>
    %699 = arith.mulf %694, %698 : vector<8x8xf32>
    %700 = arith.truncf %699 : vector<8x8xf32> to vector<8x8xbf16>
    %701 = vector.extract_strided_slice %643 {offsets = [0, 16], sizes = [8, 8], strides = [1, 1]} : vector<8x32xf32> to vector<8x8xf32>
    %702 = arith.truncf %701 : vector<8x8xf32> to vector<8x8xbf16>
    %cst_219 = arith.constant dense<0.000000e+00> : vector<8x8xf32>
    %703 = tpu.matmul %700, %702, %cst_219 {dimension_numbers = #tpu.dot_dimension_numbers<[1], [0], [0], [1], [0, 0, 1, 1], [], []>} : vector<8x8xbf16>, vector<8x8xbf16>, vector<8x8xf32> -> vector<8x8xf32>
    %704 = vector.extract_strided_slice %641 {offsets = [0, 24], sizes = [8, 8], strides = [1, 1]} : vector<8x32xf32> to vector<8x8xf32>
    %705 = arith.truncf %704 : vector<8x8xf32> to vector<8x8xbf16>
    %706 = vector.extract_strided_slice %642 {offsets = [0, 24], sizes = [8, 8], strides = [1, 1]} : vector<8x32xf32> to vector<8x8xf32>
    %707 = tpu.transpose %706, [1, 0] : vector<8x8xf32> -> vector<8x8xf32>
    %708 = arith.truncf %707 : vector<8x8xf32> to vector<8x8xbf16>
    %cst_220 = arith.constant dense<0.000000e+00> : vector<8x8xf32>
    %709 = tpu.matmul %705, %708, %cst_220 {dimension_numbers = #tpu.dot_dimension_numbers<[1], [0], [0], [1], [0, 0, 1, 1], [], []>} : vector<8x8xbf16>, vector<8x8xbf16>, vector<8x8xf32> -> vector<8x8xf32>
    %cst_221 = arith.constant dense<0xFF800000> : vector<8xf32>
    %710 = vector.multi_reduction <maximumf>, %709, %cst_221 [1] : vector<8x8xf32> to vector<8xf32>
    %711 = vector.shape_cast %710 : vector<8xf32> to vector<8x1xf32>
    %712 = vector.broadcast %711 : vector<8x1xf32> to vector<8x8xf32>
    %713 = arith.subf %709, %712 : vector<8x8xf32>
    %714 = math.exp %713 : vector<8x8xf32>
    %cst_222 = arith.constant dense<0.000000e+00> : vector<8xf32>
    %715 = vector.multi_reduction <add>, %714, %cst_222 [1] : vector<8x8xf32> to vector<8xf32>
    %716 = vector.shape_cast %715 : vector<8xf32> to vector<8x1xf32>
    %717 = tpu.reciprocal %716 {approx = true} : vector<8x1xf32> -> vector<8x1xf32>
    %718 = vector.broadcast %717 : vector<8x1xf32> to vector<8x8xf32>
    %719 = arith.mulf %714, %718 : vector<8x8xf32>
    %720 = arith.truncf %719 : vector<8x8xf32> to vector<8x8xbf16>
    %721 = vector.extract_strided_slice %643 {offsets = [0, 24], sizes = [8, 8], strides = [1, 1]} : vector<8x32xf32> to vector<8x8xf32>
    %722 = arith.truncf %721 : vector<8x8xf32> to vector<8x8xbf16>
    %cst_223 = arith.constant dense<0.000000e+00> : vector<8x8xf32>
    %723 = tpu.matmul %720, %722, %cst_223 {dimension_numbers = #tpu.dot_dimension_numbers<[1], [0], [0], [1], [0, 0, 1, 1], [], []>} : vector<8x8xbf16>, vector<8x8xbf16>, vector<8x8xf32> -> vector<8x8xf32>
    %724 = tpu.concatenate %663, %683, %703, %723 in 1 : vector<8x8xf32>, vector<8x8xf32>, vector<8x8xf32>, vector<8x8xf32> -> vector<8x32xf32>
    %725 = tpu.concatenate %638, %724 in 0 : vector<8x32xf32>, vector<8x32xf32> -> vector<16x32xf32>
    %726 = arith.truncf %725 : vector<16x32xf32> to vector<16x32xbf16>
    %cst_224 = arith.constant dense<0.000000e+00> : vector<16x32xf32>
    %727 = tpu.matmul %726, %543, %cst_224 {dimension_numbers = #tpu.dot_dimension_numbers<[1], [0], [0], [1], [0, 0, 1, 1], [], []>} : vector<16x32xbf16>, vector<32x32xbf16>, vector<16x32xf32> -> vector<16x32xf32>
    %728 = vector.broadcast %545 : vector<1x32xf32> to vector<16x32xf32>
    %729 = arith.addf %727, %728 : vector<16x32xf32>
    %730 = arith.addf %537, %729 : vector<16x32xf32>
    %c0_225 = arith.constant 0 : index
    %c0_226 = arith.constant 0 : index
    %c0_227 = arith.constant 0 : index
    %731 = vector.load %arg20[%c0_225, %c0_226, %c0_227] : memref<2x1x32xf32, #tpu.memory_space<vmem>>, vector<1x1x32xf32>
    %732 = vector.shape_cast %731 : vector<1x1x32xf32> to vector<1x32xf32>
    %c0_228 = arith.constant 0 : index
    %c0_229 = arith.constant 0 : index
    %c0_230 = arith.constant 0 : index
    %733 = vector.load %arg21[%c0_228, %c0_229, %c0_230] : memref<2x1x32xf32, #tpu.memory_space<vmem>>, vector<1x1x32xf32>
    %734 = vector.shape_cast %733 : vector<1x1x32xf32> to vector<1x32xf32>
    %cst_231 = arith.constant dense<0.000000e+00> : vector<16xf32>
    %735 = vector.multi_reduction <add>, %730, %cst_231 [1] : vector<16x32xf32> to vector<16xf32>
    %736 = vector.shape_cast %735 : vector<16xf32> to vector<16x1xf32>
    %cst_232 = arith.constant 3.200000e+01 : f32
    %737 = vector.broadcast %cst_232 : f32 to vector<16x1xf32>
    %738 = arith.divf %736, %737 : vector<16x1xf32>
    %739 = vector.broadcast %738 : vector<16x1xf32> to vector<16x32xf32>
    %740 = arith.subf %730, %739 : vector<16x32xf32>
    %741 = arith.mulf %740, %740 : vector<16x32xf32>
    %cst_233 = arith.constant dense<0.000000e+00> : vector<16xf32>
    %742 = vector.multi_reduction <add>, %741, %cst_233 [1] : vector<16x32xf32> to vector<16xf32>
    %743 = vector.shape_cast %742 : vector<16xf32> to vector<16x1xf32>
    %cst_234 = arith.constant 3.200000e+01 : f32
    %744 = vector.broadcast %cst_234 : f32 to vector<16x1xf32>
    %745 = arith.divf %743, %744 : vector<16x1xf32>
    %746 = vector.broadcast %738 : vector<16x1xf32> to vector<16x32xf32>
    %747 = arith.subf %730, %746 : vector<16x32xf32>
    %cst_235 = arith.constant 9.99999974E-6 : f32
    %748 = vector.broadcast %cst_235 : f32 to vector<16x1xf32>
    %749 = arith.addf %745, %748 : vector<16x1xf32>
    %750 = math.rsqrt %749 : vector<16x1xf32>
    %751 = vector.broadcast %750 : vector<16x1xf32> to vector<16x32xf32>
    %752 = arith.mulf %747, %751 : vector<16x32xf32>
    %753 = vector.broadcast %732 : vector<1x32xf32> to vector<16x32xf32>
    %754 = arith.mulf %752, %753 : vector<16x32xf32>
    %755 = vector.broadcast %734 : vector<1x32xf32> to vector<16x32xf32>
    %756 = arith.addf %754, %755 : vector<16x32xf32>
    %c0_236 = arith.constant 0 : index
    %c0_237 = arith.constant 0 : index
    %c0_238 = arith.constant 0 : index
    %757 = vector.load %arg22[%c0_236, %c0_237, %c0_238] : memref<2x32x32xbf16, #tpu.memory_space<vmem>>, vector<1x32x32xbf16>
    %758 = vector.shape_cast %757 : vector<1x32x32xbf16> to vector<32x32xbf16>
    %c0_239 = arith.constant 0 : index
    %c0_240 = arith.constant 0 : index
    %c0_241 = arith.constant 0 : index
    %759 = vector.load %arg23[%c0_239, %c0_240, %c0_241] : memref<2x1x32xf32, #tpu.memory_space<vmem>>, vector<1x1x32xf32>
    %760 = vector.shape_cast %759 : vector<1x1x32xf32> to vector<1x32xf32>
    %c0_242 = arith.constant 0 : index
    %c0_243 = arith.constant 0 : index
    %c0_244 = arith.constant 0 : index
    %761 = vector.load %arg24[%c0_242, %c0_243, %c0_244] : memref<2x32x64xbf16, #tpu.memory_space<vmem>>, vector<1x32x64xbf16>
    %762 = vector.shape_cast %761 : vector<1x32x64xbf16> to vector<32x64xbf16>
    %c0_245 = arith.constant 0 : index
    %c0_246 = arith.constant 0 : index
    %c0_247 = arith.constant 0 : index
    %763 = vector.load %arg25[%c0_245, %c0_246, %c0_247] : memref<2x1x64xf32, #tpu.memory_space<vmem>>, vector<1x1x64xf32>
    %764 = vector.shape_cast %763 : vector<1x1x64xf32> to vector<1x64xf32>
    %c0_248 = arith.constant 0 : index
    %c0_249 = arith.constant 0 : index
    %c0_250 = arith.constant 0 : index
    %765 = vector.load %arg26[%c0_248, %c0_249, %c0_250] : memref<2x32x32xbf16, #tpu.memory_space<vmem>>, vector<1x32x32xbf16>
    %766 = vector.shape_cast %765 : vector<1x32x32xbf16> to vector<32x32xbf16>
    %c0_251 = arith.constant 0 : index
    %c0_252 = arith.constant 0 : index
    %c0_253 = arith.constant 0 : index
    %767 = vector.load %arg27[%c0_251, %c0_252, %c0_253] : memref<2x1x32xf32, #tpu.memory_space<vmem>>, vector<1x1x32xf32>
    %768 = vector.shape_cast %767 : vector<1x1x32xf32> to vector<1x32xf32>
    %769 = arith.truncf %756 : vector<16x32xf32> to vector<16x32xbf16>
    %cst_254 = arith.constant dense<0.000000e+00> : vector<16x32xf32>
    %770 = tpu.matmul %769, %758, %cst_254 {dimension_numbers = #tpu.dot_dimension_numbers<[1], [0], [0], [1], [0, 0, 1, 1], [], []>} : vector<16x32xbf16>, vector<32x32xbf16>, vector<16x32xf32> -> vector<16x32xf32>
    %771 = vector.broadcast %760 : vector<1x32xf32> to vector<16x32xf32>
    %772 = arith.addf %770, %771 : vector<16x32xf32>
    %773 = arith.truncf %536 : vector<16x32xf32> to vector<16x32xbf16>
    %cst_255 = arith.constant dense<0.000000e+00> : vector<16x64xf32>
    %774 = tpu.matmul %773, %762, %cst_255 {dimension_numbers = #tpu.dot_dimension_numbers<[1], [0], [0], [1], [0, 0, 1, 1], [], []>} : vector<16x32xbf16>, vector<32x64xbf16>, vector<16x64xf32> -> vector<16x64xf32>
    %775 = vector.broadcast %764 : vector<1x64xf32> to vector<16x64xf32>
    %776 = arith.addf %774, %775 : vector<16x64xf32>
    %777 = vector.extract_strided_slice %776 {offsets = [0, 0], sizes = [16, 32], strides = [1, 1]} : vector<16x64xf32> to vector<16x32xf32>
    %778 = vector.extract_strided_slice %776 {offsets = [0, 32], sizes = [16, 32], strides = [1, 1]} : vector<16x64xf32> to vector<16x32xf32>
    %779 = vector.extract_strided_slice %772 {offsets = [0, 0], sizes = [8, 32], strides = [1, 1]} : vector<16x32xf32> to vector<8x32xf32>
    %cst_256 = arith.constant 0.353553385 : f32
    %780 = vector.broadcast %cst_256 : f32 to vector<8x32xf32>
    %781 = arith.mulf %779, %780 : vector<8x32xf32>
    %782 = vector.extract_strided_slice %777 {offsets = [0, 0], sizes = [8, 32], strides = [1, 1]} : vector<16x32xf32> to vector<8x32xf32>
    %783 = vector.extract_strided_slice %778 {offsets = [0, 0], sizes = [8, 32], strides = [1, 1]} : vector<16x32xf32> to vector<8x32xf32>
    %784 = vector.extract_strided_slice %781 {offsets = [0, 0], sizes = [8, 8], strides = [1, 1]} : vector<8x32xf32> to vector<8x8xf32>
    %785 = arith.truncf %784 : vector<8x8xf32> to vector<8x8xbf16>
    %786 = vector.extract_strided_slice %782 {offsets = [0, 0], sizes = [8, 8], strides = [1, 1]} : vector<8x32xf32> to vector<8x8xf32>
    %787 = tpu.transpose %786, [1, 0] : vector<8x8xf32> -> vector<8x8xf32>
    %788 = arith.truncf %787 : vector<8x8xf32> to vector<8x8xbf16>
    %cst_257 = arith.constant dense<0.000000e+00> : vector<8x8xf32>
    %789 = tpu.matmul %785, %788, %cst_257 {dimension_numbers = #tpu.dot_dimension_numbers<[1], [0], [0], [1], [0, 0, 1, 1], [], []>} : vector<8x8xbf16>, vector<8x8xbf16>, vector<8x8xf32> -> vector<8x8xf32>
    %cst_258 = arith.constant dense<0xFF800000> : vector<8xf32>
    %790 = vector.multi_reduction <maximumf>, %789, %cst_258 [1] : vector<8x8xf32> to vector<8xf32>
    %791 = vector.shape_cast %790 : vector<8xf32> to vector<8x1xf32>
    %792 = vector.broadcast %791 : vector<8x1xf32> to vector<8x8xf32>
    %793 = arith.subf %789, %792 : vector<8x8xf32>
    %794 = math.exp %793 : vector<8x8xf32>
    %cst_259 = arith.constant dense<0.000000e+00> : vector<8xf32>
    %795 = vector.multi_reduction <add>, %794, %cst_259 [1] : vector<8x8xf32> to vector<8xf32>
    %796 = vector.shape_cast %795 : vector<8xf32> to vector<8x1xf32>
    %797 = tpu.reciprocal %796 {approx = true} : vector<8x1xf32> -> vector<8x1xf32>
    %798 = vector.broadcast %797 : vector<8x1xf32> to vector<8x8xf32>
    %799 = arith.mulf %794, %798 : vector<8x8xf32>
    %800 = arith.truncf %799 : vector<8x8xf32> to vector<8x8xbf16>
    %801 = vector.extract_strided_slice %783 {offsets = [0, 0], sizes = [8, 8], strides = [1, 1]} : vector<8x32xf32> to vector<8x8xf32>
    %802 = arith.truncf %801 : vector<8x8xf32> to vector<8x8xbf16>
    %cst_260 = arith.constant dense<0.000000e+00> : vector<8x8xf32>
    %803 = tpu.matmul %800, %802, %cst_260 {dimension_numbers = #tpu.dot_dimension_numbers<[1], [0], [0], [1], [0, 0, 1, 1], [], []>} : vector<8x8xbf16>, vector<8x8xbf16>, vector<8x8xf32> -> vector<8x8xf32>
    %804 = vector.extract_strided_slice %781 {offsets = [0, 8], sizes = [8, 8], strides = [1, 1]} : vector<8x32xf32> to vector<8x8xf32>
    %805 = arith.truncf %804 : vector<8x8xf32> to vector<8x8xbf16>
    %806 = vector.extract_strided_slice %782 {offsets = [0, 8], sizes = [8, 8], strides = [1, 1]} : vector<8x32xf32> to vector<8x8xf32>
    %807 = tpu.transpose %806, [1, 0] : vector<8x8xf32> -> vector<8x8xf32>
    %808 = arith.truncf %807 : vector<8x8xf32> to vector<8x8xbf16>
    %cst_261 = arith.constant dense<0.000000e+00> : vector<8x8xf32>
    %809 = tpu.matmul %805, %808, %cst_261 {dimension_numbers = #tpu.dot_dimension_numbers<[1], [0], [0], [1], [0, 0, 1, 1], [], []>} : vector<8x8xbf16>, vector<8x8xbf16>, vector<8x8xf32> -> vector<8x8xf32>
    %cst_262 = arith.constant dense<0xFF800000> : vector<8xf32>
    %810 = vector.multi_reduction <maximumf>, %809, %cst_262 [1] : vector<8x8xf32> to vector<8xf32>
    %811 = vector.shape_cast %810 : vector<8xf32> to vector<8x1xf32>
    %812 = vector.broadcast %811 : vector<8x1xf32> to vector<8x8xf32>
    %813 = arith.subf %809, %812 : vector<8x8xf32>
    %814 = math.exp %813 : vector<8x8xf32>
    %cst_263 = arith.constant dense<0.000000e+00> : vector<8xf32>
    %815 = vector.multi_reduction <add>, %814, %cst_263 [1] : vector<8x8xf32> to vector<8xf32>
    %816 = vector.shape_cast %815 : vector<8xf32> to vector<8x1xf32>
    %817 = tpu.reciprocal %816 {approx = true} : vector<8x1xf32> -> vector<8x1xf32>
    %818 = vector.broadcast %817 : vector<8x1xf32> to vector<8x8xf32>
    %819 = arith.mulf %814, %818 : vector<8x8xf32>
    %820 = arith.truncf %819 : vector<8x8xf32> to vector<8x8xbf16>
    %821 = vector.extract_strided_slice %783 {offsets = [0, 8], sizes = [8, 8], strides = [1, 1]} : vector<8x32xf32> to vector<8x8xf32>
    %822 = arith.truncf %821 : vector<8x8xf32> to vector<8x8xbf16>
    %cst_264 = arith.constant dense<0.000000e+00> : vector<8x8xf32>
    %823 = tpu.matmul %820, %822, %cst_264 {dimension_numbers = #tpu.dot_dimension_numbers<[1], [0], [0], [1], [0, 0, 1, 1], [], []>} : vector<8x8xbf16>, vector<8x8xbf16>, vector<8x8xf32> -> vector<8x8xf32>
    %824 = vector.extract_strided_slice %781 {offsets = [0, 16], sizes = [8, 8], strides = [1, 1]} : vector<8x32xf32> to vector<8x8xf32>
    %825 = arith.truncf %824 : vector<8x8xf32> to vector<8x8xbf16>
    %826 = vector.extract_strided_slice %782 {offsets = [0, 16], sizes = [8, 8], strides = [1, 1]} : vector<8x32xf32> to vector<8x8xf32>
    %827 = tpu.transpose %826, [1, 0] : vector<8x8xf32> -> vector<8x8xf32>
    %828 = arith.truncf %827 : vector<8x8xf32> to vector<8x8xbf16>
    %cst_265 = arith.constant dense<0.000000e+00> : vector<8x8xf32>
    %829 = tpu.matmul %825, %828, %cst_265 {dimension_numbers = #tpu.dot_dimension_numbers<[1], [0], [0], [1], [0, 0, 1, 1], [], []>} : vector<8x8xbf16>, vector<8x8xbf16>, vector<8x8xf32> -> vector<8x8xf32>
    %cst_266 = arith.constant dense<0xFF800000> : vector<8xf32>
    %830 = vector.multi_reduction <maximumf>, %829, %cst_266 [1] : vector<8x8xf32> to vector<8xf32>
    %831 = vector.shape_cast %830 : vector<8xf32> to vector<8x1xf32>
    %832 = vector.broadcast %831 : vector<8x1xf32> to vector<8x8xf32>
    %833 = arith.subf %829, %832 : vector<8x8xf32>
    %834 = math.exp %833 : vector<8x8xf32>
    %cst_267 = arith.constant dense<0.000000e+00> : vector<8xf32>
    %835 = vector.multi_reduction <add>, %834, %cst_267 [1] : vector<8x8xf32> to vector<8xf32>
    %836 = vector.shape_cast %835 : vector<8xf32> to vector<8x1xf32>
    %837 = tpu.reciprocal %836 {approx = true} : vector<8x1xf32> -> vector<8x1xf32>
    %838 = vector.broadcast %837 : vector<8x1xf32> to vector<8x8xf32>
    %839 = arith.mulf %834, %838 : vector<8x8xf32>
    %840 = arith.truncf %839 : vector<8x8xf32> to vector<8x8xbf16>
    %841 = vector.extract_strided_slice %783 {offsets = [0, 16], sizes = [8, 8], strides = [1, 1]} : vector<8x32xf32> to vector<8x8xf32>
    %842 = arith.truncf %841 : vector<8x8xf32> to vector<8x8xbf16>
    %cst_268 = arith.constant dense<0.000000e+00> : vector<8x8xf32>
    %843 = tpu.matmul %840, %842, %cst_268 {dimension_numbers = #tpu.dot_dimension_numbers<[1], [0], [0], [1], [0, 0, 1, 1], [], []>} : vector<8x8xbf16>, vector<8x8xbf16>, vector<8x8xf32> -> vector<8x8xf32>
    %844 = vector.extract_strided_slice %781 {offsets = [0, 24], sizes = [8, 8], strides = [1, 1]} : vector<8x32xf32> to vector<8x8xf32>
    %845 = arith.truncf %844 : vector<8x8xf32> to vector<8x8xbf16>
    %846 = vector.extract_strided_slice %782 {offsets = [0, 24], sizes = [8, 8], strides = [1, 1]} : vector<8x32xf32> to vector<8x8xf32>
    %847 = tpu.transpose %846, [1, 0] : vector<8x8xf32> -> vector<8x8xf32>
    %848 = arith.truncf %847 : vector<8x8xf32> to vector<8x8xbf16>
    %cst_269 = arith.constant dense<0.000000e+00> : vector<8x8xf32>
    %849 = tpu.matmul %845, %848, %cst_269 {dimension_numbers = #tpu.dot_dimension_numbers<[1], [0], [0], [1], [0, 0, 1, 1], [], []>} : vector<8x8xbf16>, vector<8x8xbf16>, vector<8x8xf32> -> vector<8x8xf32>
    %cst_270 = arith.constant dense<0xFF800000> : vector<8xf32>
    %850 = vector.multi_reduction <maximumf>, %849, %cst_270 [1] : vector<8x8xf32> to vector<8xf32>
    %851 = vector.shape_cast %850 : vector<8xf32> to vector<8x1xf32>
    %852 = vector.broadcast %851 : vector<8x1xf32> to vector<8x8xf32>
    %853 = arith.subf %849, %852 : vector<8x8xf32>
    %854 = math.exp %853 : vector<8x8xf32>
    %cst_271 = arith.constant dense<0.000000e+00> : vector<8xf32>
    %855 = vector.multi_reduction <add>, %854, %cst_271 [1] : vector<8x8xf32> to vector<8xf32>
    %856 = vector.shape_cast %855 : vector<8xf32> to vector<8x1xf32>
    %857 = tpu.reciprocal %856 {approx = true} : vector<8x1xf32> -> vector<8x1xf32>
    %858 = vector.broadcast %857 : vector<8x1xf32> to vector<8x8xf32>
    %859 = arith.mulf %854, %858 : vector<8x8xf32>
    %860 = arith.truncf %859 : vector<8x8xf32> to vector<8x8xbf16>
    %861 = vector.extract_strided_slice %783 {offsets = [0, 24], sizes = [8, 8], strides = [1, 1]} : vector<8x32xf32> to vector<8x8xf32>
    %862 = arith.truncf %861 : vector<8x8xf32> to vector<8x8xbf16>
    %cst_272 = arith.constant dense<0.000000e+00> : vector<8x8xf32>
    %863 = tpu.matmul %860, %862, %cst_272 {dimension_numbers = #tpu.dot_dimension_numbers<[1], [0], [0], [1], [0, 0, 1, 1], [], []>} : vector<8x8xbf16>, vector<8x8xbf16>, vector<8x8xf32> -> vector<8x8xf32>
    %864 = tpu.concatenate %803, %823, %843, %863 in 1 : vector<8x8xf32>, vector<8x8xf32>, vector<8x8xf32>, vector<8x8xf32> -> vector<8x32xf32>
    %865 = vector.extract_strided_slice %772 {offsets = [8, 0], sizes = [8, 32], strides = [1, 1]} : vector<16x32xf32> to vector<8x32xf32>
    %cst_273 = arith.constant 0.353553385 : f32
    %866 = vector.broadcast %cst_273 : f32 to vector<8x32xf32>
    %867 = arith.mulf %865, %866 : vector<8x32xf32>
    %868 = vector.extract_strided_slice %777 {offsets = [8, 0], sizes = [8, 32], strides = [1, 1]} : vector<16x32xf32> to vector<8x32xf32>
    %869 = vector.extract_strided_slice %778 {offsets = [8, 0], sizes = [8, 32], strides = [1, 1]} : vector<16x32xf32> to vector<8x32xf32>
    %870 = vector.extract_strided_slice %867 {offsets = [0, 0], sizes = [8, 8], strides = [1, 1]} : vector<8x32xf32> to vector<8x8xf32>
    %871 = arith.truncf %870 : vector<8x8xf32> to vector<8x8xbf16>
    %872 = vector.extract_strided_slice %868 {offsets = [0, 0], sizes = [8, 8], strides = [1, 1]} : vector<8x32xf32> to vector<8x8xf32>
    %873 = tpu.transpose %872, [1, 0] : vector<8x8xf32> -> vector<8x8xf32>
    %874 = arith.truncf %873 : vector<8x8xf32> to vector<8x8xbf16>
    %cst_274 = arith.constant dense<0.000000e+00> : vector<8x8xf32>
    %875 = tpu.matmul %871, %874, %cst_274 {dimension_numbers = #tpu.dot_dimension_numbers<[1], [0], [0], [1], [0, 0, 1, 1], [], []>} : vector<8x8xbf16>, vector<8x8xbf16>, vector<8x8xf32> -> vector<8x8xf32>
    %cst_275 = arith.constant dense<0xFF800000> : vector<8xf32>
    %876 = vector.multi_reduction <maximumf>, %875, %cst_275 [1] : vector<8x8xf32> to vector<8xf32>
    %877 = vector.shape_cast %876 : vector<8xf32> to vector<8x1xf32>
    %878 = vector.broadcast %877 : vector<8x1xf32> to vector<8x8xf32>
    %879 = arith.subf %875, %878 : vector<8x8xf32>
    %880 = math.exp %879 : vector<8x8xf32>
    %cst_276 = arith.constant dense<0.000000e+00> : vector<8xf32>
    %881 = vector.multi_reduction <add>, %880, %cst_276 [1] : vector<8x8xf32> to vector<8xf32>
    %882 = vector.shape_cast %881 : vector<8xf32> to vector<8x1xf32>
    %883 = tpu.reciprocal %882 {approx = true} : vector<8x1xf32> -> vector<8x1xf32>
    %884 = vector.broadcast %883 : vector<8x1xf32> to vector<8x8xf32>
    %885 = arith.mulf %880, %884 : vector<8x8xf32>
    %886 = arith.truncf %885 : vector<8x8xf32> to vector<8x8xbf16>
    %887 = vector.extract_strided_slice %869 {offsets = [0, 0], sizes = [8, 8], strides = [1, 1]} : vector<8x32xf32> to vector<8x8xf32>
    %888 = arith.truncf %887 : vector<8x8xf32> to vector<8x8xbf16>
    %cst_277 = arith.constant dense<0.000000e+00> : vector<8x8xf32>
    %889 = tpu.matmul %886, %888, %cst_277 {dimension_numbers = #tpu.dot_dimension_numbers<[1], [0], [0], [1], [0, 0, 1, 1], [], []>} : vector<8x8xbf16>, vector<8x8xbf16>, vector<8x8xf32> -> vector<8x8xf32>
    %890 = vector.extract_strided_slice %867 {offsets = [0, 8], sizes = [8, 8], strides = [1, 1]} : vector<8x32xf32> to vector<8x8xf32>
    %891 = arith.truncf %890 : vector<8x8xf32> to vector<8x8xbf16>
    %892 = vector.extract_strided_slice %868 {offsets = [0, 8], sizes = [8, 8], strides = [1, 1]} : vector<8x32xf32> to vector<8x8xf32>
    %893 = tpu.transpose %892, [1, 0] : vector<8x8xf32> -> vector<8x8xf32>
    %894 = arith.truncf %893 : vector<8x8xf32> to vector<8x8xbf16>
    %cst_278 = arith.constant dense<0.000000e+00> : vector<8x8xf32>
    %895 = tpu.matmul %891, %894, %cst_278 {dimension_numbers = #tpu.dot_dimension_numbers<[1], [0], [0], [1], [0, 0, 1, 1], [], []>} : vector<8x8xbf16>, vector<8x8xbf16>, vector<8x8xf32> -> vector<8x8xf32>
    %cst_279 = arith.constant dense<0xFF800000> : vector<8xf32>
    %896 = vector.multi_reduction <maximumf>, %895, %cst_279 [1] : vector<8x8xf32> to vector<8xf32>
    %897 = vector.shape_cast %896 : vector<8xf32> to vector<8x1xf32>
    %898 = vector.broadcast %897 : vector<8x1xf32> to vector<8x8xf32>
    %899 = arith.subf %895, %898 : vector<8x8xf32>
    %900 = math.exp %899 : vector<8x8xf32>
    %cst_280 = arith.constant dense<0.000000e+00> : vector<8xf32>
    %901 = vector.multi_reduction <add>, %900, %cst_280 [1] : vector<8x8xf32> to vector<8xf32>
    %902 = vector.shape_cast %901 : vector<8xf32> to vector<8x1xf32>
    %903 = tpu.reciprocal %902 {approx = true} : vector<8x1xf32> -> vector<8x1xf32>
    %904 = vector.broadcast %903 : vector<8x1xf32> to vector<8x8xf32>
    %905 = arith.mulf %900, %904 : vector<8x8xf32>
    %906 = arith.truncf %905 : vector<8x8xf32> to vector<8x8xbf16>
    %907 = vector.extract_strided_slice %869 {offsets = [0, 8], sizes = [8, 8], strides = [1, 1]} : vector<8x32xf32> to vector<8x8xf32>
    %908 = arith.truncf %907 : vector<8x8xf32> to vector<8x8xbf16>
    %cst_281 = arith.constant dense<0.000000e+00> : vector<8x8xf32>
    %909 = tpu.matmul %906, %908, %cst_281 {dimension_numbers = #tpu.dot_dimension_numbers<[1], [0], [0], [1], [0, 0, 1, 1], [], []>} : vector<8x8xbf16>, vector<8x8xbf16>, vector<8x8xf32> -> vector<8x8xf32>
    %910 = vector.extract_strided_slice %867 {offsets = [0, 16], sizes = [8, 8], strides = [1, 1]} : vector<8x32xf32> to vector<8x8xf32>
    %911 = arith.truncf %910 : vector<8x8xf32> to vector<8x8xbf16>
    %912 = vector.extract_strided_slice %868 {offsets = [0, 16], sizes = [8, 8], strides = [1, 1]} : vector<8x32xf32> to vector<8x8xf32>
    %913 = tpu.transpose %912, [1, 0] : vector<8x8xf32> -> vector<8x8xf32>
    %914 = arith.truncf %913 : vector<8x8xf32> to vector<8x8xbf16>
    %cst_282 = arith.constant dense<0.000000e+00> : vector<8x8xf32>
    %915 = tpu.matmul %911, %914, %cst_282 {dimension_numbers = #tpu.dot_dimension_numbers<[1], [0], [0], [1], [0, 0, 1, 1], [], []>} : vector<8x8xbf16>, vector<8x8xbf16>, vector<8x8xf32> -> vector<8x8xf32>
    %cst_283 = arith.constant dense<0xFF800000> : vector<8xf32>
    %916 = vector.multi_reduction <maximumf>, %915, %cst_283 [1] : vector<8x8xf32> to vector<8xf32>
    %917 = vector.shape_cast %916 : vector<8xf32> to vector<8x1xf32>
    %918 = vector.broadcast %917 : vector<8x1xf32> to vector<8x8xf32>
    %919 = arith.subf %915, %918 : vector<8x8xf32>
    %920 = math.exp %919 : vector<8x8xf32>
    %cst_284 = arith.constant dense<0.000000e+00> : vector<8xf32>
    %921 = vector.multi_reduction <add>, %920, %cst_284 [1] : vector<8x8xf32> to vector<8xf32>
    %922 = vector.shape_cast %921 : vector<8xf32> to vector<8x1xf32>
    %923 = tpu.reciprocal %922 {approx = true} : vector<8x1xf32> -> vector<8x1xf32>
    %924 = vector.broadcast %923 : vector<8x1xf32> to vector<8x8xf32>
    %925 = arith.mulf %920, %924 : vector<8x8xf32>
    %926 = arith.truncf %925 : vector<8x8xf32> to vector<8x8xbf16>
    %927 = vector.extract_strided_slice %869 {offsets = [0, 16], sizes = [8, 8], strides = [1, 1]} : vector<8x32xf32> to vector<8x8xf32>
    %928 = arith.truncf %927 : vector<8x8xf32> to vector<8x8xbf16>
    %cst_285 = arith.constant dense<0.000000e+00> : vector<8x8xf32>
    %929 = tpu.matmul %926, %928, %cst_285 {dimension_numbers = #tpu.dot_dimension_numbers<[1], [0], [0], [1], [0, 0, 1, 1], [], []>} : vector<8x8xbf16>, vector<8x8xbf16>, vector<8x8xf32> -> vector<8x8xf32>
    %930 = vector.extract_strided_slice %867 {offsets = [0, 24], sizes = [8, 8], strides = [1, 1]} : vector<8x32xf32> to vector<8x8xf32>
    %931 = arith.truncf %930 : vector<8x8xf32> to vector<8x8xbf16>
    %932 = vector.extract_strided_slice %868 {offsets = [0, 24], sizes = [8, 8], strides = [1, 1]} : vector<8x32xf32> to vector<8x8xf32>
    %933 = tpu.transpose %932, [1, 0] : vector<8x8xf32> -> vector<8x8xf32>
    %934 = arith.truncf %933 : vector<8x8xf32> to vector<8x8xbf16>
    %cst_286 = arith.constant dense<0.000000e+00> : vector<8x8xf32>
    %935 = tpu.matmul %931, %934, %cst_286 {dimension_numbers = #tpu.dot_dimension_numbers<[1], [0], [0], [1], [0, 0, 1, 1], [], []>} : vector<8x8xbf16>, vector<8x8xbf16>, vector<8x8xf32> -> vector<8x8xf32>
    %cst_287 = arith.constant dense<0xFF800000> : vector<8xf32>
    %936 = vector.multi_reduction <maximumf>, %935, %cst_287 [1] : vector<8x8xf32> to vector<8xf32>
    %937 = vector.shape_cast %936 : vector<8xf32> to vector<8x1xf32>
    %938 = vector.broadcast %937 : vector<8x1xf32> to vector<8x8xf32>
    %939 = arith.subf %935, %938 : vector<8x8xf32>
    %940 = math.exp %939 : vector<8x8xf32>
    %cst_288 = arith.constant dense<0.000000e+00> : vector<8xf32>
    %941 = vector.multi_reduction <add>, %940, %cst_288 [1] : vector<8x8xf32> to vector<8xf32>
    %942 = vector.shape_cast %941 : vector<8xf32> to vector<8x1xf32>
    %943 = tpu.reciprocal %942 {approx = true} : vector<8x1xf32> -> vector<8x1xf32>
    %944 = vector.broadcast %943 : vector<8x1xf32> to vector<8x8xf32>
    %945 = arith.mulf %940, %944 : vector<8x8xf32>
    %946 = arith.truncf %945 : vector<8x8xf32> to vector<8x8xbf16>
    %947 = vector.extract_strided_slice %869 {offsets = [0, 24], sizes = [8, 8], strides = [1, 1]} : vector<8x32xf32> to vector<8x8xf32>
    %948 = arith.truncf %947 : vector<8x8xf32> to vector<8x8xbf16>
    %cst_289 = arith.constant dense<0.000000e+00> : vector<8x8xf32>
    %949 = tpu.matmul %946, %948, %cst_289 {dimension_numbers = #tpu.dot_dimension_numbers<[1], [0], [0], [1], [0, 0, 1, 1], [], []>} : vector<8x8xbf16>, vector<8x8xbf16>, vector<8x8xf32> -> vector<8x8xf32>
    %950 = tpu.concatenate %889, %909, %929, %949 in 1 : vector<8x8xf32>, vector<8x8xf32>, vector<8x8xf32>, vector<8x8xf32> -> vector<8x32xf32>
    %951 = tpu.concatenate %864, %950 in 0 : vector<8x32xf32>, vector<8x32xf32> -> vector<16x32xf32>
    %952 = arith.truncf %951 : vector<16x32xf32> to vector<16x32xbf16>
    %cst_290 = arith.constant dense<0.000000e+00> : vector<16x32xf32>
    %953 = tpu.matmul %952, %766, %cst_290 {dimension_numbers = #tpu.dot_dimension_numbers<[1], [0], [0], [1], [0, 0, 1, 1], [], []>} : vector<16x32xbf16>, vector<32x32xbf16>, vector<16x32xf32> -> vector<16x32xf32>
    %954 = vector.broadcast %768 : vector<1x32xf32> to vector<16x32xf32>
    %955 = arith.addf %953, %954 : vector<16x32xf32>
    %956 = arith.addf %756, %955 : vector<16x32xf32>
    %c0_291 = arith.constant 0 : index
    %c0_292 = arith.constant 0 : index
    %c0_293 = arith.constant 0 : index
    %957 = vector.load %arg28[%c0_291, %c0_292, %c0_293] : memref<2x1x32xf32, #tpu.memory_space<vmem>>, vector<1x1x32xf32>
    %958 = vector.shape_cast %957 : vector<1x1x32xf32> to vector<1x32xf32>
    %c0_294 = arith.constant 0 : index
    %c0_295 = arith.constant 0 : index
    %c0_296 = arith.constant 0 : index
    %959 = vector.load %arg29[%c0_294, %c0_295, %c0_296] : memref<2x1x32xf32, #tpu.memory_space<vmem>>, vector<1x1x32xf32>
    %960 = vector.shape_cast %959 : vector<1x1x32xf32> to vector<1x32xf32>
    %cst_297 = arith.constant dense<0.000000e+00> : vector<16xf32>
    %961 = vector.multi_reduction <add>, %956, %cst_297 [1] : vector<16x32xf32> to vector<16xf32>
    %962 = vector.shape_cast %961 : vector<16xf32> to vector<16x1xf32>
    %cst_298 = arith.constant 3.200000e+01 : f32
    %963 = vector.broadcast %cst_298 : f32 to vector<16x1xf32>
    %964 = arith.divf %962, %963 : vector<16x1xf32>
    %965 = vector.broadcast %964 : vector<16x1xf32> to vector<16x32xf32>
    %966 = arith.subf %956, %965 : vector<16x32xf32>
    %967 = arith.mulf %966, %966 : vector<16x32xf32>
    %cst_299 = arith.constant dense<0.000000e+00> : vector<16xf32>
    %968 = vector.multi_reduction <add>, %967, %cst_299 [1] : vector<16x32xf32> to vector<16xf32>
    %969 = vector.shape_cast %968 : vector<16xf32> to vector<16x1xf32>
    %cst_300 = arith.constant 3.200000e+01 : f32
    %970 = vector.broadcast %cst_300 : f32 to vector<16x1xf32>
    %971 = arith.divf %969, %970 : vector<16x1xf32>
    %972 = vector.broadcast %964 : vector<16x1xf32> to vector<16x32xf32>
    %973 = arith.subf %956, %972 : vector<16x32xf32>
    %cst_301 = arith.constant 9.99999974E-6 : f32
    %974 = vector.broadcast %cst_301 : f32 to vector<16x1xf32>
    %975 = arith.addf %971, %974 : vector<16x1xf32>
    %976 = math.rsqrt %975 : vector<16x1xf32>
    %977 = vector.broadcast %976 : vector<16x1xf32> to vector<16x32xf32>
    %978 = arith.mulf %973, %977 : vector<16x32xf32>
    %979 = vector.broadcast %958 : vector<1x32xf32> to vector<16x32xf32>
    %980 = arith.mulf %978, %979 : vector<16x32xf32>
    %981 = vector.broadcast %960 : vector<1x32xf32> to vector<16x32xf32>
    %982 = arith.addf %980, %981 : vector<16x32xf32>
    %c0_302 = arith.constant 0 : index
    %c0_303 = arith.constant 0 : index
    %c0_304 = arith.constant 0 : index
    %983 = vector.load %arg30[%c0_302, %c0_303, %c0_304] : memref<2x32x64xbf16, #tpu.memory_space<vmem>>, vector<1x32x64xbf16>
    %984 = vector.shape_cast %983 : vector<1x32x64xbf16> to vector<32x64xbf16>
    %c0_305 = arith.constant 0 : index
    %c0_306 = arith.constant 0 : index
    %c0_307 = arith.constant 0 : index
    %985 = vector.load %arg31[%c0_305, %c0_306, %c0_307] : memref<2x1x64xf32, #tpu.memory_space<vmem>>, vector<1x1x64xf32>
    %986 = vector.shape_cast %985 : vector<1x1x64xf32> to vector<1x64xf32>
    %c0_308 = arith.constant 0 : index
    %c0_309 = arith.constant 0 : index
    %c0_310 = arith.constant 0 : index
    %987 = vector.load %arg32[%c0_308, %c0_309, %c0_310] : memref<2x64x32xbf16, #tpu.memory_space<vmem>>, vector<1x64x32xbf16>
    %988 = vector.shape_cast %987 : vector<1x64x32xbf16> to vector<64x32xbf16>
    %c0_311 = arith.constant 0 : index
    %c0_312 = arith.constant 0 : index
    %c0_313 = arith.constant 0 : index
    %989 = vector.load %arg33[%c0_311, %c0_312, %c0_313] : memref<2x1x32xf32, #tpu.memory_space<vmem>>, vector<1x1x32xf32>
    %990 = vector.shape_cast %989 : vector<1x1x32xf32> to vector<1x32xf32>
    %991 = arith.truncf %982 : vector<16x32xf32> to vector<16x32xbf16>
    %cst_314 = arith.constant dense<0.000000e+00> : vector<16x64xf32>
    %992 = tpu.matmul %991, %984, %cst_314 {dimension_numbers = #tpu.dot_dimension_numbers<[1], [0], [0], [1], [0, 0, 1, 1], [], []>} : vector<16x32xbf16>, vector<32x64xbf16>, vector<16x64xf32> -> vector<16x64xf32>
    %993 = vector.broadcast %986 : vector<1x64xf32> to vector<16x64xf32>
    %994 = arith.addf %992, %993 : vector<16x64xf32>
    %cst_315 = arith.constant 0.000000e+00 : f32
    %995 = vector.broadcast %cst_315 : f32 to vector<16x64xf32>
    %996 = arith.maximumf %994, %995 : vector<16x64xf32>
    %997 = arith.truncf %996 : vector<16x64xf32> to vector<16x64xbf16>
    %cst_316 = arith.constant dense<0.000000e+00> : vector<16x32xf32>
    %998 = tpu.matmul %997, %988, %cst_316 {dimension_numbers = #tpu.dot_dimension_numbers<[1], [0], [0], [1], [0, 0, 1, 1], [], []>} : vector<16x64xbf16>, vector<64x32xbf16>, vector<16x32xf32> -> vector<16x32xf32>
    %999 = vector.broadcast %990 : vector<1x32xf32> to vector<16x32xf32>
    %1000 = arith.addf %998, %999 : vector<16x32xf32>
    %1001 = arith.addf %982, %1000 : vector<16x32xf32>
    %c0_317 = arith.constant 0 : index
    %c0_318 = arith.constant 0 : index
    %c0_319 = arith.constant 0 : index
    %1002 = vector.load %arg34[%c0_317, %c0_318, %c0_319] : memref<2x1x32xf32, #tpu.memory_space<vmem>>, vector<1x1x32xf32>
    %1003 = vector.shape_cast %1002 : vector<1x1x32xf32> to vector<1x32xf32>
    %c0_320 = arith.constant 0 : index
    %c0_321 = arith.constant 0 : index
    %c0_322 = arith.constant 0 : index
    %1004 = vector.load %arg35[%c0_320, %c0_321, %c0_322] : memref<2x1x32xf32, #tpu.memory_space<vmem>>, vector<1x1x32xf32>
    %1005 = vector.shape_cast %1004 : vector<1x1x32xf32> to vector<1x32xf32>
    %cst_323 = arith.constant dense<0.000000e+00> : vector<16xf32>
    %1006 = vector.multi_reduction <add>, %1001, %cst_323 [1] : vector<16x32xf32> to vector<16xf32>
    %1007 = vector.shape_cast %1006 : vector<16xf32> to vector<16x1xf32>
    %cst_324 = arith.constant 3.200000e+01 : f32
    %1008 = vector.broadcast %cst_324 : f32 to vector<16x1xf32>
    %1009 = arith.divf %1007, %1008 : vector<16x1xf32>
    %1010 = vector.broadcast %1009 : vector<16x1xf32> to vector<16x32xf32>
    %1011 = arith.subf %1001, %1010 : vector<16x32xf32>
    %1012 = arith.mulf %1011, %1011 : vector<16x32xf32>
    %cst_325 = arith.constant dense<0.000000e+00> : vector<16xf32>
    %1013 = vector.multi_reduction <add>, %1012, %cst_325 [1] : vector<16x32xf32> to vector<16xf32>
    %1014 = vector.shape_cast %1013 : vector<16xf32> to vector<16x1xf32>
    %cst_326 = arith.constant 3.200000e+01 : f32
    %1015 = vector.broadcast %cst_326 : f32 to vector<16x1xf32>
    %1016 = arith.divf %1014, %1015 : vector<16x1xf32>
    %1017 = vector.broadcast %1009 : vector<16x1xf32> to vector<16x32xf32>
    %1018 = arith.subf %1001, %1017 : vector<16x32xf32>
    %cst_327 = arith.constant 9.99999974E-6 : f32
    %1019 = vector.broadcast %cst_327 : f32 to vector<16x1xf32>
    %1020 = arith.addf %1016, %1019 : vector<16x1xf32>
    %1021 = math.rsqrt %1020 : vector<16x1xf32>
    %1022 = vector.broadcast %1021 : vector<16x1xf32> to vector<16x32xf32>
    %1023 = arith.mulf %1018, %1022 : vector<16x32xf32>
    %1024 = vector.broadcast %1003 : vector<1x32xf32> to vector<16x32xf32>
    %1025 = arith.mulf %1023, %1024 : vector<16x32xf32>
    %1026 = vector.broadcast %1005 : vector<1x32xf32> to vector<16x32xf32>
    %1027 = arith.addf %1025, %1026 : vector<16x32xf32>
    %c1_328 = arith.constant 1 : index
    %c0_329 = arith.constant 0 : index
    %c0_330 = arith.constant 0 : index
    %1028 = vector.load %arg16[%c1_328, %c0_329, %c0_330] : memref<2x32x96xbf16, #tpu.memory_space<vmem>>, vector<1x32x96xbf16>
    %1029 = vector.shape_cast %1028 : vector<1x32x96xbf16> to vector<32x96xbf16>
    %c1_331 = arith.constant 1 : index
    %c0_332 = arith.constant 0 : index
    %c0_333 = arith.constant 0 : index
    %1030 = vector.load %arg17[%c1_331, %c0_332, %c0_333] : memref<2x1x96xf32, #tpu.memory_space<vmem>>, vector<1x1x96xf32>
    %1031 = vector.shape_cast %1030 : vector<1x1x96xf32> to vector<1x96xf32>
    %c1_334 = arith.constant 1 : index
    %c0_335 = arith.constant 0 : index
    %c0_336 = arith.constant 0 : index
    %1032 = vector.load %arg18[%c1_334, %c0_335, %c0_336] : memref<2x32x32xbf16, #tpu.memory_space<vmem>>, vector<1x32x32xbf16>
    %1033 = vector.shape_cast %1032 : vector<1x32x32xbf16> to vector<32x32xbf16>
    %c1_337 = arith.constant 1 : index
    %c0_338 = arith.constant 0 : index
    %c0_339 = arith.constant 0 : index
    %1034 = vector.load %arg19[%c1_337, %c0_338, %c0_339] : memref<2x1x32xf32, #tpu.memory_space<vmem>>, vector<1x1x32xf32>
    %1035 = vector.shape_cast %1034 : vector<1x1x32xf32> to vector<1x32xf32>
    %1036 = arith.truncf %1027 : vector<16x32xf32> to vector<16x32xbf16>
    %cst_340 = arith.constant dense<0.000000e+00> : vector<16x96xf32>
    %1037 = tpu.matmul %1036, %1029, %cst_340 {dimension_numbers = #tpu.dot_dimension_numbers<[1], [0], [0], [1], [0, 0, 1, 1], [], []>} : vector<16x32xbf16>, vector<32x96xbf16>, vector<16x96xf32> -> vector<16x96xf32>
    %1038 = vector.broadcast %1031 : vector<1x96xf32> to vector<16x96xf32>
    %1039 = arith.addf %1037, %1038 : vector<16x96xf32>
    %1040 = vector.extract_strided_slice %1039 {offsets = [0, 0], sizes = [16, 32], strides = [1, 1]} : vector<16x96xf32> to vector<16x32xf32>
    %1041 = vector.extract_strided_slice %1039 {offsets = [0, 32], sizes = [16, 32], strides = [1, 1]} : vector<16x96xf32> to vector<16x32xf32>
    %1042 = vector.extract_strided_slice %1039 {offsets = [0, 64], sizes = [16, 32], strides = [1, 1]} : vector<16x96xf32> to vector<16x32xf32>
    %1043 = vector.extract_strided_slice %1040 {offsets = [0, 0], sizes = [8, 32], strides = [1, 1]} : vector<16x32xf32> to vector<8x32xf32>
    %cst_341 = arith.constant 0.353553385 : f32
    %1044 = vector.broadcast %cst_341 : f32 to vector<8x32xf32>
    %1045 = arith.mulf %1043, %1044 : vector<8x32xf32>
    %1046 = vector.extract_strided_slice %1041 {offsets = [0, 0], sizes = [8, 32], strides = [1, 1]} : vector<16x32xf32> to vector<8x32xf32>
    %1047 = vector.extract_strided_slice %1042 {offsets = [0, 0], sizes = [8, 32], strides = [1, 1]} : vector<16x32xf32> to vector<8x32xf32>
    %1048 = vector.extract_strided_slice %1045 {offsets = [0, 0], sizes = [8, 8], strides = [1, 1]} : vector<8x32xf32> to vector<8x8xf32>
    %1049 = arith.truncf %1048 : vector<8x8xf32> to vector<8x8xbf16>
    %1050 = vector.extract_strided_slice %1046 {offsets = [0, 0], sizes = [8, 8], strides = [1, 1]} : vector<8x32xf32> to vector<8x8xf32>
    %1051 = tpu.transpose %1050, [1, 0] : vector<8x8xf32> -> vector<8x8xf32>
    %1052 = arith.truncf %1051 : vector<8x8xf32> to vector<8x8xbf16>
    %cst_342 = arith.constant dense<0.000000e+00> : vector<8x8xf32>
    %1053 = tpu.matmul %1049, %1052, %cst_342 {dimension_numbers = #tpu.dot_dimension_numbers<[1], [0], [0], [1], [0, 0, 1, 1], [], []>} : vector<8x8xbf16>, vector<8x8xbf16>, vector<8x8xf32> -> vector<8x8xf32>
    %cst_343 = arith.constant dense<0xFF800000> : vector<8xf32>
    %1054 = vector.multi_reduction <maximumf>, %1053, %cst_343 [1] : vector<8x8xf32> to vector<8xf32>
    %1055 = vector.shape_cast %1054 : vector<8xf32> to vector<8x1xf32>
    %1056 = vector.broadcast %1055 : vector<8x1xf32> to vector<8x8xf32>
    %1057 = arith.subf %1053, %1056 : vector<8x8xf32>
    %1058 = math.exp %1057 : vector<8x8xf32>
    %cst_344 = arith.constant dense<0.000000e+00> : vector<8xf32>
    %1059 = vector.multi_reduction <add>, %1058, %cst_344 [1] : vector<8x8xf32> to vector<8xf32>
    %1060 = vector.shape_cast %1059 : vector<8xf32> to vector<8x1xf32>
    %1061 = tpu.reciprocal %1060 {approx = true} : vector<8x1xf32> -> vector<8x1xf32>
    %1062 = vector.broadcast %1061 : vector<8x1xf32> to vector<8x8xf32>
    %1063 = arith.mulf %1058, %1062 : vector<8x8xf32>
    %1064 = arith.truncf %1063 : vector<8x8xf32> to vector<8x8xbf16>
    %1065 = vector.extract_strided_slice %1047 {offsets = [0, 0], sizes = [8, 8], strides = [1, 1]} : vector<8x32xf32> to vector<8x8xf32>
    %1066 = arith.truncf %1065 : vector<8x8xf32> to vector<8x8xbf16>
    %cst_345 = arith.constant dense<0.000000e+00> : vector<8x8xf32>
    %1067 = tpu.matmul %1064, %1066, %cst_345 {dimension_numbers = #tpu.dot_dimension_numbers<[1], [0], [0], [1], [0, 0, 1, 1], [], []>} : vector<8x8xbf16>, vector<8x8xbf16>, vector<8x8xf32> -> vector<8x8xf32>
    %1068 = vector.extract_strided_slice %1045 {offsets = [0, 8], sizes = [8, 8], strides = [1, 1]} : vector<8x32xf32> to vector<8x8xf32>
    %1069 = arith.truncf %1068 : vector<8x8xf32> to vector<8x8xbf16>
    %1070 = vector.extract_strided_slice %1046 {offsets = [0, 8], sizes = [8, 8], strides = [1, 1]} : vector<8x32xf32> to vector<8x8xf32>
    %1071 = tpu.transpose %1070, [1, 0] : vector<8x8xf32> -> vector<8x8xf32>
    %1072 = arith.truncf %1071 : vector<8x8xf32> to vector<8x8xbf16>
    %cst_346 = arith.constant dense<0.000000e+00> : vector<8x8xf32>
    %1073 = tpu.matmul %1069, %1072, %cst_346 {dimension_numbers = #tpu.dot_dimension_numbers<[1], [0], [0], [1], [0, 0, 1, 1], [], []>} : vector<8x8xbf16>, vector<8x8xbf16>, vector<8x8xf32> -> vector<8x8xf32>
    %cst_347 = arith.constant dense<0xFF800000> : vector<8xf32>
    %1074 = vector.multi_reduction <maximumf>, %1073, %cst_347 [1] : vector<8x8xf32> to vector<8xf32>
    %1075 = vector.shape_cast %1074 : vector<8xf32> to vector<8x1xf32>
    %1076 = vector.broadcast %1075 : vector<8x1xf32> to vector<8x8xf32>
    %1077 = arith.subf %1073, %1076 : vector<8x8xf32>
    %1078 = math.exp %1077 : vector<8x8xf32>
    %cst_348 = arith.constant dense<0.000000e+00> : vector<8xf32>
    %1079 = vector.multi_reduction <add>, %1078, %cst_348 [1] : vector<8x8xf32> to vector<8xf32>
    %1080 = vector.shape_cast %1079 : vector<8xf32> to vector<8x1xf32>
    %1081 = tpu.reciprocal %1080 {approx = true} : vector<8x1xf32> -> vector<8x1xf32>
    %1082 = vector.broadcast %1081 : vector<8x1xf32> to vector<8x8xf32>
    %1083 = arith.mulf %1078, %1082 : vector<8x8xf32>
    %1084 = arith.truncf %1083 : vector<8x8xf32> to vector<8x8xbf16>
    %1085 = vector.extract_strided_slice %1047 {offsets = [0, 8], sizes = [8, 8], strides = [1, 1]} : vector<8x32xf32> to vector<8x8xf32>
    %1086 = arith.truncf %1085 : vector<8x8xf32> to vector<8x8xbf16>
    %cst_349 = arith.constant dense<0.000000e+00> : vector<8x8xf32>
    %1087 = tpu.matmul %1084, %1086, %cst_349 {dimension_numbers = #tpu.dot_dimension_numbers<[1], [0], [0], [1], [0, 0, 1, 1], [], []>} : vector<8x8xbf16>, vector<8x8xbf16>, vector<8x8xf32> -> vector<8x8xf32>
    %1088 = vector.extract_strided_slice %1045 {offsets = [0, 16], sizes = [8, 8], strides = [1, 1]} : vector<8x32xf32> to vector<8x8xf32>
    %1089 = arith.truncf %1088 : vector<8x8xf32> to vector<8x8xbf16>
    %1090 = vector.extract_strided_slice %1046 {offsets = [0, 16], sizes = [8, 8], strides = [1, 1]} : vector<8x32xf32> to vector<8x8xf32>
    %1091 = tpu.transpose %1090, [1, 0] : vector<8x8xf32> -> vector<8x8xf32>
    %1092 = arith.truncf %1091 : vector<8x8xf32> to vector<8x8xbf16>
    %cst_350 = arith.constant dense<0.000000e+00> : vector<8x8xf32>
    %1093 = tpu.matmul %1089, %1092, %cst_350 {dimension_numbers = #tpu.dot_dimension_numbers<[1], [0], [0], [1], [0, 0, 1, 1], [], []>} : vector<8x8xbf16>, vector<8x8xbf16>, vector<8x8xf32> -> vector<8x8xf32>
    %cst_351 = arith.constant dense<0xFF800000> : vector<8xf32>
    %1094 = vector.multi_reduction <maximumf>, %1093, %cst_351 [1] : vector<8x8xf32> to vector<8xf32>
    %1095 = vector.shape_cast %1094 : vector<8xf32> to vector<8x1xf32>
    %1096 = vector.broadcast %1095 : vector<8x1xf32> to vector<8x8xf32>
    %1097 = arith.subf %1093, %1096 : vector<8x8xf32>
    %1098 = math.exp %1097 : vector<8x8xf32>
    %cst_352 = arith.constant dense<0.000000e+00> : vector<8xf32>
    %1099 = vector.multi_reduction <add>, %1098, %cst_352 [1] : vector<8x8xf32> to vector<8xf32>
    %1100 = vector.shape_cast %1099 : vector<8xf32> to vector<8x1xf32>
    %1101 = tpu.reciprocal %1100 {approx = true} : vector<8x1xf32> -> vector<8x1xf32>
    %1102 = vector.broadcast %1101 : vector<8x1xf32> to vector<8x8xf32>
    %1103 = arith.mulf %1098, %1102 : vector<8x8xf32>
    %1104 = arith.truncf %1103 : vector<8x8xf32> to vector<8x8xbf16>
    %1105 = vector.extract_strided_slice %1047 {offsets = [0, 16], sizes = [8, 8], strides = [1, 1]} : vector<8x32xf32> to vector<8x8xf32>
    %1106 = arith.truncf %1105 : vector<8x8xf32> to vector<8x8xbf16>
    %cst_353 = arith.constant dense<0.000000e+00> : vector<8x8xf32>
    %1107 = tpu.matmul %1104, %1106, %cst_353 {dimension_numbers = #tpu.dot_dimension_numbers<[1], [0], [0], [1], [0, 0, 1, 1], [], []>} : vector<8x8xbf16>, vector<8x8xbf16>, vector<8x8xf32> -> vector<8x8xf32>
    %1108 = vector.extract_strided_slice %1045 {offsets = [0, 24], sizes = [8, 8], strides = [1, 1]} : vector<8x32xf32> to vector<8x8xf32>
    %1109 = arith.truncf %1108 : vector<8x8xf32> to vector<8x8xbf16>
    %1110 = vector.extract_strided_slice %1046 {offsets = [0, 24], sizes = [8, 8], strides = [1, 1]} : vector<8x32xf32> to vector<8x8xf32>
    %1111 = tpu.transpose %1110, [1, 0] : vector<8x8xf32> -> vector<8x8xf32>
    %1112 = arith.truncf %1111 : vector<8x8xf32> to vector<8x8xbf16>
    %cst_354 = arith.constant dense<0.000000e+00> : vector<8x8xf32>
    %1113 = tpu.matmul %1109, %1112, %cst_354 {dimension_numbers = #tpu.dot_dimension_numbers<[1], [0], [0], [1], [0, 0, 1, 1], [], []>} : vector<8x8xbf16>, vector<8x8xbf16>, vector<8x8xf32> -> vector<8x8xf32>
    %cst_355 = arith.constant dense<0xFF800000> : vector<8xf32>
    %1114 = vector.multi_reduction <maximumf>, %1113, %cst_355 [1] : vector<8x8xf32> to vector<8xf32>
    %1115 = vector.shape_cast %1114 : vector<8xf32> to vector<8x1xf32>
    %1116 = vector.broadcast %1115 : vector<8x1xf32> to vector<8x8xf32>
    %1117 = arith.subf %1113, %1116 : vector<8x8xf32>
    %1118 = math.exp %1117 : vector<8x8xf32>
    %cst_356 = arith.constant dense<0.000000e+00> : vector<8xf32>
    %1119 = vector.multi_reduction <add>, %1118, %cst_356 [1] : vector<8x8xf32> to vector<8xf32>
    %1120 = vector.shape_cast %1119 : vector<8xf32> to vector<8x1xf32>
    %1121 = tpu.reciprocal %1120 {approx = true} : vector<8x1xf32> -> vector<8x1xf32>
    %1122 = vector.broadcast %1121 : vector<8x1xf32> to vector<8x8xf32>
    %1123 = arith.mulf %1118, %1122 : vector<8x8xf32>
    %1124 = arith.truncf %1123 : vector<8x8xf32> to vector<8x8xbf16>
    %1125 = vector.extract_strided_slice %1047 {offsets = [0, 24], sizes = [8, 8], strides = [1, 1]} : vector<8x32xf32> to vector<8x8xf32>
    %1126 = arith.truncf %1125 : vector<8x8xf32> to vector<8x8xbf16>
    %cst_357 = arith.constant dense<0.000000e+00> : vector<8x8xf32>
    %1127 = tpu.matmul %1124, %1126, %cst_357 {dimension_numbers = #tpu.dot_dimension_numbers<[1], [0], [0], [1], [0, 0, 1, 1], [], []>} : vector<8x8xbf16>, vector<8x8xbf16>, vector<8x8xf32> -> vector<8x8xf32>
    %1128 = tpu.concatenate %1067, %1087, %1107, %1127 in 1 : vector<8x8xf32>, vector<8x8xf32>, vector<8x8xf32>, vector<8x8xf32> -> vector<8x32xf32>
    %1129 = vector.extract_strided_slice %1040 {offsets = [8, 0], sizes = [8, 32], strides = [1, 1]} : vector<16x32xf32> to vector<8x32xf32>
    %cst_358 = arith.constant 0.353553385 : f32
    %1130 = vector.broadcast %cst_358 : f32 to vector<8x32xf32>
    %1131 = arith.mulf %1129, %1130 : vector<8x32xf32>
    %1132 = vector.extract_strided_slice %1041 {offsets = [8, 0], sizes = [8, 32], strides = [1, 1]} : vector<16x32xf32> to vector<8x32xf32>
    %1133 = vector.extract_strided_slice %1042 {offsets = [8, 0], sizes = [8, 32], strides = [1, 1]} : vector<16x32xf32> to vector<8x32xf32>
    %1134 = vector.extract_strided_slice %1131 {offsets = [0, 0], sizes = [8, 8], strides = [1, 1]} : vector<8x32xf32> to vector<8x8xf32>
    %1135 = arith.truncf %1134 : vector<8x8xf32> to vector<8x8xbf16>
    %1136 = vector.extract_strided_slice %1132 {offsets = [0, 0], sizes = [8, 8], strides = [1, 1]} : vector<8x32xf32> to vector<8x8xf32>
    %1137 = tpu.transpose %1136, [1, 0] : vector<8x8xf32> -> vector<8x8xf32>
    %1138 = arith.truncf %1137 : vector<8x8xf32> to vector<8x8xbf16>
    %cst_359 = arith.constant dense<0.000000e+00> : vector<8x8xf32>
    %1139 = tpu.matmul %1135, %1138, %cst_359 {dimension_numbers = #tpu.dot_dimension_numbers<[1], [0], [0], [1], [0, 0, 1, 1], [], []>} : vector<8x8xbf16>, vector<8x8xbf16>, vector<8x8xf32> -> vector<8x8xf32>
    %cst_360 = arith.constant dense<0xFF800000> : vector<8xf32>
    %1140 = vector.multi_reduction <maximumf>, %1139, %cst_360 [1] : vector<8x8xf32> to vector<8xf32>
    %1141 = vector.shape_cast %1140 : vector<8xf32> to vector<8x1xf32>
    %1142 = vector.broadcast %1141 : vector<8x1xf32> to vector<8x8xf32>
    %1143 = arith.subf %1139, %1142 : vector<8x8xf32>
    %1144 = math.exp %1143 : vector<8x8xf32>
    %cst_361 = arith.constant dense<0.000000e+00> : vector<8xf32>
    %1145 = vector.multi_reduction <add>, %1144, %cst_361 [1] : vector<8x8xf32> to vector<8xf32>
    %1146 = vector.shape_cast %1145 : vector<8xf32> to vector<8x1xf32>
    %1147 = tpu.reciprocal %1146 {approx = true} : vector<8x1xf32> -> vector<8x1xf32>
    %1148 = vector.broadcast %1147 : vector<8x1xf32> to vector<8x8xf32>
    %1149 = arith.mulf %1144, %1148 : vector<8x8xf32>
    %1150 = arith.truncf %1149 : vector<8x8xf32> to vector<8x8xbf16>
    %1151 = vector.extract_strided_slice %1133 {offsets = [0, 0], sizes = [8, 8], strides = [1, 1]} : vector<8x32xf32> to vector<8x8xf32>
    %1152 = arith.truncf %1151 : vector<8x8xf32> to vector<8x8xbf16>
    %cst_362 = arith.constant dense<0.000000e+00> : vector<8x8xf32>
    %1153 = tpu.matmul %1150, %1152, %cst_362 {dimension_numbers = #tpu.dot_dimension_numbers<[1], [0], [0], [1], [0, 0, 1, 1], [], []>} : vector<8x8xbf16>, vector<8x8xbf16>, vector<8x8xf32> -> vector<8x8xf32>
    %1154 = vector.extract_strided_slice %1131 {offsets = [0, 8], sizes = [8, 8], strides = [1, 1]} : vector<8x32xf32> to vector<8x8xf32>
    %1155 = arith.truncf %1154 : vector<8x8xf32> to vector<8x8xbf16>
    %1156 = vector.extract_strided_slice %1132 {offsets = [0, 8], sizes = [8, 8], strides = [1, 1]} : vector<8x32xf32> to vector<8x8xf32>
    %1157 = tpu.transpose %1156, [1, 0] : vector<8x8xf32> -> vector<8x8xf32>
    %1158 = arith.truncf %1157 : vector<8x8xf32> to vector<8x8xbf16>
    %cst_363 = arith.constant dense<0.000000e+00> : vector<8x8xf32>
    %1159 = tpu.matmul %1155, %1158, %cst_363 {dimension_numbers = #tpu.dot_dimension_numbers<[1], [0], [0], [1], [0, 0, 1, 1], [], []>} : vector<8x8xbf16>, vector<8x8xbf16>, vector<8x8xf32> -> vector<8x8xf32>
    %cst_364 = arith.constant dense<0xFF800000> : vector<8xf32>
    %1160 = vector.multi_reduction <maximumf>, %1159, %cst_364 [1] : vector<8x8xf32> to vector<8xf32>
    %1161 = vector.shape_cast %1160 : vector<8xf32> to vector<8x1xf32>
    %1162 = vector.broadcast %1161 : vector<8x1xf32> to vector<8x8xf32>
    %1163 = arith.subf %1159, %1162 : vector<8x8xf32>
    %1164 = math.exp %1163 : vector<8x8xf32>
    %cst_365 = arith.constant dense<0.000000e+00> : vector<8xf32>
    %1165 = vector.multi_reduction <add>, %1164, %cst_365 [1] : vector<8x8xf32> to vector<8xf32>
    %1166 = vector.shape_cast %1165 : vector<8xf32> to vector<8x1xf32>
    %1167 = tpu.reciprocal %1166 {approx = true} : vector<8x1xf32> -> vector<8x1xf32>
    %1168 = vector.broadcast %1167 : vector<8x1xf32> to vector<8x8xf32>
    %1169 = arith.mulf %1164, %1168 : vector<8x8xf32>
    %1170 = arith.truncf %1169 : vector<8x8xf32> to vector<8x8xbf16>
    %1171 = vector.extract_strided_slice %1133 {offsets = [0, 8], sizes = [8, 8], strides = [1, 1]} : vector<8x32xf32> to vector<8x8xf32>
    %1172 = arith.truncf %1171 : vector<8x8xf32> to vector<8x8xbf16>
    %cst_366 = arith.constant dense<0.000000e+00> : vector<8x8xf32>
    %1173 = tpu.matmul %1170, %1172, %cst_366 {dimension_numbers = #tpu.dot_dimension_numbers<[1], [0], [0], [1], [0, 0, 1, 1], [], []>} : vector<8x8xbf16>, vector<8x8xbf16>, vector<8x8xf32> -> vector<8x8xf32>
    %1174 = vector.extract_strided_slice %1131 {offsets = [0, 16], sizes = [8, 8], strides = [1, 1]} : vector<8x32xf32> to vector<8x8xf32>
    %1175 = arith.truncf %1174 : vector<8x8xf32> to vector<8x8xbf16>
    %1176 = vector.extract_strided_slice %1132 {offsets = [0, 16], sizes = [8, 8], strides = [1, 1]} : vector<8x32xf32> to vector<8x8xf32>
    %1177 = tpu.transpose %1176, [1, 0] : vector<8x8xf32> -> vector<8x8xf32>
    %1178 = arith.truncf %1177 : vector<8x8xf32> to vector<8x8xbf16>
    %cst_367 = arith.constant dense<0.000000e+00> : vector<8x8xf32>
    %1179 = tpu.matmul %1175, %1178, %cst_367 {dimension_numbers = #tpu.dot_dimension_numbers<[1], [0], [0], [1], [0, 0, 1, 1], [], []>} : vector<8x8xbf16>, vector<8x8xbf16>, vector<8x8xf32> -> vector<8x8xf32>
    %cst_368 = arith.constant dense<0xFF800000> : vector<8xf32>
    %1180 = vector.multi_reduction <maximumf>, %1179, %cst_368 [1] : vector<8x8xf32> to vector<8xf32>
    %1181 = vector.shape_cast %1180 : vector<8xf32> to vector<8x1xf32>
    %1182 = vector.broadcast %1181 : vector<8x1xf32> to vector<8x8xf32>
    %1183 = arith.subf %1179, %1182 : vector<8x8xf32>
    %1184 = math.exp %1183 : vector<8x8xf32>
    %cst_369 = arith.constant dense<0.000000e+00> : vector<8xf32>
    %1185 = vector.multi_reduction <add>, %1184, %cst_369 [1] : vector<8x8xf32> to vector<8xf32>
    %1186 = vector.shape_cast %1185 : vector<8xf32> to vector<8x1xf32>
    %1187 = tpu.reciprocal %1186 {approx = true} : vector<8x1xf32> -> vector<8x1xf32>
    %1188 = vector.broadcast %1187 : vector<8x1xf32> to vector<8x8xf32>
    %1189 = arith.mulf %1184, %1188 : vector<8x8xf32>
    %1190 = arith.truncf %1189 : vector<8x8xf32> to vector<8x8xbf16>
    %1191 = vector.extract_strided_slice %1133 {offsets = [0, 16], sizes = [8, 8], strides = [1, 1]} : vector<8x32xf32> to vector<8x8xf32>
    %1192 = arith.truncf %1191 : vector<8x8xf32> to vector<8x8xbf16>
    %cst_370 = arith.constant dense<0.000000e+00> : vector<8x8xf32>
    %1193 = tpu.matmul %1190, %1192, %cst_370 {dimension_numbers = #tpu.dot_dimension_numbers<[1], [0], [0], [1], [0, 0, 1, 1], [], []>} : vector<8x8xbf16>, vector<8x8xbf16>, vector<8x8xf32> -> vector<8x8xf32>
    %1194 = vector.extract_strided_slice %1131 {offsets = [0, 24], sizes = [8, 8], strides = [1, 1]} : vector<8x32xf32> to vector<8x8xf32>
    %1195 = arith.truncf %1194 : vector<8x8xf32> to vector<8x8xbf16>
    %1196 = vector.extract_strided_slice %1132 {offsets = [0, 24], sizes = [8, 8], strides = [1, 1]} : vector<8x32xf32> to vector<8x8xf32>
    %1197 = tpu.transpose %1196, [1, 0] : vector<8x8xf32> -> vector<8x8xf32>
    %1198 = arith.truncf %1197 : vector<8x8xf32> to vector<8x8xbf16>
    %cst_371 = arith.constant dense<0.000000e+00> : vector<8x8xf32>
    %1199 = tpu.matmul %1195, %1198, %cst_371 {dimension_numbers = #tpu.dot_dimension_numbers<[1], [0], [0], [1], [0, 0, 1, 1], [], []>} : vector<8x8xbf16>, vector<8x8xbf16>, vector<8x8xf32> -> vector<8x8xf32>
    %cst_372 = arith.constant dense<0xFF800000> : vector<8xf32>
    %1200 = vector.multi_reduction <maximumf>, %1199, %cst_372 [1] : vector<8x8xf32> to vector<8xf32>
    %1201 = vector.shape_cast %1200 : vector<8xf32> to vector<8x1xf32>
    %1202 = vector.broadcast %1201 : vector<8x1xf32> to vector<8x8xf32>
    %1203 = arith.subf %1199, %1202 : vector<8x8xf32>
    %1204 = math.exp %1203 : vector<8x8xf32>
    %cst_373 = arith.constant dense<0.000000e+00> : vector<8xf32>
    %1205 = vector.multi_reduction <add>, %1204, %cst_373 [1] : vector<8x8xf32> to vector<8xf32>
    %1206 = vector.shape_cast %1205 : vector<8xf32> to vector<8x1xf32>
    %1207 = tpu.reciprocal %1206 {approx = true} : vector<8x1xf32> -> vector<8x1xf32>
    %1208 = vector.broadcast %1207 : vector<8x1xf32> to vector<8x8xf32>
    %1209 = arith.mulf %1204, %1208 : vector<8x8xf32>
    %1210 = arith.truncf %1209 : vector<8x8xf32> to vector<8x8xbf16>
    %1211 = vector.extract_strided_slice %1133 {offsets = [0, 24], sizes = [8, 8], strides = [1, 1]} : vector<8x32xf32> to vector<8x8xf32>
    %1212 = arith.truncf %1211 : vector<8x8xf32> to vector<8x8xbf16>
    %cst_374 = arith.constant dense<0.000000e+00> : vector<8x8xf32>
    %1213 = tpu.matmul %1210, %1212, %cst_374 {dimension_numbers = #tpu.dot_dimension_numbers<[1], [0], [0], [1], [0, 0, 1, 1], [], []>} : vector<8x8xbf16>, vector<8x8xbf16>, vector<8x8xf32> -> vector<8x8xf32>
    %1214 = tpu.concatenate %1153, %1173, %1193, %1213 in 1 : vector<8x8xf32>, vector<8x8xf32>, vector<8x8xf32>, vector<8x8xf32> -> vector<8x32xf32>
    %1215 = tpu.concatenate %1128, %1214 in 0 : vector<8x32xf32>, vector<8x32xf32> -> vector<16x32xf32>
    %1216 = arith.truncf %1215 : vector<16x32xf32> to vector<16x32xbf16>
    %cst_375 = arith.constant dense<0.000000e+00> : vector<16x32xf32>
    %1217 = tpu.matmul %1216, %1033, %cst_375 {dimension_numbers = #tpu.dot_dimension_numbers<[1], [0], [0], [1], [0, 0, 1, 1], [], []>} : vector<16x32xbf16>, vector<32x32xbf16>, vector<16x32xf32> -> vector<16x32xf32>
    %1218 = vector.broadcast %1035 : vector<1x32xf32> to vector<16x32xf32>
    %1219 = arith.addf %1217, %1218 : vector<16x32xf32>
    %1220 = arith.addf %1027, %1219 : vector<16x32xf32>
    %c1_376 = arith.constant 1 : index
    %c0_377 = arith.constant 0 : index
    %c0_378 = arith.constant 0 : index
    %1221 = vector.load %arg20[%c1_376, %c0_377, %c0_378] : memref<2x1x32xf32, #tpu.memory_space<vmem>>, vector<1x1x32xf32>
    %1222 = vector.shape_cast %1221 : vector<1x1x32xf32> to vector<1x32xf32>
    %c1_379 = arith.constant 1 : index
    %c0_380 = arith.constant 0 : index
    %c0_381 = arith.constant 0 : index
    %1223 = vector.load %arg21[%c1_379, %c0_380, %c0_381] : memref<2x1x32xf32, #tpu.memory_space<vmem>>, vector<1x1x32xf32>
    %1224 = vector.shape_cast %1223 : vector<1x1x32xf32> to vector<1x32xf32>
    %cst_382 = arith.constant dense<0.000000e+00> : vector<16xf32>
    %1225 = vector.multi_reduction <add>, %1220, %cst_382 [1] : vector<16x32xf32> to vector<16xf32>
    %1226 = vector.shape_cast %1225 : vector<16xf32> to vector<16x1xf32>
    %cst_383 = arith.constant 3.200000e+01 : f32
    %1227 = vector.broadcast %cst_383 : f32 to vector<16x1xf32>
    %1228 = arith.divf %1226, %1227 : vector<16x1xf32>
    %1229 = vector.broadcast %1228 : vector<16x1xf32> to vector<16x32xf32>
    %1230 = arith.subf %1220, %1229 : vector<16x32xf32>
    %1231 = arith.mulf %1230, %1230 : vector<16x32xf32>
    %cst_384 = arith.constant dense<0.000000e+00> : vector<16xf32>
    %1232 = vector.multi_reduction <add>, %1231, %cst_384 [1] : vector<16x32xf32> to vector<16xf32>
    %1233 = vector.shape_cast %1232 : vector<16xf32> to vector<16x1xf32>
    %cst_385 = arith.constant 3.200000e+01 : f32
    %1234 = vector.broadcast %cst_385 : f32 to vector<16x1xf32>
    %1235 = arith.divf %1233, %1234 : vector<16x1xf32>
    %1236 = vector.broadcast %1228 : vector<16x1xf32> to vector<16x32xf32>
    %1237 = arith.subf %1220, %1236 : vector<16x32xf32>
    %cst_386 = arith.constant 9.99999974E-6 : f32
    %1238 = vector.broadcast %cst_386 : f32 to vector<16x1xf32>
    %1239 = arith.addf %1235, %1238 : vector<16x1xf32>
    %1240 = math.rsqrt %1239 : vector<16x1xf32>
    %1241 = vector.broadcast %1240 : vector<16x1xf32> to vector<16x32xf32>
    %1242 = arith.mulf %1237, %1241 : vector<16x32xf32>
    %1243 = vector.broadcast %1222 : vector<1x32xf32> to vector<16x32xf32>
    %1244 = arith.mulf %1242, %1243 : vector<16x32xf32>
    %1245 = vector.broadcast %1224 : vector<1x32xf32> to vector<16x32xf32>
    %1246 = arith.addf %1244, %1245 : vector<16x32xf32>
    %c1_387 = arith.constant 1 : index
    %c0_388 = arith.constant 0 : index
    %c0_389 = arith.constant 0 : index
    %1247 = vector.load %arg22[%c1_387, %c0_388, %c0_389] : memref<2x32x32xbf16, #tpu.memory_space<vmem>>, vector<1x32x32xbf16>
    %1248 = vector.shape_cast %1247 : vector<1x32x32xbf16> to vector<32x32xbf16>
    %c1_390 = arith.constant 1 : index
    %c0_391 = arith.constant 0 : index
    %c0_392 = arith.constant 0 : index
    %1249 = vector.load %arg23[%c1_390, %c0_391, %c0_392] : memref<2x1x32xf32, #tpu.memory_space<vmem>>, vector<1x1x32xf32>
    %1250 = vector.shape_cast %1249 : vector<1x1x32xf32> to vector<1x32xf32>
    %c1_393 = arith.constant 1 : index
    %c0_394 = arith.constant 0 : index
    %c0_395 = arith.constant 0 : index
    %1251 = vector.load %arg24[%c1_393, %c0_394, %c0_395] : memref<2x32x64xbf16, #tpu.memory_space<vmem>>, vector<1x32x64xbf16>
    %1252 = vector.shape_cast %1251 : vector<1x32x64xbf16> to vector<32x64xbf16>
    %c1_396 = arith.constant 1 : index
    %c0_397 = arith.constant 0 : index
    %c0_398 = arith.constant 0 : index
    %1253 = vector.load %arg25[%c1_396, %c0_397, %c0_398] : memref<2x1x64xf32, #tpu.memory_space<vmem>>, vector<1x1x64xf32>
    %1254 = vector.shape_cast %1253 : vector<1x1x64xf32> to vector<1x64xf32>
    %c1_399 = arith.constant 1 : index
    %c0_400 = arith.constant 0 : index
    %c0_401 = arith.constant 0 : index
    %1255 = vector.load %arg26[%c1_399, %c0_400, %c0_401] : memref<2x32x32xbf16, #tpu.memory_space<vmem>>, vector<1x32x32xbf16>
    %1256 = vector.shape_cast %1255 : vector<1x32x32xbf16> to vector<32x32xbf16>
    %c1_402 = arith.constant 1 : index
    %c0_403 = arith.constant 0 : index
    %c0_404 = arith.constant 0 : index
    %1257 = vector.load %arg27[%c1_402, %c0_403, %c0_404] : memref<2x1x32xf32, #tpu.memory_space<vmem>>, vector<1x1x32xf32>
    %1258 = vector.shape_cast %1257 : vector<1x1x32xf32> to vector<1x32xf32>
    %1259 = arith.truncf %1246 : vector<16x32xf32> to vector<16x32xbf16>
    %cst_405 = arith.constant dense<0.000000e+00> : vector<16x32xf32>
    %1260 = tpu.matmul %1259, %1248, %cst_405 {dimension_numbers = #tpu.dot_dimension_numbers<[1], [0], [0], [1], [0, 0, 1, 1], [], []>} : vector<16x32xbf16>, vector<32x32xbf16>, vector<16x32xf32> -> vector<16x32xf32>
    %1261 = vector.broadcast %1250 : vector<1x32xf32> to vector<16x32xf32>
    %1262 = arith.addf %1260, %1261 : vector<16x32xf32>
    %1263 = arith.truncf %536 : vector<16x32xf32> to vector<16x32xbf16>
    %cst_406 = arith.constant dense<0.000000e+00> : vector<16x64xf32>
    %1264 = tpu.matmul %1263, %1252, %cst_406 {dimension_numbers = #tpu.dot_dimension_numbers<[1], [0], [0], [1], [0, 0, 1, 1], [], []>} : vector<16x32xbf16>, vector<32x64xbf16>, vector<16x64xf32> -> vector<16x64xf32>
    %1265 = vector.broadcast %1254 : vector<1x64xf32> to vector<16x64xf32>
    %1266 = arith.addf %1264, %1265 : vector<16x64xf32>
    %1267 = vector.extract_strided_slice %1266 {offsets = [0, 0], sizes = [16, 32], strides = [1, 1]} : vector<16x64xf32> to vector<16x32xf32>
    %1268 = vector.extract_strided_slice %1266 {offsets = [0, 32], sizes = [16, 32], strides = [1, 1]} : vector<16x64xf32> to vector<16x32xf32>
    %1269 = vector.extract_strided_slice %1262 {offsets = [0, 0], sizes = [8, 32], strides = [1, 1]} : vector<16x32xf32> to vector<8x32xf32>
    %cst_407 = arith.constant 0.353553385 : f32
    %1270 = vector.broadcast %cst_407 : f32 to vector<8x32xf32>
    %1271 = arith.mulf %1269, %1270 : vector<8x32xf32>
    %1272 = vector.extract_strided_slice %1267 {offsets = [0, 0], sizes = [8, 32], strides = [1, 1]} : vector<16x32xf32> to vector<8x32xf32>
    %1273 = vector.extract_strided_slice %1268 {offsets = [0, 0], sizes = [8, 32], strides = [1, 1]} : vector<16x32xf32> to vector<8x32xf32>
    %1274 = vector.extract_strided_slice %1271 {offsets = [0, 0], sizes = [8, 8], strides = [1, 1]} : vector<8x32xf32> to vector<8x8xf32>
    %1275 = arith.truncf %1274 : vector<8x8xf32> to vector<8x8xbf16>
    %1276 = vector.extract_strided_slice %1272 {offsets = [0, 0], sizes = [8, 8], strides = [1, 1]} : vector<8x32xf32> to vector<8x8xf32>
    %1277 = tpu.transpose %1276, [1, 0] : vector<8x8xf32> -> vector<8x8xf32>
    %1278 = arith.truncf %1277 : vector<8x8xf32> to vector<8x8xbf16>
    %cst_408 = arith.constant dense<0.000000e+00> : vector<8x8xf32>
    %1279 = tpu.matmul %1275, %1278, %cst_408 {dimension_numbers = #tpu.dot_dimension_numbers<[1], [0], [0], [1], [0, 0, 1, 1], [], []>} : vector<8x8xbf16>, vector<8x8xbf16>, vector<8x8xf32> -> vector<8x8xf32>
    %cst_409 = arith.constant dense<0xFF800000> : vector<8xf32>
    %1280 = vector.multi_reduction <maximumf>, %1279, %cst_409 [1] : vector<8x8xf32> to vector<8xf32>
    %1281 = vector.shape_cast %1280 : vector<8xf32> to vector<8x1xf32>
    %1282 = vector.broadcast %1281 : vector<8x1xf32> to vector<8x8xf32>
    %1283 = arith.subf %1279, %1282 : vector<8x8xf32>
    %1284 = math.exp %1283 : vector<8x8xf32>
    %cst_410 = arith.constant dense<0.000000e+00> : vector<8xf32>
    %1285 = vector.multi_reduction <add>, %1284, %cst_410 [1] : vector<8x8xf32> to vector<8xf32>
    %1286 = vector.shape_cast %1285 : vector<8xf32> to vector<8x1xf32>
    %1287 = tpu.reciprocal %1286 {approx = true} : vector<8x1xf32> -> vector<8x1xf32>
    %1288 = vector.broadcast %1287 : vector<8x1xf32> to vector<8x8xf32>
    %1289 = arith.mulf %1284, %1288 : vector<8x8xf32>
    %1290 = arith.truncf %1289 : vector<8x8xf32> to vector<8x8xbf16>
    %1291 = vector.extract_strided_slice %1273 {offsets = [0, 0], sizes = [8, 8], strides = [1, 1]} : vector<8x32xf32> to vector<8x8xf32>
    %1292 = arith.truncf %1291 : vector<8x8xf32> to vector<8x8xbf16>
    %cst_411 = arith.constant dense<0.000000e+00> : vector<8x8xf32>
    %1293 = tpu.matmul %1290, %1292, %cst_411 {dimension_numbers = #tpu.dot_dimension_numbers<[1], [0], [0], [1], [0, 0, 1, 1], [], []>} : vector<8x8xbf16>, vector<8x8xbf16>, vector<8x8xf32> -> vector<8x8xf32>
    %1294 = vector.extract_strided_slice %1271 {offsets = [0, 8], sizes = [8, 8], strides = [1, 1]} : vector<8x32xf32> to vector<8x8xf32>
    %1295 = arith.truncf %1294 : vector<8x8xf32> to vector<8x8xbf16>
    %1296 = vector.extract_strided_slice %1272 {offsets = [0, 8], sizes = [8, 8], strides = [1, 1]} : vector<8x32xf32> to vector<8x8xf32>
    %1297 = tpu.transpose %1296, [1, 0] : vector<8x8xf32> -> vector<8x8xf32>
    %1298 = arith.truncf %1297 : vector<8x8xf32> to vector<8x8xbf16>
    %cst_412 = arith.constant dense<0.000000e+00> : vector<8x8xf32>
    %1299 = tpu.matmul %1295, %1298, %cst_412 {dimension_numbers = #tpu.dot_dimension_numbers<[1], [0], [0], [1], [0, 0, 1, 1], [], []>} : vector<8x8xbf16>, vector<8x8xbf16>, vector<8x8xf32> -> vector<8x8xf32>
    %cst_413 = arith.constant dense<0xFF800000> : vector<8xf32>
    %1300 = vector.multi_reduction <maximumf>, %1299, %cst_413 [1] : vector<8x8xf32> to vector<8xf32>
    %1301 = vector.shape_cast %1300 : vector<8xf32> to vector<8x1xf32>
    %1302 = vector.broadcast %1301 : vector<8x1xf32> to vector<8x8xf32>
    %1303 = arith.subf %1299, %1302 : vector<8x8xf32>
    %1304 = math.exp %1303 : vector<8x8xf32>
    %cst_414 = arith.constant dense<0.000000e+00> : vector<8xf32>
    %1305 = vector.multi_reduction <add>, %1304, %cst_414 [1] : vector<8x8xf32> to vector<8xf32>
    %1306 = vector.shape_cast %1305 : vector<8xf32> to vector<8x1xf32>
    %1307 = tpu.reciprocal %1306 {approx = true} : vector<8x1xf32> -> vector<8x1xf32>
    %1308 = vector.broadcast %1307 : vector<8x1xf32> to vector<8x8xf32>
    %1309 = arith.mulf %1304, %1308 : vector<8x8xf32>
    %1310 = arith.truncf %1309 : vector<8x8xf32> to vector<8x8xbf16>
    %1311 = vector.extract_strided_slice %1273 {offsets = [0, 8], sizes = [8, 8], strides = [1, 1]} : vector<8x32xf32> to vector<8x8xf32>
    %1312 = arith.truncf %1311 : vector<8x8xf32> to vector<8x8xbf16>
    %cst_415 = arith.constant dense<0.000000e+00> : vector<8x8xf32>
    %1313 = tpu.matmul %1310, %1312, %cst_415 {dimension_numbers = #tpu.dot_dimension_numbers<[1], [0], [0], [1], [0, 0, 1, 1], [], []>} : vector<8x8xbf16>, vector<8x8xbf16>, vector<8x8xf32> -> vector<8x8xf32>
    %1314 = vector.extract_strided_slice %1271 {offsets = [0, 16], sizes = [8, 8], strides = [1, 1]} : vector<8x32xf32> to vector<8x8xf32>
    %1315 = arith.truncf %1314 : vector<8x8xf32> to vector<8x8xbf16>
    %1316 = vector.extract_strided_slice %1272 {offsets = [0, 16], sizes = [8, 8], strides = [1, 1]} : vector<8x32xf32> to vector<8x8xf32>
    %1317 = tpu.transpose %1316, [1, 0] : vector<8x8xf32> -> vector<8x8xf32>
    %1318 = arith.truncf %1317 : vector<8x8xf32> to vector<8x8xbf16>
    %cst_416 = arith.constant dense<0.000000e+00> : vector<8x8xf32>
    %1319 = tpu.matmul %1315, %1318, %cst_416 {dimension_numbers = #tpu.dot_dimension_numbers<[1], [0], [0], [1], [0, 0, 1, 1], [], []>} : vector<8x8xbf16>, vector<8x8xbf16>, vector<8x8xf32> -> vector<8x8xf32>
    %cst_417 = arith.constant dense<0xFF800000> : vector<8xf32>
    %1320 = vector.multi_reduction <maximumf>, %1319, %cst_417 [1] : vector<8x8xf32> to vector<8xf32>
    %1321 = vector.shape_cast %1320 : vector<8xf32> to vector<8x1xf32>
    %1322 = vector.broadcast %1321 : vector<8x1xf32> to vector<8x8xf32>
    %1323 = arith.subf %1319, %1322 : vector<8x8xf32>
    %1324 = math.exp %1323 : vector<8x8xf32>
    %cst_418 = arith.constant dense<0.000000e+00> : vector<8xf32>
    %1325 = vector.multi_reduction <add>, %1324, %cst_418 [1] : vector<8x8xf32> to vector<8xf32>
    %1326 = vector.shape_cast %1325 : vector<8xf32> to vector<8x1xf32>
    %1327 = tpu.reciprocal %1326 {approx = true} : vector<8x1xf32> -> vector<8x1xf32>
    %1328 = vector.broadcast %1327 : vector<8x1xf32> to vector<8x8xf32>
    %1329 = arith.mulf %1324, %1328 : vector<8x8xf32>
    %1330 = arith.truncf %1329 : vector<8x8xf32> to vector<8x8xbf16>
    %1331 = vector.extract_strided_slice %1273 {offsets = [0, 16], sizes = [8, 8], strides = [1, 1]} : vector<8x32xf32> to vector<8x8xf32>
    %1332 = arith.truncf %1331 : vector<8x8xf32> to vector<8x8xbf16>
    %cst_419 = arith.constant dense<0.000000e+00> : vector<8x8xf32>
    %1333 = tpu.matmul %1330, %1332, %cst_419 {dimension_numbers = #tpu.dot_dimension_numbers<[1], [0], [0], [1], [0, 0, 1, 1], [], []>} : vector<8x8xbf16>, vector<8x8xbf16>, vector<8x8xf32> -> vector<8x8xf32>
    %1334 = vector.extract_strided_slice %1271 {offsets = [0, 24], sizes = [8, 8], strides = [1, 1]} : vector<8x32xf32> to vector<8x8xf32>
    %1335 = arith.truncf %1334 : vector<8x8xf32> to vector<8x8xbf16>
    %1336 = vector.extract_strided_slice %1272 {offsets = [0, 24], sizes = [8, 8], strides = [1, 1]} : vector<8x32xf32> to vector<8x8xf32>
    %1337 = tpu.transpose %1336, [1, 0] : vector<8x8xf32> -> vector<8x8xf32>
    %1338 = arith.truncf %1337 : vector<8x8xf32> to vector<8x8xbf16>
    %cst_420 = arith.constant dense<0.000000e+00> : vector<8x8xf32>
    %1339 = tpu.matmul %1335, %1338, %cst_420 {dimension_numbers = #tpu.dot_dimension_numbers<[1], [0], [0], [1], [0, 0, 1, 1], [], []>} : vector<8x8xbf16>, vector<8x8xbf16>, vector<8x8xf32> -> vector<8x8xf32>
    %cst_421 = arith.constant dense<0xFF800000> : vector<8xf32>
    %1340 = vector.multi_reduction <maximumf>, %1339, %cst_421 [1] : vector<8x8xf32> to vector<8xf32>
    %1341 = vector.shape_cast %1340 : vector<8xf32> to vector<8x1xf32>
    %1342 = vector.broadcast %1341 : vector<8x1xf32> to vector<8x8xf32>
    %1343 = arith.subf %1339, %1342 : vector<8x8xf32>
    %1344 = math.exp %1343 : vector<8x8xf32>
    %cst_422 = arith.constant dense<0.000000e+00> : vector<8xf32>
    %1345 = vector.multi_reduction <add>, %1344, %cst_422 [1] : vector<8x8xf32> to vector<8xf32>
    %1346 = vector.shape_cast %1345 : vector<8xf32> to vector<8x1xf32>
    %1347 = tpu.reciprocal %1346 {approx = true} : vector<8x1xf32> -> vector<8x1xf32>
    %1348 = vector.broadcast %1347 : vector<8x1xf32> to vector<8x8xf32>
    %1349 = arith.mulf %1344, %1348 : vector<8x8xf32>
    %1350 = arith.truncf %1349 : vector<8x8xf32> to vector<8x8xbf16>
    %1351 = vector.extract_strided_slice %1273 {offsets = [0, 24], sizes = [8, 8], strides = [1, 1]} : vector<8x32xf32> to vector<8x8xf32>
    %1352 = arith.truncf %1351 : vector<8x8xf32> to vector<8x8xbf16>
    %cst_423 = arith.constant dense<0.000000e+00> : vector<8x8xf32>
    %1353 = tpu.matmul %1350, %1352, %cst_423 {dimension_numbers = #tpu.dot_dimension_numbers<[1], [0], [0], [1], [0, 0, 1, 1], [], []>} : vector<8x8xbf16>, vector<8x8xbf16>, vector<8x8xf32> -> vector<8x8xf32>
    %1354 = tpu.concatenate %1293, %1313, %1333, %1353 in 1 : vector<8x8xf32>, vector<8x8xf32>, vector<8x8xf32>, vector<8x8xf32> -> vector<8x32xf32>
    %1355 = vector.extract_strided_slice %1262 {offsets = [8, 0], sizes = [8, 32], strides = [1, 1]} : vector<16x32xf32> to vector<8x32xf32>
    %cst_424 = arith.constant 0.353553385 : f32
    %1356 = vector.broadcast %cst_424 : f32 to vector<8x32xf32>
    %1357 = arith.mulf %1355, %1356 : vector<8x32xf32>
    %1358 = vector.extract_strided_slice %1267 {offsets = [8, 0], sizes = [8, 32], strides = [1, 1]} : vector<16x32xf32> to vector<8x32xf32>
    %1359 = vector.extract_strided_slice %1268 {offsets = [8, 0], sizes = [8, 32], strides = [1, 1]} : vector<16x32xf32> to vector<8x32xf32>
    %1360 = vector.extract_strided_slice %1357 {offsets = [0, 0], sizes = [8, 8], strides = [1, 1]} : vector<8x32xf32> to vector<8x8xf32>
    %1361 = arith.truncf %1360 : vector<8x8xf32> to vector<8x8xbf16>
    %1362 = vector.extract_strided_slice %1358 {offsets = [0, 0], sizes = [8, 8], strides = [1, 1]} : vector<8x32xf32> to vector<8x8xf32>
    %1363 = tpu.transpose %1362, [1, 0] : vector<8x8xf32> -> vector<8x8xf32>
    %1364 = arith.truncf %1363 : vector<8x8xf32> to vector<8x8xbf16>
    %cst_425 = arith.constant dense<0.000000e+00> : vector<8x8xf32>
    %1365 = tpu.matmul %1361, %1364, %cst_425 {dimension_numbers = #tpu.dot_dimension_numbers<[1], [0], [0], [1], [0, 0, 1, 1], [], []>} : vector<8x8xbf16>, vector<8x8xbf16>, vector<8x8xf32> -> vector<8x8xf32>
    %cst_426 = arith.constant dense<0xFF800000> : vector<8xf32>
    %1366 = vector.multi_reduction <maximumf>, %1365, %cst_426 [1] : vector<8x8xf32> to vector<8xf32>
    %1367 = vector.shape_cast %1366 : vector<8xf32> to vector<8x1xf32>
    %1368 = vector.broadcast %1367 : vector<8x1xf32> to vector<8x8xf32>
    %1369 = arith.subf %1365, %1368 : vector<8x8xf32>
    %1370 = math.exp %1369 : vector<8x8xf32>
    %cst_427 = arith.constant dense<0.000000e+00> : vector<8xf32>
    %1371 = vector.multi_reduction <add>, %1370, %cst_427 [1] : vector<8x8xf32> to vector<8xf32>
    %1372 = vector.shape_cast %1371 : vector<8xf32> to vector<8x1xf32>
    %1373 = tpu.reciprocal %1372 {approx = true} : vector<8x1xf32> -> vector<8x1xf32>
    %1374 = vector.broadcast %1373 : vector<8x1xf32> to vector<8x8xf32>
    %1375 = arith.mulf %1370, %1374 : vector<8x8xf32>
    %1376 = arith.truncf %1375 : vector<8x8xf32> to vector<8x8xbf16>
    %1377 = vector.extract_strided_slice %1359 {offsets = [0, 0], sizes = [8, 8], strides = [1, 1]} : vector<8x32xf32> to vector<8x8xf32>
    %1378 = arith.truncf %1377 : vector<8x8xf32> to vector<8x8xbf16>
    %cst_428 = arith.constant dense<0.000000e+00> : vector<8x8xf32>
    %1379 = tpu.matmul %1376, %1378, %cst_428 {dimension_numbers = #tpu.dot_dimension_numbers<[1], [0], [0], [1], [0, 0, 1, 1], [], []>} : vector<8x8xbf16>, vector<8x8xbf16>, vector<8x8xf32> -> vector<8x8xf32>
    %1380 = vector.extract_strided_slice %1357 {offsets = [0, 8], sizes = [8, 8], strides = [1, 1]} : vector<8x32xf32> to vector<8x8xf32>
    %1381 = arith.truncf %1380 : vector<8x8xf32> to vector<8x8xbf16>
    %1382 = vector.extract_strided_slice %1358 {offsets = [0, 8], sizes = [8, 8], strides = [1, 1]} : vector<8x32xf32> to vector<8x8xf32>
    %1383 = tpu.transpose %1382, [1, 0] : vector<8x8xf32> -> vector<8x8xf32>
    %1384 = arith.truncf %1383 : vector<8x8xf32> to vector<8x8xbf16>
    %cst_429 = arith.constant dense<0.000000e+00> : vector<8x8xf32>
    %1385 = tpu.matmul %1381, %1384, %cst_429 {dimension_numbers = #tpu.dot_dimension_numbers<[1], [0], [0], [1], [0, 0, 1, 1], [], []>} : vector<8x8xbf16>, vector<8x8xbf16>, vector<8x8xf32> -> vector<8x8xf32>
    %cst_430 = arith.constant dense<0xFF800000> : vector<8xf32>
    %1386 = vector.multi_reduction <maximumf>, %1385, %cst_430 [1] : vector<8x8xf32> to vector<8xf32>
    %1387 = vector.shape_cast %1386 : vector<8xf32> to vector<8x1xf32>
    %1388 = vector.broadcast %1387 : vector<8x1xf32> to vector<8x8xf32>
    %1389 = arith.subf %1385, %1388 : vector<8x8xf32>
    %1390 = math.exp %1389 : vector<8x8xf32>
    %cst_431 = arith.constant dense<0.000000e+00> : vector<8xf32>
    %1391 = vector.multi_reduction <add>, %1390, %cst_431 [1] : vector<8x8xf32> to vector<8xf32>
    %1392 = vector.shape_cast %1391 : vector<8xf32> to vector<8x1xf32>
    %1393 = tpu.reciprocal %1392 {approx = true} : vector<8x1xf32> -> vector<8x1xf32>
    %1394 = vector.broadcast %1393 : vector<8x1xf32> to vector<8x8xf32>
    %1395 = arith.mulf %1390, %1394 : vector<8x8xf32>
    %1396 = arith.truncf %1395 : vector<8x8xf32> to vector<8x8xbf16>
    %1397 = vector.extract_strided_slice %1359 {offsets = [0, 8], sizes = [8, 8], strides = [1, 1]} : vector<8x32xf32> to vector<8x8xf32>
    %1398 = arith.truncf %1397 : vector<8x8xf32> to vector<8x8xbf16>
    %cst_432 = arith.constant dense<0.000000e+00> : vector<8x8xf32>
    %1399 = tpu.matmul %1396, %1398, %cst_432 {dimension_numbers = #tpu.dot_dimension_numbers<[1], [0], [0], [1], [0, 0, 1, 1], [], []>} : vector<8x8xbf16>, vector<8x8xbf16>, vector<8x8xf32> -> vector<8x8xf32>
    %1400 = vector.extract_strided_slice %1357 {offsets = [0, 16], sizes = [8, 8], strides = [1, 1]} : vector<8x32xf32> to vector<8x8xf32>
    %1401 = arith.truncf %1400 : vector<8x8xf32> to vector<8x8xbf16>
    %1402 = vector.extract_strided_slice %1358 {offsets = [0, 16], sizes = [8, 8], strides = [1, 1]} : vector<8x32xf32> to vector<8x8xf32>
    %1403 = tpu.transpose %1402, [1, 0] : vector<8x8xf32> -> vector<8x8xf32>
    %1404 = arith.truncf %1403 : vector<8x8xf32> to vector<8x8xbf16>
    %cst_433 = arith.constant dense<0.000000e+00> : vector<8x8xf32>
    %1405 = tpu.matmul %1401, %1404, %cst_433 {dimension_numbers = #tpu.dot_dimension_numbers<[1], [0], [0], [1], [0, 0, 1, 1], [], []>} : vector<8x8xbf16>, vector<8x8xbf16>, vector<8x8xf32> -> vector<8x8xf32>
    %cst_434 = arith.constant dense<0xFF800000> : vector<8xf32>
    %1406 = vector.multi_reduction <maximumf>, %1405, %cst_434 [1] : vector<8x8xf32> to vector<8xf32>
    %1407 = vector.shape_cast %1406 : vector<8xf32> to vector<8x1xf32>
    %1408 = vector.broadcast %1407 : vector<8x1xf32> to vector<8x8xf32>
    %1409 = arith.subf %1405, %1408 : vector<8x8xf32>
    %1410 = math.exp %1409 : vector<8x8xf32>
    %cst_435 = arith.constant dense<0.000000e+00> : vector<8xf32>
    %1411 = vector.multi_reduction <add>, %1410, %cst_435 [1] : vector<8x8xf32> to vector<8xf32>
    %1412 = vector.shape_cast %1411 : vector<8xf32> to vector<8x1xf32>
    %1413 = tpu.reciprocal %1412 {approx = true} : vector<8x1xf32> -> vector<8x1xf32>
    %1414 = vector.broadcast %1413 : vector<8x1xf32> to vector<8x8xf32>
    %1415 = arith.mulf %1410, %1414 : vector<8x8xf32>
    %1416 = arith.truncf %1415 : vector<8x8xf32> to vector<8x8xbf16>
    %1417 = vector.extract_strided_slice %1359 {offsets = [0, 16], sizes = [8, 8], strides = [1, 1]} : vector<8x32xf32> to vector<8x8xf32>
    %1418 = arith.truncf %1417 : vector<8x8xf32> to vector<8x8xbf16>
    %cst_436 = arith.constant dense<0.000000e+00> : vector<8x8xf32>
    %1419 = tpu.matmul %1416, %1418, %cst_436 {dimension_numbers = #tpu.dot_dimension_numbers<[1], [0], [0], [1], [0, 0, 1, 1], [], []>} : vector<8x8xbf16>, vector<8x8xbf16>, vector<8x8xf32> -> vector<8x8xf32>
    %1420 = vector.extract_strided_slice %1357 {offsets = [0, 24], sizes = [8, 8], strides = [1, 1]} : vector<8x32xf32> to vector<8x8xf32>
    %1421 = arith.truncf %1420 : vector<8x8xf32> to vector<8x8xbf16>
    %1422 = vector.extract_strided_slice %1358 {offsets = [0, 24], sizes = [8, 8], strides = [1, 1]} : vector<8x32xf32> to vector<8x8xf32>
    %1423 = tpu.transpose %1422, [1, 0] : vector<8x8xf32> -> vector<8x8xf32>
    %1424 = arith.truncf %1423 : vector<8x8xf32> to vector<8x8xbf16>
    %cst_437 = arith.constant dense<0.000000e+00> : vector<8x8xf32>
    %1425 = tpu.matmul %1421, %1424, %cst_437 {dimension_numbers = #tpu.dot_dimension_numbers<[1], [0], [0], [1], [0, 0, 1, 1], [], []>} : vector<8x8xbf16>, vector<8x8xbf16>, vector<8x8xf32> -> vector<8x8xf32>
    %cst_438 = arith.constant dense<0xFF800000> : vector<8xf32>
    %1426 = vector.multi_reduction <maximumf>, %1425, %cst_438 [1] : vector<8x8xf32> to vector<8xf32>
    %1427 = vector.shape_cast %1426 : vector<8xf32> to vector<8x1xf32>
    %1428 = vector.broadcast %1427 : vector<8x1xf32> to vector<8x8xf32>
    %1429 = arith.subf %1425, %1428 : vector<8x8xf32>
    %1430 = math.exp %1429 : vector<8x8xf32>
    %cst_439 = arith.constant dense<0.000000e+00> : vector<8xf32>
    %1431 = vector.multi_reduction <add>, %1430, %cst_439 [1] : vector<8x8xf32> to vector<8xf32>
    %1432 = vector.shape_cast %1431 : vector<8xf32> to vector<8x1xf32>
    %1433 = tpu.reciprocal %1432 {approx = true} : vector<8x1xf32> -> vector<8x1xf32>
    %1434 = vector.broadcast %1433 : vector<8x1xf32> to vector<8x8xf32>
    %1435 = arith.mulf %1430, %1434 : vector<8x8xf32>
    %1436 = arith.truncf %1435 : vector<8x8xf32> to vector<8x8xbf16>
    %1437 = vector.extract_strided_slice %1359 {offsets = [0, 24], sizes = [8, 8], strides = [1, 1]} : vector<8x32xf32> to vector<8x8xf32>
    %1438 = arith.truncf %1437 : vector<8x8xf32> to vector<8x8xbf16>
    %cst_440 = arith.constant dense<0.000000e+00> : vector<8x8xf32>
    %1439 = tpu.matmul %1436, %1438, %cst_440 {dimension_numbers = #tpu.dot_dimension_numbers<[1], [0], [0], [1], [0, 0, 1, 1], [], []>} : vector<8x8xbf16>, vector<8x8xbf16>, vector<8x8xf32> -> vector<8x8xf32>
    %1440 = tpu.concatenate %1379, %1399, %1419, %1439 in 1 : vector<8x8xf32>, vector<8x8xf32>, vector<8x8xf32>, vector<8x8xf32> -> vector<8x32xf32>
    %1441 = tpu.concatenate %1354, %1440 in 0 : vector<8x32xf32>, vector<8x32xf32> -> vector<16x32xf32>
    %1442 = arith.truncf %1441 : vector<16x32xf32> to vector<16x32xbf16>
    %cst_441 = arith.constant dense<0.000000e+00> : vector<16x32xf32>
    %1443 = tpu.matmul %1442, %1256, %cst_441 {dimension_numbers = #tpu.dot_dimension_numbers<[1], [0], [0], [1], [0, 0, 1, 1], [], []>} : vector<16x32xbf16>, vector<32x32xbf16>, vector<16x32xf32> -> vector<16x32xf32>
    %1444 = vector.broadcast %1258 : vector<1x32xf32> to vector<16x32xf32>
    %1445 = arith.addf %1443, %1444 : vector<16x32xf32>
    %1446 = arith.addf %1246, %1445 : vector<16x32xf32>
    %c1_442 = arith.constant 1 : index
    %c0_443 = arith.constant 0 : index
    %c0_444 = arith.constant 0 : index
    %1447 = vector.load %arg28[%c1_442, %c0_443, %c0_444] : memref<2x1x32xf32, #tpu.memory_space<vmem>>, vector<1x1x32xf32>
    %1448 = vector.shape_cast %1447 : vector<1x1x32xf32> to vector<1x32xf32>
    %c1_445 = arith.constant 1 : index
    %c0_446 = arith.constant 0 : index
    %c0_447 = arith.constant 0 : index
    %1449 = vector.load %arg29[%c1_445, %c0_446, %c0_447] : memref<2x1x32xf32, #tpu.memory_space<vmem>>, vector<1x1x32xf32>
    %1450 = vector.shape_cast %1449 : vector<1x1x32xf32> to vector<1x32xf32>
    %cst_448 = arith.constant dense<0.000000e+00> : vector<16xf32>
    %1451 = vector.multi_reduction <add>, %1446, %cst_448 [1] : vector<16x32xf32> to vector<16xf32>
    %1452 = vector.shape_cast %1451 : vector<16xf32> to vector<16x1xf32>
    %cst_449 = arith.constant 3.200000e+01 : f32
    %1453 = vector.broadcast %cst_449 : f32 to vector<16x1xf32>
    %1454 = arith.divf %1452, %1453 : vector<16x1xf32>
    %1455 = vector.broadcast %1454 : vector<16x1xf32> to vector<16x32xf32>
    %1456 = arith.subf %1446, %1455 : vector<16x32xf32>
    %1457 = arith.mulf %1456, %1456 : vector<16x32xf32>
    %cst_450 = arith.constant dense<0.000000e+00> : vector<16xf32>
    %1458 = vector.multi_reduction <add>, %1457, %cst_450 [1] : vector<16x32xf32> to vector<16xf32>
    %1459 = vector.shape_cast %1458 : vector<16xf32> to vector<16x1xf32>
    %cst_451 = arith.constant 3.200000e+01 : f32
    %1460 = vector.broadcast %cst_451 : f32 to vector<16x1xf32>
    %1461 = arith.divf %1459, %1460 : vector<16x1xf32>
    %1462 = vector.broadcast %1454 : vector<16x1xf32> to vector<16x32xf32>
    %1463 = arith.subf %1446, %1462 : vector<16x32xf32>
    %cst_452 = arith.constant 9.99999974E-6 : f32
    %1464 = vector.broadcast %cst_452 : f32 to vector<16x1xf32>
    %1465 = arith.addf %1461, %1464 : vector<16x1xf32>
    %1466 = math.rsqrt %1465 : vector<16x1xf32>
    %1467 = vector.broadcast %1466 : vector<16x1xf32> to vector<16x32xf32>
    %1468 = arith.mulf %1463, %1467 : vector<16x32xf32>
    %1469 = vector.broadcast %1448 : vector<1x32xf32> to vector<16x32xf32>
    %1470 = arith.mulf %1468, %1469 : vector<16x32xf32>
    %1471 = vector.broadcast %1450 : vector<1x32xf32> to vector<16x32xf32>
    %1472 = arith.addf %1470, %1471 : vector<16x32xf32>
    %c1_453 = arith.constant 1 : index
    %c0_454 = arith.constant 0 : index
    %c0_455 = arith.constant 0 : index
    %1473 = vector.load %arg30[%c1_453, %c0_454, %c0_455] : memref<2x32x64xbf16, #tpu.memory_space<vmem>>, vector<1x32x64xbf16>
    %1474 = vector.shape_cast %1473 : vector<1x32x64xbf16> to vector<32x64xbf16>
    %c1_456 = arith.constant 1 : index
    %c0_457 = arith.constant 0 : index
    %c0_458 = arith.constant 0 : index
    %1475 = vector.load %arg31[%c1_456, %c0_457, %c0_458] : memref<2x1x64xf32, #tpu.memory_space<vmem>>, vector<1x1x64xf32>
    %1476 = vector.shape_cast %1475 : vector<1x1x64xf32> to vector<1x64xf32>
    %c1_459 = arith.constant 1 : index
    %c0_460 = arith.constant 0 : index
    %c0_461 = arith.constant 0 : index
    %1477 = vector.load %arg32[%c1_459, %c0_460, %c0_461] : memref<2x64x32xbf16, #tpu.memory_space<vmem>>, vector<1x64x32xbf16>
    %1478 = vector.shape_cast %1477 : vector<1x64x32xbf16> to vector<64x32xbf16>
    %c1_462 = arith.constant 1 : index
    %c0_463 = arith.constant 0 : index
    %c0_464 = arith.constant 0 : index
    %1479 = vector.load %arg33[%c1_462, %c0_463, %c0_464] : memref<2x1x32xf32, #tpu.memory_space<vmem>>, vector<1x1x32xf32>
    %1480 = vector.shape_cast %1479 : vector<1x1x32xf32> to vector<1x32xf32>
    %1481 = arith.truncf %1472 : vector<16x32xf32> to vector<16x32xbf16>
    %cst_465 = arith.constant dense<0.000000e+00> : vector<16x64xf32>
    %1482 = tpu.matmul %1481, %1474, %cst_465 {dimension_numbers = #tpu.dot_dimension_numbers<[1], [0], [0], [1], [0, 0, 1, 1], [], []>} : vector<16x32xbf16>, vector<32x64xbf16>, vector<16x64xf32> -> vector<16x64xf32>
    %1483 = vector.broadcast %1476 : vector<1x64xf32> to vector<16x64xf32>
    %1484 = arith.addf %1482, %1483 : vector<16x64xf32>
    %cst_466 = arith.constant 0.000000e+00 : f32
    %1485 = vector.broadcast %cst_466 : f32 to vector<16x64xf32>
    %1486 = arith.maximumf %1484, %1485 : vector<16x64xf32>
    %1487 = arith.truncf %1486 : vector<16x64xf32> to vector<16x64xbf16>
    %cst_467 = arith.constant dense<0.000000e+00> : vector<16x32xf32>
    %1488 = tpu.matmul %1487, %1478, %cst_467 {dimension_numbers = #tpu.dot_dimension_numbers<[1], [0], [0], [1], [0, 0, 1, 1], [], []>} : vector<16x64xbf16>, vector<64x32xbf16>, vector<16x32xf32> -> vector<16x32xf32>
    %1489 = vector.broadcast %1480 : vector<1x32xf32> to vector<16x32xf32>
    %1490 = arith.addf %1488, %1489 : vector<16x32xf32>
    %1491 = arith.addf %1472, %1490 : vector<16x32xf32>
    %c1_468 = arith.constant 1 : index
    %c0_469 = arith.constant 0 : index
    %c0_470 = arith.constant 0 : index
    %1492 = vector.load %arg34[%c1_468, %c0_469, %c0_470] : memref<2x1x32xf32, #tpu.memory_space<vmem>>, vector<1x1x32xf32>
    %1493 = vector.shape_cast %1492 : vector<1x1x32xf32> to vector<1x32xf32>
    %c1_471 = arith.constant 1 : index
    %c0_472 = arith.constant 0 : index
    %c0_473 = arith.constant 0 : index
    %1494 = vector.load %arg35[%c1_471, %c0_472, %c0_473] : memref<2x1x32xf32, #tpu.memory_space<vmem>>, vector<1x1x32xf32>
    %1495 = vector.shape_cast %1494 : vector<1x1x32xf32> to vector<1x32xf32>
    %cst_474 = arith.constant dense<0.000000e+00> : vector<16xf32>
    %1496 = vector.multi_reduction <add>, %1491, %cst_474 [1] : vector<16x32xf32> to vector<16xf32>
    %1497 = vector.shape_cast %1496 : vector<16xf32> to vector<16x1xf32>
    %cst_475 = arith.constant 3.200000e+01 : f32
    %1498 = vector.broadcast %cst_475 : f32 to vector<16x1xf32>
    %1499 = arith.divf %1497, %1498 : vector<16x1xf32>
    %1500 = vector.broadcast %1499 : vector<16x1xf32> to vector<16x32xf32>
    %1501 = arith.subf %1491, %1500 : vector<16x32xf32>
    %1502 = arith.mulf %1501, %1501 : vector<16x32xf32>
    %cst_476 = arith.constant dense<0.000000e+00> : vector<16xf32>
    %1503 = vector.multi_reduction <add>, %1502, %cst_476 [1] : vector<16x32xf32> to vector<16xf32>
    %1504 = vector.shape_cast %1503 : vector<16xf32> to vector<16x1xf32>
    %cst_477 = arith.constant 3.200000e+01 : f32
    %1505 = vector.broadcast %cst_477 : f32 to vector<16x1xf32>
    %1506 = arith.divf %1504, %1505 : vector<16x1xf32>
    %1507 = vector.broadcast %1499 : vector<16x1xf32> to vector<16x32xf32>
    %1508 = arith.subf %1491, %1507 : vector<16x32xf32>
    %cst_478 = arith.constant 9.99999974E-6 : f32
    %1509 = vector.broadcast %cst_478 : f32 to vector<16x1xf32>
    %1510 = arith.addf %1506, %1509 : vector<16x1xf32>
    %1511 = math.rsqrt %1510 : vector<16x1xf32>
    %1512 = vector.broadcast %1511 : vector<16x1xf32> to vector<16x32xf32>
    %1513 = arith.mulf %1508, %1512 : vector<16x32xf32>
    %1514 = vector.broadcast %1493 : vector<1x32xf32> to vector<16x32xf32>
    %1515 = arith.mulf %1513, %1514 : vector<16x32xf32>
    %1516 = vector.broadcast %1495 : vector<1x32xf32> to vector<16x32xf32>
    %1517 = arith.addf %1515, %1516 : vector<16x32xf32>
    %c0_479 = arith.constant 0 : index
    %c0_480 = arith.constant 0 : index
    %1518 = vector.load %arg36[%c0_479, %c0_480] : memref<32x128xbf16, #tpu.memory_space<vmem>>, vector<32x128xbf16>
    %1519 = arith.truncf %1517 : vector<16x32xf32> to vector<16x32xbf16>
    %cst_481 = arith.constant dense<0.000000e+00> : vector<16x128xf32>
    %1520 = tpu.matmul %1519, %1518, %cst_481 {dimension_numbers = #tpu.dot_dimension_numbers<[1], [0], [0], [1], [0, 0, 1, 1], [], []>} : vector<16x32xbf16>, vector<32x128xbf16>, vector<16x128xf32> -> vector<16x128xf32>
    %c0_482 = arith.constant 0 : index
    %c0_483 = arith.constant 0 : index
    %1521 = vector.load %arg37[%c0_482, %c0_483] : memref<1x128xf32, #tpu.memory_space<vmem>>, vector<1x128xf32>
    %1522 = vector.broadcast %1521 : vector<1x128xf32> to vector<16x128xf32>
    %1523 = arith.addf %1520, %1522 : vector<16x128xf32>
    %c0_484 = arith.constant 0 : index
    %c0_485 = arith.constant 0 : index
    %1524 = vector.load %arg38[%c0_484, %c0_485] : memref<16x128xf32, #tpu.memory_space<vmem>>, vector<16x128xf32>
    tpu.vector_store %arg38[%c0_484, %c0_485], %1523 {strides = array<i32>} : memref<16x128xf32, #tpu.memory_space<vmem>>, vector<16x128xf32>,
    return
  }
}

</mosaic_0001>

<llo_original>
// kernel: transformer_forward.1
$region0: #{transformer_forward.1}
  #allocation0 [shape = 'u32[]', space=smem, size = 0x4, offset = 0x4, fixed_abs, tag = 'smem constant byte address 0x4 - core index']
  #allocation1 [shape = 'u32[72,128]{1,0:T(1,128)}', space=vmem, size = 0x9000, scoped, tag = 'internal scratch']
  %s0 = inlined_call_operand.smem [shape: u32[39], index: -1, kind: input, shape index: {}]
  %s1 = sld [smem:[%s0]]
  %s2 = scalar_lea.smem %s0, 1
  %s3 = sld [smem:[%s2]]
  %s4 = scalar_lea.smem %s0, 2
  %s5 = sld [smem:[%s4]]
  %s6 = scalar_lea.smem %s0, 3
  %s7 = sld [smem:[%s6]]
  %s8 = scalar_lea.smem %s0, 4
  %s9 = sld [smem:[%s8]]
  %s10 = scalar_lea.smem %s0, 5
  %s11 = sld [smem:[%s10]]
  %s12 = scalar_lea.smem %s0, 6
  %s13 = sld [smem:[%s12]]
  %s14 = scalar_lea.smem %s0, 7
  %s15 = sld [smem:[%s14]]
  %s16 = scalar_lea.smem %s0, 8
  %s17 = sld [smem:[%s16]]
  %s18 = scalar_lea.smem %s0, 9
  %s19 = sld [smem:[%s18]]
  %s20 = scalar_lea.smem %s0, 10
  %s21 = sld [smem:[%s20]]
  %s22 = scalar_lea.smem %s0, 11
  %s23 = sld [smem:[%s22]]
  %s24 = scalar_lea.smem %s0, 12
  %s25 = sld [smem:[%s24]]
  %s26 = scalar_lea.smem %s0, 13
  %s27 = sld [smem:[%s26]]
  %s28 = scalar_lea.smem %s0, 14
  %s29 = sld [smem:[%s28]]
  %s30 = scalar_lea.smem %s0, 15
  %s31 = sld [smem:[%s30]]
  %s32 = scalar_lea.smem %s0, 16
  %s33 = sld [smem:[%s32]]
  %s34 = scalar_lea.smem %s0, 17
  %s35 = sld [smem:[%s34]]
  %s36 = scalar_lea.smem %s0, 18
  %s37 = sld [smem:[%s36]]
  %s38 = scalar_lea.smem %s0, 19
  %s39 = sld [smem:[%s38]]
  %s40 = scalar_lea.smem %s0, 20
  %s41 = sld [smem:[%s40]]
  %s42 = scalar_lea.smem %s0, 21
  %s43 = sld [smem:[%s42]]
  %s44 = scalar_lea.smem %s0, 22
  %s45 = sld [smem:[%s44]]
  %s46 = scalar_lea.smem %s0, 23
  %s47 = sld [smem:[%s46]]
  %s48 = scalar_lea.smem %s0, 24
  %s49 = sld [smem:[%s48]]
  %s50 = scalar_lea.smem %s0, 25
  %s51 = sld [smem:[%s50]]
  %s52 = scalar_lea.smem %s0, 26
  %s53 = sld [smem:[%s52]]
  %s54 = scalar_lea.smem %s0, 27
  %s55 = sld [smem:[%s54]]
  %s56 = scalar_lea.smem %s0, 28
  %s57 = sld [smem:[%s56]]
  %s58 = scalar_lea.smem %s0, 29
  %s59 = sld [smem:[%s58]]
  %s60 = scalar_lea.smem %s0, 30
  %s61 = sld [smem:[%s60]]
  %s62 = scalar_lea.smem %s0, 31
  %s63 = sld [smem:[%s62]]
  %s64 = scalar_lea.smem %s0, 32
  %s65 = sld [smem:[%s64]]
  %s66 = scalar_lea.smem %s0, 33
  %s67 = sld [smem:[%s66]]
  %s68 = scalar_lea.smem %s0, 34
  %s69 = sld [smem:[%s68]]
  %s70 = scalar_lea.smem %s0, 35
  %s71 = sld [smem:[%s70]]
  %s72 = scalar_lea.smem %s0, 36
  %s73 = sld [smem:[%s72]]
  %s74 = scalar_lea.smem %s0, 37
  %s75 = sld [smem:[%s74]]
  %s76 = scalar_lea.smem %s0, 38
  %s77 = sld [smem:[%s76]]
  %s78 = sld [smem:[#allocation0]]
  $region162: #{transformer_forward.1} parent=0
    _
  %s80 = ssub.s32 1, %s78
  %s81 = scalar_select 0, %s80, %s78
  // Predicated region
  $region2: #{transformer_forward.1} parent=0 // pred_check
    _
  $region3: #{transformer_forward.1} parent=0 // pred_check_branch
    %83 = sbr.rel (0) target = $region5
  $region4: #{transformer_forward.1} parent=0 // pred_region
    _
  $region5: #{transformer_forward.1} parent=0 // pred_fallthru
    _
  // Predicated region
  $region6: #{transformer_forward.1} parent=0 // pred_check
    _
  $region7: #{transformer_forward.1} parent=0 // pred_check_branch
    %85 = sbr.rel (0) target = $region9
  $region8: #{transformer_forward.1} parent=0 // pred_region
    _
  $region9: #{transformer_forward.1} parent=0 // pred_fallthru
    _
  // Predicated region
  $region10: #{transformer_forward.1} parent=0 // pred_check
    _
  $region11: #{transformer_forward.1} parent=0 // pred_check_branch
    %87 = sbr.rel (0) target = $region13
  $region12: #{transformer_forward.1} parent=0 // pred_region
    _
  $region13: #{transformer_forward.1} parent=0 // pred_fallthru
    _
  // Predicated region
  $region14: #{transformer_forward.1} parent=0 // pred_check
    _
  $region15: #{transformer_forward.1} parent=0 // pred_check_branch
    %89 = sbr.rel (0) target = $region17
  $region16: #{transformer_forward.1} parent=0 // pred_region
    _
  $region17: #{transformer_forward.1} parent=0 // pred_fallthru
    _
  // Predicated region
  $region18: #{transformer_forward.1} parent=0 // pred_check
    _
  $region19: #{transformer_forward.1} parent=0 // pred_check_branch
    %91 = sbr.rel (0) target = $region21
  $region20: #{transformer_forward.1} parent=0 // pred_region
    _
  $region21: #{transformer_forward.1} parent=0 // pred_fallthru
    _
  // Predicated region
  $region22: #{transformer_forward.1} parent=0 // pred_check
    _
  $region23: #{transformer_forward.1} parent=0 // pred_check_branch
    %93 = sbr.rel (0) target = $region25
  $region24: #{transformer_forward.1} parent=0 // pred_region
    _
  $region25: #{transformer_forward.1} parent=0 // pred_fallthru
    _
  // Predicated region
  $region26: #{transformer_forward.1} parent=0 // pred_check
    _
  $region27: #{transformer_forward.1} parent=0 // pred_check_branch
    %95 = sbr.rel (0) target = $region29
  $region28: #{transformer_forward.1} parent=0 // pred_region
    _
  $region29: #{transformer_forward.1} parent=0 // pred_fallthru
    _
  // Predicated region
  $region30: #{transformer_forward.1} parent=0 // pred_check
    _
  $region31: #{transformer_forward.1} parent=0 // pred_check_branch
    %97 = sbr.rel (0) target = $region33
  $region32: #{transformer_forward.1} parent=0 // pred_region
    _
  $region33: #{transformer_forward.1} parent=0 // pred_fallthru
    _
  // Predicated region
  $region34: #{transformer_forward.1} parent=0 // pred_check
    _
  $region35: #{transformer_forward.1} parent=0 // pred_check_branch
    %99 = sbr.rel (0) target = $region37
  $region36: #{transformer_forward.1} parent=0 // pred_region
    _
  $region37: #{transformer_forward.1} parent=0 // pred_fallthru
    _
  // Predicated region
  $region38: #{transformer_forward.1} parent=0 // pred_check
    _
  $region39: #{transformer_forward.1} parent=0 // pred_check_branch
    %101 = sbr.rel (0) target = $region41
  $region40: #{transformer_forward.1} parent=0 // pred_region
    _
  $region41: #{transformer_forward.1} parent=0 // pred_fallthru
    _
  // Predicated region
  $region42: #{transformer_forward.1} parent=0 // pred_check
    _
  $region43: #{transformer_forward.1} parent=0 // pred_check_branch
    %103 = sbr.rel (0) target = $region45
  $region44: #{transformer_forward.1} parent=0 // pred_region
    _
  $region45: #{transformer_forward.1} parent=0 // pred_fallthru
    _
  // Predicated region
  $region46: #{transformer_forward.1} parent=0 // pred_check
    _
  $region47: #{transformer_forward.1} parent=0 // pred_check_branch
    %105 = sbr.rel (0) target = $region49
  $region48: #{transformer_forward.1} parent=0 // pred_region
    _
  $region49: #{transformer_forward.1} parent=0 // pred_fallthru
    _
  // Predicated region
  $region50: #{transformer_forward.1} parent=0 // pred_check
    _
  $region51: #{transformer_forward.1} parent=0 // pred_check_branch
    %107 = sbr.rel (0) target = $region53
  $region52: #{transformer_forward.1} parent=0 // pred_region
    _
  $region53: #{transformer_forward.1} parent=0 // pred_fallthru
    _
  // Predicated region
  $region54: #{transformer_forward.1} parent=0 // pred_check
    _
  $region55: #{transformer_forward.1} parent=0 // pred_check_branch
    %109 = sbr.rel (0) target = $region57
  $region56: #{transformer_forward.1} parent=0 // pred_region
    _
  $region57: #{transformer_forward.1} parent=0 // pred_fallthru
    _
  // Predicated region
  $region58: #{transformer_forward.1} parent=0 // pred_check
    _
  $region59: #{transformer_forward.1} parent=0 // pred_check_branch
    %111 = sbr.rel (0) target = $region61
  $region60: #{transformer_forward.1} parent=0 // pred_region
    _
  $region61: #{transformer_forward.1} parent=0 // pred_fallthru
    _
  // Predicated region
  $region62: #{transformer_forward.1} parent=0 // pred_check
    _
  $region63: #{transformer_forward.1} parent=0 // pred_check_branch
    %113 = sbr.rel (0) target = $region65
  $region64: #{transformer_forward.1} parent=0 // pred_region
    _
  $region65: #{transformer_forward.1} parent=0 // pred_fallthru
    _
  // Predicated region
  $region66: #{transformer_forward.1} parent=0 // pred_check
    _
  $region67: #{transformer_forward.1} parent=0 // pred_check_branch
    %115 = sbr.rel (0) target = $region69
  $region68: #{transformer_forward.1} parent=0 // pred_region
    _
  $region69: #{transformer_forward.1} parent=0 // pred_fallthru
    _
  // Predicated region
  $region70: #{transformer_forward.1} parent=0 // pred_check
    _
  $region71: #{transformer_forward.1} parent=0 // pred_check_branch
    %117 = sbr.rel (0) target = $region73
  $region72: #{transformer_forward.1} parent=0 // pred_region
    _
  $region73: #{transformer_forward.1} parent=0 // pred_fallthru
    _
  // Predicated region
  $region74: #{transformer_forward.1} parent=0 // pred_check
    _
  $region75: #{transformer_forward.1} parent=0 // pred_check_branch
    %119 = sbr.rel (0) target = $region77
  $region76: #{transformer_forward.1} parent=0 // pred_region
    _
  $region77: #{transformer_forward.1} parent=0 // pred_fallthru
    _
  // Predicated region
  $region78: #{transformer_forward.1} parent=0 // pred_check
    _
  $region79: #{transformer_forward.1} parent=0 // pred_check_branch
    %121 = sbr.rel (0) target = $region81
  $region80: #{transformer_forward.1} parent=0 // pred_region
    _
  $region81: #{transformer_forward.1} parent=0 // pred_fallthru
    _
  // Predicated region
  $region82: #{transformer_forward.1} parent=0 // pred_check
    _
  $region83: #{transformer_forward.1} parent=0 // pred_check_branch
    %123 = sbr.rel (0) target = $region85
  $region84: #{transformer_forward.1} parent=0 // pred_region
    _
  $region85: #{transformer_forward.1} parent=0 // pred_fallthru
    _
  // Predicated region
  $region86: #{transformer_forward.1} parent=0 // pred_check
    _
  $region87: #{transformer_forward.1} parent=0 // pred_check_branch
    %125 = sbr.rel (0) target = $region89
  $region88: #{transformer_forward.1} parent=0 // pred_region
    _
  $region89: #{transformer_forward.1} parent=0 // pred_fallthru
    _
  // Predicated region
  $region90: #{transformer_forward.1} parent=0 // pred_check
    _
  $region91: #{transformer_forward.1} parent=0 // pred_check_branch
    %127 = sbr.rel (0) target = $region93
  $region92: #{transformer_forward.1} parent=0 // pred_region
    _
  $region93: #{transformer_forward.1} parent=0 // pred_fallthru
    _
  // Predicated region
  $region94: #{transformer_forward.1} parent=0 // pred_check
    _
  $region95: #{transformer_forward.1} parent=0 // pred_check_branch
    %129 = sbr.rel (0) target = $region97
  $region96: #{transformer_forward.1} parent=0 // pred_region
    _
  $region97: #{transformer_forward.1} parent=0 // pred_fallthru
    _
  // Predicated region
  $region98: #{transformer_forward.1} parent=0 // pred_check
    _
  $region99: #{transformer_forward.1} parent=0 // pred_check_branch
    %131 = sbr.rel (0) target = $region101
  $region100: #{transformer_forward.1} parent=0 // pred_region
    _
  $region101: #{transformer_forward.1} parent=0 // pred_fallthru
    _
  // Predicated region
  $region102: #{transformer_forward.1} parent=0 // pred_check
    _
  $region103: #{transformer_forward.1} parent=0 // pred_check_branch
    %133 = sbr.rel (0) target = $region105
  $region104: #{transformer_forward.1} parent=0 // pred_region
    _
  $region105: #{transformer_forward.1} parent=0 // pred_fallthru
    _
  // Predicated region
  $region106: #{transformer_forward.1} parent=0 // pred_check
    _
  $region107: #{transformer_forward.1} parent=0 // pred_check_branch
    %135 = sbr.rel (0) target = $region109
  $region108: #{transformer_forward.1} parent=0 // pred_region
    _
  $region109: #{transformer_forward.1} parent=0 // pred_fallthru
    _
  // Predicated region
  $region110: #{transformer_forward.1} parent=0 // pred_check
    _
  $region111: #{transformer_forward.1} parent=0 // pred_check_branch
    %137 = sbr.rel (0) target = $region113
  $region112: #{transformer_forward.1} parent=0 // pred_region
    _
  $region113: #{transformer_forward.1} parent=0 // pred_fallthru
    _
  // Predicated region
  $region114: #{transformer_forward.1} parent=0 // pred_check
    _
  $region115: #{transformer_forward.1} parent=0 // pred_check_branch
    %139 = sbr.rel (0) target = $region117
  $region116: #{transformer_forward.1} parent=0 // pred_region
    _
  $region117: #{transformer_forward.1} parent=0 // pred_fallthru
    _
  // Predicated region
  $region118: #{transformer_forward.1} parent=0 // pred_check
    _
  $region119: #{transformer_forward.1} parent=0 // pred_check_branch
    %141 = sbr.rel (0) target = $region121
  $region120: #{transformer_forward.1} parent=0 // pred_region
    _
  $region121: #{transformer_forward.1} parent=0 // pred_fallthru
    _
  // Predicated region
  $region122: #{transformer_forward.1} parent=0 // pred_check
    _
  $region123: #{transformer_forward.1} parent=0 // pred_check_branch
    %143 = sbr.rel (0) target = $region125
  $region124: #{transformer_forward.1} parent=0 // pred_region
    _
  $region125: #{transformer_forward.1} parent=0 // pred_fallthru
    _
  // Predicated region
  $region126: #{transformer_forward.1} parent=0 // pred_check
    _
  $region127: #{transformer_forward.1} parent=0 // pred_check_branch
    %145 = sbr.rel (0) target = $region129
  $region128: #{transformer_forward.1} parent=0 // pred_region
    _
  $region129: #{transformer_forward.1} parent=0 // pred_fallthru
    _
  // Predicated region
  $region130: #{transformer_forward.1} parent=0 // pred_check
    _
  $region131: #{transformer_forward.1} parent=0 // pred_check_branch
    %147 = sbr.rel (0) target = $region133
  $region132: #{transformer_forward.1} parent=0 // pred_region
    _
  $region133: #{transformer_forward.1} parent=0 // pred_fallthru
    _
  // Predicated region
  $region134: #{transformer_forward.1} parent=0 // pred_check
    _
  $region135: #{transformer_forward.1} parent=0 // pred_check_branch
    %149 = sbr.rel (0) target = $region137
  $region136: #{transformer_forward.1} parent=0 // pred_region
    _
  $region137: #{transformer_forward.1} parent=0 // pred_fallthru
    _
  // Predicated region
  $region138: #{transformer_forward.1} parent=0 // pred_check
    _
  $region139: #{transformer_forward.1} parent=0 // pred_check_branch
    %151 = sbr.rel (0) target = $region141
  $region140: #{transformer_forward.1} parent=0 // pred_region
    _
  $region141: #{transformer_forward.1} parent=0 // pred_fallthru
    _
  // Predicated region
  $region142: #{transformer_forward.1} parent=0 // pred_check
    _
  $region143: #{transformer_forward.1} parent=0 // pred_check_branch
    %153 = sbr.rel (0) target = $region145
  $region144: #{transformer_forward.1} parent=0 // pred_region
    _
  $region145: #{transformer_forward.1} parent=0 // pred_fallthru
    _
  // Predicated region
  $region146: #{transformer_forward.1} parent=0 // pred_check
    _
  $region147: #{transformer_forward.1} parent=0 // pred_check_branch
    %155 = sbr.rel (0) target = $region149
  $region148: #{transformer_forward.1} parent=0 // pred_region
    _
  $region149: #{transformer_forward.1} parent=0 // pred_fallthru
    _
  // Predicated region
  $region150: #{transformer_forward.1} parent=0 // pred_check
    _
  $region151: #{transformer_forward.1} parent=0 // pred_check_branch
    %157 = sbr.rel (0) target = $region153
  $region152: #{transformer_forward.1} parent=0 // pred_region
    _
  $region153: #{transformer_forward.1} parent=0 // pred_fallthru
    _
  %v159 = vld [vmem:[%s1] sm:$0xff]
  %v160 = vld [vmem:[%s1 + $0x8] sm:$0xff]
  %v161 = vld [vmem:[%s5] sm:$0x3]
  %v162 = vpack.c.bf16 %v160, %v159
  %v163 = vld [vmem:[%s7] sm:$0x1]
  %v165 = vperm.slane %v163, 0
  %vm167 = vcmask 31744
  %v169 = vsel %vm167, %v162, 0
  %vm171 = vcmask 1041408
  %v173 = vsel %vm171, %v161, 0
  %175 = vmatpush.bf16.msra.mxu0 0
  %176 = vmatpush.bf16.msra.mxu0 0
  %177 = vmatpush.bf16.msra.mxu0 0
  %178 = vmatpush.bf16.msra.mxu0 0
  %179 = vmatpush.bf16.msra.mxu0 0
  %180 = vmatpush.bf16.msra.mxu0 0
  %181 = vmatpush.bf16.msra.mxu0 0
  %182 = vmatpush.bf16.msra.mxu0 %v173
  %183 = vmatmul.bf16.gmra.mxu0 %v169
  %v184 = vpop.f32.mrf.mxu0
  %v185 = vadd.f32 %v165, %v184
  %v186 = vpop.f32.mrf.mxu0
  %v187 = vadd.f32 %v165, %v186
  %188 = vdwg.mxu0
  %v189 = vld [vmem:[%s3] sm:$0xff]
  %v190 = vld [vmem:[%s3 + $0x8] sm:$0xff]
  %v191 = vadd.f32 %v185, %v189
  %v192 = vadd.f32 %v187, %v190
  %v193 = vld [vmem:[%s9] sm:$0xf]
  %v194 = vld [vmem:[%s9 + $0x4] sm:$0xf]
  %v195 = vld [vmem:[%s9 + $0x8] sm:$0xf]
  %v196 = vld [vmem:[%s9 + $0xc] sm:$0xf]
  %v197 = vld [vmem:[%s11] sm:$0x1]
  %v198 = vld [vmem:[%s13] sm:$0xf]
  %v199 = vld [vmem:[%s13 + $0x4] sm:$0xf]
  %v200 = vld [vmem:[%s13 + $0x8] sm:$0xf]
  %v201 = vld [vmem:[%s13 + $0xc] sm:$0xf]
  %v202 = vld [vmem:[%s15] sm:$0x1]
  %v203 = vpack.c.bf16 %v192, %v191
  %v205 = vperm.slane %v197, 0
  %v211 = vunpack.c.l.b16 %v193
  %v212 = vunpack.c.l.b16 %v194
  %v213 = vunpack.c.l.b16 %v195
  %v214 = vunpack.c.l.b16 %v196
  %v215 = vpack.c.b16 %v212, %v211
  %v216 = vpack.c.b16 %v214, %v213
  %vm219 = vcmask 261120
  %v221 = vsel %vm219, %v203, 0
  %223 = vmatpush.bf16.msra.mxu0 0
  %224 = vmatpush.bf16.msra.mxu0 0
  %225 = vmatpush.bf16.msra.mxu0 0
  %226 = vmatpush.bf16.msra.mxu0 0
  %227 = vmatpush.bf16.msra.mxu0 0
  %228 = vmatpush.bf16.msra.mxu0 0
  %229 = vmatpush.bf16.msra.mxu0 %v216
  %230 = vmatpush.bf16.msra.mxu0 %v215
  %231 = vmatmul.bf16.gmra.mxu0 %v221
  %v232 = vpop.f32.mrf.mxu0
  %v233 = vadd.f32 %v205, %v232
  %v234 = vpop.f32.mrf.mxu0
  %v235 = vadd.f32 %v205, %v234
  %236 = vdwg.mxu0
  %v237 = vmul.f32 %v233, 0.35355338
  %v238 = vpack.c.bf16 %v237, %v237
  %240 = vrot.lane.b32.xlu0 %v233, 96
  %v241 = vpop.permute.xlu0 %240
  %243 = vxpose.xlu0.b32.start [1/16] %v241, 128
  %244 = vxpose.xlu0.b32.cont [2/16] 0.0, 128
  %245 = vxpose.xlu0.b32.cont [3/16] 0.0, 128
  %246 = vxpose.xlu0.b32.cont [4/16] 0.0, 128
  %247 = vxpose.xlu0.b32.cont [5/16] 0.0, 128
  %248 = vxpose.xlu0.b32.cont [6/16] 0.0, 128
  %249 = vxpose.xlu0.b32.cont [7/16] 0.0, 128
  %250 = vxpose.xlu0.b32.cont [8/16] 0.0, 128
  %251 = vxpose.xlu0.b32.cont [9/16] 0.0, 128
  %252 = vxpose.xlu0.b32.cont [10/16] 0.0, 128
  %253 = vxpose.xlu0.b32.cont [11/16] 0.0, 128
  %254 = vxpose.xlu0.b32.cont [12/16] 0.0, 128
  %255 = vxpose.xlu0.b32.cont [13/16] 0.0, 128
  %256 = vxpose.xlu0.b32.cont [14/16] 0.0, 128
  %257 = vxpose.xlu0.b32.cont [15/16] 0.0, 128
  %258 = vxpose.xlu0.b32.end [16/16] 0.0, 128
  %v259 = vpop.trf.xlu0
  %v260 = vpop.trf.xlu0
  %v261 = vpop.trf.xlu0
  %v262 = vpop.trf.xlu0
  %v263 = vpop.trf.xlu0
  %v264 = vpop.trf.xlu0
  %v265 = vpop.trf.xlu0
  %v266 = vpop.trf.xlu0
  %v267 = vpop.trf.xlu0
  %v268 = vpop.trf.xlu0
  %v269 = vpop.trf.xlu0
  %v270 = vpop.trf.xlu0
  %v271 = vpop.trf.xlu0
  %v272 = vpop.trf.xlu0
  %v273 = vpop.trf.xlu0
  %v274 = vpop.trf.xlu0
  %v275 = vpack.c.bf16 %v259, %v259
  %vm276 = vcmask 64512
  %v278 = vsel %vm276, %v238, 0
  %vm280 = vcmask 1043456
  %v282 = vsel %vm280, %v275, 0
  %284 = vmatpush.bf16.msra.mxu0 0
  %285 = vmatpush.bf16.msra.mxu0 0
  %286 = vmatpush.bf16.msra.mxu0 0
  %287 = vmatpush.bf16.msra.mxu0 0
  %288 = vmatpush.bf16.msra.mxu0 0
  %289 = vmatpush.bf16.msra.mxu0 0
  %290 = vmatpush.bf16.msra.mxu0 0
  %291 = vmatpush.bf16.msra.mxu0 %v282
  %292 = vmatmul.bf16.gmra.mxu0 %v278
  %v293 = vpop.f32.mrf.mxu0
  %v294 = vadd.f32 0.0, %v293
  %v295 = vpop.f32.mrf.mxu0
  %296 = vdwg.mxu0
  %v297 = vsel %vm276, %v294, -inf
  %298 = vmax.xlane.f32.xlu0 %v297
  %v299 = vpop.xlane.xlu0 %298
  %v300 = vsub.f32 %v294, %v299
  %v301 = vmul.f32 %v300, 1.442695
  %v302 = vpow.pop %v301
  %v303 = vsel %vm276, %v302, 0.0
  %304 = vadd.xlane.f32.xlu0 %v303
  %v305 = vpop.xlane.xlu0 %304
  %v306 = vrcp.pop %v305
  %v307 = vmul.f32 %v302, %v306
  %v308 = vpack.c.bf16 %v307, %v307
  %v309 = vpack.c.bf16 %v233, %v233
  %311 = vrot.lane.b32.xlu0 %v309, 64
  %v312 = vpop.permute.xlu0 %311
  %v314 = vsel %vm276, %v308, 0
  %v317 = vsel %vm280, %v312, 0
  %319 = vmatpush.bf16.msra.mxu0 0
  %320 = vmatpush.bf16.msra.mxu0 0
  %321 = vmatpush.bf16.msra.mxu0 0
  %322 = vmatpush.bf16.msra.mxu0 0
  %323 = vmatpush.bf16.msra.mxu0 0
  %324 = vmatpush.bf16.msra.mxu0 0
  %325 = vmatpush.bf16.msra.mxu0 0
  %326 = vmatpush.bf16.msra.mxu0 %v317
  %327 = vmatmul.bf16.gmra.mxu0 %v314
  %v328 = vpop.f32.mrf.mxu0
  %v329 = vadd.f32 0.0, %v328
  %v330 = vpop.f32.mrf.mxu0
  %331 = vdwg.mxu0
  %332 = vrot.lane.b32.xlu0 %v233, 88
  %v333 = vpop.permute.xlu0 %332
  %335 = vxpose.xlu0.b32.start [1/16] %v333, 128
  %336 = vxpose.xlu0.b32.cont [2/16] 0.0, 128
  %337 = vxpose.xlu0.b32.cont [3/16] 0.0, 128
  %338 = vxpose.xlu0.b32.cont [4/16] 0.0, 128
  %339 = vxpose.xlu0.b32.cont [5/16] 0.0, 128
  %340 = vxpose.xlu0.b32.cont [6/16] 0.0, 128
  %341 = vxpose.xlu0.b32.cont [7/16] 0.0, 128
  %342 = vxpose.xlu0.b32.cont [8/16] 0.0, 128
  %343 = vxpose.xlu0.b32.cont [9/16] 0.0, 128
  %344 = vxpose.xlu0.b32.cont [10/16] 0.0, 128
  %345 = vxpose.xlu0.b32.cont [11/16] 0.0, 128
  %346 = vxpose.xlu0.b32.cont [12/16] 0.0, 128
  %347 = vxpose.xlu0.b32.cont [13/16] 0.0, 128
  %348 = vxpose.xlu0.b32.cont [14/16] 0.0, 128
  %349 = vxpose.xlu0.b32.cont [15/16] 0.0, 128
  %350 = vxpose.xlu0.b32.end [16/16] 0.0, 128
  %v351 = vpop.trf.xlu0
  %v352 = vpop.trf.xlu0
  %v353 = vpop.trf.xlu0
  %v354 = vpop.trf.xlu0
  %v355 = vpop.trf.xlu0
  %v356 = vpop.trf.xlu0
  %v357 = vpop.trf.xlu0
  %v358 = vpop.trf.xlu0
  %v359 = vpop.trf.xlu0
  %v360 = vpop.trf.xlu0
  %v361 = vpop.trf.xlu0
  %v362 = vpop.trf.xlu0
  %v363 = vpop.trf.xlu0
  %v364 = vpop.trf.xlu0
  %v365 = vpop.trf.xlu0
  %v366 = vpop.trf.xlu0
  %v367 = vpack.c.bf16 %v351, %v351
  %369 = vrot.lane.b32.xlu0 %v238, 120
  %v370 = vpop.permute.xlu0 %369
  %v372 = vsel %vm276, %v370, 0
  %v375 = vsel %vm280, %v367, 0
  %377 = vmatpush.bf16.msra.mxu0 0
  %378 = vmatpush.bf16.msra.mxu0 0
  %379 = vmatpush.bf16.msra.mxu0 0
  %380 = vmatpush.bf16.msra.mxu0 0
  %381 = vmatpush.bf16.msra.mxu0 0
  %382 = vmatpush.bf16.msra.mxu0 0
  %383 = vmatpush.bf16.msra.mxu0 0
  %384 = vmatpush.bf16.msra.mxu0 %v375
  %385 = vmatmul.bf16.gmra.mxu0 %v372
  %v386 = vpop.f32.mrf.mxu0
  %v387 = vadd.f32 0.0, %v386
  %v388 = vpop.f32.mrf.mxu0
  %389 = vdwg.mxu0
  %v390 = vsel %vm276, %v387, -inf
  %391 = vmax.xlane.f32.xlu0 %v390
  %v392 = vpop.xlane.xlu0 %391
  %v393 = vsub.f32 %v387, %v392
  %v394 = vmul.f32 %v393, 1.442695
  %v395 = vpow.pop %v394
  %v396 = vsel %vm276, %v395, 0.0
  %397 = vadd.xlane.f32.xlu0 %v396
  %v398 = vpop.xlane.xlu0 %397
  %v399 = vrcp.pop %v398
  %v400 = vmul.f32 %v395, %v399
  %v401 = vpack.c.bf16 %v400, %v400
  %402 = vrot.lane.b32.xlu0 %v309, 56
  %v403 = vpop.permute.xlu0 %402
  %v405 = vsel %vm276, %v401, 0
  %v408 = vsel %vm280, %v403, 0
  %410 = vmatpush.bf16.msra.mxu0 0
  %411 = vmatpush.bf16.msra.mxu0 0
  %412 = vmatpush.bf16.msra.mxu0 0
  %413 = vmatpush.bf16.msra.mxu0 0
  %414 = vmatpush.bf16.msra.mxu0 0
  %415 = vmatpush.bf16.msra.mxu0 0
  %416 = vmatpush.bf16.msra.mxu0 0
  %417 = vmatpush.bf16.msra.mxu0 %v408
  %418 = vmatmul.bf16.gmra.mxu0 %v405
  %v419 = vpop.f32.mrf.mxu0
  %v420 = vadd.f32 0.0, %v419
  %v421 = vpop.f32.mrf.mxu0
  %422 = vdwg.mxu0
  %423 = vrot.lane.b32.xlu0 %v233, 80
  %v424 = vpop.permute.xlu0 %423
  %426 = vxpose.xlu0.b32.start [1/16] %v424, 128
  %427 = vxpose.xlu0.b32.cont [2/16] 0.0, 128
  %428 = vxpose.xlu0.b32.cont [3/16] 0.0, 128
  %429 = vxpose.xlu0.b32.cont [4/16] 0.0, 128
  %430 = vxpose.xlu0.b32.cont [5/16] 0.0, 128
  %431 = vxpose.xlu0.b32.cont [6/16] 0.0, 128
  %432 = vxpose.xlu0.b32.cont [7/16] 0.0, 128
  %433 = vxpose.xlu0.b32.cont [8/16] 0.0, 128
  %434 = vxpose.xlu0.b32.cont [9/16] 0.0, 128
  %435 = vxpose.xlu0.b32.cont [10/16] 0.0, 128
  %436 = vxpose.xlu0.b32.cont [11/16] 0.0, 128
  %437 = vxpose.xlu0.b32.cont [12/16] 0.0, 128
  %438 = vxpose.xlu0.b32.cont [13/16] 0.0, 128
  %439 = vxpose.xlu0.b32.cont [14/16] 0.0, 128
  %440 = vxpose.xlu0.b32.cont [15/16] 0.0, 128
  %441 = vxpose.xlu0.b32.end [16/16] 0.0, 128
  %v442 = vpop.trf.xlu0
  %v443 = vpop.trf.xlu0
  %v444 = vpop.trf.xlu0
  %v445 = vpop.trf.xlu0
  %v446 = vpop.trf.xlu0
  %v447 = vpop.trf.xlu0
  %v448 = vpop.trf.xlu0
  %v449 = vpop.trf.xlu0
  %v450 = vpop.trf.xlu0
  %v451 = vpop.trf.xlu0
  %v452 = vpop.trf.xlu0
  %v453 = vpop.trf.xlu0
  %v454 = vpop.trf.xlu0
  %v455 = vpop.trf.xlu0
  %v456 = vpop.trf.xlu0
  %v457 = vpop.trf.xlu0
  %v458 = vpack.c.bf16 %v442, %v442
  %459 = vrot.lane.b32.xlu0 %v238, 112
  %v460 = vpop.permute.xlu0 %459
  %v462 = vsel %vm276, %v460, 0
  %v465 = vsel %vm280, %v458, 0
  %467 = vmatpush.bf16.msra.mxu0 0
  %468 = vmatpush.bf16.msra.mxu0 0
  %469 = vmatpush.bf16.msra.mxu0 0
  %470 = vmatpush.bf16.msra.mxu0 0
  %471 = vmatpush.bf16.msra.mxu0 0
  %472 = vmatpush.bf16.msra.mxu0 0
  %473 = vmatpush.bf16.msra.mxu0 0
  %474 = vmatpush.bf16.msra.mxu0 %v465
  %475 = vmatmul.bf16.gmra.mxu0 %v462
  %v476 = vpop.f32.mrf.mxu0
  %v477 = vadd.f32 0.0, %v476
  %v478 = vpop.f32.mrf.mxu0
  %479 = vdwg.mxu0
  %v480 = vsel %vm276, %v477, -inf
  %481 = vmax.xlane.f32.xlu0 %v480
  %v482 = vpop.xlane.xlu0 %481
  %v483 = vsub.f32 %v477, %v482
  %v484 = vmul.f32 %v483, 1.442695
  %v485 = vpow.pop %v484
  %v486 = vsel %vm276, %v485, 0.0
  %487 = vadd.xlane.f32.xlu0 %v486
  %v488 = vpop.xlane.xlu0 %487
  %v489 = vrcp.pop %v488
  %v490 = vmul.f32 %v485, %v489
  %v491 = vpack.c.bf16 %v490, %v490
  %492 = vrot.lane.b32.xlu0 %v309, 48
  %v493 = vpop.permute.xlu0 %492
  %v495 = vsel %vm276, %v491, 0
  %v498 = vsel %vm280, %v493, 0
  %500 = vmatpush.bf16.msra.mxu0 0
  %501 = vmatpush.bf16.msra.mxu0 0
  %502 = vmatpush.bf16.msra.mxu0 0
  %503 = vmatpush.bf16.msra.mxu0 0
  %504 = vmatpush.bf16.msra.mxu0 0
  %505 = vmatpush.bf16.msra.mxu0 0
  %506 = vmatpush.bf16.msra.mxu0 0
  %507 = vmatpush.bf16.msra.mxu0 %v498
  %508 = vmatmul.bf16.gmra.mxu0 %v495
  %v509 = vpop.f32.mrf.mxu0
  %v510 = vadd.f32 0.0, %v509
  %v511 = vpop.f32.mrf.mxu0
  %512 = vdwg.mxu0
  %513 = vrot.lane.b32.xlu0 %v233, 72
  %v514 = vpop.permute.xlu0 %513
  %516 = vxpose.xlu0.b32.start [1/16] %v514, 128
  %517 = vxpose.xlu0.b32.cont [2/16] 0.0, 128
  %518 = vxpose.xlu0.b32.cont [3/16] 0.0, 128
  %519 = vxpose.xlu0.b32.cont [4/16] 0.0, 128
  %520 = vxpose.xlu0.b32.cont [5/16] 0.0, 128
  %521 = vxpose.xlu0.b32.cont [6/16] 0.0, 128
  %522 = vxpose.xlu0.b32.cont [7/16] 0.0, 128
  %523 = vxpose.xlu0.b32.cont [8/16] 0.0, 128
  %524 = vxpose.xlu0.b32.cont [9/16] 0.0, 128
  %525 = vxpose.xlu0.b32.cont [10/16] 0.0, 128
  %526 = vxpose.xlu0.b32.cont [11/16] 0.0, 128
  %527 = vxpose.xlu0.b32.cont [12/16] 0.0, 128
  %528 = vxpose.xlu0.b32.cont [13/16] 0.0, 128
  %529 = vxpose.xlu0.b32.cont [14/16] 0.0, 128
  %530 = vxpose.xlu0.b32.cont [15/16] 0.0, 128
  %531 = vxpose.xlu0.b32.end [16/16] 0.0, 128
  %v532 = vpop.trf.xlu0
  %v533 = vpop.trf.xlu0
  %v534 = vpop.trf.xlu0
  %v535 = vpop.trf.xlu0
  %v536 = vpop.trf.xlu0
  %v537 = vpop.trf.xlu0
  %v538 = vpop.trf.xlu0
  %v539 = vpop.trf.xlu0
  %v540 = vpop.trf.xlu0
  %v541 = vpop.trf.xlu0
  %v542 = vpop.trf.xlu0
  %v543 = vpop.trf.xlu0
  %v544 = vpop.trf.xlu0
  %v545 = vpop.trf.xlu0
  %v546 = vpop.trf.xlu0
  %v547 = vpop.trf.xlu0
  %v548 = vpack.c.bf16 %v532, %v532
  %549 = vrot.lane.b32.xlu0 %v238, 104
  %v550 = vpop.permute.xlu0 %549
  %v552 = vsel %vm276, %v550, 0
  %v555 = vsel %vm280, %v548, 0
  %557 = vmatpush.bf16.msra.mxu0 0
  %558 = vmatpush.bf16.msra.mxu0 0
  %559 = vmatpush.bf16.msra.mxu0 0
  %560 = vmatpush.bf16.msra.mxu0 0
  %561 = vmatpush.bf16.msra.mxu0 0
  %562 = vmatpush.bf16.msra.mxu0 0
  %563 = vmatpush.bf16.msra.mxu0 0
  %564 = vmatpush.bf16.msra.mxu0 %v555
  %565 = vmatmul.bf16.gmra.mxu0 %v552
  %v566 = vpop.f32.mrf.mxu0
  %v567 = vadd.f32 0.0, %v566
  %v568 = vpop.f32.mrf.mxu0
  %569 = vdwg.mxu0
  %v570 = vsel %vm276, %v567, -inf
  %571 = vmax.xlane.f32.xlu0 %v570
  %v572 = vpop.xlane.xlu0 %571
  %v573 = vsub.f32 %v567, %v572
  %v574 = vmul.f32 %v573, 1.442695
  %v575 = vpow.pop %v574
  %v576 = vsel %vm276, %v575, 0.0
  %577 = vadd.xlane.f32.xlu0 %v576
  %v578 = vpop.xlane.xlu0 %577
  %v579 = vrcp.pop %v578
  %v580 = vmul.f32 %v575, %v579
  %v581 = vpack.c.bf16 %v580, %v580
  %582 = vrot.lane.b32.xlu0 %v309, 40
  %v583 = vpop.permute.xlu0 %582
  %v585 = vsel %vm276, %v581, 0
  %v588 = vsel %vm280, %v583, 0
  %590 = vmatpush.bf16.msra.mxu0 0
  %591 = vmatpush.bf16.msra.mxu0 0
  %592 = vmatpush.bf16.msra.mxu0 0
  %593 = vmatpush.bf16.msra.mxu0 0
  %594 = vmatpush.bf16.msra.mxu0 0
  %595 = vmatpush.bf16.msra.mxu0 0
  %596 = vmatpush.bf16.msra.mxu0 0
  %597 = vmatpush.bf16.msra.mxu0 %v588
  %598 = vmatmul.bf16.gmra.mxu0 %v585
  %v599 = vpop.f32.mrf.mxu0
  %v600 = vadd.f32 0.0, %v599
  %v601 = vpop.f32.mrf.mxu0
  %602 = vdwg.mxu0
  %604 = vrot.lane.b32.xlu0 %v420, 8
  %v605 = vpop.permute.xlu0 %604
  %608 = vrot.lane.b32.xlu0 %v510, 16
  %v609 = vpop.permute.xlu0 %608
  %612 = vrot.lane.b32.xlu0 %v600, 24
  %v613 = vpop.permute.xlu0 %612
  %v615 = vsel %vm276, %v329, %v605
  %vm616 = vcmask 130048
  %v617 = vsel %vm616, %v615, %v609
  %vm618 = vcmask 195584
  %v619 = vsel %vm618, %v617, %v613
  %v620 = vmul.f32 %v235, 0.35355338
  %v621 = vpack.c.bf16 %v620, %v620
  %623 = vrot.lane.b32.xlu0 %v235, 96
  %v624 = vpop.permute.xlu0 %623
  %626 = vxpose.xlu0.b32.start [1/16] %v624, 128
  %627 = vxpose.xlu0.b32.cont [2/16] 0.0, 128
  %628 = vxpose.xlu0.b32.cont [3/16] 0.0, 128
  %629 = vxpose.xlu0.b32.cont [4/16] 0.0, 128
  %630 = vxpose.xlu0.b32.cont [5/16] 0.0, 128
  %631 = vxpose.xlu0.b32.cont [6/16] 0.0, 128
  %632 = vxpose.xlu0.b32.cont [7/16] 0.0, 128
  %633 = vxpose.xlu0.b32.cont [8/16] 0.0, 128
  %634 = vxpose.xlu0.b32.cont [9/16] 0.0, 128
  %635 = vxpose.xlu0.b32.cont [10/16] 0.0, 128
  %636 = vxpose.xlu0.b32.cont [11/16] 0.0, 128
  %637 = vxpose.xlu0.b32.cont [12/16] 0.0, 128
  %638 = vxpose.xlu0.b32.cont [13/16] 0.0, 128
  %639 = vxpose.xlu0.b32.cont [14/16] 0.0, 128
  %640 = vxpose.xlu0.b32.cont [15/16] 0.0, 128
  %641 = vxpose.xlu0.b32.end [16/16] 0.0, 128
  %v642 = vpop.trf.xlu0
  %v643 = vpop.trf.xlu0
  %v644 = vpop.trf.xlu0
  %v645 = vpop.trf.xlu0
  %v646 = vpop.trf.xlu0
  %v647 = vpop.trf.xlu0
  %v648 = vpop.trf.xlu0
  %v649 = vpop.trf.xlu0
  %v650 = vpop.trf.xlu0
  %v651 = vpop.trf.xlu0
  %v652 = vpop.trf.xlu0
  %v653 = vpop.trf.xlu0
  %v654 = vpop.trf.xlu0
  %v655 = vpop.trf.xlu0
  %v656 = vpop.trf.xlu0
  %v657 = vpop.trf.xlu0
  %v658 = vpack.c.bf16 %v642, %v642
  %v660 = vsel %vm276, %v621, 0
  %v663 = vsel %vm280, %v658, 0
  %665 = vmatpush.bf16.msra.mxu0 0
  %666 = vmatpush.bf16.msra.mxu0 0
  %667 = vmatpush.bf16.msra.mxu0 0
  %668 = vmatpush.bf16.msra.mxu0 0
  %669 = vmatpush.bf16.msra.mxu0 0
  %670 = vmatpush.bf16.msra.mxu0 0
  %671 = vmatpush.bf16.msra.mxu0 0
  %672 = vmatpush.bf16.msra.mxu0 %v663
  %673 = vmatmul.bf16.gmra.mxu0 %v660
  %v674 = vpop.f32.mrf.mxu0
  %v675 = vadd.f32 0.0, %v674
  %v676 = vpop.f32.mrf.mxu0
  %677 = vdwg.mxu0
  %v678 = vsel %vm276, %v675, -inf
  %679 = vmax.xlane.f32.xlu0 %v678
  %v680 = vpop.xlane.xlu0 %679
  %v681 = vsub.f32 %v675, %v680
  %v682 = vmul.f32 %v681, 1.442695
  %v683 = vpow.pop %v682
  %v684 = vsel %vm276, %v683, 0.0
  %685 = vadd.xlane.f32.xlu0 %v684
  %v686 = vpop.xlane.xlu0 %685
  %v687 = vrcp.pop %v686
  %v688 = vmul.f32 %v683, %v687
  %v689 = vpack.c.bf16 %v688, %v688
  %v690 = vpack.c.bf16 %v235, %v235
  %692 = vrot.lane.b32.xlu0 %v690, 64
  %v693 = vpop.permute.xlu0 %692
  %v695 = vsel %vm276, %v689, 0
  %v698 = vsel %vm280, %v693, 0
  %700 = vmatpush.bf16.msra.mxu0 0
  %701 = vmatpush.bf16.msra.mxu0 0
  %702 = vmatpush.bf16.msra.mxu0 0
  %703 = vmatpush.bf16.msra.mxu0 0
  %704 = vmatpush.bf16.msra.mxu0 0
  %705 = vmatpush.bf16.msra.mxu0 0
  %706 = vmatpush.bf16.msra.mxu0 0
  %707 = vmatpush.bf16.msra.mxu0 %v698
  %708 = vmatmul.bf16.gmra.mxu0 %v695
  %v709 = vpop.f32.mrf.mxu0
  %v710 = vadd.f32 0.0, %v709
  %v711 = vpop.f32.mrf.mxu0
  %712 = vdwg.mxu0
  %713 = vrot.lane.b32.xlu0 %v235, 88
  %v714 = vpop.permute.xlu0 %713
  %716 = vxpose.xlu0.b32.start [1/16] %v714, 128
  %717 = vxpose.xlu0.b32.cont [2/16] 0.0, 128
  %718 = vxpose.xlu0.b32.cont [3/16] 0.0, 128
  %719 = vxpose.xlu0.b32.cont [4/16] 0.0, 128
  %720 = vxpose.xlu0.b32.cont [5/16] 0.0, 128
  %721 = vxpose.xlu0.b32.cont [6/16] 0.0, 128
  %722 = vxpose.xlu0.b32.cont [7/16] 0.0, 128
  %723 = vxpose.xlu0.b32.cont [8/16] 0.0, 128
  %724 = vxpose.xlu0.b32.cont [9/16] 0.0, 128
  %725 = vxpose.xlu0.b32.cont [10/16] 0.0, 128
  %726 = vxpose.xlu0.b32.cont [11/16] 0.0, 128
  %727 = vxpose.xlu0.b32.cont [12/16] 0.0, 128
  %728 = vxpose.xlu0.b32.cont [13/16] 0.0, 128
  %729 = vxpose.xlu0.b32.cont [14/16] 0.0, 128
  %730 = vxpose.xlu0.b32.cont [15/16] 0.0, 128
  %731 = vxpose.xlu0.b32.end [16/16] 0.0, 128
  %v732 = vpop.trf.xlu0
  %v733 = vpop.trf.xlu0
  %v734 = vpop.trf.xlu0
  %v735 = vpop.trf.xlu0
  %v736 = vpop.trf.xlu0
  %v737 = vpop.trf.xlu0
  %v738 = vpop.trf.xlu0
  %v739 = vpop.trf.xlu0
  %v740 = vpop.trf.xlu0
  %v741 = vpop.trf.xlu0
  %v742 = vpop.trf.xlu0
  %v743 = vpop.trf.xlu0
  %v744 = vpop.trf.xlu0
  %v745 = vpop.trf.xlu0
  %v746 = vpop.trf.xlu0
  %v747 = vpop.trf.xlu0
  %v748 = vpack.c.bf16 %v732, %v732
  %750 = vrot.lane.b32.xlu0 %v621, 120
  %v751 = vpop.permute.xlu0 %750
  %v753 = vsel %vm276, %v751, 0
  %v756 = vsel %vm280, %v748, 0
  %758 = vmatpush.bf16.msra.mxu0 0
  %759 = vmatpush.bf16.msra.mxu0 0
  %760 = vmatpush.bf16.msra.mxu0 0
  %761 = vmatpush.bf16.msra.mxu0 0
  %762 = vmatpush.bf16.msra.mxu0 0
  %763 = vmatpush.bf16.msra.mxu0 0
  %764 = vmatpush.bf16.msra.mxu0 0
  %765 = vmatpush.bf16.msra.mxu0 %v756
  %766 = vmatmul.bf16.gmra.mxu0 %v753
  %v767 = vpop.f32.mrf.mxu0
  %v768 = vadd.f32 0.0, %v767
  %v769 = vpop.f32.mrf.mxu0
  %770 = vdwg.mxu0
  %v771 = vsel %vm276, %v768, -inf
  %772 = vmax.xlane.f32.xlu0 %v771
  %v773 = vpop.xlane.xlu0 %772
  %v774 = vsub.f32 %v768, %v773
  %v775 = vmul.f32 %v774, 1.442695
  %v776 = vpow.pop %v775
  %v777 = vsel %vm276, %v776, 0.0
  %778 = vadd.xlane.f32.xlu0 %v777
  %v779 = vpop.xlane.xlu0 %778
  %v780 = vrcp.pop %v779
  %v781 = vmul.f32 %v776, %v780
  %v782 = vpack.c.bf16 %v781, %v781
  %783 = vrot.lane.b32.xlu0 %v690, 56
  %v784 = vpop.permute.xlu0 %783
  %v786 = vsel %vm276, %v782, 0
  %v789 = vsel %vm280, %v784, 0
  %791 = vmatpush.bf16.msra.mxu0 0
  %792 = vmatpush.bf16.msra.mxu0 0
  %793 = vmatpush.bf16.msra.mxu0 0
  %794 = vmatpush.bf16.msra.mxu0 0
  %795 = vmatpush.bf16.msra.mxu0 0
  %796 = vmatpush.bf16.msra.mxu0 0
  %797 = vmatpush.bf16.msra.mxu0 0
  %798 = vmatpush.bf16.msra.mxu0 %v789
  %799 = vmatmul.bf16.gmra.mxu0 %v786
  %v800 = vpop.f32.mrf.mxu0
  %v801 = vadd.f32 0.0, %v800
  %v802 = vpop.f32.mrf.mxu0
  %803 = vdwg.mxu0
  %804 = vrot.lane.b32.xlu0 %v235, 80
  %v805 = vpop.permute.xlu0 %804
  %807 = vxpose.xlu0.b32.start [1/16] %v805, 128
  %808 = vxpose.xlu0.b32.cont [2/16] 0.0, 128
  %809 = vxpose.xlu0.b32.cont [3/16] 0.0, 128
  %810 = vxpose.xlu0.b32.cont [4/16] 0.0, 128
  %811 = vxpose.xlu0.b32.cont [5/16] 0.0, 128
  %812 = vxpose.xlu0.b32.cont [6/16] 0.0, 128
  %813 = vxpose.xlu0.b32.cont [7/16] 0.0, 128
  %814 = vxpose.xlu0.b32.cont [8/16] 0.0, 128
  %815 = vxpose.xlu0.b32.cont [9/16] 0.0, 128
  %816 = vxpose.xlu0.b32.cont [10/16] 0.0, 128
  %817 = vxpose.xlu0.b32.cont [11/16] 0.0, 128
  %818 = vxpose.xlu0.b32.cont [12/16] 0.0, 128
  %819 = vxpose.xlu0.b32.cont [13/16] 0.0, 128
  %820 = vxpose.xlu0.b32.cont [14/16] 0.0, 128
  %821 = vxpose.xlu0.b32.cont [15/16] 0.0, 128
  %822 = vxpose.xlu0.b32.end [16/16] 0.0, 128
  %v823 = vpop.trf.xlu0
  %v824 = vpop.trf.xlu0
  %v825 = vpop.trf.xlu0
  %v826 = vpop.trf.xlu0
  %v827 = vpop.trf.xlu0
  %v828 = vpop.trf.xlu0
  %v829 = vpop.trf.xlu0
  %v830 = vpop.trf.xlu0
  %v831 = vpop.trf.xlu0
  %v832 = vpop.trf.xlu0
  %v833 = vpop.trf.xlu0
  %v834 = vpop.trf.xlu0
  %v835 = vpop.trf.xlu0
  %v836 = vpop.trf.xlu0
  %v837 = vpop.trf.xlu0
  %v838 = vpop.trf.xlu0
  %v839 = vpack.c.bf16 %v823, %v823
  %840 = vrot.lane.b32.xlu0 %v621, 112
  %v841 = vpop.permute.xlu0 %840
  %v843 = vsel %vm276, %v841, 0
  %v846 = vsel %vm280, %v839, 0
  %848 = vmatpush.bf16.msra.mxu0 0
  %849 = vmatpush.bf16.msra.mxu0 0
  %850 = vmatpush.bf16.msra.mxu0 0
  %851 = vmatpush.bf16.msra.mxu0 0
  %852 = vmatpush.bf16.msra.mxu0 0
  %853 = vmatpush.bf16.msra.mxu0 0
  %854 = vmatpush.bf16.msra.mxu0 0
  %855 = vmatpush.bf16.msra.mxu0 %v846
  %856 = vmatmul.bf16.gmra.mxu0 %v843
  %v857 = vpop.f32.mrf.mxu0
  %v858 = vadd.f32 0.0, %v857
  %v859 = vpop.f32.mrf.mxu0
  %860 = vdwg.mxu0
  %v861 = vsel %vm276, %v858, -inf
  %862 = vmax.xlane.f32.xlu0 %v861
  %v863 = vpop.xlane.xlu0 %862
  %v864 = vsub.f32 %v858, %v863
  %v865 = vmul.f32 %v864, 1.442695
  %v866 = vpow.pop %v865
  %v867 = vsel %vm276, %v866, 0.0
  %868 = vadd.xlane.f32.xlu0 %v867
  %v869 = vpop.xlane.xlu0 %868
  %v870 = vrcp.pop %v869
  %v871 = vmul.f32 %v866, %v870
  %v872 = vpack.c.bf16 %v871, %v871
  %873 = vrot.lane.b32.xlu0 %v690, 48
  %v874 = vpop.permute.xlu0 %873
  %v876 = vsel %vm276, %v872, 0
  %v879 = vsel %vm280, %v874, 0
  %881 = vmatpush.bf16.msra.mxu0 0
  %882 = vmatpush.bf16.msra.mxu0 0
  %883 = vmatpush.bf16.msra.mxu0 0
  %884 = vmatpush.bf16.msra.mxu0 0
  %885 = vmatpush.bf16.msra.mxu0 0
  %886 = vmatpush.bf16.msra.mxu0 0
  %887 = vmatpush.bf16.msra.mxu0 0
  %888 = vmatpush.bf16.msra.mxu0 %v879
  %889 = vmatmul.bf16.gmra.mxu0 %v876
  %v890 = vpop.f32.mrf.mxu0
  %v891 = vadd.f32 0.0, %v890
  %v892 = vpop.f32.mrf.mxu0
  %893 = vdwg.mxu0
  %894 = vrot.lane.b32.xlu0 %v235, 72
  %v895 = vpop.permute.xlu0 %894
  %897 = vxpose.xlu0.b32.start [1/16] %v895, 128
  %898 = vxpose.xlu0.b32.cont [2/16] 0.0, 128
  %899 = vxpose.xlu0.b32.cont [3/16] 0.0, 128
  %900 = vxpose.xlu0.b32.cont [4/16] 0.0, 128
  %901 = vxpose.xlu0.b32.cont [5/16] 0.0, 128
  %902 = vxpose.xlu0.b32.cont [6/16] 0.0, 128
  %903 = vxpose.xlu0.b32.cont [7/16] 0.0, 128
  %904 = vxpose.xlu0.b32.cont [8/16] 0.0, 128
  %905 = vxpose.xlu0.b32.cont [9/16] 0.0, 128
  %906 = vxpose.xlu0.b32.cont [10/16] 0.0, 128
  %907 = vxpose.xlu0.b32.cont [11/16] 0.0, 128
  %908 = vxpose.xlu0.b32.cont [12/16] 0.0, 128
  %909 = vxpose.xlu0.b32.cont [13/16] 0.0, 128
  %910 = vxpose.xlu0.b32.cont [14/16] 0.0, 128
  %911 = vxpose.xlu0.b32.cont [15/16] 0.0, 128
  %912 = vxpose.xlu0.b32.end [16/16] 0.0, 128
  %v913 = vpop.trf.xlu0
  %v914 = vpop.trf.xlu0
  %v915 = vpop.trf.xlu0
  %v916 = vpop.trf.xlu0
  %v917 = vpop.trf.xlu0
  %v918 = vpop.trf.xlu0
  %v919 = vpop.trf.xlu0
  %v920 = vpop.trf.xlu0
  %v921 = vpop.trf.xlu0
  %v922 = vpop.trf.xlu0
  %v923 = vpop.trf.xlu0
  %v924 = vpop.trf.xlu0
  %v925 = vpop.trf.xlu0
  %v926 = vpop.trf.xlu0
  %v927 = vpop.trf.xlu0
  %v928 = vpop.trf.xlu0
  %v929 = vpack.c.bf16 %v913, %v913
  %930 = vrot.lane.b32.xlu0 %v621, 104
  %v931 = vpop.permute.xlu0 %930
  %v933 = vsel %vm276, %v931, 0
  %v936 = vsel %vm280, %v929, 0
  %938 = vmatpush.bf16.msra.mxu0 0
  %939 = vmatpush.bf16.msra.mxu0 0
  %940 = vmatpush.bf16.msra.mxu0 0
  %941 = vmatpush.bf16.msra.mxu0 0
  %942 = vmatpush.bf16.msra.mxu0 0
  %943 = vmatpush.bf16.msra.mxu0 0
  %944 = vmatpush.bf16.msra.mxu0 0
  %945 = vmatpush.bf16.msra.mxu0 %v936
  %946 = vmatmul.bf16.gmra.mxu0 %v933
  %v947 = vpop.f32.mrf.mxu0
  %v948 = vadd.f32 0.0, %v947
  %v949 = vpop.f32.mrf.mxu0
  %950 = vdwg.mxu0
  %v951 = vsel %vm276, %v948, -inf
  %952 = vmax.xlane.f32.xlu0 %v951
  %v953 = vpop.xlane.xlu0 %952
  %v954 = vsub.f32 %v948, %v953
  %v955 = vmul.f32 %v954, 1.442695
  %v956 = vpow.pop %v955
  %v957 = vsel %vm276, %v956, 0.0
  %958 = vadd.xlane.f32.xlu0 %v957
  %v959 = vpop.xlane.xlu0 %958
  %v960 = vrcp.pop %v959
  %v961 = vmul.f32 %v956, %v960
  %v962 = vpack.c.bf16 %v961, %v961
  %963 = vrot.lane.b32.xlu0 %v690, 40
  %v964 = vpop.permute.xlu0 %963
  %v966 = vsel %vm276, %v962, 0
  %v969 = vsel %vm280, %v964, 0
  %971 = vmatpush.bf16.msra.mxu0 0
  %972 = vmatpush.bf16.msra.mxu0 0
  %973 = vmatpush.bf16.msra.mxu0 0
  %974 = vmatpush.bf16.msra.mxu0 0
  %975 = vmatpush.bf16.msra.mxu0 0
  %976 = vmatpush.bf16.msra.mxu0 0
  %977 = vmatpush.bf16.msra.mxu0 0
  %978 = vmatpush.bf16.msra.mxu0 %v969
  %979 = vmatmul.bf16.gmra.mxu0 %v966
  %v980 = vpop.f32.mrf.mxu0
  %v981 = vadd.f32 0.0, %v980
  %v982 = vpop.f32.mrf.mxu0
  %983 = vdwg.mxu0
  %985 = vrot.lane.b32.xlu0 %v801, 8
  %v986 = vpop.permute.xlu0 %985
  %989 = vrot.lane.b32.xlu0 %v891, 16
  %v990 = vpop.permute.xlu0 %989
  %993 = vrot.lane.b32.xlu0 %v981, 24
  %v994 = vpop.permute.xlu0 %993
  %v996 = vsel %vm276, %v710, %v986
  %v997 = vsel %vm616, %v996, %v990
  %v998 = vsel %vm618, %v997, %v994
  %v999 = vpack.c.bf16 %v998, %v619
  %v1001 = vperm.slane %v202, 0
  %v1007 = vunpack.c.l.b16 %v198
  %v1008 = vunpack.c.l.b16 %v199
  %v1009 = vunpack.c.l.b16 %v200
  %v1010 = vunpack.c.l.b16 %v201
  %v1011 = vpack.c.b16 %v1008, %v1007
  %v1012 = vpack.c.b16 %v1010, %v1009
  %v1016 = vsel %vm219, %v999, 0
  %1018 = vmatpush.bf16.msra.mxu0 0
  %1019 = vmatpush.bf16.msra.mxu0 0
  %1020 = vmatpush.bf16.msra.mxu0 0
  %1021 = vmatpush.bf16.msra.mxu0 0
  %1022 = vmatpush.bf16.msra.mxu0 0
  %1023 = vmatpush.bf16.msra.mxu0 0
  %1024 = vmatpush.bf16.msra.mxu0 %v1012
  %1025 = vmatpush.bf16.msra.mxu0 %v1011
  %1026 = vmatmul.bf16.gmra.mxu0 %v1016
  %v1027 = vpop.f32.mrf.mxu0
  %v1028 = vadd.f32 %v1001, %v1027
  %v1029 = vpop.f32.mrf.mxu0
  %v1030 = vadd.f32 %v1001, %v1029
  %1031 = vdwg.mxu0
  %v1032 = vadd.f32 %v191, %v1028
  %v1033 = vadd.f32 %v192, %v1030
  %v1034 = vld [vmem:[%s17] sm:$0x1]
  %v1035 = vld [vmem:[%s19] sm:$0x1]
  %v1036 = vsel %vm219, %v1032, 0.0
  %1037 = vadd.xlane.f32.xlu0 %v1036
  %v1038 = vpop.xlane.xlu0 %1037
  %v1039 = vsel %vm219, %v1033, 0.0
  %1040 = vadd.xlane.f32.xlu0 %v1039
  %v1041 = vpop.xlane.xlu0 %1040
  %v1042 = vrcp.pop 32.0
  %v1043 = vmul.f32 32.0, %v1042
  %v1044 = vsub.f32 1.0, %v1043
  %v1045 = vmul.f32 %v1042, %v1044
  %v1046 = vadd.f32 %v1042, %v1045
  %vm1047 = vweird.f32 %v1042
  %v1048 = vsel %vm1047, %v1042, %v1046
  %v1049 = vmul.f32 %v1038, %v1048
  %v1050 = vmul.f32 %v1041, %v1048
  %v1051 = vsub.f32 %v1032, %v1049
  %v1052 = vsub.f32 %v1033, %v1050
  %v1053 = vmul.f32 %v1051, %v1051
  %v1054 = vmul.f32 %v1052, %v1052
  %v1055 = vsel %vm219, %v1053, 0.0
  %1056 = vadd.xlane.f32.xlu0 %v1055
  %v1057 = vpop.xlane.xlu0 %1056
  %v1058 = vsel %vm219, %v1054, 0.0
  %1059 = vadd.xlane.f32.xlu0 %v1058
  %v1060 = vpop.xlane.xlu0 %1059
  %v1061 = vmul.f32 %v1057, %v1048
  %v1062 = vmul.f32 %v1060, %v1048
  %v1063 = vadd.f32 %v1061, 1e-05
  %v1064 = vadd.f32 %v1062, 1e-05
  %v1065 = vrsqrt.pop %v1063
  %v1066 = vmul.f32 %v1065, %v1063
  %v1067 = vmul.f32 %v1066, %v1065
  %v1068 = vmul.f32 0.5, %v1067
  %v1069 = vsub.f32 1.5, %v1068
  %v1070 = vmul.f32 %v1065, %v1069
  %vm1071 = vweird.f32 %v1063
  %vm1072 = vweird.f32 %v1065
  %vm1073 = vmor %vm1071, %vm1072
  %v1074 = vsel %vm1073, %v1065, %v1070
  %v1075 = vrsqrt.pop %v1064
  %v1076 = vmul.f32 %v1075, %v1064
  %v1077 = vmul.f32 %v1076, %v1075
  %v1078 = vmul.f32 0.5, %v1077
  %v1079 = vsub.f32 1.5, %v1078
  %v1080 = vmul.f32 %v1075, %v1079
  %vm1081 = vweird.f32 %v1064
  %vm1082 = vweird.f32 %v1075
  %vm1083 = vmor %vm1081, %vm1082
  %v1084 = vsel %vm1083, %v1075, %v1080
  %v1085 = vmul.f32 %v1051, %v1074
  %v1086 = vmul.f32 %v1052, %v1084
  %v1088 = vperm.slane %v1034, 0
  %v1090 = vmul.f32 %v1085, %v1088
  %v1091 = vmul.f32 %v1086, %v1088
  %v1093 = vperm.slane %v1035, 0
  %v1095 = vadd.f32 %v1090, %v1093
  %v1096 = vadd.f32 %v1091, %v1093
  %v1097 = vld [vmem:[%s21] sm:$0xf]
  %v1098 = vld [vmem:[%s21 + $0x4] sm:$0xf]
  %v1099 = vld [vmem:[%s21 + $0x8] sm:$0xf]
  %v1100 = vld [vmem:[%s21 + $0xc] sm:$0xf]
  %v1101 = vld [vmem:[%s23] sm:$0x1]
  %v1102 = vld [vmem:[%s25] sm:$0xf]
  %v1103 = vld [vmem:[%s25 + $0x4] sm:$0xf]
  %v1104 = vld [vmem:[%s25 + $0x8] sm:$0xf]
  %v1105 = vld [vmem:[%s25 + $0xc] sm:$0xf]
  %v1106 = vld [vmem:[%s25 + $0x10] sm:$0xf]
  %v1107 = vld [vmem:[%s25 + $0x14] sm:$0xf]
  %v1108 = vld [vmem:[%s25 + $0x18] sm:$0xf]
  %v1109 = vld [vmem:[%s25 + $0x1c] sm:$0xf]
  %v1110 = vld [vmem:[%s27] sm:$0x1]
  %v1111 = vpack.c.bf16 %v1096, %v1095
  %v1113 = vperm.slane %v1101, 0
  %v1119 = vunpack.c.l.b16 %v1097
  %v1120 = vunpack.c.l.b16 %v1098
  %v1121 = vunpack.c.l.b16 %v1099
  %v1122 = vunpack.c.l.b16 %v1100
  %v1123 = vpack.c.b16 %v1120, %v1119
  %v1124 = vpack.c.b16 %v1122, %v1121
  %v1128 = vsel %vm219, %v1111, 0
  %1130 = vmatpush.bf16.msra.mxu0 0
  %1131 = vmatpush.bf16.msra.mxu0 0
  %1132 = vmatpush.bf16.msra.mxu0 0
  %1133 = vmatpush.bf16.msra.mxu0 0
  %1134 = vmatpush.bf16.msra.mxu0 0
  %1135 = vmatpush.bf16.msra.mxu0 0
  %1136 = vmatpush.bf16.msra.mxu0 %v1124
  %1137 = vmatpush.bf16.msra.mxu0 %v1123
  %1138 = vmatmul.bf16.gmra.mxu0 %v1128
  %v1139 = vpop.f32.mrf.mxu0
  %v1140 = vadd.f32 %v1113, %v1139
  %v1141 = vpop.f32.mrf.mxu0
  %v1142 = vadd.f32 %v1113, %v1141
  %1143 = vdwg.mxu0
  %v1144 = vmax.f32 %v1140, 0.0
  %v1145 = vmax.f32 %v1142, 0.0
  %v1146 = vpack.c.bf16 %v1145, %v1144
  %v1148 = vperm.slane %v1110, 0
  %v1158 = vunpack.c.l.b16 %v1102
  %v1159 = vunpack.c.l.b16 %v1103
  %v1160 = vunpack.c.l.b16 %v1104
  %v1161 = vunpack.c.l.b16 %v1105
  %v1162 = vunpack.c.l.b16 %v1106
  %v1163 = vunpack.c.l.b16 %v1107
  %v1164 = vunpack.c.l.b16 %v1108
  %v1165 = vunpack.c.l.b16 %v1109
  %v1166 = vpack.c.b16 %v1159, %v1158
  %v1167 = vpack.c.b16 %v1161, %v1160
  %v1168 = vpack.c.b16 %v1163, %v1162
  %v1169 = vpack.c.b16 %v1165, %v1164
  %vm1174 = vcmask 523264
  %v1176 = vsel %vm1174, %v1146, 0
  %1178 = vmatpush.bf16.msra.mxu0 0
  %1179 = vmatpush.bf16.msra.mxu0 0
  %1180 = vmatpush.bf16.msra.mxu0 0
  %1181 = vmatpush.bf16.msra.mxu0 0
  %1182 = vmatpush.bf16.msra.mxu0 %v1169
  %1183 = vmatpush.bf16.msra.mxu0 %v1168
  %1184 = vmatpush.bf16.msra.mxu0 %v1167
  %1185 = vmatpush.bf16.msra.mxu0 %v1166
  %1186 = vmatmul.bf16.gmra.mxu0 %v1176
  %v1187 = vpop.f32.mrf.mxu0
  %v1188 = vadd.f32 %v1148, %v1187
  %v1189 = vpop.f32.mrf.mxu0
  %v1190 = vadd.f32 %v1148, %v1189
  %1191 = vdwg.mxu0
  %v1192 = vadd.f32 %v1095, %v1188
  %v1193 = vadd.f32 %v1096, %v1190
  %v1194 = vld [vmem:[%s29] sm:$0x1]
  %v1195 = vld [vmem:[%s31] sm:$0x1]
  %v1196 = vsel %vm219, %v1192, 0.0
  %1197 = vadd.xlane.f32.xlu0 %v1196
  %v1198 = vpop.xlane.xlu0 %1197
  %v1199 = vsel %vm219, %v1193, 0.0
  %1200 = vadd.xlane.f32.xlu0 %v1199
  %v1201 = vpop.xlane.xlu0 %1200
  %v1202 = vmul.f32 %v1198, %v1048
  %v1203 = vmul.f32 %v1201, %v1048
  %v1204 = vsub.f32 %v1192, %v1202
  %v1205 = vsub.f32 %v1193, %v1203
  %v1206 = vmul.f32 %v1204, %v1204
  %v1207 = vmul.f32 %v1205, %v1205
  %v1208 = vsel %vm219, %v1206, 0.0
  %1209 = vadd.xlane.f32.xlu0 %v1208
  %v1210 = vpop.xlane.xlu0 %1209
  %v1211 = vsel %vm219, %v1207, 0.0
  %1212 = vadd.xlane.f32.xlu0 %v1211
  %v1213 = vpop.xlane.xlu0 %1212
  %v1214 = vmul.f32 %v1210, %v1048
  %v1215 = vmul.f32 %v1213, %v1048
  %v1216 = vadd.f32 %v1214, 1e-05
  %v1217 = vadd.f32 %v1215, 1e-05
  %v1218 = vrsqrt.pop %v1216
  %v1219 = vmul.f32 %v1218, %v1216
  %v1220 = vmul.f32 %v1219, %v1218
  %v1221 = vmul.f32 0.5, %v1220
  %v1222 = vsub.f32 1.5, %v1221
  %v1223 = vmul.f32 %v1218, %v1222
  %vm1224 = vweird.f32 %v1216
  %vm1225 = vweird.f32 %v1218
  %vm1226 = vmor %vm1224, %vm1225
  %v1227 = vsel %vm1226, %v1218, %v1223
  %v1228 = vrsqrt.pop %v1217
  %v1229 = vmul.f32 %v1228, %v1217
  %v1230 = vmul.f32 %v1229, %v1228
  %v1231 = vmul.f32 0.5, %v1230
  %v1232 = vsub.f32 1.5, %v1231
  %v1233 = vmul.f32 %v1228, %v1232
  %vm1234 = vweird.f32 %v1217
  %vm1235 = vweird.f32 %v1228
  %vm1236 = vmor %vm1234, %vm1235
  %v1237 = vsel %vm1236, %v1228, %v1233
  %v1238 = vmul.f32 %v1204, %v1227
  %v1239 = vmul.f32 %v1205, %v1237
  %v1241 = vperm.slane %v1194, 0
  %v1243 = vmul.f32 %v1238, %v1241
  %v1244 = vmul.f32 %v1239, %v1241
  %v1246 = vperm.slane %v1195, 0
  %v1248 = vadd.f32 %v1243, %v1246
  %v1249 = vadd.f32 %v1244, %v1246
  %s1250 = scalar_lea.vmem %s9, 16
  %v1251 = vld [vmem:[%s1250] sm:$0xf]
  %v1252 = vld [vmem:[%s1250 + $0x4] sm:$0xf]
  %v1253 = vld [vmem:[%s1250 + $0x8] sm:$0xf]
  %v1254 = vld [vmem:[%s1250 + $0xc] sm:$0xf]
  %s1255 = scalar_lea.vmem %s11, 1
  %v1256 = vld [vmem:[%s1255] sm:$0x1]
  %s1257 = scalar_lea.vmem %s13, 16
  %v1258 = vld [vmem:[%s1257] sm:$0xf]
  %v1259 = vld [vmem:[%s1257 + $0x4] sm:$0xf]
  %v1260 = vld [vmem:[%s1257 + $0x8] sm:$0xf]
  %v1261 = vld [vmem:[%s1257 + $0xc] sm:$0xf]
  %s1262 = scalar_lea.vmem %s15, 1
  %v1263 = vld [vmem:[%s1262] sm:$0x1]
  %v1264 = vpack.c.bf16 %v1249, %v1248
  %v1266 = vperm.slane %v1256, 0
  %v1272 = vunpack.c.l.b16 %v1251
  %v1273 = vunpack.c.l.b16 %v1252
  %v1274 = vunpack.c.l.b16 %v1253
  %v1275 = vunpack.c.l.b16 %v1254
  %v1276 = vpack.c.b16 %v1273, %v1272
  %v1277 = vpack.c.b16 %v1275, %v1274
  %v1281 = vsel %vm219, %v1264, 0
  %1283 = vmatpush.bf16.msra.mxu0 0
  %1284 = vmatpush.bf16.msra.mxu0 0
  %1285 = vmatpush.bf16.msra.mxu0 0
  %1286 = vmatpush.bf16.msra.mxu0 0
  %1287 = vmatpush.bf16.msra.mxu0 0
  %1288 = vmatpush.bf16.msra.mxu0 0
  %1289 = vmatpush.bf16.msra.mxu0 %v1277
  %1290 = vmatpush.bf16.msra.mxu0 %v1276
  %1291 = vmatmul.bf16.gmra.mxu0 %v1281
  %v1292 = vpop.f32.mrf.mxu0
  %v1293 = vadd.f32 %v1266, %v1292
  %v1294 = vpop.f32.mrf.mxu0
  %v1295 = vadd.f32 %v1266, %v1294
  %1296 = vdwg.mxu0
  %v1297 = vmul.f32 %v1293, 0.35355338
  %v1298 = vpack.c.bf16 %v1297, %v1297
  %1300 = vrot.lane.b32.xlu0 %v1293, 96
  %v1301 = vpop.permute.xlu0 %1300
  %1303 = vxpose.xlu0.b32.start [1/16] %v1301, 128
  %1304 = vxpose.xlu0.b32.cont [2/16] 0.0, 128
  %1305 = vxpose.xlu0.b32.cont [3/16] 0.0, 128
  %1306 = vxpose.xlu0.b32.cont [4/16] 0.0, 128
  %1307 = vxpose.xlu0.b32.cont [5/16] 0.0, 128
  %1308 = vxpose.xlu0.b32.cont [6/16] 0.0, 128
  %1309 = vxpose.xlu0.b32.cont [7/16] 0.0, 128
  %1310 = vxpose.xlu0.b32.cont [8/16] 0.0, 128
  %1311 = vxpose.xlu0.b32.cont [9/16] 0.0, 128
  %1312 = vxpose.xlu0.b32.cont [10/16] 0.0, 128
  %1313 = vxpose.xlu0.b32.cont [11/16] 0.0, 128
  %1314 = vxpose.xlu0.b32.cont [12/16] 0.0, 128
  %1315 = vxpose.xlu0.b32.cont [13/16] 0.0, 128
  %1316 = vxpose.xlu0.b32.cont [14/16] 0.0, 128
  %1317 = vxpose.xlu0.b32.cont [15/16] 0.0, 128
  %1318 = vxpose.xlu0.b32.end [16/16] 0.0, 128
  %v1319 = vpop.trf.xlu0
  %v1320 = vpop.trf.xlu0
  %v1321 = vpop.trf.xlu0
  %v1322 = vpop.trf.xlu0
  %v1323 = vpop.trf.xlu0
  %v1324 = vpop.trf.xlu0
  %v1325 = vpop.trf.xlu0
  %v1326 = vpop.trf.xlu0
  %v1327 = vpop.trf.xlu0
  %v1328 = vpop.trf.xlu0
  %v1329 = vpop.trf.xlu0
  %v1330 = vpop.trf.xlu0
  %v1331 = vpop.trf.xlu0
  %v1332 = vpop.trf.xlu0
  %v1333 = vpop.trf.xlu0
  %v1334 = vpop.trf.xlu0
  %v1335 = vpack.c.bf16 %v1319, %v1319
  %v1337 = vsel %vm276, %v1298, 0
  %v1340 = vsel %vm280, %v1335, 0
  %1342 = vmatpush.bf16.msra.mxu0 0
  %1343 = vmatpush.bf16.msra.mxu0 0
  %1344 = vmatpush.bf16.msra.mxu0 0
  %1345 = vmatpush.bf16.msra.mxu0 0
  %1346 = vmatpush.bf16.msra.mxu0 0
  %1347 = vmatpush.bf16.msra.mxu0 0
  %1348 = vmatpush.bf16.msra.mxu0 0
  %1349 = vmatpush.bf16.msra.mxu0 %v1340
  %1350 = vmatmul.bf16.gmra.mxu0 %v1337
  %v1351 = vpop.f32.mrf.mxu0
  %v1352 = vadd.f32 0.0, %v1351
  %v1353 = vpop.f32.mrf.mxu0
  %1354 = vdwg.mxu0
  %v1355 = vsel %vm276, %v1352, -inf
  %1356 = vmax.xlane.f32.xlu0 %v1355
  %v1357 = vpop.xlane.xlu0 %1356
  %v1358 = vsub.f32 %v1352, %v1357
  %v1359 = vmul.f32 %v1358, 1.442695
  %v1360 = vpow.pop %v1359
  %v1361 = vsel %vm276, %v1360, 0.0
  %1362 = vadd.xlane.f32.xlu0 %v1361
  %v1363 = vpop.xlane.xlu0 %1362
  %v1364 = vrcp.pop %v1363
  %v1365 = vmul.f32 %v1360, %v1364
  %v1366 = vpack.c.bf16 %v1365, %v1365
  %v1367 = vpack.c.bf16 %v1293, %v1293
  %1369 = vrot.lane.b32.xlu0 %v1367, 64
  %v1370 = vpop.permute.xlu0 %1369
  %v1372 = vsel %vm276, %v1366, 0
  %v1375 = vsel %vm280, %v1370, 0
  %1377 = vmatpush.bf16.msra.mxu0 0
  %1378 = vmatpush.bf16.msra.mxu0 0
  %1379 = vmatpush.bf16.msra.mxu0 0
  %1380 = vmatpush.bf16.msra.mxu0 0
  %1381 = vmatpush.bf16.msra.mxu0 0
  %1382 = vmatpush.bf16.msra.mxu0 0
  %1383 = vmatpush.bf16.msra.mxu0 0
  %1384 = vmatpush.bf16.msra.mxu0 %v1375
  %1385 = vmatmul.bf16.gmra.mxu0 %v1372
  %v1386 = vpop.f32.mrf.mxu0
  %v1387 = vadd.f32 0.0, %v1386
  %v1388 = vpop.f32.mrf.mxu0
  %1389 = vdwg.mxu0
  %1390 = vrot.lane.b32.xlu0 %v1293, 88
  %v1391 = vpop.permute.xlu0 %1390
  %1393 = vxpose.xlu0.b32.start [1/16] %v1391, 128
  %1394 = vxpose.xlu0.b32.cont [2/16] 0.0, 128
  %1395 = vxpose.xlu0.b32.cont [3/16] 0.0, 128
  %1396 = vxpose.xlu0.b32.cont [4/16] 0.0, 128
  %1397 = vxpose.xlu0.b32.cont [5/16] 0.0, 128
  %1398 = vxpose.xlu0.b32.cont [6/16] 0.0, 128
  %1399 = vxpose.xlu0.b32.cont [7/16] 0.0, 128
  %1400 = vxpose.xlu0.b32.cont [8/16] 0.0, 128
  %1401 = vxpose.xlu0.b32.cont [9/16] 0.0, 128
  %1402 = vxpose.xlu0.b32.cont [10/16] 0.0, 128
  %1403 = vxpose.xlu0.b32.cont [11/16] 0.0, 128
  %1404 = vxpose.xlu0.b32.cont [12/16] 0.0, 128
  %1405 = vxpose.xlu0.b32.cont [13/16] 0.0, 128
  %1406 = vxpose.xlu0.b32.cont [14/16] 0.0, 128
  %1407 = vxpose.xlu0.b32.cont [15/16] 0.0, 128
  %1408 = vxpose.xlu0.b32.end [16/16] 0.0, 128
  %v1409 = vpop.trf.xlu0
  %v1410 = vpop.trf.xlu0
  %v1411 = vpop.trf.xlu0
  %v1412 = vpop.trf.xlu0
  %v1413 = vpop.trf.xlu0
  %v1414 = vpop.trf.xlu0
  %v1415 = vpop.trf.xlu0
  %v1416 = vpop.trf.xlu0
  %v1417 = vpop.trf.xlu0
  %v1418 = vpop.trf.xlu0
  %v1419 = vpop.trf.xlu0
  %v1420 = vpop.trf.xlu0
  %v1421 = vpop.trf.xlu0
  %v1422 = vpop.trf.xlu0
  %v1423 = vpop.trf.xlu0
  %v1424 = vpop.trf.xlu0
  %v1425 = vpack.c.bf16 %v1409, %v1409
  %1427 = vrot.lane.b32.xlu0 %v1298, 120
  %v1428 = vpop.permute.xlu0 %1427
  %v1430 = vsel %vm276, %v1428, 0
  %v1433 = vsel %vm280, %v1425, 0
  %1435 = vmatpush.bf16.msra.mxu0 0
  %1436 = vmatpush.bf16.msra.mxu0 0
  %1437 = vmatpush.bf16.msra.mxu0 0
  %1438 = vmatpush.bf16.msra.mxu0 0
  %1439 = vmatpush.bf16.msra.mxu0 0
  %1440 = vmatpush.bf16.msra.mxu0 0
  %1441 = vmatpush.bf16.msra.mxu0 0
  %1442 = vmatpush.bf16.msra.mxu0 %v1433
  %1443 = vmatmul.bf16.gmra.mxu0 %v1430
  %v1444 = vpop.f32.mrf.mxu0
  %v1445 = vadd.f32 0.0, %v1444
  %v1446 = vpop.f32.mrf.mxu0
  %1447 = vdwg.mxu0
  %v1448 = vsel %vm276, %v1445, -inf
  %1449 = vmax.xlane.f32.xlu0 %v1448
  %v1450 = vpop.xlane.xlu0 %1449
  %v1451 = vsub.f32 %v1445, %v1450
  %v1452 = vmul.f32 %v1451, 1.442695
  %v1453 = vpow.pop %v1452
  %v1454 = vsel %vm276, %v1453, 0.0
  %1455 = vadd.xlane.f32.xlu0 %v1454
  %v1456 = vpop.xlane.xlu0 %1455
  %v1457 = vrcp.pop %v1456
  %v1458 = vmul.f32 %v1453, %v1457
  %v1459 = vpack.c.bf16 %v1458, %v1458
  %1460 = vrot.lane.b32.xlu0 %v1367, 56
  %v1461 = vpop.permute.xlu0 %1460
  %v1463 = vsel %vm276, %v1459, 0
  %v1466 = vsel %vm280, %v1461, 0
  %1468 = vmatpush.bf16.msra.mxu0 0
  %1469 = vmatpush.bf16.msra.mxu0 0
  %1470 = vmatpush.bf16.msra.mxu0 0
  %1471 = vmatpush.bf16.msra.mxu0 0
  %1472 = vmatpush.bf16.msra.mxu0 0
  %1473 = vmatpush.bf16.msra.mxu0 0
  %1474 = vmatpush.bf16.msra.mxu0 0
  %1475 = vmatpush.bf16.msra.mxu0 %v1466
  %1476 = vmatmul.bf16.gmra.mxu0 %v1463
  %v1477 = vpop.f32.mrf.mxu0
  %v1478 = vadd.f32 0.0, %v1477
  %v1479 = vpop.f32.mrf.mxu0
  %1480 = vdwg.mxu0
  %1481 = vrot.lane.b32.xlu0 %v1293, 80
  %v1482 = vpop.permute.xlu0 %1481
  %1484 = vxpose.xlu0.b32.start [1/16] %v1482, 128
  %1485 = vxpose.xlu0.b32.cont [2/16] 0.0, 128
  %1486 = vxpose.xlu0.b32.cont [3/16] 0.0, 128
  %1487 = vxpose.xlu0.b32.cont [4/16] 0.0, 128
  %1488 = vxpose.xlu0.b32.cont [5/16] 0.0, 128
  %1489 = vxpose.xlu0.b32.cont [6/16] 0.0, 128
  %1490 = vxpose.xlu0.b32.cont [7/16] 0.0, 128
  %1491 = vxpose.xlu0.b32.cont [8/16] 0.0, 128
  %1492 = vxpose.xlu0.b32.cont [9/16] 0.0, 128
  %1493 = vxpose.xlu0.b32.cont [10/16] 0.0, 128
  %1494 = vxpose.xlu0.b32.cont [11/16] 0.0, 128
  %1495 = vxpose.xlu0.b32.cont [12/16] 0.0, 128
  %1496 = vxpose.xlu0.b32.cont [13/16] 0.0, 128
  %1497 = vxpose.xlu0.b32.cont [14/16] 0.0, 128
  %1498 = vxpose.xlu0.b32.cont [15/16] 0.0, 128
  %1499 = vxpose.xlu0.b32.end [16/16] 0.0, 128
  %v1500 = vpop.trf.xlu0
  %v1501 = vpop.trf.xlu0
  %v1502 = vpop.trf.xlu0
  %v1503 = vpop.trf.xlu0
  %v1504 = vpop.trf.xlu0
  %v1505 = vpop.trf.xlu0
  %v1506 = vpop.trf.xlu0
  %v1507 = vpop.trf.xlu0
  %v1508 = vpop.trf.xlu0
  %v1509 = vpop.trf.xlu0
  %v1510 = vpop.trf.xlu0
  %v1511 = vpop.trf.xlu0
  %v1512 = vpop.trf.xlu0
  %v1513 = vpop.trf.xlu0
  %v1514 = vpop.trf.xlu0
  %v1515 = vpop.trf.xlu0
  %v1516 = vpack.c.bf16 %v1500, %v1500
  %1517 = vrot.lane.b32.xlu0 %v1298, 112
  %v1518 = vpop.permute.xlu0 %1517
  %v1520 = vsel %vm276, %v1518, 0
  %v1523 = vsel %vm280, %v1516, 0
  %1525 = vmatpush.bf16.msra.mxu0 0
  %1526 = vmatpush.bf16.msra.mxu0 0
  %1527 = vmatpush.bf16.msra.mxu0 0
  %1528 = vmatpush.bf16.msra.mxu0 0
  %1529 = vmatpush.bf16.msra.mxu0 0
  %1530 = vmatpush.bf16.msra.mxu0 0
  %1531 = vmatpush.bf16.msra.mxu0 0
  %1532 = vmatpush.bf16.msra.mxu0 %v1523
  %1533 = vmatmul.bf16.gmra.mxu0 %v1520
  %v1534 = vpop.f32.mrf.mxu0
  %v1535 = vadd.f32 0.0, %v1534
  %v1536 = vpop.f32.mrf.mxu0
  %1537 = vdwg.mxu0
  %v1538 = vsel %vm276, %v1535, -inf
  %1539 = vmax.xlane.f32.xlu0 %v1538
  %v1540 = vpop.xlane.xlu0 %1539
  %v1541 = vsub.f32 %v1535, %v1540
  %v1542 = vmul.f32 %v1541, 1.442695
  %v1543 = vpow.pop %v1542
  %v1544 = vsel %vm276, %v1543, 0.0
  %1545 = vadd.xlane.f32.xlu0 %v1544
  %v1546 = vpop.xlane.xlu0 %1545
  %v1547 = vrcp.pop %v1546
  %v1548 = vmul.f32 %v1543, %v1547
  %v1549 = vpack.c.bf16 %v1548, %v1548
  %1550 = vrot.lane.b32.xlu0 %v1367, 48
  %v1551 = vpop.permute.xlu0 %1550
  %v1553 = vsel %vm276, %v1549, 0
  %v1556 = vsel %vm280, %v1551, 0
  %1558 = vmatpush.bf16.msra.mxu0 0
  %1559 = vmatpush.bf16.msra.mxu0 0
  %1560 = vmatpush.bf16.msra.mxu0 0
  %1561 = vmatpush.bf16.msra.mxu0 0
  %1562 = vmatpush.bf16.msra.mxu0 0
  %1563 = vmatpush.bf16.msra.mxu0 0
  %1564 = vmatpush.bf16.msra.mxu0 0
  %1565 = vmatpush.bf16.msra.mxu0 %v1556
  %1566 = vmatmul.bf16.gmra.mxu0 %v1553
  %v1567 = vpop.f32.mrf.mxu0
  %v1568 = vadd.f32 0.0, %v1567
  %v1569 = vpop.f32.mrf.mxu0
  %1570 = vdwg.mxu0
  %1571 = vrot.lane.b32.xlu0 %v1293, 72
  %v1572 = vpop.permute.xlu0 %1571
  %1574 = vxpose.xlu0.b32.start [1/16] %v1572, 128
  %1575 = vxpose.xlu0.b32.cont [2/16] 0.0, 128
  %1576 = vxpose.xlu0.b32.cont [3/16] 0.0, 128
  %1577 = vxpose.xlu0.b32.cont [4/16] 0.0, 128
  %1578 = vxpose.xlu0.b32.cont [5/16] 0.0, 128
  %1579 = vxpose.xlu0.b32.cont [6/16] 0.0, 128
  %1580 = vxpose.xlu0.b32.cont [7/16] 0.0, 128
  %1581 = vxpose.xlu0.b32.cont [8/16] 0.0, 128
  %1582 = vxpose.xlu0.b32.cont [9/16] 0.0, 128
  %1583 = vxpose.xlu0.b32.cont [10/16] 0.0, 128
  %1584 = vxpose.xlu0.b32.cont [11/16] 0.0, 128
  %1585 = vxpose.xlu0.b32.cont [12/16] 0.0, 128
  %1586 = vxpose.xlu0.b32.cont [13/16] 0.0, 128
  %1587 = vxpose.xlu0.b32.cont [14/16] 0.0, 128
  %1588 = vxpose.xlu0.b32.cont [15/16] 0.0, 128
  %1589 = vxpose.xlu0.b32.end [16/16] 0.0, 128
  %v1590 = vpop.trf.xlu0
  %v1591 = vpop.trf.xlu0
  %v1592 = vpop.trf.xlu0
  %v1593 = vpop.trf.xlu0
  %v1594 = vpop.trf.xlu0
  %v1595 = vpop.trf.xlu0
  %v1596 = vpop.trf.xlu0
  %v1597 = vpop.trf.xlu0
  %v1598 = vpop.trf.xlu0
  %v1599 = vpop.trf.xlu0
  %v1600 = vpop.trf.xlu0
  %v1601 = vpop.trf.xlu0
  %v1602 = vpop.trf.xlu0
  %v1603 = vpop.trf.xlu0
  %v1604 = vpop.trf.xlu0
  %v1605 = vpop.trf.xlu0
  %v1606 = vpack.c.bf16 %v1590, %v1590
  %1607 = vrot.lane.b32.xlu0 %v1298, 104
  %v1608 = vpop.permute.xlu0 %1607
  %v1610 = vsel %vm276, %v1608, 0
  %v1613 = vsel %vm280, %v1606, 0
  %1615 = vmatpush.bf16.msra.mxu0 0
  %1616 = vmatpush.bf16.msra.mxu0 0
  %1617 = vmatpush.bf16.msra.mxu0 0
  %1618 = vmatpush.bf16.msra.mxu0 0
  %1619 = vmatpush.bf16.msra.mxu0 0
  %1620 = vmatpush.bf16.msra.mxu0 0
  %1621 = vmatpush.bf16.msra.mxu0 0
  %1622 = vmatpush.bf16.msra.mxu0 %v1613
  %1623 = vmatmul.bf16.gmra.mxu0 %v1610
  %v1624 = vpop.f32.mrf.mxu0
  %v1625 = vadd.f32 0.0, %v1624
  %v1626 = vpop.f32.mrf.mxu0
  %1627 = vdwg.mxu0
  %v1628 = vsel %vm276, %v1625, -inf
  %1629 = vmax.xlane.f32.xlu0 %v1628
  %v1630 = vpop.xlane.xlu0 %1629
  %v1631 = vsub.f32 %v1625, %v1630
  %v1632 = vmul.f32 %v1631, 1.442695
  %v1633 = vpow.pop %v1632
  %v1634 = vsel %vm276, %v1633, 0.0
  %1635 = vadd.xlane.f32.xlu0 %v1634
  %v1636 = vpop.xlane.xlu0 %1635
  %v1637 = vrcp.pop %v1636
  %v1638 = vmul.f32 %v1633, %v1637
  %v1639 = vpack.c.bf16 %v1638, %v1638
  %1640 = vrot.lane.b32.xlu0 %v1367, 40
  %v1641 = vpop.permute.xlu0 %1640
  %v1643 = vsel %vm276, %v1639, 0
  %v1646 = vsel %vm280, %v1641, 0
  %1648 = vmatpush.bf16.msra.mxu0 0
  %1649 = vmatpush.bf16.msra.mxu0 0
  %1650 = vmatpush.bf16.msra.mxu0 0
  %1651 = vmatpush.bf16.msra.mxu0 0
  %1652 = vmatpush.bf16.msra.mxu0 0
  %1653 = vmatpush.bf16.msra.mxu0 0
  %1654 = vmatpush.bf16.msra.mxu0 0
  %1655 = vmatpush.bf16.msra.mxu0 %v1646
  %1656 = vmatmul.bf16.gmra.mxu0 %v1643
  %v1657 = vpop.f32.mrf.mxu0
  %v1658 = vadd.f32 0.0, %v1657
  %v1659 = vpop.f32.mrf.mxu0
  %1660 = vdwg.mxu0
  %1662 = vrot.lane.b32.xlu0 %v1478, 8
  %v1663 = vpop.permute.xlu0 %1662
  %1666 = vrot.lane.b32.xlu0 %v1568, 16
  %v1667 = vpop.permute.xlu0 %1666
  %1670 = vrot.lane.b32.xlu0 %v1658, 24
  %v1671 = vpop.permute.xlu0 %1670
  %v1673 = vsel %vm276, %v1387, %v1663
  %v1674 = vsel %vm616, %v1673, %v1667
  %v1675 = vsel %vm618, %v1674, %v1671
  %v1676 = vmul.f32 %v1295, 0.35355338
  %v1677 = vpack.c.bf16 %v1676, %v1676
  %1679 = vrot.lane.b32.xlu0 %v1295, 96
  %v1680 = vpop.permute.xlu0 %1679
  %1682 = vxpose.xlu0.b32.start [1/16] %v1680, 128
  %1683 = vxpose.xlu0.b32.cont [2/16] 0.0, 128
  %1684 = vxpose.xlu0.b32.cont [3/16] 0.0, 128
  %1685 = vxpose.xlu0.b32.cont [4/16] 0.0, 128
  %1686 = vxpose.xlu0.b32.cont [5/16] 0.0, 128
  %1687 = vxpose.xlu0.b32.cont [6/16] 0.0, 128
  %1688 = vxpose.xlu0.b32.cont [7/16] 0.0, 128
  %1689 = vxpose.xlu0.b32.cont [8/16] 0.0, 128
  %1690 = vxpose.xlu0.b32.cont [9/16] 0.0, 128
  %1691 = vxpose.xlu0.b32.cont [10/16] 0.0, 128
  %1692 = vxpose.xlu0.b32.cont [11/16] 0.0, 128
  %1693 = vxpose.xlu0.b32.cont [12/16] 0.0, 128
  %1694 = vxpose.xlu0.b32.cont [13/16] 0.0, 128
  %1695 = vxpose.xlu0.b32.cont [14/16] 0.0, 128
  %1696 = vxpose.xlu0.b32.cont [15/16] 0.0, 128
  %1697 = vxpose.xlu0.b32.end [16/16] 0.0, 128
  %v1698 = vpop.trf.xlu0
  %v1699 = vpop.trf.xlu0
  %v1700 = vpop.trf.xlu0
  %v1701 = vpop.trf.xlu0
  %v1702 = vpop.trf.xlu0
  %v1703 = vpop.trf.xlu0
  %v1704 = vpop.trf.xlu0
  %v1705 = vpop.trf.xlu0
  %v1706 = vpop.trf.xlu0
  %v1707 = vpop.trf.xlu0
  %v1708 = vpop.trf.xlu0
  %v1709 = vpop.trf.xlu0
  %v1710 = vpop.trf.xlu0
  %v1711 = vpop.trf.xlu0
  %v1712 = vpop.trf.xlu0
  %v1713 = vpop.trf.xlu0
  %v1714 = vpack.c.bf16 %v1698, %v1698
  %v1716 = vsel %vm276, %v1677, 0
  %v1719 = vsel %vm280, %v1714, 0
  %1721 = vmatpush.bf16.msra.mxu0 0
  %1722 = vmatpush.bf16.msra.mxu0 0
  %1723 = vmatpush.bf16.msra.mxu0 0
  %1724 = vmatpush.bf16.msra.mxu0 0
  %1725 = vmatpush.bf16.msra.mxu0 0
  %1726 = vmatpush.bf16.msra.mxu0 0
  %1727 = vmatpush.bf16.msra.mxu0 0
  %1728 = vmatpush.bf16.msra.mxu0 %v1719
  %1729 = vmatmul.bf16.gmra.mxu0 %v1716
  %v1730 = vpop.f32.mrf.mxu0
  %v1731 = vadd.f32 0.0, %v1730
  %v1732 = vpop.f32.mrf.mxu0
  %1733 = vdwg.mxu0
  %v1734 = vsel %vm276, %v1731, -inf
  %1735 = vmax.xlane.f32.xlu0 %v1734
  %v1736 = vpop.xlane.xlu0 %1735
  %v1737 = vsub.f32 %v1731, %v1736
  %v1738 = vmul.f32 %v1737, 1.442695
  %v1739 = vpow.pop %v1738
  %v1740 = vsel %vm276, %v1739, 0.0
  %1741 = vadd.xlane.f32.xlu0 %v1740
  %v1742 = vpop.xlane.xlu0 %1741
  %v1743 = vrcp.pop %v1742
  %v1744 = vmul.f32 %v1739, %v1743
  %v1745 = vpack.c.bf16 %v1744, %v1744
  %v1746 = vpack.c.bf16 %v1295, %v1295
  %1748 = vrot.lane.b32.xlu0 %v1746, 64
  %v1749 = vpop.permute.xlu0 %1748
  %v1751 = vsel %vm276, %v1745, 0
  %v1754 = vsel %vm280, %v1749, 0
  %1756 = vmatpush.bf16.msra.mxu0 0
  %1757 = vmatpush.bf16.msra.mxu0 0
  %1758 = vmatpush.bf16.msra.mxu0 0
  %1759 = vmatpush.bf16.msra.mxu0 0
  %1760 = vmatpush.bf16.msra.mxu0 0
  %1761 = vmatpush.bf16.msra.mxu0 0
  %1762 = vmatpush.bf16.msra.mxu0 0
  %1763 = vmatpush.bf16.msra.mxu0 %v1754
  %1764 = vmatmul.bf16.gmra.mxu0 %v1751
  %v1765 = vpop.f32.mrf.mxu0
  %v1766 = vadd.f32 0.0, %v1765
  %v1767 = vpop.f32.mrf.mxu0
  %1768 = vdwg.mxu0
  %1769 = vrot.lane.b32.xlu0 %v1295, 88
  %v1770 = vpop.permute.xlu0 %1769
  %1772 = vxpose.xlu0.b32.start [1/16] %v1770, 128
  %1773 = vxpose.xlu0.b32.cont [2/16] 0.0, 128
  %1774 = vxpose.xlu0.b32.cont [3/16] 0.0, 128
  %1775 = vxpose.xlu0.b32.cont [4/16] 0.0, 128
  %1776 = vxpose.xlu0.b32.cont [5/16] 0.0, 128
  %1777 = vxpose.xlu0.b32.cont [6/16] 0.0, 128
  %1778 = vxpose.xlu0.b32.cont [7/16] 0.0, 128
  %1779 = vxpose.xlu0.b32.cont [8/16] 0.0, 128
  %1780 = vxpose.xlu0.b32.cont [9/16] 0.0, 128
  %1781 = vxpose.xlu0.b32.cont [10/16] 0.0, 128
  %1782 = vxpose.xlu0.b32.cont [11/16] 0.0, 128
  %1783 = vxpose.xlu0.b32.cont [12/16] 0.0, 128
  %1784 = vxpose.xlu0.b32.cont [13/16] 0.0, 128
  %1785 = vxpose.xlu0.b32.cont [14/16] 0.0, 128
  %1786 = vxpose.xlu0.b32.cont [15/16] 0.0, 128
  %1787 = vxpose.xlu0.b32.end [16/16] 0.0, 128
  %v1788 = vpop.trf.xlu0
  %v1789 = vpop.trf.xlu0
  %v1790 = vpop.trf.xlu0
  %v1791 = vpop.trf.xlu0
  %v1792 = vpop.trf.xlu0
  %v1793 = vpop.trf.xlu0
  %v1794 = vpop.trf.xlu0
  %v1795 = vpop.trf.xlu0
  %v1796 = vpop.trf.xlu0
  %v1797 = vpop.trf.xlu0
  %v1798 = vpop.trf.xlu0
  %v1799 = vpop.trf.xlu0
  %v1800 = vpop.trf.xlu0
  %v1801 = vpop.trf.xlu0
  %v1802 = vpop.trf.xlu0
  %v1803 = vpop.trf.xlu0
  %v1804 = vpack.c.bf16 %v1788, %v1788
  %1806 = vrot.lane.b32.xlu0 %v1677, 120
  %v1807 = vpop.permute.xlu0 %1806
  %v1809 = vsel %vm276, %v1807, 0
  %v1812 = vsel %vm280, %v1804, 0
  %1814 = vmatpush.bf16.msra.mxu0 0
  %1815 = vmatpush.bf16.msra.mxu0 0
  %1816 = vmatpush.bf16.msra.mxu0 0
  %1817 = vmatpush.bf16.msra.mxu0 0
  %1818 = vmatpush.bf16.msra.mxu0 0
  %1819 = vmatpush.bf16.msra.mxu0 0
  %1820 = vmatpush.bf16.msra.mxu0 0
  %1821 = vmatpush.bf16.msra.mxu0 %v1812
  %1822 = vmatmul.bf16.gmra.mxu0 %v1809
  %v1823 = vpop.f32.mrf.mxu0
  %v1824 = vadd.f32 0.0, %v1823
  %v1825 = vpop.f32.mrf.mxu0
  %1826 = vdwg.mxu0
  %v1827 = vsel %vm276, %v1824, -inf
  %1828 = vmax.xlane.f32.xlu0 %v1827
  %v1829 = vpop.xlane.xlu0 %1828
  %v1830 = vsub.f32 %v1824, %v1829
  %v1831 = vmul.f32 %v1830, 1.442695
  %v1832 = vpow.pop %v1831
  %v1833 = vsel %vm276, %v1832, 0.0
  %1834 = vadd.xlane.f32.xlu0 %v1833
  %v1835 = vpop.xlane.xlu0 %1834
  %v1836 = vrcp.pop %v1835
  %v1837 = vmul.f32 %v1832, %v1836
  %v1838 = vpack.c.bf16 %v1837, %v1837
  %1839 = vrot.lane.b32.xlu0 %v1746, 56
  %v1840 = vpop.permute.xlu0 %1839
  %v1842 = vsel %vm276, %v1838, 0
  %v1845 = vsel %vm280, %v1840, 0
  %1847 = vmatpush.bf16.msra.mxu0 0
  %1848 = vmatpush.bf16.msra.mxu0 0
  %1849 = vmatpush.bf16.msra.mxu0 0
  %1850 = vmatpush.bf16.msra.mxu0 0
  %1851 = vmatpush.bf16.msra.mxu0 0
  %1852 = vmatpush.bf16.msra.mxu0 0
  %1853 = vmatpush.bf16.msra.mxu0 0
  %1854 = vmatpush.bf16.msra.mxu0 %v1845
  %1855 = vmatmul.bf16.gmra.mxu0 %v1842
  %v1856 = vpop.f32.mrf.mxu0
  %v1857 = vadd.f32 0.0, %v1856
  %v1858 = vpop.f32.mrf.mxu0
  %1859 = vdwg.mxu0
  %1860 = vrot.lane.b32.xlu0 %v1295, 80
  %v1861 = vpop.permute.xlu0 %1860
  %1863 = vxpose.xlu0.b32.start [1/16] %v1861, 128
  %1864 = vxpose.xlu0.b32.cont [2/16] 0.0, 128
  %1865 = vxpose.xlu0.b32.cont [3/16] 0.0, 128
  %1866 = vxpose.xlu0.b32.cont [4/16] 0.0, 128
  %1867 = vxpose.xlu0.b32.cont [5/16] 0.0, 128
  %1868 = vxpose.xlu0.b32.cont [6/16] 0.0, 128
  %1869 = vxpose.xlu0.b32.cont [7/16] 0.0, 128
  %1870 = vxpose.xlu0.b32.cont [8/16] 0.0, 128
  %1871 = vxpose.xlu0.b32.cont [9/16] 0.0, 128
  %1872 = vxpose.xlu0.b32.cont [10/16] 0.0, 128
  %1873 = vxpose.xlu0.b32.cont [11/16] 0.0, 128
  %1874 = vxpose.xlu0.b32.cont [12/16] 0.0, 128
  %1875 = vxpose.xlu0.b32.cont [13/16] 0.0, 128
  %1876 = vxpose.xlu0.b32.cont [14/16] 0.0, 128
  %1877 = vxpose.xlu0.b32.cont [15/16] 0.0, 128
  %1878 = vxpose.xlu0.b32.end [16/16] 0.0, 128
  %v1879 = vpop.trf.xlu0
  %v1880 = vpop.trf.xlu0
  %v1881 = vpop.trf.xlu0
  %v1882 = vpop.trf.xlu0
  %v1883 = vpop.trf.xlu0
  %v1884 = vpop.trf.xlu0
  %v1885 = vpop.trf.xlu0
  %v1886 = vpop.trf.xlu0
  %v1887 = vpop.trf.xlu0
  %v1888 = vpop.trf.xlu0
  %v1889 = vpop.trf.xlu0
  %v1890 = vpop.trf.xlu0
  %v1891 = vpop.trf.xlu0
  %v1892 = vpop.trf.xlu0
  %v1893 = vpop.trf.xlu0
  %v1894 = vpop.trf.xlu0
  %v1895 = vpack.c.bf16 %v1879, %v1879
  %1896 = vrot.lane.b32.xlu0 %v1677, 112
  %v1897 = vpop.permute.xlu0 %1896
  %v1899 = vsel %vm276, %v1897, 0
  %v1902 = vsel %vm280, %v1895, 0
  %1904 = vmatpush.bf16.msra.mxu0 0
  %1905 = vmatpush.bf16.msra.mxu0 0
  %1906 = vmatpush.bf16.msra.mxu0 0
  %1907 = vmatpush.bf16.msra.mxu0 0
  %1908 = vmatpush.bf16.msra.mxu0 0
  %1909 = vmatpush.bf16.msra.mxu0 0
  %1910 = vmatpush.bf16.msra.mxu0 0
  %1911 = vmatpush.bf16.msra.mxu0 %v1902
  %1912 = vmatmul.bf16.gmra.mxu0 %v1899
  %v1913 = vpop.f32.mrf.mxu0
  %v1914 = vadd.f32 0.0, %v1913
  %v1915 = vpop.f32.mrf.mxu0
  %1916 = vdwg.mxu0
  %v1917 = vsel %vm276, %v1914, -inf
  %1918 = vmax.xlane.f32.xlu0 %v1917
  %v1919 = vpop.xlane.xlu0 %1918
  %v1920 = vsub.f32 %v1914, %v1919
  %v1921 = vmul.f32 %v1920, 1.442695
  %v1922 = vpow.pop %v1921
  %v1923 = vsel %vm276, %v1922, 0.0
  %1924 = vadd.xlane.f32.xlu0 %v1923
  %v1925 = vpop.xlane.xlu0 %1924
  %v1926 = vrcp.pop %v1925
  %v1927 = vmul.f32 %v1922, %v1926
  %v1928 = vpack.c.bf16 %v1927, %v1927
  %1929 = vrot.lane.b32.xlu0 %v1746, 48
  %v1930 = vpop.permute.xlu0 %1929
  %v1932 = vsel %vm276, %v1928, 0
  %v1935 = vsel %vm280, %v1930, 0
  %1937 = vmatpush.bf16.msra.mxu0 0
  %1938 = vmatpush.bf16.msra.mxu0 0
  %1939 = vmatpush.bf16.msra.mxu0 0
  %1940 = vmatpush.bf16.msra.mxu0 0
  %1941 = vmatpush.bf16.msra.mxu0 0
  %1942 = vmatpush.bf16.msra.mxu0 0
  %1943 = vmatpush.bf16.msra.mxu0 0
  %1944 = vmatpush.bf16.msra.mxu0 %v1935
  %1945 = vmatmul.bf16.gmra.mxu0 %v1932
  %v1946 = vpop.f32.mrf.mxu0
  %v1947 = vadd.f32 0.0, %v1946
  %v1948 = vpop.f32.mrf.mxu0
  %1949 = vdwg.mxu0
  %1950 = vrot.lane.b32.xlu0 %v1295, 72
  %v1951 = vpop.permute.xlu0 %1950
  %1953 = vxpose.xlu0.b32.start [1/16] %v1951, 128
  %1954 = vxpose.xlu0.b32.cont [2/16] 0.0, 128
  %1955 = vxpose.xlu0.b32.cont [3/16] 0.0, 128
  %1956 = vxpose.xlu0.b32.cont [4/16] 0.0, 128
  %1957 = vxpose.xlu0.b32.cont [5/16] 0.0, 128
  %1958 = vxpose.xlu0.b32.cont [6/16] 0.0, 128
  %1959 = vxpose.xlu0.b32.cont [7/16] 0.0, 128
  %1960 = vxpose.xlu0.b32.cont [8/16] 0.0, 128
  %1961 = vxpose.xlu0.b32.cont [9/16] 0.0, 128
  %1962 = vxpose.xlu0.b32.cont [10/16] 0.0, 128
  %1963 = vxpose.xlu0.b32.cont [11/16] 0.0, 128
  %1964 = vxpose.xlu0.b32.cont [12/16] 0.0, 128
  %1965 = vxpose.xlu0.b32.cont [13/16] 0.0, 128
  %1966 = vxpose.xlu0.b32.cont [14/16] 0.0, 128
  %1967 = vxpose.xlu0.b32.cont [15/16] 0.0, 128
  %1968 = vxpose.xlu0.b32.end [16/16] 0.0, 128
  %v1969 = vpop.trf.xlu0
  %v1970 = vpop.trf.xlu0
  %v1971 = vpop.trf.xlu0
  %v1972 = vpop.trf.xlu0
  %v1973 = vpop.trf.xlu0
  %v1974 = vpop.trf.xlu0
  %v1975 = vpop.trf.xlu0
  %v1976 = vpop.trf.xlu0
  %v1977 = vpop.trf.xlu0
  %v1978 = vpop.trf.xlu0
  %v1979 = vpop.trf.xlu0
  %v1980 = vpop.trf.xlu0
  %v1981 = vpop.trf.xlu0
  %v1982 = vpop.trf.xlu0
  %v1983 = vpop.trf.xlu0
  %v1984 = vpop.trf.xlu0
  %v1985 = vpack.c.bf16 %v1969, %v1969
  %1986 = vrot.lane.b32.xlu0 %v1677, 104
  %v1987 = vpop.permute.xlu0 %1986
  %v1989 = vsel %vm276, %v1987, 0
  %v1992 = vsel %vm280, %v1985, 0
  %1994 = vmatpush.bf16.msra.mxu0 0
  %1995 = vmatpush.bf16.msra.mxu0 0
  %1996 = vmatpush.bf16.msra.mxu0 0
  %1997 = vmatpush.bf16.msra.mxu0 0
  %1998 = vmatpush.bf16.msra.mxu0 0
  %1999 = vmatpush.bf16.msra.mxu0 0
  %2000 = vmatpush.bf16.msra.mxu0 0
  %2001 = vmatpush.bf16.msra.mxu0 %v1992
  %2002 = vmatmul.bf16.gmra.mxu0 %v1989
  %v2003 = vpop.f32.mrf.mxu0
  %v2004 = vadd.f32 0.0, %v2003
  %v2005 = vpop.f32.mrf.mxu0
  %2006 = vdwg.mxu0
  %v2007 = vsel %vm276, %v2004, -inf
  %2008 = vmax.xlane.f32.xlu0 %v2007
  %v2009 = vpop.xlane.xlu0 %2008
  %v2010 = vsub.f32 %v2004, %v2009
  %v2011 = vmul.f32 %v2010, 1.442695
  %v2012 = vpow.pop %v2011
  %v2013 = vsel %vm276, %v2012, 0.0
  %2014 = vadd.xlane.f32.xlu0 %v2013
  %v2015 = vpop.xlane.xlu0 %2014
  %v2016 = vrcp.pop %v2015
  %v2017 = vmul.f32 %v2012, %v2016
  %v2018 = vpack.c.bf16 %v2017, %v2017
  %2019 = vrot.lane.b32.xlu0 %v1746, 40
  %v2020 = vpop.permute.xlu0 %2019
  %v2022 = vsel %vm276, %v2018, 0
  %v2025 = vsel %vm280, %v2020, 0
  %2027 = vmatpush.bf16.msra.mxu0 0
  %2028 = vmatpush.bf16.msra.mxu0 0
  %2029 = vmatpush.bf16.msra.mxu0 0
  %2030 = vmatpush.bf16.msra.mxu0 0
  %2031 = vmatpush.bf16.msra.mxu0 0
  %2032 = vmatpush.bf16.msra.mxu0 0
  %2033 = vmatpush.bf16.msra.mxu0 0
  %2034 = vmatpush.bf16.msra.mxu0 %v2025
  %2035 = vmatmul.bf16.gmra.mxu0 %v2022
  %v2036 = vpop.f32.mrf.mxu0
  %v2037 = vadd.f32 0.0, %v2036
  %v2038 = vpop.f32.mrf.mxu0
  %2039 = vdwg.mxu0
  %2041 = vrot.lane.b32.xlu0 %v1857, 8
  %v2042 = vpop.permute.xlu0 %2041
  %2045 = vrot.lane.b32.xlu0 %v1947, 16
  %v2046 = vpop.permute.xlu0 %2045
  %2049 = vrot.lane.b32.xlu0 %v2037, 24
  %v2050 = vpop.permute.xlu0 %2049
  %v2052 = vsel %vm276, %v1766, %v2042
  %v2053 = vsel %vm616, %v2052, %v2046
  %v2054 = vsel %vm618, %v2053, %v2050
  %v2055 = vpack.c.bf16 %v2054, %v1675
  %v2057 = vperm.slane %v1263, 0
  %v2063 = vunpack.c.l.b16 %v1258
  %v2064 = vunpack.c.l.b16 %v1259
  %v2065 = vunpack.c.l.b16 %v1260
  %v2066 = vunpack.c.l.b16 %v1261
  %v2067 = vpack.c.b16 %v2064, %v2063
  %v2068 = vpack.c.b16 %v2066, %v2065
  %v2072 = vsel %vm219, %v2055, 0
  %2074 = vmatpush.bf16.msra.mxu0 0
  %2075 = vmatpush.bf16.msra.mxu0 0
  %2076 = vmatpush.bf16.msra.mxu0 0
  %2077 = vmatpush.bf16.msra.mxu0 0
  %2078 = vmatpush.bf16.msra.mxu0 0
  %2079 = vmatpush.bf16.msra.mxu0 0
  %2080 = vmatpush.bf16.msra.mxu0 %v2068
  %2081 = vmatpush.bf16.msra.mxu0 %v2067
  %2082 = vmatmul.bf16.gmra.mxu0 %v2072
  %v2083 = vpop.f32.mrf.mxu0
  %v2084 = vadd.f32 %v2057, %v2083
  %v2085 = vpop.f32.mrf.mxu0
  %v2086 = vadd.f32 %v2057, %v2085
  %2087 = vdwg.mxu0
  %v2088 = vadd.f32 %v1248, %v2084
  %v2089 = vadd.f32 %v1249, %v2086
  %s2090 = scalar_lea.vmem %s17, 1
  %v2091 = vld [vmem:[%s2090] sm:$0x1]
  %s2092 = scalar_lea.vmem %s19, 1
  %v2093 = vld [vmem:[%s2092] sm:$0x1]
  %v2094 = vsel %vm219, %v2088, 0.0
  %2095 = vadd.xlane.f32.xlu0 %v2094
  %v2096 = vpop.xlane.xlu0 %2095
  %v2097 = vsel %vm219, %v2089, 0.0
  %2098 = vadd.xlane.f32.xlu0 %v2097
  %v2099 = vpop.xlane.xlu0 %2098
  %v2100 = vmul.f32 %v2096, %v1048
  %v2101 = vmul.f32 %v2099, %v1048
  %v2102 = vsub.f32 %v2088, %v2100
  %v2103 = vsub.f32 %v2089, %v2101
  %v2104 = vmul.f32 %v2102, %v2102
  %v2105 = vmul.f32 %v2103, %v2103
  %v2106 = vsel %vm219, %v2104, 0.0
  %2107 = vadd.xlane.f32.xlu0 %v2106
  %v2108 = vpop.xlane.xlu0 %2107
  %v2109 = vsel %vm219, %v2105, 0.0
  %2110 = vadd.xlane.f32.xlu0 %v2109
  %v2111 = vpop.xlane.xlu0 %2110
  %v2112 = vmul.f32 %v2108, %v1048
  %v2113 = vmul.f32 %v2111, %v1048
  %v2114 = vadd.f32 %v2112, 1e-05
  %v2115 = vadd.f32 %v2113, 1e-05
  %v2116 = vrsqrt.pop %v2114
  %v2117 = vmul.f32 %v2116, %v2114
  %v2118 = vmul.f32 %v2117, %v2116
  %v2119 = vmul.f32 0.5, %v2118
  %v2120 = vsub.f32 1.5, %v2119
  %v2121 = vmul.f32 %v2116, %v2120
  %vm2122 = vweird.f32 %v2114
  %vm2123 = vweird.f32 %v2116
  %vm2124 = vmor %vm2122, %vm2123
  %v2125 = vsel %vm2124, %v2116, %v2121
  %v2126 = vrsqrt.pop %v2115
  %v2127 = vmul.f32 %v2126, %v2115
  %v2128 = vmul.f32 %v2127, %v2126
  %v2129 = vmul.f32 0.5, %v2128
  %v2130 = vsub.f32 1.5, %v2129
  %v2131 = vmul.f32 %v2126, %v2130
  %vm2132 = vweird.f32 %v2115
  %vm2133 = vweird.f32 %v2126
  %vm2134 = vmor %vm2132, %vm2133
  %v2135 = vsel %vm2134, %v2126, %v2131
  %v2136 = vmul.f32 %v2102, %v2125
  %v2137 = vmul.f32 %v2103, %v2135
  %v2139 = vperm.slane %v2091, 0
  %v2141 = vmul.f32 %v2136, %v2139
  %v2142 = vmul.f32 %v2137, %v2139
  %v2144 = vperm.slane %v2093, 0
  %v2146 = vadd.f32 %v2141, %v2144
  %v2147 = vadd.f32 %v2142, %v2144
  %s2148 = scalar_lea.vmem %s21, 16
  %v2149 = vld [vmem:[%s2148] sm:$0xf]
  %v2150 = vld [vmem:[%s2148 + $0x4] sm:$0xf]
  %v2151 = vld [vmem:[%s2148 + $0x8] sm:$0xf]
  %v2152 = vld [vmem:[%s2148 + $0xc] sm:$0xf]
  %s2153 = scalar_lea.vmem %s23, 1
  %v2154 = vld [vmem:[%s2153] sm:$0x1]
  %s2155 = scalar_lea.vmem %s25, 32
  %v2156 = vld [vmem:[%s2155] sm:$0xf]
  %v2157 = vld [vmem:[%s2155 + $0x4] sm:$0xf]
  %v2158 = vld [vmem:[%s2155 + $0x8] sm:$0xf]
  %v2159 = vld [vmem:[%s2155 + $0xc] sm:$0xf]
  %v2160 = vld [vmem:[%s2155 + $0x10] sm:$0xf]
  %v2161 = vld [vmem:[%s2155 + $0x14] sm:$0xf]
  %v2162 = vld [vmem:[%s2155 + $0x18] sm:$0xf]
  %v2163 = vld [vmem:[%s2155 + $0x1c] sm:$0xf]
  %s2164 = scalar_lea.vmem %s27, 1
  %v2165 = vld [vmem:[%s2164] sm:$0x1]
  %v2166 = vpack.c.bf16 %v2147, %v2146
  %v2168 = vperm.slane %v2154, 0
  %v2174 = vunpack.c.l.b16 %v2149
  %v2175 = vunpack.c.l.b16 %v2150
  %v2176 = vunpack.c.l.b16 %v2151
  %v2177 = vunpack.c.l.b16 %v2152
  %v2178 = vpack.c.b16 %v2175, %v2174
  %v2179 = vpack.c.b16 %v2177, %v2176
  %v2183 = vsel %vm219, %v2166, 0
  %2185 = vmatpush.bf16.msra.mxu0 0
  %2186 = vmatpush.bf16.msra.mxu0 0
  %2187 = vmatpush.bf16.msra.mxu0 0
  %2188 = vmatpush.bf16.msra.mxu0 0
  %2189 = vmatpush.bf16.msra.mxu0 0
  %2190 = vmatpush.bf16.msra.mxu0 0
  %2191 = vmatpush.bf16.msra.mxu0 %v2179
  %2192 = vmatpush.bf16.msra.mxu0 %v2178
  %2193 = vmatmul.bf16.gmra.mxu0 %v2183
  %v2194 = vpop.f32.mrf.mxu0
  %v2195 = vadd.f32 %v2168, %v2194
  %v2196 = vpop.f32.mrf.mxu0
  %v2197 = vadd.f32 %v2168, %v2196
  %2198 = vdwg.mxu0
  %v2199 = vmax.f32 %v2195, 0.0
  %v2200 = vmax.f32 %v2197, 0.0
  %v2201 = vpack.c.bf16 %v2200, %v2199
  %v2203 = vperm.slane %v2165, 0
  %v2213 = vunpack.c.l.b16 %v2156
  %v2214 = vunpack.c.l.b16 %v2157
  %v2215 = vunpack.c.l.b16 %v2158
  %v2216 = vunpack.c.l.b16 %v2159
  %v2217 = vunpack.c.l.b16 %v2160
  %v2218 = vunpack.c.l.b16 %v2161
  %v2219 = vunpack.c.l.b16 %v2162
  %v2220 = vunpack.c.l.b16 %v2163
  %v2221 = vpack.c.b16 %v2214, %v2213
  %v2222 = vpack.c.b16 %v2216, %v2215
  %v2223 = vpack.c.b16 %v2218, %v2217
  %v2224 = vpack.c.b16 %v2220, %v2219
  %v2230 = vsel %vm1174, %v2201, 0
  %2232 = vmatpush.bf16.msra.mxu0 0
  %2233 = vmatpush.bf16.msra.mxu0 0
  %2234 = vmatpush.bf16.msra.mxu0 0
  %2235 = vmatpush.bf16.msra.mxu0 0
  %2236 = vmatpush.bf16.msra.mxu0 %v2224
  %2237 = vmatpush.bf16.msra.mxu0 %v2223
  %2238 = vmatpush.bf16.msra.mxu0 %v2222
  %2239 = vmatpush.bf16.msra.mxu0 %v2221
  %2240 = vmatmul.bf16.gmra.mxu0 %v2230
  %v2241 = vpop.f32.mrf.mxu0
  %v2242 = vadd.f32 %v2203, %v2241
  %v2243 = vpop.f32.mrf.mxu0
  %v2244 = vadd.f32 %v2203, %v2243
  %2245 = vdwg.mxu0
  %v2246 = vadd.f32 %v2146, %v2242
  %v2247 = vadd.f32 %v2147, %v2244
  %s2248 = scalar_lea.vmem %s29, 1
  %v2249 = vld [vmem:[%s2248] sm:$0x1]
  %s2250 = scalar_lea.vmem %s31, 1
  %v2251 = vld [vmem:[%s2250] sm:$0x1]
  %v2252 = vsel %vm219, %v2246, 0.0
  %2253 = vadd.xlane.f32.xlu0 %v2252
  %v2254 = vpop.xlane.xlu0 %2253
  %v2255 = vsel %vm219, %v2247, 0.0
  %2256 = vadd.xlane.f32.xlu0 %v2255
  %v2257 = vpop.xlane.xlu0 %2256
  %v2258 = vmul.f32 %v2254, %v1048
  %v2259 = vmul.f32 %v2257, %v1048
  %v2260 = vsub.f32 %v2246, %v2258
  %v2261 = vsub.f32 %v2247, %v2259
  %v2262 = vmul.f32 %v2260, %v2260
  %v2263 = vmul.f32 %v2261, %v2261
  %v2264 = vsel %vm219, %v2262, 0.0
  %2265 = vadd.xlane.f32.xlu0 %v2264
  %v2266 = vpop.xlane.xlu0 %2265
  %v2267 = vsel %vm219, %v2263, 0.0
  %2268 = vadd.xlane.f32.xlu0 %v2267
  %v2269 = vpop.xlane.xlu0 %2268
  %v2270 = vmul.f32 %v2266, %v1048
  %v2271 = vmul.f32 %v2269, %v1048
  %v2272 = vadd.f32 %v2270, 1e-05
  %v2273 = vadd.f32 %v2271, 1e-05
  %v2274 = vrsqrt.pop %v2272
  %v2275 = vmul.f32 %v2274, %v2272
  %v2276 = vmul.f32 %v2275, %v2274
  %v2277 = vmul.f32 0.5, %v2276
  %v2278 = vsub.f32 1.5, %v2277
  %v2279 = vmul.f32 %v2274, %v2278
  %vm2280 = vweird.f32 %v2272
  %vm2281 = vweird.f32 %v2274
  %vm2282 = vmor %vm2280, %vm2281
  %v2283 = vsel %vm2282, %v2274, %v2279
  %v2284 = vrsqrt.pop %v2273
  %v2285 = vmul.f32 %v2284, %v2273
  %v2286 = vmul.f32 %v2285, %v2284
  %v2287 = vmul.f32 0.5, %v2286
  %v2288 = vsub.f32 1.5, %v2287
  %v2289 = vmul.f32 %v2284, %v2288
  %vm2290 = vweird.f32 %v2273
  %vm2291 = vweird.f32 %v2284
  %vm2292 = vmor %vm2290, %vm2291
  %v2293 = vsel %vm2292, %v2284, %v2289
  %v2294 = vmul.f32 %v2260, %v2283
  %v2295 = vmul.f32 %v2261, %v2293
  %v2297 = vperm.slane %v2249, 0
  %v2299 = vmul.f32 %v2294, %v2297
  %v2300 = vmul.f32 %v2295, %v2297
  %v2302 = vperm.slane %v2251, 0
  %v2304 = vadd.f32 %v2299, %v2302
  %v2305 = vadd.f32 %v2300, %v2302
  %v2306 = vld [vmem:[%s33] sm:$0xf]
  %v2307 = vld [vmem:[%s33 + $0x4] sm:$0xf]
  %v2308 = vld [vmem:[%s33 + $0x8] sm:$0xf]
  %v2309 = vld [vmem:[%s33 + $0xc] sm:$0xf]
  %v2310 = vld [vmem:[%s35] sm:$0x1]
  %v2311 = vld [vmem:[%s37] sm:$0xf]
  %v2312 = vld [vmem:[%s37 + $0x4] sm:$0xf]
  %v2313 = vld [vmem:[%s37 + $0x8] sm:$0xf]
  %v2314 = vld [vmem:[%s37 + $0xc] sm:$0xf]
  %v2315 = vld [vmem:[%s39] sm:$0x1]
  %v2317 = vperm.slane %v2310, 0
  %v2323 = vunpack.c.l.b16 %v2306
  %v2324 = vunpack.c.l.b16 %v2307
  %v2325 = vunpack.c.l.b16 %v2308
  %v2326 = vunpack.c.l.b16 %v2309
  %v2327 = vpack.c.b16 %v2324, %v2323
  %v2328 = vpack.c.b16 %v2326, %v2325
  %v2332 = vsel %vm219, 0, 0
  %2334 = vmatpush.bf16.msra.mxu0 0
  %2335 = vmatpush.bf16.msra.mxu0 0
  %2336 = vmatpush.bf16.msra.mxu0 0
  %2337 = vmatpush.bf16.msra.mxu0 0
  %2338 = vmatpush.bf16.msra.mxu0 0
  %2339 = vmatpush.bf16.msra.mxu0 0
  %2340 = vmatpush.bf16.msra.mxu0 %v2328
  %2341 = vmatpush.bf16.msra.mxu0 %v2327
  %2342 = vmatmul.bf16.gmra.mxu0 %v2332
  %v2343 = vpop.f32.mrf.mxu0
  %v2344 = vadd.f32 %v2317, %v2343
  %v2345 = vpop.f32.mrf.mxu0
  %v2346 = vadd.f32 %v2317, %v2345
  %2347 = vdwg.mxu0
  %v2348 = vmul.f32 %v2344, 0.35355338
  %v2349 = vpack.c.bf16 %v2348, %v2348
  %2351 = vrot.lane.b32.xlu0 %v2344, 96
  %v2352 = vpop.permute.xlu0 %2351
  %2354 = vxpose.xlu0.b32.start [1/16] %v2352, 128
  %2355 = vxpose.xlu0.b32.cont [2/16] 0.0, 128
  %2356 = vxpose.xlu0.b32.cont [3/16] 0.0, 128
  %2357 = vxpose.xlu0.b32.cont [4/16] 0.0, 128
  %2358 = vxpose.xlu0.b32.cont [5/16] 0.0, 128
  %2359 = vxpose.xlu0.b32.cont [6/16] 0.0, 128
  %2360 = vxpose.xlu0.b32.cont [7/16] 0.0, 128
  %2361 = vxpose.xlu0.b32.cont [8/16] 0.0, 128
  %2362 = vxpose.xlu0.b32.cont [9/16] 0.0, 128
  %2363 = vxpose.xlu0.b32.cont [10/16] 0.0, 128
  %2364 = vxpose.xlu0.b32.cont [11/16] 0.0, 128
  %2365 = vxpose.xlu0.b32.cont [12/16] 0.0, 128
  %2366 = vxpose.xlu0.b32.cont [13/16] 0.0, 128
  %2367 = vxpose.xlu0.b32.cont [14/16] 0.0, 128
  %2368 = vxpose.xlu0.b32.cont [15/16] 0.0, 128
  %2369 = vxpose.xlu0.b32.end [16/16] 0.0, 128
  %v2370 = vpop.trf.xlu0
  %v2371 = vpop.trf.xlu0
  %v2372 = vpop.trf.xlu0
  %v2373 = vpop.trf.xlu0
  %v2374 = vpop.trf.xlu0
  %v2375 = vpop.trf.xlu0
  %v2376 = vpop.trf.xlu0
  %v2377 = vpop.trf.xlu0
  %v2378 = vpop.trf.xlu0
  %v2379 = vpop.trf.xlu0
  %v2380 = vpop.trf.xlu0
  %v2381 = vpop.trf.xlu0
  %v2382 = vpop.trf.xlu0
  %v2383 = vpop.trf.xlu0
  %v2384 = vpop.trf.xlu0
  %v2385 = vpop.trf.xlu0
  %v2386 = vpack.c.bf16 %v2370, %v2370
  %v2388 = vsel %vm276, %v2349, 0
  %v2391 = vsel %vm280, %v2386, 0
  %2393 = vmatpush.bf16.msra.mxu0 0
  %2394 = vmatpush.bf16.msra.mxu0 0
  %2395 = vmatpush.bf16.msra.mxu0 0
  %2396 = vmatpush.bf16.msra.mxu0 0
  %2397 = vmatpush.bf16.msra.mxu0 0
  %2398 = vmatpush.bf16.msra.mxu0 0
  %2399 = vmatpush.bf16.msra.mxu0 0
  %2400 = vmatpush.bf16.msra.mxu0 %v2391
  %2401 = vmatmul.bf16.gmra.mxu0 %v2388
  %v2402 = vpop.f32.mrf.mxu0
  %v2403 = vadd.f32 0.0, %v2402
  %v2404 = vpop.f32.mrf.mxu0
  %2405 = vdwg.mxu0
  %v2406 = vsel %vm276, %v2403, -inf
  %2407 = vmax.xlane.f32.xlu0 %v2406
  %v2408 = vpop.xlane.xlu0 %2407
  %v2409 = vsub.f32 %v2403, %v2408
  %v2410 = vmul.f32 %v2409, 1.442695
  %v2411 = vpow.pop %v2410
  %v2412 = vsel %vm276, %v2411, 0.0
  %2413 = vadd.xlane.f32.xlu0 %v2412
  %v2414 = vpop.xlane.xlu0 %2413
  %v2415 = vrcp.pop %v2414
  %v2416 = vmul.f32 %v2411, %v2415
  %v2417 = vpack.c.bf16 %v2416, %v2416
  %v2418 = vpack.c.bf16 %v2344, %v2344
  %2420 = vrot.lane.b32.xlu0 %v2418, 64
  %v2421 = vpop.permute.xlu0 %2420
  %v2423 = vsel %vm276, %v2417, 0
  %v2426 = vsel %vm280, %v2421, 0
  %2428 = vmatpush.bf16.msra.mxu0 0
  %2429 = vmatpush.bf16.msra.mxu0 0
  %2430 = vmatpush.bf16.msra.mxu0 0
  %2431 = vmatpush.bf16.msra.mxu0 0
  %2432 = vmatpush.bf16.msra.mxu0 0
  %2433 = vmatpush.bf16.msra.mxu0 0
  %2434 = vmatpush.bf16.msra.mxu0 0
  %2435 = vmatpush.bf16.msra.mxu0 %v2426
  %2436 = vmatmul.bf16.gmra.mxu0 %v2423
  %v2437 = vpop.f32.mrf.mxu0
  %v2438 = vadd.f32 0.0, %v2437
  %v2439 = vpop.f32.mrf.mxu0
  %2440 = vdwg.mxu0
  %2441 = vrot.lane.b32.xlu0 %v2344, 88
  %v2442 = vpop.permute.xlu0 %2441
  %2444 = vxpose.xlu0.b32.start [1/16] %v2442, 128
  %2445 = vxpose.xlu0.b32.cont [2/16] 0.0, 128
  %2446 = vxpose.xlu0.b32.cont [3/16] 0.0, 128
  %2447 = vxpose.xlu0.b32.cont [4/16] 0.0, 128
  %2448 = vxpose.xlu0.b32.cont [5/16] 0.0, 128
  %2449 = vxpose.xlu0.b32.cont [6/16] 0.0, 128
  %2450 = vxpose.xlu0.b32.cont [7/16] 0.0, 128
  %2451 = vxpose.xlu0.b32.cont [8/16] 0.0, 128
  %2452 = vxpose.xlu0.b32.cont [9/16] 0.0, 128
  %2453 = vxpose.xlu0.b32.cont [10/16] 0.0, 128
  %2454 = vxpose.xlu0.b32.cont [11/16] 0.0, 128
  %2455 = vxpose.xlu0.b32.cont [12/16] 0.0, 128
  %2456 = vxpose.xlu0.b32.cont [13/16] 0.0, 128
  %2457 = vxpose.xlu0.b32.cont [14/16] 0.0, 128
  %2458 = vxpose.xlu0.b32.cont [15/16] 0.0, 128
  %2459 = vxpose.xlu0.b32.end [16/16] 0.0, 128
  %v2460 = vpop.trf.xlu0
  %v2461 = vpop.trf.xlu0
  %v2462 = vpop.trf.xlu0
  %v2463 = vpop.trf.xlu0
  %v2464 = vpop.trf.xlu0
  %v2465 = vpop.trf.xlu0
  %v2466 = vpop.trf.xlu0
  %v2467 = vpop.trf.xlu0
  %v2468 = vpop.trf.xlu0
  %v2469 = vpop.trf.xlu0
  %v2470 = vpop.trf.xlu0
  %v2471 = vpop.trf.xlu0
  %v2472 = vpop.trf.xlu0
  %v2473 = vpop.trf.xlu0
  %v2474 = vpop.trf.xlu0
  %v2475 = vpop.trf.xlu0
  %v2476 = vpack.c.bf16 %v2460, %v2460
  %2478 = vrot.lane.b32.xlu0 %v2349, 120
  %v2479 = vpop.permute.xlu0 %2478
  %v2481 = vsel %vm276, %v2479, 0
  %v2484 = vsel %vm280, %v2476, 0
  %2486 = vmatpush.bf16.msra.mxu0 0
  %2487 = vmatpush.bf16.msra.mxu0 0
  %2488 = vmatpush.bf16.msra.mxu0 0
  %2489 = vmatpush.bf16.msra.mxu0 0
  %2490 = vmatpush.bf16.msra.mxu0 0
  %2491 = vmatpush.bf16.msra.mxu0 0
  %2492 = vmatpush.bf16.msra.mxu0 0
  %2493 = vmatpush.bf16.msra.mxu0 %v2484
  %2494 = vmatmul.bf16.gmra.mxu0 %v2481
  %v2495 = vpop.f32.mrf.mxu0
  %v2496 = vadd.f32 0.0, %v2495
  %v2497 = vpop.f32.mrf.mxu0
  %2498 = vdwg.mxu0
  %v2499 = vsel %vm276, %v2496, -inf
  %2500 = vmax.xlane.f32.xlu0 %v2499
  %v2501 = vpop.xlane.xlu0 %2500
  %v2502 = vsub.f32 %v2496, %v2501
  %v2503 = vmul.f32 %v2502, 1.442695
  %v2504 = vpow.pop %v2503
  %v2505 = vsel %vm276, %v2504, 0.0
  %2506 = vadd.xlane.f32.xlu0 %v2505
  %v2507 = vpop.xlane.xlu0 %2506
  %v2508 = vrcp.pop %v2507
  %v2509 = vmul.f32 %v2504, %v2508
  %v2510 = vpack.c.bf16 %v2509, %v2509
  %2511 = vrot.lane.b32.xlu0 %v2418, 56
  %v2512 = vpop.permute.xlu0 %2511
  %v2514 = vsel %vm276, %v2510, 0
  %v2517 = vsel %vm280, %v2512, 0
  %2519 = vmatpush.bf16.msra.mxu0 0
  %2520 = vmatpush.bf16.msra.mxu0 0
  %2521 = vmatpush.bf16.msra.mxu0 0
  %2522 = vmatpush.bf16.msra.mxu0 0
  %2523 = vmatpush.bf16.msra.mxu0 0
  %2524 = vmatpush.bf16.msra.mxu0 0
  %2525 = vmatpush.bf16.msra.mxu0 0
  %2526 = vmatpush.bf16.msra.mxu0 %v2517
  %2527 = vmatmul.bf16.gmra.mxu0 %v2514
  %v2528 = vpop.f32.mrf.mxu0
  %v2529 = vadd.f32 0.0, %v2528
  %v2530 = vpop.f32.mrf.mxu0
  %2531 = vdwg.mxu0
  %2532 = vrot.lane.b32.xlu0 %v2344, 80
  %v2533 = vpop.permute.xlu0 %2532
  %2535 = vxpose.xlu0.b32.start [1/16] %v2533, 128
  %2536 = vxpose.xlu0.b32.cont [2/16] 0.0, 128
  %2537 = vxpose.xlu0.b32.cont [3/16] 0.0, 128
  %2538 = vxpose.xlu0.b32.cont [4/16] 0.0, 128
  %2539 = vxpose.xlu0.b32.cont [5/16] 0.0, 128
  %2540 = vxpose.xlu0.b32.cont [6/16] 0.0, 128
  %2541 = vxpose.xlu0.b32.cont [7/16] 0.0, 128
  %2542 = vxpose.xlu0.b32.cont [8/16] 0.0, 128
  %2543 = vxpose.xlu0.b32.cont [9/16] 0.0, 128
  %2544 = vxpose.xlu0.b32.cont [10/16] 0.0, 128
  %2545 = vxpose.xlu0.b32.cont [11/16] 0.0, 128
  %2546 = vxpose.xlu0.b32.cont [12/16] 0.0, 128
  %2547 = vxpose.xlu0.b32.cont [13/16] 0.0, 128
  %2548 = vxpose.xlu0.b32.cont [14/16] 0.0, 128
  %2549 = vxpose.xlu0.b32.cont [15/16] 0.0, 128
  %2550 = vxpose.xlu0.b32.end [16/16] 0.0, 128
  %v2551 = vpop.trf.xlu0
  %v2552 = vpop.trf.xlu0
  %v2553 = vpop.trf.xlu0
  %v2554 = vpop.trf.xlu0
  %v2555 = vpop.trf.xlu0
  %v2556 = vpop.trf.xlu0
  %v2557 = vpop.trf.xlu0
  %v2558 = vpop.trf.xlu0
  %v2559 = vpop.trf.xlu0
  %v2560 = vpop.trf.xlu0
  %v2561 = vpop.trf.xlu0
  %v2562 = vpop.trf.xlu0
  %v2563 = vpop.trf.xlu0
  %v2564 = vpop.trf.xlu0
  %v2565 = vpop.trf.xlu0
  %v2566 = vpop.trf.xlu0
  %v2567 = vpack.c.bf16 %v2551, %v2551
  %2568 = vrot.lane.b32.xlu0 %v2349, 112
  %v2569 = vpop.permute.xlu0 %2568
  %v2571 = vsel %vm276, %v2569, 0
  %v2574 = vsel %vm280, %v2567, 0
  %2576 = vmatpush.bf16.msra.mxu0 0
  %2577 = vmatpush.bf16.msra.mxu0 0
  %2578 = vmatpush.bf16.msra.mxu0 0
  %2579 = vmatpush.bf16.msra.mxu0 0
  %2580 = vmatpush.bf16.msra.mxu0 0
  %2581 = vmatpush.bf16.msra.mxu0 0
  %2582 = vmatpush.bf16.msra.mxu0 0
  %2583 = vmatpush.bf16.msra.mxu0 %v2574
  %2584 = vmatmul.bf16.gmra.mxu0 %v2571
  %v2585 = vpop.f32.mrf.mxu0
  %v2586 = vadd.f32 0.0, %v2585
  %v2587 = vpop.f32.mrf.mxu0
  %2588 = vdwg.mxu0
  %v2589 = vsel %vm276, %v2586, -inf
  %2590 = vmax.xlane.f32.xlu0 %v2589
  %v2591 = vpop.xlane.xlu0 %2590
  %v2592 = vsub.f32 %v2586, %v2591
  %v2593 = vmul.f32 %v2592, 1.442695
  %v2594 = vpow.pop %v2593
  %v2595 = vsel %vm276, %v2594, 0.0
  %2596 = vadd.xlane.f32.xlu0 %v2595
  %v2597 = vpop.xlane.xlu0 %2596
  %v2598 = vrcp.pop %v2597
  %v2599 = vmul.f32 %v2594, %v2598
  %v2600 = vpack.c.bf16 %v2599, %v2599
  %2601 = vrot.lane.b32.xlu0 %v2418, 48
  %v2602 = vpop.permute.xlu0 %2601
  %v2604 = vsel %vm276, %v2600, 0
  %v2607 = vsel %vm280, %v2602, 0
  %2609 = vmatpush.bf16.msra.mxu0 0
  %2610 = vmatpush.bf16.msra.mxu0 0
  %2611 = vmatpush.bf16.msra.mxu0 0
  %2612 = vmatpush.bf16.msra.mxu0 0
  %2613 = vmatpush.bf16.msra.mxu0 0
  %2614 = vmatpush.bf16.msra.mxu0 0
  %2615 = vmatpush.bf16.msra.mxu0 0
  %2616 = vmatpush.bf16.msra.mxu0 %v2607
  %2617 = vmatmul.bf16.gmra.mxu0 %v2604
  %v2618 = vpop.f32.mrf.mxu0
  %v2619 = vadd.f32 0.0, %v2618
  %v2620 = vpop.f32.mrf.mxu0
  %2621 = vdwg.mxu0
  %2622 = vrot.lane.b32.xlu0 %v2344, 72
  %v2623 = vpop.permute.xlu0 %2622
  %2625 = vxpose.xlu0.b32.start [1/16] %v2623, 128
  %2626 = vxpose.xlu0.b32.cont [2/16] 0.0, 128
  %2627 = vxpose.xlu0.b32.cont [3/16] 0.0, 128
  %2628 = vxpose.xlu0.b32.cont [4/16] 0.0, 128
  %2629 = vxpose.xlu0.b32.cont [5/16] 0.0, 128
  %2630 = vxpose.xlu0.b32.cont [6/16] 0.0, 128
  %2631 = vxpose.xlu0.b32.cont [7/16] 0.0, 128
  %2632 = vxpose.xlu0.b32.cont [8/16] 0.0, 128
  %2633 = vxpose.xlu0.b32.cont [9/16] 0.0, 128
  %2634 = vxpose.xlu0.b32.cont [10/16] 0.0, 128
  %2635 = vxpose.xlu0.b32.cont [11/16] 0.0, 128
  %2636 = vxpose.xlu0.b32.cont [12/16] 0.0, 128
  %2637 = vxpose.xlu0.b32.cont [13/16] 0.0, 128
  %2638 = vxpose.xlu0.b32.cont [14/16] 0.0, 128
  %2639 = vxpose.xlu0.b32.cont [15/16] 0.0, 128
  %2640 = vxpose.xlu0.b32.end [16/16] 0.0, 128
  %v2641 = vpop.trf.xlu0
  %v2642 = vpop.trf.xlu0
  %v2643 = vpop.trf.xlu0
  %v2644 = vpop.trf.xlu0
  %v2645 = vpop.trf.xlu0
  %v2646 = vpop.trf.xlu0
  %v2647 = vpop.trf.xlu0
  %v2648 = vpop.trf.xlu0
  %v2649 = vpop.trf.xlu0
  %v2650 = vpop.trf.xlu0
  %v2651 = vpop.trf.xlu0
  %v2652 = vpop.trf.xlu0
  %v2653 = vpop.trf.xlu0
  %v2654 = vpop.trf.xlu0
  %v2655 = vpop.trf.xlu0
  %v2656 = vpop.trf.xlu0
  %v2657 = vpack.c.bf16 %v2641, %v2641
  %2658 = vrot.lane.b32.xlu0 %v2349, 104
  %v2659 = vpop.permute.xlu0 %2658
  %v2661 = vsel %vm276, %v2659, 0
  %v2664 = vsel %vm280, %v2657, 0
  %2666 = vmatpush.bf16.msra.mxu0 0
  %2667 = vmatpush.bf16.msra.mxu0 0
  %2668 = vmatpush.bf16.msra.mxu0 0
  %2669 = vmatpush.bf16.msra.mxu0 0
  %2670 = vmatpush.bf16.msra.mxu0 0
  %2671 = vmatpush.bf16.msra.mxu0 0
  %2672 = vmatpush.bf16.msra.mxu0 0
  %2673 = vmatpush.bf16.msra.mxu0 %v2664
  %2674 = vmatmul.bf16.gmra.mxu0 %v2661
  %v2675 = vpop.f32.mrf.mxu0
  %v2676 = vadd.f32 0.0, %v2675
  %v2677 = vpop.f32.mrf.mxu0
  %2678 = vdwg.mxu0
  %v2679 = vsel %vm276, %v2676, -inf
  %2680 = vmax.xlane.f32.xlu0 %v2679
  %v2681 = vpop.xlane.xlu0 %2680
  %v2682 = vsub.f32 %v2676, %v2681
  %v2683 = vmul.f32 %v2682, 1.442695
  %v2684 = vpow.pop %v2683
  %v2685 = vsel %vm276, %v2684, 0.0
  %2686 = vadd.xlane.f32.xlu0 %v2685
  %v2687 = vpop.xlane.xlu0 %2686
  %v2688 = vrcp.pop %v2687
  %v2689 = vmul.f32 %v2684, %v2688
  %v2690 = vpack.c.bf16 %v2689, %v2689
  %2691 = vrot.lane.b32.xlu0 %v2418, 40
  %v2692 = vpop.permute.xlu0 %2691
  %v2694 = vsel %vm276, %v2690, 0
  %v2697 = vsel %vm280, %v2692, 0
  %2699 = vmatpush.bf16.msra.mxu0 0
  %2700 = vmatpush.bf16.msra.mxu0 0
  %2701 = vmatpush.bf16.msra.mxu0 0
  %2702 = vmatpush.bf16.msra.mxu0 0
  %2703 = vmatpush.bf16.msra.mxu0 0
  %2704 = vmatpush.bf16.msra.mxu0 0
  %2705 = vmatpush.bf16.msra.mxu0 0
  %2706 = vmatpush.bf16.msra.mxu0 %v2697
  %2707 = vmatmul.bf16.gmra.mxu0 %v2694
  %v2708 = vpop.f32.mrf.mxu0
  %v2709 = vadd.f32 0.0, %v2708
  %v2710 = vpop.f32.mrf.mxu0
  %2711 = vdwg.mxu0
  %2713 = vrot.lane.b32.xlu0 %v2529, 8
  %v2714 = vpop.permute.xlu0 %2713
  %2717 = vrot.lane.b32.xlu0 %v2619, 16
  %v2718 = vpop.permute.xlu0 %2717
  %2721 = vrot.lane.b32.xlu0 %v2709, 24
  %v2722 = vpop.permute.xlu0 %2721
  %v2724 = vsel %vm276, %v2438, %v2714
  %v2725 = vsel %vm616, %v2724, %v2718
  %v2726 = vsel %vm618, %v2725, %v2722
  %v2727 = vmul.f32 %v2346, 0.35355338
  %v2728 = vpack.c.bf16 %v2727, %v2727
  %2730 = vrot.lane.b32.xlu0 %v2346, 96
  %v2731 = vpop.permute.xlu0 %2730
  %2733 = vxpose.xlu0.b32.start [1/16] %v2731, 128
  %2734 = vxpose.xlu0.b32.cont [2/16] 0.0, 128
  %2735 = vxpose.xlu0.b32.cont [3/16] 0.0, 128
  %2736 = vxpose.xlu0.b32.cont [4/16] 0.0, 128
  %2737 = vxpose.xlu0.b32.cont [5/16] 0.0, 128
  %2738 = vxpose.xlu0.b32.cont [6/16] 0.0, 128
  %2739 = vxpose.xlu0.b32.cont [7/16] 0.0, 128
  %2740 = vxpose.xlu0.b32.cont [8/16] 0.0, 128
  %2741 = vxpose.xlu0.b32.cont [9/16] 0.0, 128
  %2742 = vxpose.xlu0.b32.cont [10/16] 0.0, 128
  %2743 = vxpose.xlu0.b32.cont [11/16] 0.0, 128
  %2744 = vxpose.xlu0.b32.cont [12/16] 0.0, 128
  %2745 = vxpose.xlu0.b32.cont [13/16] 0.0, 128
  %2746 = vxpose.xlu0.b32.cont [14/16] 0.0, 128
  %2747 = vxpose.xlu0.b32.cont [15/16] 0.0, 128
  %2748 = vxpose.xlu0.b32.end [16/16] 0.0, 128
  %v2749 = vpop.trf.xlu0
  %v2750 = vpop.trf.xlu0
  %v2751 = vpop.trf.xlu0
  %v2752 = vpop.trf.xlu0
  %v2753 = vpop.trf.xlu0
  %v2754 = vpop.trf.xlu0
  %v2755 = vpop.trf.xlu0
  %v2756 = vpop.trf.xlu0
  %v2757 = vpop.trf.xlu0
  %v2758 = vpop.trf.xlu0
  %v2759 = vpop.trf.xlu0
  %v2760 = vpop.trf.xlu0
  %v2761 = vpop.trf.xlu0
  %v2762 = vpop.trf.xlu0
  %v2763 = vpop.trf.xlu0
  %v2764 = vpop.trf.xlu0
  %v2765 = vpack.c.bf16 %v2749, %v2749
  %v2767 = vsel %vm276, %v2728, 0
  %v2770 = vsel %vm280, %v2765, 0
  %2772 = vmatpush.bf16.msra.mxu0 0
  %2773 = vmatpush.bf16.msra.mxu0 0
  %2774 = vmatpush.bf16.msra.mxu0 0
  %2775 = vmatpush.bf16.msra.mxu0 0
  %2776 = vmatpush.bf16.msra.mxu0 0
  %2777 = vmatpush.bf16.msra.mxu0 0
  %2778 = vmatpush.bf16.msra.mxu0 0
  %2779 = vmatpush.bf16.msra.mxu0 %v2770
  %2780 = vmatmul.bf16.gmra.mxu0 %v2767
  %v2781 = vpop.f32.mrf.mxu0
  %v2782 = vadd.f32 0.0, %v2781
  %v2783 = vpop.f32.mrf.mxu0
  %2784 = vdwg.mxu0
  %v2785 = vsel %vm276, %v2782, -inf
  %2786 = vmax.xlane.f32.xlu0 %v2785
  %v2787 = vpop.xlane.xlu0 %2786
  %v2788 = vsub.f32 %v2782, %v2787
  %v2789 = vmul.f32 %v2788, 1.442695
  %v2790 = vpow.pop %v2789
  %v2791 = vsel %vm276, %v2790, 0.0
  %2792 = vadd.xlane.f32.xlu0 %v2791
  %v2793 = vpop.xlane.xlu0 %2792
  %v2794 = vrcp.pop %v2793
  %v2795 = vmul.f32 %v2790, %v2794
  %v2796 = vpack.c.bf16 %v2795, %v2795
  %v2797 = vpack.c.bf16 %v2346, %v2346
  %2799 = vrot.lane.b32.xlu0 %v2797, 64
  %v2800 = vpop.permute.xlu0 %2799
  %v2802 = vsel %vm276, %v2796, 0
  %v2805 = vsel %vm280, %v2800, 0
  %2807 = vmatpush.bf16.msra.mxu0 0
  %2808 = vmatpush.bf16.msra.mxu0 0
  %2809 = vmatpush.bf16.msra.mxu0 0
  %2810 = vmatpush.bf16.msra.mxu0 0
  %2811 = vmatpush.bf16.msra.mxu0 0
  %2812 = vmatpush.bf16.msra.mxu0 0
  %2813 = vmatpush.bf16.msra.mxu0 0
  %2814 = vmatpush.bf16.msra.mxu0 %v2805
  %2815 = vmatmul.bf16.gmra.mxu0 %v2802
  %v2816 = vpop.f32.mrf.mxu0
  %v2817 = vadd.f32 0.0, %v2816
  %v2818 = vpop.f32.mrf.mxu0
  %2819 = vdwg.mxu0
  %2820 = vrot.lane.b32.xlu0 %v2346, 88
  %v2821 = vpop.permute.xlu0 %2820
  %2823 = vxpose.xlu0.b32.start [1/16] %v2821, 128
  %2824 = vxpose.xlu0.b32.cont [2/16] 0.0, 128
  %2825 = vxpose.xlu0.b32.cont [3/16] 0.0, 128
  %2826 = vxpose.xlu0.b32.cont [4/16] 0.0, 128
  %2827 = vxpose.xlu0.b32.cont [5/16] 0.0, 128
  %2828 = vxpose.xlu0.b32.cont [6/16] 0.0, 128
  %2829 = vxpose.xlu0.b32.cont [7/16] 0.0, 128
  %2830 = vxpose.xlu0.b32.cont [8/16] 0.0, 128
  %2831 = vxpose.xlu0.b32.cont [9/16] 0.0, 128
  %2832 = vxpose.xlu0.b32.cont [10/16] 0.0, 128
  %2833 = vxpose.xlu0.b32.cont [11/16] 0.0, 128
  %2834 = vxpose.xlu0.b32.cont [12/16] 0.0, 128
  %2835 = vxpose.xlu0.b32.cont [13/16] 0.0, 128
  %2836 = vxpose.xlu0.b32.cont [14/16] 0.0, 128
  %2837 = vxpose.xlu0.b32.cont [15/16] 0.0, 128
  %2838 = vxpose.xlu0.b32.end [16/16] 0.0, 128
  %v2839 = vpop.trf.xlu0
  %v2840 = vpop.trf.xlu0
  %v2841 = vpop.trf.xlu0
  %v2842 = vpop.trf.xlu0
  %v2843 = vpop.trf.xlu0
  %v2844 = vpop.trf.xlu0
  %v2845 = vpop.trf.xlu0
  %v2846 = vpop.trf.xlu0
  %v2847 = vpop.trf.xlu0
  %v2848 = vpop.trf.xlu0
  %v2849 = vpop.trf.xlu0
  %v2850 = vpop.trf.xlu0
  %v2851 = vpop.trf.xlu0
  %v2852 = vpop.trf.xlu0
  %v2853 = vpop.trf.xlu0
  %v2854 = vpop.trf.xlu0
  %v2855 = vpack.c.bf16 %v2839, %v2839
  %2857 = vrot.lane.b32.xlu0 %v2728, 120
  %v2858 = vpop.permute.xlu0 %2857
  %v2860 = vsel %vm276, %v2858, 0
  %v2863 = vsel %vm280, %v2855, 0
  %2865 = vmatpush.bf16.msra.mxu0 0
  %2866 = vmatpush.bf16.msra.mxu0 0
  %2867 = vmatpush.bf16.msra.mxu0 0
  %2868 = vmatpush.bf16.msra.mxu0 0
  %2869 = vmatpush.bf16.msra.mxu0 0
  %2870 = vmatpush.bf16.msra.mxu0 0
  %2871 = vmatpush.bf16.msra.mxu0 0
  %2872 = vmatpush.bf16.msra.mxu0 %v2863
  %2873 = vmatmul.bf16.gmra.mxu0 %v2860
  %v2874 = vpop.f32.mrf.mxu0
  %v2875 = vadd.f32 0.0, %v2874
  %v2876 = vpop.f32.mrf.mxu0
  %2877 = vdwg.mxu0
  %v2878 = vsel %vm276, %v2875, -inf
  %2879 = vmax.xlane.f32.xlu0 %v2878
  %v2880 = vpop.xlane.xlu0 %2879
  %v2881 = vsub.f32 %v2875, %v2880
  %v2882 = vmul.f32 %v2881, 1.442695
  %v2883 = vpow.pop %v2882
  %v2884 = vsel %vm276, %v2883, 0.0
  %2885 = vadd.xlane.f32.xlu0 %v2884
  %v2886 = vpop.xlane.xlu0 %2885
  %v2887 = vrcp.pop %v2886
  %v2888 = vmul.f32 %v2883, %v2887
  %v2889 = vpack.c.bf16 %v2888, %v2888
  %2890 = vrot.lane.b32.xlu0 %v2797, 56
  %v2891 = vpop.permute.xlu0 %2890
  %v2893 = vsel %vm276, %v2889, 0
  %v2896 = vsel %vm280, %v2891, 0
  %2898 = vmatpush.bf16.msra.mxu0 0
  %2899 = vmatpush.bf16.msra.mxu0 0
  %2900 = vmatpush.bf16.msra.mxu0 0
  %2901 = vmatpush.bf16.msra.mxu0 0
  %2902 = vmatpush.bf16.msra.mxu0 0
  %2903 = vmatpush.bf16.msra.mxu0 0
  %2904 = vmatpush.bf16.msra.mxu0 0
  %2905 = vmatpush.bf16.msra.mxu0 %v2896
  %2906 = vmatmul.bf16.gmra.mxu0 %v2893
  %v2907 = vpop.f32.mrf.mxu0
  %v2908 = vadd.f32 0.0, %v2907
  %v2909 = vpop.f32.mrf.mxu0
  %2910 = vdwg.mxu0
  %2911 = vrot.lane.b32.xlu0 %v2346, 80
  %v2912 = vpop.permute.xlu0 %2911
  %2914 = vxpose.xlu0.b32.start [1/16] %v2912, 128
  %2915 = vxpose.xlu0.b32.cont [2/16] 0.0, 128
  %2916 = vxpose.xlu0.b32.cont [3/16] 0.0, 128
  %2917 = vxpose.xlu0.b32.cont [4/16] 0.0, 128
  %2918 = vxpose.xlu0.b32.cont [5/16] 0.0, 128
  %2919 = vxpose.xlu0.b32.cont [6/16] 0.0, 128
  %2920 = vxpose.xlu0.b32.cont [7/16] 0.0, 128
  %2921 = vxpose.xlu0.b32.cont [8/16] 0.0, 128
  %2922 = vxpose.xlu0.b32.cont [9/16] 0.0, 128
  %2923 = vxpose.xlu0.b32.cont [10/16] 0.0, 128
  %2924 = vxpose.xlu0.b32.cont [11/16] 0.0, 128
  %2925 = vxpose.xlu0.b32.cont [12/16] 0.0, 128
  %2926 = vxpose.xlu0.b32.cont [13/16] 0.0, 128
  %2927 = vxpose.xlu0.b32.cont [14/16] 0.0, 128
  %2928 = vxpose.xlu0.b32.cont [15/16] 0.0, 128
  %2929 = vxpose.xlu0.b32.end [16/16] 0.0, 128
  %v2930 = vpop.trf.xlu0
  %v2931 = vpop.trf.xlu0
  %v2932 = vpop.trf.xlu0
  %v2933 = vpop.trf.xlu0
  %v2934 = vpop.trf.xlu0
  %v2935 = vpop.trf.xlu0
  %v2936 = vpop.trf.xlu0
  %v2937 = vpop.trf.xlu0
  %v2938 = vpop.trf.xlu0
  %v2939 = vpop.trf.xlu0
  %v2940 = vpop.trf.xlu0
  %v2941 = vpop.trf.xlu0
  %v2942 = vpop.trf.xlu0
  %v2943 = vpop.trf.xlu0
  %v2944 = vpop.trf.xlu0
  %v2945 = vpop.trf.xlu0
  %v2946 = vpack.c.bf16 %v2930, %v2930
  %2947 = vrot.lane.b32.xlu0 %v2728, 112
  %v2948 = vpop.permute.xlu0 %2947
  %v2950 = vsel %vm276, %v2948, 0
  %v2953 = vsel %vm280, %v2946, 0
  %2955 = vmatpush.bf16.msra.mxu0 0
  %2956 = vmatpush.bf16.msra.mxu0 0
  %2957 = vmatpush.bf16.msra.mxu0 0
  %2958 = vmatpush.bf16.msra.mxu0 0
  %2959 = vmatpush.bf16.msra.mxu0 0
  %2960 = vmatpush.bf16.msra.mxu0 0
  %2961 = vmatpush.bf16.msra.mxu0 0
  %2962 = vmatpush.bf16.msra.mxu0 %v2953
  %2963 = vmatmul.bf16.gmra.mxu0 %v2950
  %v2964 = vpop.f32.mrf.mxu0
  %v2965 = vadd.f32 0.0, %v2964
  %v2966 = vpop.f32.mrf.mxu0
  %2967 = vdwg.mxu0
  %v2968 = vsel %vm276, %v2965, -inf
  %2969 = vmax.xlane.f32.xlu0 %v2968
  %v2970 = vpop.xlane.xlu0 %2969
  %v2971 = vsub.f32 %v2965, %v2970
  %v2972 = vmul.f32 %v2971, 1.442695
  %v2973 = vpow.pop %v2972
  %v2974 = vsel %vm276, %v2973, 0.0
  %2975 = vadd.xlane.f32.xlu0 %v2974
  %v2976 = vpop.xlane.xlu0 %2975
  %v2977 = vrcp.pop %v2976
  %v2978 = vmul.f32 %v2973, %v2977
  %v2979 = vpack.c.bf16 %v2978, %v2978
  %2980 = vrot.lane.b32.xlu0 %v2797, 48
  %v2981 = vpop.permute.xlu0 %2980
  %v2983 = vsel %vm276, %v2979, 0
  %v2986 = vsel %vm280, %v2981, 0
  %2988 = vmatpush.bf16.msra.mxu0 0
  %2989 = vmatpush.bf16.msra.mxu0 0
  %2990 = vmatpush.bf16.msra.mxu0 0
  %2991 = vmatpush.bf16.msra.mxu0 0
  %2992 = vmatpush.bf16.msra.mxu0 0
  %2993 = vmatpush.bf16.msra.mxu0 0
  %2994 = vmatpush.bf16.msra.mxu0 0
  %2995 = vmatpush.bf16.msra.mxu0 %v2986
  %2996 = vmatmul.bf16.gmra.mxu0 %v2983
  %v2997 = vpop.f32.mrf.mxu0
  %v2998 = vadd.f32 0.0, %v2997
  %v2999 = vpop.f32.mrf.mxu0
  %3000 = vdwg.mxu0
  %3001 = vrot.lane.b32.xlu0 %v2346, 72
  %v3002 = vpop.permute.xlu0 %3001
  %3004 = vxpose.xlu0.b32.start [1/16] %v3002, 128
  %3005 = vxpose.xlu0.b32.cont [2/16] 0.0, 128
  %3006 = vxpose.xlu0.b32.cont [3/16] 0.0, 128
  %3007 = vxpose.xlu0.b32.cont [4/16] 0.0, 128
  %3008 = vxpose.xlu0.b32.cont [5/16] 0.0, 128
  %3009 = vxpose.xlu0.b32.cont [6/16] 0.0, 128
  %3010 = vxpose.xlu0.b32.cont [7/16] 0.0, 128
  %3011 = vxpose.xlu0.b32.cont [8/16] 0.0, 128
  %3012 = vxpose.xlu0.b32.cont [9/16] 0.0, 128
  %3013 = vxpose.xlu0.b32.cont [10/16] 0.0, 128
  %3014 = vxpose.xlu0.b32.cont [11/16] 0.0, 128
  %3015 = vxpose.xlu0.b32.cont [12/16] 0.0, 128
  %3016 = vxpose.xlu0.b32.cont [13/16] 0.0, 128
  %3017 = vxpose.xlu0.b32.cont [14/16] 0.0, 128
  %3018 = vxpose.xlu0.b32.cont [15/16] 0.0, 128
  %3019 = vxpose.xlu0.b32.end [16/16] 0.0, 128
  %v3020 = vpop.trf.xlu0
  %v3021 = vpop.trf.xlu0
  %v3022 = vpop.trf.xlu0
  %v3023 = vpop.trf.xlu0
  %v3024 = vpop.trf.xlu0
  %v3025 = vpop.trf.xlu0
  %v3026 = vpop.trf.xlu0
  %v3027 = vpop.trf.xlu0
  %v3028 = vpop.trf.xlu0
  %v3029 = vpop.trf.xlu0
  %v3030 = vpop.trf.xlu0
  %v3031 = vpop.trf.xlu0
  %v3032 = vpop.trf.xlu0
  %v3033 = vpop.trf.xlu0
  %v3034 = vpop.trf.xlu0
  %v3035 = vpop.trf.xlu0
  %v3036 = vpack.c.bf16 %v3020, %v3020
  %3037 = vrot.lane.b32.xlu0 %v2728, 104
  %v3038 = vpop.permute.xlu0 %3037
  %v3040 = vsel %vm276, %v3038, 0
  %v3043 = vsel %vm280, %v3036, 0
  %3045 = vmatpush.bf16.msra.mxu0 0
  %3046 = vmatpush.bf16.msra.mxu0 0
  %3047 = vmatpush.bf16.msra.mxu0 0
  %3048 = vmatpush.bf16.msra.mxu0 0
  %3049 = vmatpush.bf16.msra.mxu0 0
  %3050 = vmatpush.bf16.msra.mxu0 0
  %3051 = vmatpush.bf16.msra.mxu0 0
  %3052 = vmatpush.bf16.msra.mxu0 %v3043
  %3053 = vmatmul.bf16.gmra.mxu0 %v3040
  %v3054 = vpop.f32.mrf.mxu0
  %v3055 = vadd.f32 0.0, %v3054
  %v3056 = vpop.f32.mrf.mxu0
  %3057 = vdwg.mxu0
  %v3058 = vsel %vm276, %v3055, -inf
  %3059 = vmax.xlane.f32.xlu0 %v3058
  %v3060 = vpop.xlane.xlu0 %3059
  %v3061 = vsub.f32 %v3055, %v3060
  %v3062 = vmul.f32 %v3061, 1.442695
  %v3063 = vpow.pop %v3062
  %v3064 = vsel %vm276, %v3063, 0.0
  %3065 = vadd.xlane.f32.xlu0 %v3064
  %v3066 = vpop.xlane.xlu0 %3065
  %v3067 = vrcp.pop %v3066
  %v3068 = vmul.f32 %v3063, %v3067
  %v3069 = vpack.c.bf16 %v3068, %v3068
  %3070 = vrot.lane.b32.xlu0 %v2797, 40
  %v3071 = vpop.permute.xlu0 %3070
  %v3073 = vsel %vm276, %v3069, 0
  %v3076 = vsel %vm280, %v3071, 0
  %3078 = vmatpush.bf16.msra.mxu0 0
  %3079 = vmatpush.bf16.msra.mxu0 0
  %3080 = vmatpush.bf16.msra.mxu0 0
  %3081 = vmatpush.bf16.msra.mxu0 0
  %3082 = vmatpush.bf16.msra.mxu0 0
  %3083 = vmatpush.bf16.msra.mxu0 0
  %3084 = vmatpush.bf16.msra.mxu0 0
  %3085 = vmatpush.bf16.msra.mxu0 %v3076
  %3086 = vmatmul.bf16.gmra.mxu0 %v3073
  %v3087 = vpop.f32.mrf.mxu0
  %v3088 = vadd.f32 0.0, %v3087
  %v3089 = vpop.f32.mrf.mxu0
  %3090 = vdwg.mxu0
  %3092 = vrot.lane.b32.xlu0 %v2908, 8
  %v3093 = vpop.permute.xlu0 %3092
  %3096 = vrot.lane.b32.xlu0 %v2998, 16
  %v3097 = vpop.permute.xlu0 %3096
  %3100 = vrot.lane.b32.xlu0 %v3088, 24
  %v3101 = vpop.permute.xlu0 %3100
  %v3103 = vsel %vm276, %v2817, %v3093
  %v3104 = vsel %vm616, %v3103, %v3097
  %v3105 = vsel %vm618, %v3104, %v3101
  %v3106 = vpack.c.bf16 %v3105, %v2726
  %v3108 = vperm.slane %v2315, 0
  %v3114 = vunpack.c.l.b16 %v2311
  %v3115 = vunpack.c.l.b16 %v2312
  %v3116 = vunpack.c.l.b16 %v2313
  %v3117 = vunpack.c.l.b16 %v2314
  %v3118 = vpack.c.b16 %v3115, %v3114
  %v3119 = vpack.c.b16 %v3117, %v3116
  %v3123 = vsel %vm219, %v3106, 0
  %3125 = vmatpush.bf16.msra.mxu0 0
  %3126 = vmatpush.bf16.msra.mxu0 0
  %3127 = vmatpush.bf16.msra.mxu0 0
  %3128 = vmatpush.bf16.msra.mxu0 0
  %3129 = vmatpush.bf16.msra.mxu0 0
  %3130 = vmatpush.bf16.msra.mxu0 0
  %3131 = vmatpush.bf16.msra.mxu0 %v3119
  %3132 = vmatpush.bf16.msra.mxu0 %v3118
  %3133 = vmatmul.bf16.gmra.mxu0 %v3123
  %v3134 = vpop.f32.mrf.mxu0
  %v3135 = vadd.f32 %v3108, %v3134
  %v3136 = vpop.f32.mrf.mxu0
  %v3137 = vadd.f32 %v3108, %v3136
  %3138 = vdwg.mxu0
  %v3139 = vadd.f32 %v3135, 0.0
  %v3140 = vadd.f32 %v3137, 0.0
  %v3141 = vld [vmem:[%s41] sm:$0x1]
  %v3142 = vld [vmem:[%s43] sm:$0x1]
  %v3143 = vsel %vm219, %v3139, 0.0
  %3144 = vadd.xlane.f32.xlu0 %v3143
  %v3145 = vpop.xlane.xlu0 %3144
  %v3146 = vsel %vm219, %v3140, 0.0
  %3147 = vadd.xlane.f32.xlu0 %v3146
  %v3148 = vpop.xlane.xlu0 %3147
  %v3149 = vmul.f32 %v3145, %v1048
  %v3150 = vmul.f32 %v3148, %v1048
  %v3151 = vsub.f32 %v3139, %v3149
  %v3152 = vsub.f32 %v3140, %v3150
  %v3153 = vmul.f32 %v3151, %v3151
  %v3154 = vmul.f32 %v3152, %v3152
  %v3155 = vsel %vm219, %v3153, 0.0
  %3156 = vadd.xlane.f32.xlu0 %v3155
  %v3157 = vpop.xlane.xlu0 %3156
  %v3158 = vsel %vm219, %v3154, 0.0
  %3159 = vadd.xlane.f32.xlu0 %v3158
  %v3160 = vpop.xlane.xlu0 %3159
  %v3161 = vmul.f32 %v3157, %v1048
  %v3162 = vmul.f32 %v3160, %v1048
  %v3163 = vadd.f32 %v3161, 1e-05
  %v3164 = vadd.f32 %v3162, 1e-05
  %v3165 = vrsqrt.pop %v3163
  %v3166 = vmul.f32 %v3165, %v3163
  %v3167 = vmul.f32 %v3166, %v3165
  %v3168 = vmul.f32 0.5, %v3167
  %v3169 = vsub.f32 1.5, %v3168
  %v3170 = vmul.f32 %v3165, %v3169
  %vm3171 = vweird.f32 %v3163
  %vm3172 = vweird.f32 %v3165
  %vm3173 = vmor %vm3171, %vm3172
  %v3174 = vsel %vm3173, %v3165, %v3170
  %v3175 = vrsqrt.pop %v3164
  %v3176 = vmul.f32 %v3175, %v3164
  %v3177 = vmul.f32 %v3176, %v3175
  %v3178 = vmul.f32 0.5, %v3177
  %v3179 = vsub.f32 1.5, %v3178
  %v3180 = vmul.f32 %v3175, %v3179
  %vm3181 = vweird.f32 %v3164
  %vm3182 = vweird.f32 %v3175
  %vm3183 = vmor %vm3181, %vm3182
  %v3184 = vsel %vm3183, %v3175, %v3180
  %v3185 = vmul.f32 %v3151, %v3174
  %v3186 = vmul.f32 %v3152, %v3184
  %v3188 = vperm.slane %v3141, 0
  %v3190 = vmul.f32 %v3185, %v3188
  %v3191 = vmul.f32 %v3186, %v3188
  %v3193 = vperm.slane %v3142, 0
  %v3195 = vadd.f32 %v3190, %v3193
  %v3196 = vadd.f32 %v3191, %v3193
  %v3197 = vld [vmem:[%s45] sm:$0xf]
  %v3198 = vld [vmem:[%s45 + $0x4] sm:$0xf]
  %v3199 = vld [vmem:[%s45 + $0x8] sm:$0xf]
  %v3200 = vld [vmem:[%s45 + $0xc] sm:$0xf]
  %v3201 = vld [vmem:[%s47] sm:$0x1]
  %v3202 = vld [vmem:[%s49] sm:$0xf]
  %v3203 = vld [vmem:[%s49 + $0x4] sm:$0xf]
  %v3204 = vld [vmem:[%s49 + $0x8] sm:$0xf]
  %v3205 = vld [vmem:[%s49 + $0xc] sm:$0xf]
  %v3206 = vld [vmem:[%s51] sm:$0x1]
  %v3207 = vld [vmem:[%s53] sm:$0xf]
  %v3208 = vld [vmem:[%s53 + $0x4] sm:$0xf]
  %v3209 = vld [vmem:[%s53 + $0x8] sm:$0xf]
  %v3210 = vld [vmem:[%s53 + $0xc] sm:$0xf]
  %v3211 = vld [vmem:[%s55] sm:$0x1]
  %v3212 = vpack.c.bf16 %v3196, %v3195
  %v3214 = vperm.slane %v3201, 0
  %v3220 = vunpack.c.l.b16 %v3197
  %v3221 = vunpack.c.l.b16 %v3198
  %v3222 = vunpack.c.l.b16 %v3199
  %v3223 = vunpack.c.l.b16 %v3200
  %v3224 = vpack.c.b16 %v3221, %v3220
  %v3225 = vpack.c.b16 %v3223, %v3222
  %v3229 = vsel %vm219, %v3212, 0
  %3231 = vmatpush.bf16.msra.mxu0 0
  %3232 = vmatpush.bf16.msra.mxu0 0
  %3233 = vmatpush.bf16.msra.mxu0 0
  %3234 = vmatpush.bf16.msra.mxu0 0
  %3235 = vmatpush.bf16.msra.mxu0 0
  %3236 = vmatpush.bf16.msra.mxu0 0
  %3237 = vmatpush.bf16.msra.mxu0 %v3225
  %3238 = vmatpush.bf16.msra.mxu0 %v3224
  %3239 = vmatmul.bf16.gmra.mxu0 %v3229
  %v3240 = vpop.f32.mrf.mxu0
  %v3241 = vadd.f32 %v3214, %v3240
  %v3242 = vpop.f32.mrf.mxu0
  %v3243 = vadd.f32 %v3214, %v3242
  %3244 = vdwg.mxu0
  %v3245 = vpack.c.bf16 %v2305, %v2304
  %v3247 = vperm.slane %v3206, 0
  %v3253 = vunpack.c.l.b16 %v3202
  %v3254 = vunpack.c.l.b16 %v3203
  %v3255 = vunpack.c.l.b16 %v3204
  %v3256 = vunpack.c.l.b16 %v3205
  %v3257 = vpack.c.b16 %v3254, %v3253
  %v3258 = vpack.c.b16 %v3256, %v3255
  %v3262 = vsel %vm219, %v3245, 0
  %3264 = vmatpush.bf16.msra.mxu0 0
  %3265 = vmatpush.bf16.msra.mxu0 0
  %3266 = vmatpush.bf16.msra.mxu0 0
  %3267 = vmatpush.bf16.msra.mxu0 0
  %3268 = vmatpush.bf16.msra.mxu0 0
  %3269 = vmatpush.bf16.msra.mxu0 0
  %3270 = vmatpush.bf16.msra.mxu0 %v3258
  %3271 = vmatpush.bf16.msra.mxu0 %v3257
  %3272 = vmatmul.bf16.gmra.mxu0 %v3262
  %v3273 = vpop.f32.mrf.mxu0
  %v3274 = vadd.f32 %v3247, %v3273
  %v3275 = vpop.f32.mrf.mxu0
  %v3276 = vadd.f32 %v3247, %v3275
  %3277 = vdwg.mxu0
  %v3278 = vmul.f32 %v3241, 0.35355338
  %v3279 = vpack.c.bf16 %v3278, %v3278
  %3280 = vxpose.xlu0.b32.start [1/16] %v3274, 128
  %3281 = vxpose.xlu0.b32.cont [2/16] 0.0, 128
  %3282 = vxpose.xlu0.b32.cont [3/16] 0.0, 128
  %3283 = vxpose.xlu0.b32.cont [4/16] 0.0, 128
  %3284 = vxpose.xlu0.b32.cont [5/16] 0.0, 128
  %3285 = vxpose.xlu0.b32.cont [6/16] 0.0, 128
  %3286 = vxpose.xlu0.b32.cont [7/16] 0.0, 128
  %3287 = vxpose.xlu0.b32.cont [8/16] 0.0, 128
  %3288 = vxpose.xlu0.b32.cont [9/16] 0.0, 128
  %3289 = vxpose.xlu0.b32.cont [10/16] 0.0, 128
  %3290 = vxpose.xlu0.b32.cont [11/16] 0.0, 128
  %3291 = vxpose.xlu0.b32.cont [12/16] 0.0, 128
  %3292 = vxpose.xlu0.b32.cont [13/16] 0.0, 128
  %3293 = vxpose.xlu0.b32.cont [14/16] 0.0, 128
  %3294 = vxpose.xlu0.b32.cont [15/16] 0.0, 128
  %3295 = vxpose.xlu0.b32.end [16/16] 0.0, 128
  %v3296 = vpop.trf.xlu0
  %v3297 = vpop.trf.xlu0
  %v3298 = vpop.trf.xlu0
  %v3299 = vpop.trf.xlu0
  %v3300 = vpop.trf.xlu0
  %v3301 = vpop.trf.xlu0
  %v3302 = vpop.trf.xlu0
  %v3303 = vpop.trf.xlu0
  %v3304 = vpop.trf.xlu0
  %v3305 = vpop.trf.xlu0
  %v3306 = vpop.trf.xlu0
  %v3307 = vpop.trf.xlu0
  %v3308 = vpop.trf.xlu0
  %v3309 = vpop.trf.xlu0
  %v3310 = vpop.trf.xlu0
  %v3311 = vpop.trf.xlu0
  %v3312 = vpack.c.bf16 %v3296, %v3296
  %v3314 = vsel %vm276, %v3279, 0
  %v3317 = vsel %vm280, %v3312, 0
  %3319 = vmatpush.bf16.msra.mxu0 0
  %3320 = vmatpush.bf16.msra.mxu0 0
  %3321 = vmatpush.bf16.msra.mxu0 0
  %3322 = vmatpush.bf16.msra.mxu0 0
  %3323 = vmatpush.bf16.msra.mxu0 0
  %3324 = vmatpush.bf16.msra.mxu0 0
  %3325 = vmatpush.bf16.msra.mxu0 0
  %3326 = vmatpush.bf16.msra.mxu0 %v3317
  %3327 = vmatmul.bf16.gmra.mxu0 %v3314
  %v3328 = vpop.f32.mrf.mxu0
  %v3329 = vadd.f32 0.0, %v3328
  %v3330 = vpop.f32.mrf.mxu0
  %3331 = vdwg.mxu0
  %v3332 = vsel %vm276, %v3329, -inf
  %3333 = vmax.xlane.f32.xlu0 %v3332
  %v3334 = vpop.xlane.xlu0 %3333
  %v3335 = vsub.f32 %v3329, %v3334
  %v3336 = vmul.f32 %v3335, 1.442695
  %v3337 = vpow.pop %v3336
  %v3338 = vsel %vm276, %v3337, 0.0
  %3339 = vadd.xlane.f32.xlu0 %v3338
  %v3340 = vpop.xlane.xlu0 %3339
  %v3341 = vrcp.pop %v3340
  %v3342 = vmul.f32 %v3337, %v3341
  %v3343 = vpack.c.bf16 %v3342, %v3342
  %v3344 = vpack.c.bf16 %v3274, %v3274
  %3346 = vrot.lane.b32.xlu0 %v3344, 96
  %v3347 = vpop.permute.xlu0 %3346
  %v3349 = vsel %vm276, %v3343, 0
  %v3352 = vsel %vm280, %v3347, 0
  %3354 = vmatpush.bf16.msra.mxu0 0
  %3355 = vmatpush.bf16.msra.mxu0 0
  %3356 = vmatpush.bf16.msra.mxu0 0
  %3357 = vmatpush.bf16.msra.mxu0 0
  %3358 = vmatpush.bf16.msra.mxu0 0
  %3359 = vmatpush.bf16.msra.mxu0 0
  %3360 = vmatpush.bf16.msra.mxu0 0
  %3361 = vmatpush.bf16.msra.mxu0 %v3352
  %3362 = vmatmul.bf16.gmra.mxu0 %v3349
  %v3363 = vpop.f32.mrf.mxu0
  %v3364 = vadd.f32 0.0, %v3363
  %v3365 = vpop.f32.mrf.mxu0
  %3366 = vdwg.mxu0
  %3368 = vrot.lane.b32.xlu0 %v3274, 120
  %v3369 = vpop.permute.xlu0 %3368
  %3371 = vxpose.xlu0.b32.start [1/16] %v3369, 128
  %3372 = vxpose.xlu0.b32.cont [2/16] 0.0, 128
  %3373 = vxpose.xlu0.b32.cont [3/16] 0.0, 128
  %3374 = vxpose.xlu0.b32.cont [4/16] 0.0, 128
  %3375 = vxpose.xlu0.b32.cont [5/16] 0.0, 128
  %3376 = vxpose.xlu0.b32.cont [6/16] 0.0, 128
  %3377 = vxpose.xlu0.b32.cont [7/16] 0.0, 128
  %3378 = vxpose.xlu0.b32.cont [8/16] 0.0, 128
  %3379 = vxpose.xlu0.b32.cont [9/16] 0.0, 128
  %3380 = vxpose.xlu0.b32.cont [10/16] 0.0, 128
  %3381 = vxpose.xlu0.b32.cont [11/16] 0.0, 128
  %3382 = vxpose.xlu0.b32.cont [12/16] 0.0, 128
  %3383 = vxpose.xlu0.b32.cont [13/16] 0.0, 128
  %3384 = vxpose.xlu0.b32.cont [14/16] 0.0, 128
  %3385 = vxpose.xlu0.b32.cont [15/16] 0.0, 128
  %3386 = vxpose.xlu0.b32.end [16/16] 0.0, 128
  %v3387 = vpop.trf.xlu0
  %v3388 = vpop.trf.xlu0
  %v3389 = vpop.trf.xlu0
  %v3390 = vpop.trf.xlu0
  %v3391 = vpop.trf.xlu0
  %v3392 = vpop.trf.xlu0
  %v3393 = vpop.trf.xlu0
  %v3394 = vpop.trf.xlu0
  %v3395 = vpop.trf.xlu0
  %v3396 = vpop.trf.xlu0
  %v3397 = vpop.trf.xlu0
  %v3398 = vpop.trf.xlu0
  %v3399 = vpop.trf.xlu0
  %v3400 = vpop.trf.xlu0
  %v3401 = vpop.trf.xlu0
  %v3402 = vpop.trf.xlu0
  %v3403 = vpack.c.bf16 %v3387, %v3387
  %3405 = vrot.lane.b32.xlu0 %v3279, 120
  %v3406 = vpop.permute.xlu0 %3405
  %v3408 = vsel %vm276, %v3406, 0
  %v3411 = vsel %vm280, %v3403, 0
  %3413 = vmatpush.bf16.msra.mxu0 0
  %3414 = vmatpush.bf16.msra.mxu0 0
  %3415 = vmatpush.bf16.msra.mxu0 0
  %3416 = vmatpush.bf16.msra.mxu0 0
  %3417 = vmatpush.bf16.msra.mxu0 0
  %3418 = vmatpush.bf16.msra.mxu0 0
  %3419 = vmatpush.bf16.msra.mxu0 0
  %3420 = vmatpush.bf16.msra.mxu0 %v3411
  %3421 = vmatmul.bf16.gmra.mxu0 %v3408
  %v3422 = vpop.f32.mrf.mxu0
  %v3423 = vadd.f32 0.0, %v3422
  %v3424 = vpop.f32.mrf.mxu0
  %3425 = vdwg.mxu0
  %v3426 = vsel %vm276, %v3423, -inf
  %3427 = vmax.xlane.f32.xlu0 %v3426
  %v3428 = vpop.xlane.xlu0 %3427
  %v3429 = vsub.f32 %v3423, %v3428
  %v3430 = vmul.f32 %v3429, 1.442695
  %v3431 = vpow.pop %v3430
  %v3432 = vsel %vm276, %v3431, 0.0
  %3433 = vadd.xlane.f32.xlu0 %v3432
  %v3434 = vpop.xlane.xlu0 %3433
  %v3435 = vrcp.pop %v3434
  %v3436 = vmul.f32 %v3431, %v3435
  %v3437 = vpack.c.bf16 %v3436, %v3436
  %3438 = vrot.lane.b32.xlu0 %v3344, 88
  %v3439 = vpop.permute.xlu0 %3438
  %v3441 = vsel %vm276, %v3437, 0
  %v3444 = vsel %vm280, %v3439, 0
  %3446 = vmatpush.bf16.msra.mxu0 0
  %3447 = vmatpush.bf16.msra.mxu0 0
  %3448 = vmatpush.bf16.msra.mxu0 0
  %3449 = vmatpush.bf16.msra.mxu0 0
  %3450 = vmatpush.bf16.msra.mxu0 0
  %3451 = vmatpush.bf16.msra.mxu0 0
  %3452 = vmatpush.bf16.msra.mxu0 0
  %3453 = vmatpush.bf16.msra.mxu0 %v3444
  %3454 = vmatmul.bf16.gmra.mxu0 %v3441
  %v3455 = vpop.f32.mrf.mxu0
  %v3456 = vadd.f32 0.0, %v3455
  %v3457 = vpop.f32.mrf.mxu0
  %3458 = vdwg.mxu0
  %3459 = vrot.lane.b32.xlu0 %v3274, 112
  %v3460 = vpop.permute.xlu0 %3459
  %3462 = vxpose.xlu0.b32.start [1/16] %v3460, 128
  %3463 = vxpose.xlu0.b32.cont [2/16] 0.0, 128
  %3464 = vxpose.xlu0.b32.cont [3/16] 0.0, 128
  %3465 = vxpose.xlu0.b32.cont [4/16] 0.0, 128
  %3466 = vxpose.xlu0.b32.cont [5/16] 0.0, 128
  %3467 = vxpose.xlu0.b32.cont [6/16] 0.0, 128
  %3468 = vxpose.xlu0.b32.cont [7/16] 0.0, 128
  %3469 = vxpose.xlu0.b32.cont [8/16] 0.0, 128
  %3470 = vxpose.xlu0.b32.cont [9/16] 0.0, 128
  %3471 = vxpose.xlu0.b32.cont [10/16] 0.0, 128
  %3472 = vxpose.xlu0.b32.cont [11/16] 0.0, 128
  %3473 = vxpose.xlu0.b32.cont [12/16] 0.0, 128
  %3474 = vxpose.xlu0.b32.cont [13/16] 0.0, 128
  %3475 = vxpose.xlu0.b32.cont [14/16] 0.0, 128
  %3476 = vxpose.xlu0.b32.cont [15/16] 0.0, 128
  %3477 = vxpose.xlu0.b32.end [16/16] 0.0, 128
  %v3478 = vpop.trf.xlu0
  %v3479 = vpop.trf.xlu0
  %v3480 = vpop.trf.xlu0
  %v3481 = vpop.trf.xlu0
  %v3482 = vpop.trf.xlu0
  %v3483 = vpop.trf.xlu0
  %v3484 = vpop.trf.xlu0
  %v3485 = vpop.trf.xlu0
  %v3486 = vpop.trf.xlu0
  %v3487 = vpop.trf.xlu0
  %v3488 = vpop.trf.xlu0
  %v3489 = vpop.trf.xlu0
  %v3490 = vpop.trf.xlu0
  %v3491 = vpop.trf.xlu0
  %v3492 = vpop.trf.xlu0
  %v3493 = vpop.trf.xlu0
  %v3494 = vpack.c.bf16 %v3478, %v3478
  %3495 = vrot.lane.b32.xlu0 %v3279, 112
  %v3496 = vpop.permute.xlu0 %3495
  %v3498 = vsel %vm276, %v3496, 0
  %v3501 = vsel %vm280, %v3494, 0
  %3503 = vmatpush.bf16.msra.mxu0 0
  %3504 = vmatpush.bf16.msra.mxu0 0
  %3505 = vmatpush.bf16.msra.mxu0 0
  %3506 = vmatpush.bf16.msra.mxu0 0
  %3507 = vmatpush.bf16.msra.mxu0 0
  %3508 = vmatpush.bf16.msra.mxu0 0
  %3509 = vmatpush.bf16.msra.mxu0 0
  %3510 = vmatpush.bf16.msra.mxu0 %v3501
  %3511 = vmatmul.bf16.gmra.mxu0 %v3498
  %v3512 = vpop.f32.mrf.mxu0
  %v3513 = vadd.f32 0.0, %v3512
  %v3514 = vpop.f32.mrf.mxu0
  %3515 = vdwg.mxu0
  %v3516 = vsel %vm276, %v3513, -inf
  %3517 = vmax.xlane.f32.xlu0 %v3516
  %v3518 = vpop.xlane.xlu0 %3517
  %v3519 = vsub.f32 %v3513, %v3518
  %v3520 = vmul.f32 %v3519, 1.442695
  %v3521 = vpow.pop %v3520
  %v3522 = vsel %vm276, %v3521, 0.0
  %3523 = vadd.xlane.f32.xlu0 %v3522
  %v3524 = vpop.xlane.xlu0 %3523
  %v3525 = vrcp.pop %v3524
  %v3526 = vmul.f32 %v3521, %v3525
  %v3527 = vpack.c.bf16 %v3526, %v3526
  %3528 = vrot.lane.b32.xlu0 %v3344, 80
  %v3529 = vpop.permute.xlu0 %3528
  %v3531 = vsel %vm276, %v3527, 0
  %v3534 = vsel %vm280, %v3529, 0
  %3536 = vmatpush.bf16.msra.mxu0 0
  %3537 = vmatpush.bf16.msra.mxu0 0
  %3538 = vmatpush.bf16.msra.mxu0 0
  %3539 = vmatpush.bf16.msra.mxu0 0
  %3540 = vmatpush.bf16.msra.mxu0 0
  %3541 = vmatpush.bf16.msra.mxu0 0
  %3542 = vmatpush.bf16.msra.mxu0 0
  %3543 = vmatpush.bf16.msra.mxu0 %v3534
  %3544 = vmatmul.bf16.gmra.mxu0 %v3531
  %v3545 = vpop.f32.mrf.mxu0
  %v3546 = vadd.f32 0.0, %v3545
  %v3547 = vpop.f32.mrf.mxu0
  %3548 = vdwg.mxu0
  %3549 = vrot.lane.b32.xlu0 %v3274, 104
  %v3550 = vpop.permute.xlu0 %3549
  %3552 = vxpose.xlu0.b32.start [1/16] %v3550, 128
  %3553 = vxpose.xlu0.b32.cont [2/16] 0.0, 128
  %3554 = vxpose.xlu0.b32.cont [3/16] 0.0, 128
  %3555 = vxpose.xlu0.b32.cont [4/16] 0.0, 128
  %3556 = vxpose.xlu0.b32.cont [5/16] 0.0, 128
  %3557 = vxpose.xlu0.b32.cont [6/16] 0.0, 128
  %3558 = vxpose.xlu0.b32.cont [7/16] 0.0, 128
  %3559 = vxpose.xlu0.b32.cont [8/16] 0.0, 128
  %3560 = vxpose.xlu0.b32.cont [9/16] 0.0, 128
  %3561 = vxpose.xlu0.b32.cont [10/16] 0.0, 128
  %3562 = vxpose.xlu0.b32.cont [11/16] 0.0, 128
  %3563 = vxpose.xlu0.b32.cont [12/16] 0.0, 128
  %3564 = vxpose.xlu0.b32.cont [13/16] 0.0, 128
  %3565 = vxpose.xlu0.b32.cont [14/16] 0.0, 128
  %3566 = vxpose.xlu0.b32.cont [15/16] 0.0, 128
  %3567 = vxpose.xlu0.b32.end [16/16] 0.0, 128
  %v3568 = vpop.trf.xlu0
  %v3569 = vpop.trf.xlu0
  %v3570 = vpop.trf.xlu0
  %v3571 = vpop.trf.xlu0
  %v3572 = vpop.trf.xlu0
  %v3573 = vpop.trf.xlu0
  %v3574 = vpop.trf.xlu0
  %v3575 = vpop.trf.xlu0
  %v3576 = vpop.trf.xlu0
  %v3577 = vpop.trf.xlu0
  %v3578 = vpop.trf.xlu0
  %v3579 = vpop.trf.xlu0
  %v3580 = vpop.trf.xlu0
  %v3581 = vpop.trf.xlu0
  %v3582 = vpop.trf.xlu0
  %v3583 = vpop.trf.xlu0
  %v3584 = vpack.c.bf16 %v3568, %v3568
  %3585 = vrot.lane.b32.xlu0 %v3279, 104
  %v3586 = vpop.permute.xlu0 %3585
  %v3588 = vsel %vm276, %v3586, 0
  %v3591 = vsel %vm280, %v3584, 0
  %3593 = vmatpush.bf16.msra.mxu0 0
  %3594 = vmatpush.bf16.msra.mxu0 0
  %3595 = vmatpush.bf16.msra.mxu0 0
  %3596 = vmatpush.bf16.msra.mxu0 0
  %3597 = vmatpush.bf16.msra.mxu0 0
  %3598 = vmatpush.bf16.msra.mxu0 0
  %3599 = vmatpush.bf16.msra.mxu0 0
  %3600 = vmatpush.bf16.msra.mxu0 %v3591
  %3601 = vmatmul.bf16.gmra.mxu0 %v3588
  %v3602 = vpop.f32.mrf.mxu0
  %v3603 = vadd.f32 0.0, %v3602
  %v3604 = vpop.f32.mrf.mxu0
  %3605 = vdwg.mxu0
  %v3606 = vsel %vm276, %v3603, -inf
  %3607 = vmax.xlane.f32.xlu0 %v3606
  %v3608 = vpop.xlane.xlu0 %3607
  %v3609 = vsub.f32 %v3603, %v3608
  %v3610 = vmul.f32 %v3609, 1.442695
  %v3611 = vpow.pop %v3610
  %v3612 = vsel %vm276, %v3611, 0.0
  %3613 = vadd.xlane.f32.xlu0 %v3612
  %v3614 = vpop.xlane.xlu0 %3613
  %v3615 = vrcp.pop %v3614
  %v3616 = vmul.f32 %v3611, %v3615
  %v3617 = vpack.c.bf16 %v3616, %v3616
  %3618 = vrot.lane.b32.xlu0 %v3344, 72
  %v3619 = vpop.permute.xlu0 %3618
  %v3621 = vsel %vm276, %v3617, 0
  %v3624 = vsel %vm280, %v3619, 0
  %3626 = vmatpush.bf16.msra.mxu0 0
  %3627 = vmatpush.bf16.msra.mxu0 0
  %3628 = vmatpush.bf16.msra.mxu0 0
  %3629 = vmatpush.bf16.msra.mxu0 0
  %3630 = vmatpush.bf16.msra.mxu0 0
  %3631 = vmatpush.bf16.msra.mxu0 0
  %3632 = vmatpush.bf16.msra.mxu0 0
  %3633 = vmatpush.bf16.msra.mxu0 %v3624
  %3634 = vmatmul.bf16.gmra.mxu0 %v3621
  %v3635 = vpop.f32.mrf.mxu0
  %v3636 = vadd.f32 0.0, %v3635
  %v3637 = vpop.f32.mrf.mxu0
  %3638 = vdwg.mxu0
  %3640 = vrot.lane.b32.xlu0 %v3456, 8
  %v3641 = vpop.permute.xlu0 %3640
  %3644 = vrot.lane.b32.xlu0 %v3546, 16
  %v3645 = vpop.permute.xlu0 %3644
  %3648 = vrot.lane.b32.xlu0 %v3636, 24
  %v3649 = vpop.permute.xlu0 %3648
  %v3651 = vsel %vm276, %v3364, %v3641
  %v3652 = vsel %vm616, %v3651, %v3645
  %v3653 = vsel %vm618, %v3652, %v3649
  %v3654 = vmul.f32 %v3243, 0.35355338
  %v3655 = vpack.c.bf16 %v3654, %v3654
  %3656 = vxpose.xlu0.b32.start [1/16] %v3276, 128
  %3657 = vxpose.xlu0.b32.cont [2/16] 0.0, 128
  %3658 = vxpose.xlu0.b32.cont [3/16] 0.0, 128
  %3659 = vxpose.xlu0.b32.cont [4/16] 0.0, 128
  %3660 = vxpose.xlu0.b32.cont [5/16] 0.0, 128
  %3661 = vxpose.xlu0.b32.cont [6/16] 0.0, 128
  %3662 = vxpose.xlu0.b32.cont [7/16] 0.0, 128
  %3663 = vxpose.xlu0.b32.cont [8/16] 0.0, 128
  %3664 = vxpose.xlu0.b32.cont [9/16] 0.0, 128
  %3665 = vxpose.xlu0.b32.cont [10/16] 0.0, 128
  %3666 = vxpose.xlu0.b32.cont [11/16] 0.0, 128
  %3667 = vxpose.xlu0.b32.cont [12/16] 0.0, 128
  %3668 = vxpose.xlu0.b32.cont [13/16] 0.0, 128
  %3669 = vxpose.xlu0.b32.cont [14/16] 0.0, 128
  %3670 = vxpose.xlu0.b32.cont [15/16] 0.0, 128
  %3671 = vxpose.xlu0.b32.end [16/16] 0.0, 128
  %v3672 = vpop.trf.xlu0
  %v3673 = vpop.trf.xlu0
  %v3674 = vpop.trf.xlu0
  %v3675 = vpop.trf.xlu0
  %v3676 = vpop.trf.xlu0
  %v3677 = vpop.trf.xlu0
  %v3678 = vpop.trf.xlu0
  %v3679 = vpop.trf.xlu0
  %v3680 = vpop.trf.xlu0
  %v3681 = vpop.trf.xlu0
  %v3682 = vpop.trf.xlu0
  %v3683 = vpop.trf.xlu0
  %v3684 = vpop.trf.xlu0
  %v3685 = vpop.trf.xlu0
  %v3686 = vpop.trf.xlu0
  %v3687 = vpop.trf.xlu0
  %v3688 = vpack.c.bf16 %v3672, %v3672
  %v3690 = vsel %vm276, %v3655, 0
  %v3693 = vsel %vm280, %v3688, 0
  %3695 = vmatpush.bf16.msra.mxu0 0
  %3696 = vmatpush.bf16.msra.mxu0 0
  %3697 = vmatpush.bf16.msra.mxu0 0
  %3698 = vmatpush.bf16.msra.mxu0 0
  %3699 = vmatpush.bf16.msra.mxu0 0
  %3700 = vmatpush.bf16.msra.mxu0 0
  %3701 = vmatpush.bf16.msra.mxu0 0
  %3702 = vmatpush.bf16.msra.mxu0 %v3693
  %3703 = vmatmul.bf16.gmra.mxu0 %v3690
  %v3704 = vpop.f32.mrf.mxu0
  %v3705 = vadd.f32 0.0, %v3704
  %v3706 = vpop.f32.mrf.mxu0
  %3707 = vdwg.mxu0
  %v3708 = vsel %vm276, %v3705, -inf
  %3709 = vmax.xlane.f32.xlu0 %v3708
  %v3710 = vpop.xlane.xlu0 %3709
  %v3711 = vsub.f32 %v3705, %v3710
  %v3712 = vmul.f32 %v3711, 1.442695
  %v3713 = vpow.pop %v3712
  %v3714 = vsel %vm276, %v3713, 0.0
  %3715 = vadd.xlane.f32.xlu0 %v3714
  %v3716 = vpop.xlane.xlu0 %3715
  %v3717 = vrcp.pop %v3716
  %v3718 = vmul.f32 %v3713, %v3717
  %v3719 = vpack.c.bf16 %v3718, %v3718
  %v3720 = vpack.c.bf16 %v3276, %v3276
  %3722 = vrot.lane.b32.xlu0 %v3720, 96
  %v3723 = vpop.permute.xlu0 %3722
  %v3725 = vsel %vm276, %v3719, 0
  %v3728 = vsel %vm280, %v3723, 0
  %3730 = vmatpush.bf16.msra.mxu0 0
  %3731 = vmatpush.bf16.msra.mxu0 0
  %3732 = vmatpush.bf16.msra.mxu0 0
  %3733 = vmatpush.bf16.msra.mxu0 0
  %3734 = vmatpush.bf16.msra.mxu0 0
  %3735 = vmatpush.bf16.msra.mxu0 0
  %3736 = vmatpush.bf16.msra.mxu0 0
  %3737 = vmatpush.bf16.msra.mxu0 %v3728
  %3738 = vmatmul.bf16.gmra.mxu0 %v3725
  %v3739 = vpop.f32.mrf.mxu0
  %v3740 = vadd.f32 0.0, %v3739
  %v3741 = vpop.f32.mrf.mxu0
  %3742 = vdwg.mxu0
  %3744 = vrot.lane.b32.xlu0 %v3276, 120
  %v3745 = vpop.permute.xlu0 %3744
  %3747 = vxpose.xlu0.b32.start [1/16] %v3745, 128
  %3748 = vxpose.xlu0.b32.cont [2/16] 0.0, 128
  %3749 = vxpose.xlu0.b32.cont [3/16] 0.0, 128
  %3750 = vxpose.xlu0.b32.cont [4/16] 0.0, 128
  %3751 = vxpose.xlu0.b32.cont [5/16] 0.0, 128
  %3752 = vxpose.xlu0.b32.cont [6/16] 0.0, 128
  %3753 = vxpose.xlu0.b32.cont [7/16] 0.0, 128
  %3754 = vxpose.xlu0.b32.cont [8/16] 0.0, 128
  %3755 = vxpose.xlu0.b32.cont [9/16] 0.0, 128
  %3756 = vxpose.xlu0.b32.cont [10/16] 0.0, 128
  %3757 = vxpose.xlu0.b32.cont [11/16] 0.0, 128
  %3758 = vxpose.xlu0.b32.cont [12/16] 0.0, 128
  %3759 = vxpose.xlu0.b32.cont [13/16] 0.0, 128
  %3760 = vxpose.xlu0.b32.cont [14/16] 0.0, 128
  %3761 = vxpose.xlu0.b32.cont [15/16] 0.0, 128
  %3762 = vxpose.xlu0.b32.end [16/16] 0.0, 128
  %v3763 = vpop.trf.xlu0
  %v3764 = vpop.trf.xlu0
  %v3765 = vpop.trf.xlu0
  %v3766 = vpop.trf.xlu0
  %v3767 = vpop.trf.xlu0
  %v3768 = vpop.trf.xlu0
  %v3769 = vpop.trf.xlu0
  %v3770 = vpop.trf.xlu0
  %v3771 = vpop.trf.xlu0
  %v3772 = vpop.trf.xlu0
  %v3773 = vpop.trf.xlu0
  %v3774 = vpop.trf.xlu0
  %v3775 = vpop.trf.xlu0
  %v3776 = vpop.trf.xlu0
  %v3777 = vpop.trf.xlu0
  %v3778 = vpop.trf.xlu0
  %v3779 = vpack.c.bf16 %v3763, %v3763
  %3781 = vrot.lane.b32.xlu0 %v3655, 120
  %v3782 = vpop.permute.xlu0 %3781
  %v3784 = vsel %vm276, %v3782, 0
  %v3787 = vsel %vm280, %v3779, 0
  %3789 = vmatpush.bf16.msra.mxu0 0
  %3790 = vmatpush.bf16.msra.mxu0 0
  %3791 = vmatpush.bf16.msra.mxu0 0
  %3792 = vmatpush.bf16.msra.mxu0 0
  %3793 = vmatpush.bf16.msra.mxu0 0
  %3794 = vmatpush.bf16.msra.mxu0 0
  %3795 = vmatpush.bf16.msra.mxu0 0
  %3796 = vmatpush.bf16.msra.mxu0 %v3787
  %3797 = vmatmul.bf16.gmra.mxu0 %v3784
  %v3798 = vpop.f32.mrf.mxu0
  %v3799 = vadd.f32 0.0, %v3798
  %v3800 = vpop.f32.mrf.mxu0
  %3801 = vdwg.mxu0
  %v3802 = vsel %vm276, %v3799, -inf
  %3803 = vmax.xlane.f32.xlu0 %v3802
  %v3804 = vpop.xlane.xlu0 %3803
  %v3805 = vsub.f32 %v3799, %v3804
  %v3806 = vmul.f32 %v3805, 1.442695
  %v3807 = vpow.pop %v3806
  %v3808 = vsel %vm276, %v3807, 0.0
  %3809 = vadd.xlane.f32.xlu0 %v3808
  %v3810 = vpop.xlane.xlu0 %3809
  %v3811 = vrcp.pop %v3810
  %v3812 = vmul.f32 %v3807, %v3811
  %v3813 = vpack.c.bf16 %v3812, %v3812
  %3814 = vrot.lane.b32.xlu0 %v3720, 88
  %v3815 = vpop.permute.xlu0 %3814
  %v3817 = vsel %vm276, %v3813, 0
  %v3820 = vsel %vm280, %v3815, 0
  %3822 = vmatpush.bf16.msra.mxu0 0
  %3823 = vmatpush.bf16.msra.mxu0 0
  %3824 = vmatpush.bf16.msra.mxu0 0
  %3825 = vmatpush.bf16.msra.mxu0 0
  %3826 = vmatpush.bf16.msra.mxu0 0
  %3827 = vmatpush.bf16.msra.mxu0 0
  %3828 = vmatpush.bf16.msra.mxu0 0
  %3829 = vmatpush.bf16.msra.mxu0 %v3820
  %3830 = vmatmul.bf16.gmra.mxu0 %v3817
  %v3831 = vpop.f32.mrf.mxu0
  %v3832 = vadd.f32 0.0, %v3831
  %v3833 = vpop.f32.mrf.mxu0
  %3834 = vdwg.mxu0
  %3835 = vrot.lane.b32.xlu0 %v3276, 112
  %v3836 = vpop.permute.xlu0 %3835
  %3838 = vxpose.xlu0.b32.start [1/16] %v3836, 128
  %3839 = vxpose.xlu0.b32.cont [2/16] 0.0, 128
  %3840 = vxpose.xlu0.b32.cont [3/16] 0.0, 128
  %3841 = vxpose.xlu0.b32.cont [4/16] 0.0, 128
  %3842 = vxpose.xlu0.b32.cont [5/16] 0.0, 128
  %3843 = vxpose.xlu0.b32.cont [6/16] 0.0, 128
  %3844 = vxpose.xlu0.b32.cont [7/16] 0.0, 128
  %3845 = vxpose.xlu0.b32.cont [8/16] 0.0, 128
  %3846 = vxpose.xlu0.b32.cont [9/16] 0.0, 128
  %3847 = vxpose.xlu0.b32.cont [10/16] 0.0, 128
  %3848 = vxpose.xlu0.b32.cont [11/16] 0.0, 128
  %3849 = vxpose.xlu0.b32.cont [12/16] 0.0, 128
  %3850 = vxpose.xlu0.b32.cont [13/16] 0.0, 128
  %3851 = vxpose.xlu0.b32.cont [14/16] 0.0, 128
  %3852 = vxpose.xlu0.b32.cont [15/16] 0.0, 128
  %3853 = vxpose.xlu0.b32.end [16/16] 0.0, 128
  %v3854 = vpop.trf.xlu0
  %v3855 = vpop.trf.xlu0
  %v3856 = vpop.trf.xlu0
  %v3857 = vpop.trf.xlu0
  %v3858 = vpop.trf.xlu0
  %v3859 = vpop.trf.xlu0
  %v3860 = vpop.trf.xlu0
  %v3861 = vpop.trf.xlu0
  %v3862 = vpop.trf.xlu0
  %v3863 = vpop.trf.xlu0
  %v3864 = vpop.trf.xlu0
  %v3865 = vpop.trf.xlu0
  %v3866 = vpop.trf.xlu0
  %v3867 = vpop.trf.xlu0
  %v3868 = vpop.trf.xlu0
  %v3869 = vpop.trf.xlu0
  %v3870 = vpack.c.bf16 %v3854, %v3854
  %3871 = vrot.lane.b32.xlu0 %v3655, 112
  %v3872 = vpop.permute.xlu0 %3871
  %v3874 = vsel %vm276, %v3872, 0
  %v3877 = vsel %vm280, %v3870, 0
  %3879 = vmatpush.bf16.msra.mxu0 0
  %3880 = vmatpush.bf16.msra.mxu0 0
  %3881 = vmatpush.bf16.msra.mxu0 0
  %3882 = vmatpush.bf16.msra.mxu0 0
  %3883 = vmatpush.bf16.msra.mxu0 0
  %3884 = vmatpush.bf16.msra.mxu0 0
  %3885 = vmatpush.bf16.msra.mxu0 0
  %3886 = vmatpush.bf16.msra.mxu0 %v3877
  %3887 = vmatmul.bf16.gmra.mxu0 %v3874
  %v3888 = vpop.f32.mrf.mxu0
  %v3889 = vadd.f32 0.0, %v3888
  %v3890 = vpop.f32.mrf.mxu0
  %3891 = vdwg.mxu0
  %v3892 = vsel %vm276, %v3889, -inf
  %3893 = vmax.xlane.f32.xlu0 %v3892
  %v3894 = vpop.xlane.xlu0 %3893
  %v3895 = vsub.f32 %v3889, %v3894
  %v3896 = vmul.f32 %v3895, 1.442695
  %v3897 = vpow.pop %v3896
  %v3898 = vsel %vm276, %v3897, 0.0
  %3899 = vadd.xlane.f32.xlu0 %v3898
  %v3900 = vpop.xlane.xlu0 %3899
  %v3901 = vrcp.pop %v3900
  %v3902 = vmul.f32 %v3897, %v3901
  %v3903 = vpack.c.bf16 %v3902, %v3902
  %3904 = vrot.lane.b32.xlu0 %v3720, 80
  %v3905 = vpop.permute.xlu0 %3904
  %v3907 = vsel %vm276, %v3903, 0
  %v3910 = vsel %vm280, %v3905, 0
  %3912 = vmatpush.bf16.msra.mxu0 0
  %3913 = vmatpush.bf16.msra.mxu0 0
  %3914 = vmatpush.bf16.msra.mxu0 0
  %3915 = vmatpush.bf16.msra.mxu0 0
  %3916 = vmatpush.bf16.msra.mxu0 0
  %3917 = vmatpush.bf16.msra.mxu0 0
  %3918 = vmatpush.bf16.msra.mxu0 0
  %3919 = vmatpush.bf16.msra.mxu0 %v3910
  %3920 = vmatmul.bf16.gmra.mxu0 %v3907
  %v3921 = vpop.f32.mrf.mxu0
  %v3922 = vadd.f32 0.0, %v3921
  %v3923 = vpop.f32.mrf.mxu0
  %3924 = vdwg.mxu0
  %3925 = vrot.lane.b32.xlu0 %v3276, 104
  %v3926 = vpop.permute.xlu0 %3925
  %3928 = vxpose.xlu0.b32.start [1/16] %v3926, 128
  %3929 = vxpose.xlu0.b32.cont [2/16] 0.0, 128
  %3930 = vxpose.xlu0.b32.cont [3/16] 0.0, 128
  %3931 = vxpose.xlu0.b32.cont [4/16] 0.0, 128
  %3932 = vxpose.xlu0.b32.cont [5/16] 0.0, 128
  %3933 = vxpose.xlu0.b32.cont [6/16] 0.0, 128
  %3934 = vxpose.xlu0.b32.cont [7/16] 0.0, 128
  %3935 = vxpose.xlu0.b32.cont [8/16] 0.0, 128
  %3936 = vxpose.xlu0.b32.cont [9/16] 0.0, 128
  %3937 = vxpose.xlu0.b32.cont [10/16] 0.0, 128
  %3938 = vxpose.xlu0.b32.cont [11/16] 0.0, 128
  %3939 = vxpose.xlu0.b32.cont [12/16] 0.0, 128
  %3940 = vxpose.xlu0.b32.cont [13/16] 0.0, 128
  %3941 = vxpose.xlu0.b32.cont [14/16] 0.0, 128
  %3942 = vxpose.xlu0.b32.cont [15/16] 0.0, 128
  %3943 = vxpose.xlu0.b32.end [16/16] 0.0, 128
  %v3944 = vpop.trf.xlu0
  %v3945 = vpop.trf.xlu0
  %v3946 = vpop.trf.xlu0
  %v3947 = vpop.trf.xlu0
  %v3948 = vpop.trf.xlu0
  %v3949 = vpop.trf.xlu0
  %v3950 = vpop.trf.xlu0
  %v3951 = vpop.trf.xlu0
  %v3952 = vpop.trf.xlu0
  %v3953 = vpop.trf.xlu0
  %v3954 = vpop.trf.xlu0
  %v3955 = vpop.trf.xlu0
  %v3956 = vpop.trf.xlu0
  %v3957 = vpop.trf.xlu0
  %v3958 = vpop.trf.xlu0
  %v3959 = vpop.trf.xlu0
  %v3960 = vpack.c.bf16 %v3944, %v3944
  %3961 = vrot.lane.b32.xlu0 %v3655, 104
  %v3962 = vpop.permute.xlu0 %3961
  %v3964 = vsel %vm276, %v3962, 0
  %v3967 = vsel %vm280, %v3960, 0
  %3969 = vmatpush.bf16.msra.mxu0 0
  %3970 = vmatpush.bf16.msra.mxu0 0
  %3971 = vmatpush.bf16.msra.mxu0 0
  %3972 = vmatpush.bf16.msra.mxu0 0
  %3973 = vmatpush.bf16.msra.mxu0 0
  %3974 = vmatpush.bf16.msra.mxu0 0
  %3975 = vmatpush.bf16.msra.mxu0 0
  %3976 = vmatpush.bf16.msra.mxu0 %v3967
  %3977 = vmatmul.bf16.gmra.mxu0 %v3964
  %v3978 = vpop.f32.mrf.mxu0
  %v3979 = vadd.f32 0.0, %v3978
  %v3980 = vpop.f32.mrf.mxu0
  %3981 = vdwg.mxu0
  %v3982 = vsel %vm276, %v3979, -inf
  %3983 = vmax.xlane.f32.xlu0 %v3982
  %v3984 = vpop.xlane.xlu0 %3983
  %v3985 = vsub.f32 %v3979, %v3984
  %v3986 = vmul.f32 %v3985, 1.442695
  %v3987 = vpow.pop %v3986
  %v3988 = vsel %vm276, %v3987, 0.0
  %3989 = vadd.xlane.f32.xlu0 %v3988
  %v3990 = vpop.xlane.xlu0 %3989
  %v3991 = vrcp.pop %v3990
  %v3992 = vmul.f32 %v3987, %v3991
  %v3993 = vpack.c.bf16 %v3992, %v3992
  %3994 = vrot.lane.b32.xlu0 %v3720, 72
  %v3995 = vpop.permute.xlu0 %3994
  %v3997 = vsel %vm276, %v3993, 0
  %v4000 = vsel %vm280, %v3995, 0
  %4002 = vmatpush.bf16.msra.mxu0 0
  %4003 = vmatpush.bf16.msra.mxu0 0
  %4004 = vmatpush.bf16.msra.mxu0 0
  %4005 = vmatpush.bf16.msra.mxu0 0
  %4006 = vmatpush.bf16.msra.mxu0 0
  %4007 = vmatpush.bf16.msra.mxu0 0
  %4008 = vmatpush.bf16.msra.mxu0 0
  %4009 = vmatpush.bf16.msra.mxu0 %v4000
  %4010 = vmatmul.bf16.gmra.mxu0 %v3997
  %v4011 = vpop.f32.mrf.mxu0
  %v4012 = vadd.f32 0.0, %v4011
  %v4013 = vpop.f32.mrf.mxu0
  %4014 = vdwg.mxu0
  %4016 = vrot.lane.b32.xlu0 %v3832, 8
  %v4017 = vpop.permute.xlu0 %4016
  %4020 = vrot.lane.b32.xlu0 %v3922, 16
  %v4021 = vpop.permute.xlu0 %4020
  %4024 = vrot.lane.b32.xlu0 %v4012, 24
  %v4025 = vpop.permute.xlu0 %4024
  %v4027 = vsel %vm276, %v3740, %v4017
  %v4028 = vsel %vm616, %v4027, %v4021
  %v4029 = vsel %vm618, %v4028, %v4025
  %v4030 = vpack.c.bf16 %v4029, %v3653
  %v4032 = vperm.slane %v3211, 0
  %v4038 = vunpack.c.l.b16 %v3207
  %v4039 = vunpack.c.l.b16 %v3208
  %v4040 = vunpack.c.l.b16 %v3209
  %v4041 = vunpack.c.l.b16 %v3210
  %v4042 = vpack.c.b16 %v4039, %v4038
  %v4043 = vpack.c.b16 %v4041, %v4040
  %v4047 = vsel %vm219, %v4030, 0
  %4049 = vmatpush.bf16.msra.mxu0 0
  %4050 = vmatpush.bf16.msra.mxu0 0
  %4051 = vmatpush.bf16.msra.mxu0 0
  %4052 = vmatpush.bf16.msra.mxu0 0
  %4053 = vmatpush.bf16.msra.mxu0 0
  %4054 = vmatpush.bf16.msra.mxu0 0
  %4055 = vmatpush.bf16.msra.mxu0 %v4043
  %4056 = vmatpush.bf16.msra.mxu0 %v4042
  %4057 = vmatmul.bf16.gmra.mxu0 %v4047
  %v4058 = vpop.f32.mrf.mxu0
  %v4059 = vadd.f32 %v4032, %v4058
  %v4060 = vpop.f32.mrf.mxu0
  %v4061 = vadd.f32 %v4032, %v4060
  %4062 = vdwg.mxu0
  %v4063 = vadd.f32 %v3195, %v4059
  %v4064 = vadd.f32 %v3196, %v4061
  %v4065 = vld [vmem:[%s57] sm:$0x1]
  %v4066 = vld [vmem:[%s59] sm:$0x1]
  %v4067 = vsel %vm219, %v4063, 0.0
  %4068 = vadd.xlane.f32.xlu0 %v4067
  %v4069 = vpop.xlane.xlu0 %4068
  %v4070 = vsel %vm219, %v4064, 0.0
  %4071 = vadd.xlane.f32.xlu0 %v4070
  %v4072 = vpop.xlane.xlu0 %4071
  %v4073 = vmul.f32 %v4069, %v1048
  %v4074 = vmul.f32 %v4072, %v1048
  %v4075 = vsub.f32 %v4063, %v4073
  %v4076 = vsub.f32 %v4064, %v4074
  %v4077 = vmul.f32 %v4075, %v4075
  %v4078 = vmul.f32 %v4076, %v4076
  %v4079 = vsel %vm219, %v4077, 0.0
  %4080 = vadd.xlane.f32.xlu0 %v4079
  %v4081 = vpop.xlane.xlu0 %4080
  %v4082 = vsel %vm219, %v4078, 0.0
  %4083 = vadd.xlane.f32.xlu0 %v4082
  %v4084 = vpop.xlane.xlu0 %4083
  %v4085 = vmul.f32 %v4081, %v1048
  %v4086 = vmul.f32 %v4084, %v1048
  %v4087 = vadd.f32 %v4085, 1e-05
  %v4088 = vadd.f32 %v4086, 1e-05
  %v4089 = vrsqrt.pop %v4087
  %v4090 = vmul.f32 %v4089, %v4087
  %v4091 = vmul.f32 %v4090, %v4089
  %v4092 = vmul.f32 0.5, %v4091
  %v4093 = vsub.f32 1.5, %v4092
  %v4094 = vmul.f32 %v4089, %v4093
  %vm4095 = vweird.f32 %v4087
  %vm4096 = vweird.f32 %v4089
  %vm4097 = vmor %vm4095, %vm4096
  %v4098 = vsel %vm4097, %v4089, %v4094
  %v4099 = vrsqrt.pop %v4088
  %v4100 = vmul.f32 %v4099, %v4088
  %v4101 = vmul.f32 %v4100, %v4099
  %v4102 = vmul.f32 0.5, %v4101
  %v4103 = vsub.f32 1.5, %v4102
  %v4104 = vmul.f32 %v4099, %v4103
  %vm4105 = vweird.f32 %v4088
  %vm4106 = vweird.f32 %v4099
  %vm4107 = vmor %vm4105, %vm4106
  %v4108 = vsel %vm4107, %v4099, %v4104
  %v4109 = vmul.f32 %v4075, %v4098
  %v4110 = vmul.f32 %v4076, %v4108
  %v4112 = vperm.slane %v4065, 0
  %v4114 = vmul.f32 %v4109, %v4112
  %v4115 = vmul.f32 %v4110, %v4112
  %v4117 = vperm.slane %v4066, 0
  %v4119 = vadd.f32 %v4114, %v4117
  %v4120 = vadd.f32 %v4115, %v4117
  %v4121 = vld [vmem:[%s61] sm:$0xf]
  %v4122 = vld [vmem:[%s61 + $0x4] sm:$0xf]
  %v4123 = vld [vmem:[%s61 + $0x8] sm:$0xf]
  %v4124 = vld [vmem:[%s61 + $0xc] sm:$0xf]
  %v4125 = vld [vmem:[%s63] sm:$0x1]
  %v4126 = vld [vmem:[%s65] sm:$0xf]
  %v4127 = vld [vmem:[%s65 + $0x4] sm:$0xf]
  %v4128 = vld [vmem:[%s65 + $0x8] sm:$0xf]
  %v4129 = vld [vmem:[%s65 + $0xc] sm:$0xf]
  %v4130 = vld [vmem:[%s65 + $0x10] sm:$0xf]
  %v4131 = vld [vmem:[%s65 + $0x14] sm:$0xf]
  %v4132 = vld [vmem:[%s65 + $0x18] sm:$0xf]
  %v4133 = vld [vmem:[%s65 + $0x1c] sm:$0xf]
  %v4134 = vld [vmem:[%s67] sm:$0x1]
  %v4135 = vpack.c.bf16 %v4120, %v4119
  %v4137 = vperm.slane %v4125, 0
  %v4143 = vunpack.c.l.b16 %v4121
  %v4144 = vunpack.c.l.b16 %v4122
  %v4145 = vunpack.c.l.b16 %v4123
  %v4146 = vunpack.c.l.b16 %v4124
  %v4147 = vpack.c.b16 %v4144, %v4143
  %v4148 = vpack.c.b16 %v4146, %v4145
  %v4152 = vsel %vm219, %v4135, 0
  %4154 = vmatpush.bf16.msra.mxu0 0
  %4155 = vmatpush.bf16.msra.mxu0 0
  %4156 = vmatpush.bf16.msra.mxu0 0
  %4157 = vmatpush.bf16.msra.mxu0 0
  %4158 = vmatpush.bf16.msra.mxu0 0
  %4159 = vmatpush.bf16.msra.mxu0 0
  %4160 = vmatpush.bf16.msra.mxu0 %v4148
  %4161 = vmatpush.bf16.msra.mxu0 %v4147
  %4162 = vmatmul.bf16.gmra.mxu0 %v4152
  %v4163 = vpop.f32.mrf.mxu0
  %v4164 = vadd.f32 %v4137, %v4163
  %v4165 = vpop.f32.mrf.mxu0
  %v4166 = vadd.f32 %v4137, %v4165
  %4167 = vdwg.mxu0
  %v4168 = vmax.f32 %v4164, 0.0
  %v4169 = vmax.f32 %v4166, 0.0
  %v4170 = vpack.c.bf16 %v4169, %v4168
  %v4172 = vperm.slane %v4134, 0
  %v4182 = vunpack.c.l.b16 %v4126
  %v4183 = vunpack.c.l.b16 %v4127
  %v4184 = vunpack.c.l.b16 %v4128
  %v4185 = vunpack.c.l.b16 %v4129
  %v4186 = vunpack.c.l.b16 %v4130
  %v4187 = vunpack.c.l.b16 %v4131
  %v4188 = vunpack.c.l.b16 %v4132
  %v4189 = vunpack.c.l.b16 %v4133
  %v4190 = vpack.c.b16 %v4183, %v4182
  %v4191 = vpack.c.b16 %v4185, %v4184
  %v4192 = vpack.c.b16 %v4187, %v4186
  %v4193 = vpack.c.b16 %v4189, %v4188
  %v4199 = vsel %vm1174, %v4170, 0
  %4201 = vmatpush.bf16.msra.mxu0 0
  %4202 = vmatpush.bf16.msra.mxu0 0
  %4203 = vmatpush.bf16.msra.mxu0 0
  %4204 = vmatpush.bf16.msra.mxu0 0
  %4205 = vmatpush.bf16.msra.mxu0 %v4193
  %4206 = vmatpush.bf16.msra.mxu0 %v4192
  %4207 = vmatpush.bf16.msra.mxu0 %v4191
  %4208 = vmatpush.bf16.msra.mxu0 %v4190
  %4209 = vmatmul.bf16.gmra.mxu0 %v4199
  %v4210 = vpop.f32.mrf.mxu0
  %v4211 = vadd.f32 %v4172, %v4210
  %v4212 = vpop.f32.mrf.mxu0
  %v4213 = vadd.f32 %v4172, %v4212
  %4214 = vdwg.mxu0
  %v4215 = vadd.f32 %v4119, %v4211
  %v4216 = vadd.f32 %v4120, %v4213
  %v4217 = vld [vmem:[%s69] sm:$0x1]
  %v4218 = vld [vmem:[%s71] sm:$0x1]
  %v4219 = vsel %vm219, %v4215, 0.0
  %4220 = vadd.xlane.f32.xlu0 %v4219
  %v4221 = vpop.xlane.xlu0 %4220
  %v4222 = vsel %vm219, %v4216, 0.0
  %4223 = vadd.xlane.f32.xlu0 %v4222
  %v4224 = vpop.xlane.xlu0 %4223
  %v4225 = vmul.f32 %v4221, %v1048
  %v4226 = vmul.f32 %v4224, %v1048
  %v4227 = vsub.f32 %v4215, %v4225
  %v4228 = vsub.f32 %v4216, %v4226
  %v4229 = vmul.f32 %v4227, %v4227
  %v4230 = vmul.f32 %v4228, %v4228
  %v4231 = vsel %vm219, %v4229, 0.0
  %4232 = vadd.xlane.f32.xlu0 %v4231
  %v4233 = vpop.xlane.xlu0 %4232
  %v4234 = vsel %vm219, %v4230, 0.0
  %4235 = vadd.xlane.f32.xlu0 %v4234
  %v4236 = vpop.xlane.xlu0 %4235
  %v4237 = vmul.f32 %v4233, %v1048
  %v4238 = vmul.f32 %v4236, %v1048
  %v4239 = vadd.f32 %v4237, 1e-05
  %v4240 = vadd.f32 %v4238, 1e-05
  %v4241 = vrsqrt.pop %v4239
  %v4242 = vmul.f32 %v4241, %v4239
  %v4243 = vmul.f32 %v4242, %v4241
  %v4244 = vmul.f32 0.5, %v4243
  %v4245 = vsub.f32 1.5, %v4244
  %v4246 = vmul.f32 %v4241, %v4245
  %vm4247 = vweird.f32 %v4239
  %vm4248 = vweird.f32 %v4241
  %vm4249 = vmor %vm4247, %vm4248
  %v4250 = vsel %vm4249, %v4241, %v4246
  %v4251 = vrsqrt.pop %v4240
  %v4252 = vmul.f32 %v4251, %v4240
  %v4253 = vmul.f32 %v4252, %v4251
  %v4254 = vmul.f32 0.5, %v4253
  %v4255 = vsub.f32 1.5, %v4254
  %v4256 = vmul.f32 %v4251, %v4255
  %vm4257 = vweird.f32 %v4240
  %vm4258 = vweird.f32 %v4251
  %vm4259 = vmor %vm4257, %vm4258
  %v4260 = vsel %vm4259, %v4251, %v4256
  %v4261 = vmul.f32 %v4227, %v4250
  %v4262 = vmul.f32 %v4228, %v4260
  %v4264 = vperm.slane %v4217, 0
  %v4266 = vmul.f32 %v4261, %v4264
  %v4267 = vmul.f32 %v4262, %v4264
  %v4269 = vperm.slane %v4218, 0
  %v4271 = vadd.f32 %v4266, %v4269
  %v4272 = vadd.f32 %v4267, %v4269
  %s4273 = scalar_lea.vmem %s33, 16
  %v4274 = vld [vmem:[%s4273] sm:$0xf]
  %v4275 = vld [vmem:[%s4273 + $0x4] sm:$0xf]
  %v4276 = vld [vmem:[%s4273 + $0x8] sm:$0xf]
  %v4277 = vld [vmem:[%s4273 + $0xc] sm:$0xf]
  %s4278 = scalar_lea.vmem %s35, 1
  %v4279 = vld [vmem:[%s4278] sm:$0x1]
  %s4280 = scalar_lea.vmem %s37, 16
  %v4281 = vld [vmem:[%s4280] sm:$0xf]
  %v4282 = vld [vmem:[%s4280 + $0x4] sm:$0xf]
  %v4283 = vld [vmem:[%s4280 + $0x8] sm:$0xf]
  %v4284 = vld [vmem:[%s4280 + $0xc] sm:$0xf]
  %s4285 = scalar_lea.vmem %s39, 1
  %v4286 = vld [vmem:[%s4285] sm:$0x1]
  %v4287 = vpack.c.bf16 %v4272, %v4271
  %v4289 = vperm.slane %v4279, 0
  %v4295 = vunpack.c.l.b16 %v4274
  %v4296 = vunpack.c.l.b16 %v4275
  %v4297 = vunpack.c.l.b16 %v4276
  %v4298 = vunpack.c.l.b16 %v4277
  %v4299 = vpack.c.b16 %v4296, %v4295
  %v4300 = vpack.c.b16 %v4298, %v4297
  %v4304 = vsel %vm219, %v4287, 0
  %4306 = vmatpush.bf16.msra.mxu0 0
  %4307 = vmatpush.bf16.msra.mxu0 0
  %4308 = vmatpush.bf16.msra.mxu0 0
  %4309 = vmatpush.bf16.msra.mxu0 0
  %4310 = vmatpush.bf16.msra.mxu0 0
  %4311 = vmatpush.bf16.msra.mxu0 0
  %4312 = vmatpush.bf16.msra.mxu0 %v4300
  %4313 = vmatpush.bf16.msra.mxu0 %v4299
  %4314 = vmatmul.bf16.gmra.mxu0 %v4304
  %v4315 = vpop.f32.mrf.mxu0
  %v4316 = vadd.f32 %v4289, %v4315
  %v4317 = vpop.f32.mrf.mxu0
  %v4318 = vadd.f32 %v4289, %v4317
  %4319 = vdwg.mxu0
  %v4320 = vmul.f32 %v4316, 0.35355338
  %v4321 = vpack.c.bf16 %v4320, %v4320
  %4323 = vrot.lane.b32.xlu0 %v4316, 96
  %v4324 = vpop.permute.xlu0 %4323
  %4326 = vxpose.xlu0.b32.start [1/16] %v4324, 128
  %4327 = vxpose.xlu0.b32.cont [2/16] 0.0, 128
  %4328 = vxpose.xlu0.b32.cont [3/16] 0.0, 128
  %4329 = vxpose.xlu0.b32.cont [4/16] 0.0, 128
  %4330 = vxpose.xlu0.b32.cont [5/16] 0.0, 128
  %4331 = vxpose.xlu0.b32.cont [6/16] 0.0, 128
  %4332 = vxpose.xlu0.b32.cont [7/16] 0.0, 128
  %4333 = vxpose.xlu0.b32.cont [8/16] 0.0, 128
  %4334 = vxpose.xlu0.b32.cont [9/16] 0.0, 128
  %4335 = vxpose.xlu0.b32.cont [10/16] 0.0, 128
  %4336 = vxpose.xlu0.b32.cont [11/16] 0.0, 128
  %4337 = vxpose.xlu0.b32.cont [12/16] 0.0, 128
  %4338 = vxpose.xlu0.b32.cont [13/16] 0.0, 128
  %4339 = vxpose.xlu0.b32.cont [14/16] 0.0, 128
  %4340 = vxpose.xlu0.b32.cont [15/16] 0.0, 128
  %4341 = vxpose.xlu0.b32.end [16/16] 0.0, 128
  %v4342 = vpop.trf.xlu0
  %v4343 = vpop.trf.xlu0
  %v4344 = vpop.trf.xlu0
  %v4345 = vpop.trf.xlu0
  %v4346 = vpop.trf.xlu0
  %v4347 = vpop.trf.xlu0
  %v4348 = vpop.trf.xlu0
  %v4349 = vpop.trf.xlu0
  %v4350 = vpop.trf.xlu0
  %v4351 = vpop.trf.xlu0
  %v4352 = vpop.trf.xlu0
  %v4353 = vpop.trf.xlu0
  %v4354 = vpop.trf.xlu0
  %v4355 = vpop.trf.xlu0
  %v4356 = vpop.trf.xlu0
  %v4357 = vpop.trf.xlu0
  %v4358 = vpack.c.bf16 %v4342, %v4342
  %v4360 = vsel %vm276, %v4321, 0
  %v4363 = vsel %vm280, %v4358, 0
  %4365 = vmatpush.bf16.msra.mxu0 0
  %4366 = vmatpush.bf16.msra.mxu0 0
  %4367 = vmatpush.bf16.msra.mxu0 0
  %4368 = vmatpush.bf16.msra.mxu0 0
  %4369 = vmatpush.bf16.msra.mxu0 0
  %4370 = vmatpush.bf16.msra.mxu0 0
  %4371 = vmatpush.bf16.msra.mxu0 0
  %4372 = vmatpush.bf16.msra.mxu0 %v4363
  %4373 = vmatmul.bf16.gmra.mxu0 %v4360
  %v4374 = vpop.f32.mrf.mxu0
  %v4375 = vadd.f32 0.0, %v4374
  %v4376 = vpop.f32.mrf.mxu0
  %4377 = vdwg.mxu0
  %v4378 = vsel %vm276, %v4375, -inf
  %4379 = vmax.xlane.f32.xlu0 %v4378
  %v4380 = vpop.xlane.xlu0 %4379
  %v4381 = vsub.f32 %v4375, %v4380
  %v4382 = vmul.f32 %v4381, 1.442695
  %v4383 = vpow.pop %v4382
  %v4384 = vsel %vm276, %v4383, 0.0
  %4385 = vadd.xlane.f32.xlu0 %v4384
  %v4386 = vpop.xlane.xlu0 %4385
  %v4387 = vrcp.pop %v4386
  %v4388 = vmul.f32 %v4383, %v4387
  %v4389 = vpack.c.bf16 %v4388, %v4388
  %v4390 = vpack.c.bf16 %v4316, %v4316
  %4392 = vrot.lane.b32.xlu0 %v4390, 64
  %v4393 = vpop.permute.xlu0 %4392
  %v4395 = vsel %vm276, %v4389, 0
  %v4398 = vsel %vm280, %v4393, 0
  %4400 = vmatpush.bf16.msra.mxu0 0
  %4401 = vmatpush.bf16.msra.mxu0 0
  %4402 = vmatpush.bf16.msra.mxu0 0
  %4403 = vmatpush.bf16.msra.mxu0 0
  %4404 = vmatpush.bf16.msra.mxu0 0
  %4405 = vmatpush.bf16.msra.mxu0 0
  %4406 = vmatpush.bf16.msra.mxu0 0
  %4407 = vmatpush.bf16.msra.mxu0 %v4398
  %4408 = vmatmul.bf16.gmra.mxu0 %v4395
  %v4409 = vpop.f32.mrf.mxu0
  %v4410 = vadd.f32 0.0, %v4409
  %v4411 = vpop.f32.mrf.mxu0
  %4412 = vdwg.mxu0
  %4413 = vrot.lane.b32.xlu0 %v4316, 88
  %v4414 = vpop.permute.xlu0 %4413
  %4416 = vxpose.xlu0.b32.start [1/16] %v4414, 128
  %4417 = vxpose.xlu0.b32.cont [2/16] 0.0, 128
  %4418 = vxpose.xlu0.b32.cont [3/16] 0.0, 128
  %4419 = vxpose.xlu0.b32.cont [4/16] 0.0, 128
  %4420 = vxpose.xlu0.b32.cont [5/16] 0.0, 128
  %4421 = vxpose.xlu0.b32.cont [6/16] 0.0, 128
  %4422 = vxpose.xlu0.b32.cont [7/16] 0.0, 128
  %4423 = vxpose.xlu0.b32.cont [8/16] 0.0, 128
  %4424 = vxpose.xlu0.b32.cont [9/16] 0.0, 128
  %4425 = vxpose.xlu0.b32.cont [10/16] 0.0, 128
  %4426 = vxpose.xlu0.b32.cont [11/16] 0.0, 128
  %4427 = vxpose.xlu0.b32.cont [12/16] 0.0, 128
  %4428 = vxpose.xlu0.b32.cont [13/16] 0.0, 128
  %4429 = vxpose.xlu0.b32.cont [14/16] 0.0, 128
  %4430 = vxpose.xlu0.b32.cont [15/16] 0.0, 128
  %4431 = vxpose.xlu0.b32.end [16/16] 0.0, 128
  %v4432 = vpop.trf.xlu0
  %v4433 = vpop.trf.xlu0
  %v4434 = vpop.trf.xlu0
  %v4435 = vpop.trf.xlu0
  %v4436 = vpop.trf.xlu0
  %v4437 = vpop.trf.xlu0
  %v4438 = vpop.trf.xlu0
  %v4439 = vpop.trf.xlu0
  %v4440 = vpop.trf.xlu0
  %v4441 = vpop.trf.xlu0
  %v4442 = vpop.trf.xlu0
  %v4443 = vpop.trf.xlu0
  %v4444 = vpop.trf.xlu0
  %v4445 = vpop.trf.xlu0
  %v4446 = vpop.trf.xlu0
  %v4447 = vpop.trf.xlu0
  %v4448 = vpack.c.bf16 %v4432, %v4432
  %4450 = vrot.lane.b32.xlu0 %v4321, 120
  %v4451 = vpop.permute.xlu0 %4450
  %v4453 = vsel %vm276, %v4451, 0
  %v4456 = vsel %vm280, %v4448, 0
  %4458 = vmatpush.bf16.msra.mxu0 0
  %4459 = vmatpush.bf16.msra.mxu0 0
  %4460 = vmatpush.bf16.msra.mxu0 0
  %4461 = vmatpush.bf16.msra.mxu0 0
  %4462 = vmatpush.bf16.msra.mxu0 0
  %4463 = vmatpush.bf16.msra.mxu0 0
  %4464 = vmatpush.bf16.msra.mxu0 0
  %4465 = vmatpush.bf16.msra.mxu0 %v4456
  %4466 = vmatmul.bf16.gmra.mxu0 %v4453
  %v4467 = vpop.f32.mrf.mxu0
  %v4468 = vadd.f32 0.0, %v4467
  %v4469 = vpop.f32.mrf.mxu0
  %4470 = vdwg.mxu0
  %v4471 = vsel %vm276, %v4468, -inf
  %4472 = vmax.xlane.f32.xlu0 %v4471
  %v4473 = vpop.xlane.xlu0 %4472
  %v4474 = vsub.f32 %v4468, %v4473
  %v4475 = vmul.f32 %v4474, 1.442695
  %v4476 = vpow.pop %v4475
  %v4477 = vsel %vm276, %v4476, 0.0
  %4478 = vadd.xlane.f32.xlu0 %v4477
  %v4479 = vpop.xlane.xlu0 %4478
  %v4480 = vrcp.pop %v4479
  %v4481 = vmul.f32 %v4476, %v4480
  %v4482 = vpack.c.bf16 %v4481, %v4481
  %4483 = vrot.lane.b32.xlu0 %v4390, 56
  %v4484 = vpop.permute.xlu0 %4483
  %v4486 = vsel %vm276, %v4482, 0
  %v4489 = vsel %vm280, %v4484, 0
  %4491 = vmatpush.bf16.msra.mxu0 0
  %4492 = vmatpush.bf16.msra.mxu0 0
  %4493 = vmatpush.bf16.msra.mxu0 0
  %4494 = vmatpush.bf16.msra.mxu0 0
  %4495 = vmatpush.bf16.msra.mxu0 0
  %4496 = vmatpush.bf16.msra.mxu0 0
  %4497 = vmatpush.bf16.msra.mxu0 0
  %4498 = vmatpush.bf16.msra.mxu0 %v4489
  %4499 = vmatmul.bf16.gmra.mxu0 %v4486
  %v4500 = vpop.f32.mrf.mxu0
  %v4501 = vadd.f32 0.0, %v4500
  %v4502 = vpop.f32.mrf.mxu0
  %4503 = vdwg.mxu0
  %4504 = vrot.lane.b32.xlu0 %v4316, 80
  %v4505 = vpop.permute.xlu0 %4504
  %4507 = vxpose.xlu0.b32.start [1/16] %v4505, 128
  %4508 = vxpose.xlu0.b32.cont [2/16] 0.0, 128
  %4509 = vxpose.xlu0.b32.cont [3/16] 0.0, 128
  %4510 = vxpose.xlu0.b32.cont [4/16] 0.0, 128
  %4511 = vxpose.xlu0.b32.cont [5/16] 0.0, 128
  %4512 = vxpose.xlu0.b32.cont [6/16] 0.0, 128
  %4513 = vxpose.xlu0.b32.cont [7/16] 0.0, 128
  %4514 = vxpose.xlu0.b32.cont [8/16] 0.0, 128
  %4515 = vxpose.xlu0.b32.cont [9/16] 0.0, 128
  %4516 = vxpose.xlu0.b32.cont [10/16] 0.0, 128
  %4517 = vxpose.xlu0.b32.cont [11/16] 0.0, 128
  %4518 = vxpose.xlu0.b32.cont [12/16] 0.0, 128
  %4519 = vxpose.xlu0.b32.cont [13/16] 0.0, 128
  %4520 = vxpose.xlu0.b32.cont [14/16] 0.0, 128
  %4521 = vxpose.xlu0.b32.cont [15/16] 0.0, 128
  %4522 = vxpose.xlu0.b32.end [16/16] 0.0, 128
  %v4523 = vpop.trf.xlu0
  %v4524 = vpop.trf.xlu0
  %v4525 = vpop.trf.xlu0
  %v4526 = vpop.trf.xlu0
  %v4527 = vpop.trf.xlu0
  %v4528 = vpop.trf.xlu0
  %v4529 = vpop.trf.xlu0
  %v4530 = vpop.trf.xlu0
  %v4531 = vpop.trf.xlu0
  %v4532 = vpop.trf.xlu0
  %v4533 = vpop.trf.xlu0
  %v4534 = vpop.trf.xlu0
  %v4535 = vpop.trf.xlu0
  %v4536 = vpop.trf.xlu0
  %v4537 = vpop.trf.xlu0
  %v4538 = vpop.trf.xlu0
  %v4539 = vpack.c.bf16 %v4523, %v4523
  %4540 = vrot.lane.b32.xlu0 %v4321, 112
  %v4541 = vpop.permute.xlu0 %4540
  %v4543 = vsel %vm276, %v4541, 0
  %v4546 = vsel %vm280, %v4539, 0
  %4548 = vmatpush.bf16.msra.mxu0 0
  %4549 = vmatpush.bf16.msra.mxu0 0
  %4550 = vmatpush.bf16.msra.mxu0 0
  %4551 = vmatpush.bf16.msra.mxu0 0
  %4552 = vmatpush.bf16.msra.mxu0 0
  %4553 = vmatpush.bf16.msra.mxu0 0
  %4554 = vmatpush.bf16.msra.mxu0 0
  %4555 = vmatpush.bf16.msra.mxu0 %v4546
  %4556 = vmatmul.bf16.gmra.mxu0 %v4543
  %v4557 = vpop.f32.mrf.mxu0
  %v4558 = vadd.f32 0.0, %v4557
  %v4559 = vpop.f32.mrf.mxu0
  %4560 = vdwg.mxu0
  %v4561 = vsel %vm276, %v4558, -inf
  %4562 = vmax.xlane.f32.xlu0 %v4561
  %v4563 = vpop.xlane.xlu0 %4562
  %v4564 = vsub.f32 %v4558, %v4563
  %v4565 = vmul.f32 %v4564, 1.442695
  %v4566 = vpow.pop %v4565
  %v4567 = vsel %vm276, %v4566, 0.0
  %4568 = vadd.xlane.f32.xlu0 %v4567
  %v4569 = vpop.xlane.xlu0 %4568
  %v4570 = vrcp.pop %v4569
  %v4571 = vmul.f32 %v4566, %v4570
  %v4572 = vpack.c.bf16 %v4571, %v4571
  %4573 = vrot.lane.b32.xlu0 %v4390, 48
  %v4574 = vpop.permute.xlu0 %4573
  %v4576 = vsel %vm276, %v4572, 0
  %v4579 = vsel %vm280, %v4574, 0
  %4581 = vmatpush.bf16.msra.mxu0 0
  %4582 = vmatpush.bf16.msra.mxu0 0
  %4583 = vmatpush.bf16.msra.mxu0 0
  %4584 = vmatpush.bf16.msra.mxu0 0
  %4585 = vmatpush.bf16.msra.mxu0 0
  %4586 = vmatpush.bf16.msra.mxu0 0
  %4587 = vmatpush.bf16.msra.mxu0 0
  %4588 = vmatpush.bf16.msra.mxu0 %v4579
  %4589 = vmatmul.bf16.gmra.mxu0 %v4576
  %v4590 = vpop.f32.mrf.mxu0
  %v4591 = vadd.f32 0.0, %v4590
  %v4592 = vpop.f32.mrf.mxu0
  %4593 = vdwg.mxu0
  %4594 = vrot.lane.b32.xlu0 %v4316, 72
  %v4595 = vpop.permute.xlu0 %4594
  %4597 = vxpose.xlu0.b32.start [1/16] %v4595, 128
  %4598 = vxpose.xlu0.b32.cont [2/16] 0.0, 128
  %4599 = vxpose.xlu0.b32.cont [3/16] 0.0, 128
  %4600 = vxpose.xlu0.b32.cont [4/16] 0.0, 128
  %4601 = vxpose.xlu0.b32.cont [5/16] 0.0, 128
  %4602 = vxpose.xlu0.b32.cont [6/16] 0.0, 128
  %4603 = vxpose.xlu0.b32.cont [7/16] 0.0, 128
  %4604 = vxpose.xlu0.b32.cont [8/16] 0.0, 128
  %4605 = vxpose.xlu0.b32.cont [9/16] 0.0, 128
  %4606 = vxpose.xlu0.b32.cont [10/16] 0.0, 128
  %4607 = vxpose.xlu0.b32.cont [11/16] 0.0, 128
  %4608 = vxpose.xlu0.b32.cont [12/16] 0.0, 128
  %4609 = vxpose.xlu0.b32.cont [13/16] 0.0, 128
  %4610 = vxpose.xlu0.b32.cont [14/16] 0.0, 128
  %4611 = vxpose.xlu0.b32.cont [15/16] 0.0, 128
  %4612 = vxpose.xlu0.b32.end [16/16] 0.0, 128
  %v4613 = vpop.trf.xlu0
  %v4614 = vpop.trf.xlu0
  %v4615 = vpop.trf.xlu0
  %v4616 = vpop.trf.xlu0
  %v4617 = vpop.trf.xlu0
  %v4618 = vpop.trf.xlu0
  %v4619 = vpop.trf.xlu0
  %v4620 = vpop.trf.xlu0
  %v4621 = vpop.trf.xlu0
  %v4622 = vpop.trf.xlu0
  %v4623 = vpop.trf.xlu0
  %v4624 = vpop.trf.xlu0
  %v4625 = vpop.trf.xlu0
  %v4626 = vpop.trf.xlu0
  %v4627 = vpop.trf.xlu0
  %v4628 = vpop.trf.xlu0
  %v4629 = vpack.c.bf16 %v4613, %v4613
  %4630 = vrot.lane.b32.xlu0 %v4321, 104
  %v4631 = vpop.permute.xlu0 %4630
  %v4633 = vsel %vm276, %v4631, 0
  %v4636 = vsel %vm280, %v4629, 0
  %4638 = vmatpush.bf16.msra.mxu0 0
  %4639 = vmatpush.bf16.msra.mxu0 0
  %4640 = vmatpush.bf16.msra.mxu0 0
  %4641 = vmatpush.bf16.msra.mxu0 0
  %4642 = vmatpush.bf16.msra.mxu0 0
  %4643 = vmatpush.bf16.msra.mxu0 0
  %4644 = vmatpush.bf16.msra.mxu0 0
  %4645 = vmatpush.bf16.msra.mxu0 %v4636
  %4646 = vmatmul.bf16.gmra.mxu0 %v4633
  %v4647 = vpop.f32.mrf.mxu0
  %v4648 = vadd.f32 0.0, %v4647
  %v4649 = vpop.f32.mrf.mxu0
  %4650 = vdwg.mxu0
  %v4651 = vsel %vm276, %v4648, -inf
  %4652 = vmax.xlane.f32.xlu0 %v4651
  %v4653 = vpop.xlane.xlu0 %4652
  %v4654 = vsub.f32 %v4648, %v4653
  %v4655 = vmul.f32 %v4654, 1.442695
  %v4656 = vpow.pop %v4655
  %v4657 = vsel %vm276, %v4656, 0.0
  %4658 = vadd.xlane.f32.xlu0 %v4657
  %v4659 = vpop.xlane.xlu0 %4658
  %v4660 = vrcp.pop %v4659
  %v4661 = vmul.f32 %v4656, %v4660
  %v4662 = vpack.c.bf16 %v4661, %v4661
  %4663 = vrot.lane.b32.xlu0 %v4390, 40
  %v4664 = vpop.permute.xlu0 %4663
  %v4666 = vsel %vm276, %v4662, 0
  %v4669 = vsel %vm280, %v4664, 0
  %4671 = vmatpush.bf16.msra.mxu0 0
  %4672 = vmatpush.bf16.msra.mxu0 0
  %4673 = vmatpush.bf16.msra.mxu0 0
  %4674 = vmatpush.bf16.msra.mxu0 0
  %4675 = vmatpush.bf16.msra.mxu0 0
  %4676 = vmatpush.bf16.msra.mxu0 0
  %4677 = vmatpush.bf16.msra.mxu0 0
  %4678 = vmatpush.bf16.msra.mxu0 %v4669
  %4679 = vmatmul.bf16.gmra.mxu0 %v4666
  %v4680 = vpop.f32.mrf.mxu0
  %v4681 = vadd.f32 0.0, %v4680
  %v4682 = vpop.f32.mrf.mxu0
  %4683 = vdwg.mxu0
  %4685 = vrot.lane.b32.xlu0 %v4501, 8
  %v4686 = vpop.permute.xlu0 %4685
  %4689 = vrot.lane.b32.xlu0 %v4591, 16
  %v4690 = vpop.permute.xlu0 %4689
  %4693 = vrot.lane.b32.xlu0 %v4681, 24
  %v4694 = vpop.permute.xlu0 %4693
  %v4696 = vsel %vm276, %v4410, %v4686
  %v4697 = vsel %vm616, %v4696, %v4690
  %v4698 = vsel %vm618, %v4697, %v4694
  %v4699 = vmul.f32 %v4318, 0.35355338
  %v4700 = vpack.c.bf16 %v4699, %v4699
  %4702 = vrot.lane.b32.xlu0 %v4318, 96
  %v4703 = vpop.permute.xlu0 %4702
  %4705 = vxpose.xlu0.b32.start [1/16] %v4703, 128
  %4706 = vxpose.xlu0.b32.cont [2/16] 0.0, 128
  %4707 = vxpose.xlu0.b32.cont [3/16] 0.0, 128
  %4708 = vxpose.xlu0.b32.cont [4/16] 0.0, 128
  %4709 = vxpose.xlu0.b32.cont [5/16] 0.0, 128
  %4710 = vxpose.xlu0.b32.cont [6/16] 0.0, 128
  %4711 = vxpose.xlu0.b32.cont [7/16] 0.0, 128
  %4712 = vxpose.xlu0.b32.cont [8/16] 0.0, 128
  %4713 = vxpose.xlu0.b32.cont [9/16] 0.0, 128
  %4714 = vxpose.xlu0.b32.cont [10/16] 0.0, 128
  %4715 = vxpose.xlu0.b32.cont [11/16] 0.0, 128
  %4716 = vxpose.xlu0.b32.cont [12/16] 0.0, 128
  %4717 = vxpose.xlu0.b32.cont [13/16] 0.0, 128
  %4718 = vxpose.xlu0.b32.cont [14/16] 0.0, 128
  %4719 = vxpose.xlu0.b32.cont [15/16] 0.0, 128
  %4720 = vxpose.xlu0.b32.end [16/16] 0.0, 128
  %v4721 = vpop.trf.xlu0
  %v4722 = vpop.trf.xlu0
  %v4723 = vpop.trf.xlu0
  %v4724 = vpop.trf.xlu0
  %v4725 = vpop.trf.xlu0
  %v4726 = vpop.trf.xlu0
  %v4727 = vpop.trf.xlu0
  %v4728 = vpop.trf.xlu0
  %v4729 = vpop.trf.xlu0
  %v4730 = vpop.trf.xlu0
  %v4731 = vpop.trf.xlu0
  %v4732 = vpop.trf.xlu0
  %v4733 = vpop.trf.xlu0
  %v4734 = vpop.trf.xlu0
  %v4735 = vpop.trf.xlu0
  %v4736 = vpop.trf.xlu0
  %v4737 = vpack.c.bf16 %v4721, %v4721
  %v4739 = vsel %vm276, %v4700, 0
  %v4742 = vsel %vm280, %v4737, 0
  %4744 = vmatpush.bf16.msra.mxu0 0
  %4745 = vmatpush.bf16.msra.mxu0 0
  %4746 = vmatpush.bf16.msra.mxu0 0
  %4747 = vmatpush.bf16.msra.mxu0 0
  %4748 = vmatpush.bf16.msra.mxu0 0
  %4749 = vmatpush.bf16.msra.mxu0 0
  %4750 = vmatpush.bf16.msra.mxu0 0
  %4751 = vmatpush.bf16.msra.mxu0 %v4742
  %4752 = vmatmul.bf16.gmra.mxu0 %v4739
  %v4753 = vpop.f32.mrf.mxu0
  %v4754 = vadd.f32 0.0, %v4753
  %v4755 = vpop.f32.mrf.mxu0
  %4756 = vdwg.mxu0
  %v4757 = vsel %vm276, %v4754, -inf
  %4758 = vmax.xlane.f32.xlu0 %v4757
  %v4759 = vpop.xlane.xlu0 %4758
  %v4760 = vsub.f32 %v4754, %v4759
  %v4761 = vmul.f32 %v4760, 1.442695
  %v4762 = vpow.pop %v4761
  %v4763 = vsel %vm276, %v4762, 0.0
  %4764 = vadd.xlane.f32.xlu0 %v4763
  %v4765 = vpop.xlane.xlu0 %4764
  %v4766 = vrcp.pop %v4765
  %v4767 = vmul.f32 %v4762, %v4766
  %v4768 = vpack.c.bf16 %v4767, %v4767
  %v4769 = vpack.c.bf16 %v4318, %v4318
  %4771 = vrot.lane.b32.xlu0 %v4769, 64
  %v4772 = vpop.permute.xlu0 %4771
  %v4774 = vsel %vm276, %v4768, 0
  %v4777 = vsel %vm280, %v4772, 0
  %4779 = vmatpush.bf16.msra.mxu0 0
  %4780 = vmatpush.bf16.msra.mxu0 0
  %4781 = vmatpush.bf16.msra.mxu0 0
  %4782 = vmatpush.bf16.msra.mxu0 0
  %4783 = vmatpush.bf16.msra.mxu0 0
  %4784 = vmatpush.bf16.msra.mxu0 0
  %4785 = vmatpush.bf16.msra.mxu0 0
  %4786 = vmatpush.bf16.msra.mxu0 %v4777
  %4787 = vmatmul.bf16.gmra.mxu0 %v4774
  %v4788 = vpop.f32.mrf.mxu0
  %v4789 = vadd.f32 0.0, %v4788
  %v4790 = vpop.f32.mrf.mxu0
  %4791 = vdwg.mxu0
  %4792 = vrot.lane.b32.xlu0 %v4318, 88
  %v4793 = vpop.permute.xlu0 %4792
  %4795 = vxpose.xlu0.b32.start [1/16] %v4793, 128
  %4796 = vxpose.xlu0.b32.cont [2/16] 0.0, 128
  %4797 = vxpose.xlu0.b32.cont [3/16] 0.0, 128
  %4798 = vxpose.xlu0.b32.cont [4/16] 0.0, 128
  %4799 = vxpose.xlu0.b32.cont [5/16] 0.0, 128
  %4800 = vxpose.xlu0.b32.cont [6/16] 0.0, 128
  %4801 = vxpose.xlu0.b32.cont [7/16] 0.0, 128
  %4802 = vxpose.xlu0.b32.cont [8/16] 0.0, 128
  %4803 = vxpose.xlu0.b32.cont [9/16] 0.0, 128
  %4804 = vxpose.xlu0.b32.cont [10/16] 0.0, 128
  %4805 = vxpose.xlu0.b32.cont [11/16] 0.0, 128
  %4806 = vxpose.xlu0.b32.cont [12/16] 0.0, 128
  %4807 = vxpose.xlu0.b32.cont [13/16] 0.0, 128
  %4808 = vxpose.xlu0.b32.cont [14/16] 0.0, 128
  %4809 = vxpose.xlu0.b32.cont [15/16] 0.0, 128
  %4810 = vxpose.xlu0.b32.end [16/16] 0.0, 128
  %v4811 = vpop.trf.xlu0
  %v4812 = vpop.trf.xlu0
  %v4813 = vpop.trf.xlu0
  %v4814 = vpop.trf.xlu0
  %v4815 = vpop.trf.xlu0
  %v4816 = vpop.trf.xlu0
  %v4817 = vpop.trf.xlu0
  %v4818 = vpop.trf.xlu0
  %v4819 = vpop.trf.xlu0
  %v4820 = vpop.trf.xlu0
  %v4821 = vpop.trf.xlu0
  %v4822 = vpop.trf.xlu0
  %v4823 = vpop.trf.xlu0
  %v4824 = vpop.trf.xlu0
  %v4825 = vpop.trf.xlu0
  %v4826 = vpop.trf.xlu0
  %v4827 = vpack.c.bf16 %v4811, %v4811
  %4829 = vrot.lane.b32.xlu0 %v4700, 120
  %v4830 = vpop.permute.xlu0 %4829
  %v4832 = vsel %vm276, %v4830, 0
  %v4835 = vsel %vm280, %v4827, 0
  %4837 = vmatpush.bf16.msra.mxu0 0
  %4838 = vmatpush.bf16.msra.mxu0 0
  %4839 = vmatpush.bf16.msra.mxu0 0
  %4840 = vmatpush.bf16.msra.mxu0 0
  %4841 = vmatpush.bf16.msra.mxu0 0
  %4842 = vmatpush.bf16.msra.mxu0 0
  %4843 = vmatpush.bf16.msra.mxu0 0
  %4844 = vmatpush.bf16.msra.mxu0 %v4835
  %4845 = vmatmul.bf16.gmra.mxu0 %v4832
  %v4846 = vpop.f32.mrf.mxu0
  %v4847 = vadd.f32 0.0, %v4846
  %v4848 = vpop.f32.mrf.mxu0
  %4849 = vdwg.mxu0
  %v4850 = vsel %vm276, %v4847, -inf
  %4851 = vmax.xlane.f32.xlu0 %v4850
  %v4852 = vpop.xlane.xlu0 %4851
  %v4853 = vsub.f32 %v4847, %v4852
  %v4854 = vmul.f32 %v4853, 1.442695
  %v4855 = vpow.pop %v4854
  %v4856 = vsel %vm276, %v4855, 0.0
  %4857 = vadd.xlane.f32.xlu0 %v4856
  %v4858 = vpop.xlane.xlu0 %4857
  %v4859 = vrcp.pop %v4858
  %v4860 = vmul.f32 %v4855, %v4859
  %v4861 = vpack.c.bf16 %v4860, %v4860
  %4862 = vrot.lane.b32.xlu0 %v4769, 56
  %v4863 = vpop.permute.xlu0 %4862
  %v4865 = vsel %vm276, %v4861, 0
  %v4868 = vsel %vm280, %v4863, 0
  %4870 = vmatpush.bf16.msra.mxu0 0
  %4871 = vmatpush.bf16.msra.mxu0 0
  %4872 = vmatpush.bf16.msra.mxu0 0
  %4873 = vmatpush.bf16.msra.mxu0 0
  %4874 = vmatpush.bf16.msra.mxu0 0
  %4875 = vmatpush.bf16.msra.mxu0 0
  %4876 = vmatpush.bf16.msra.mxu0 0
  %4877 = vmatpush.bf16.msra.mxu0 %v4868
  %4878 = vmatmul.bf16.gmra.mxu0 %v4865
  %v4879 = vpop.f32.mrf.mxu0
  %v4880 = vadd.f32 0.0, %v4879
  %v4881 = vpop.f32.mrf.mxu0
  %4882 = vdwg.mxu0
  %4883 = vrot.lane.b32.xlu0 %v4318, 80
  %v4884 = vpop.permute.xlu0 %4883
  %4886 = vxpose.xlu0.b32.start [1/16] %v4884, 128
  %4887 = vxpose.xlu0.b32.cont [2/16] 0.0, 128
  %4888 = vxpose.xlu0.b32.cont [3/16] 0.0, 128
  %4889 = vxpose.xlu0.b32.cont [4/16] 0.0, 128
  %4890 = vxpose.xlu0.b32.cont [5/16] 0.0, 128
  %4891 = vxpose.xlu0.b32.cont [6/16] 0.0, 128
  %4892 = vxpose.xlu0.b32.cont [7/16] 0.0, 128
  %4893 = vxpose.xlu0.b32.cont [8/16] 0.0, 128
  %4894 = vxpose.xlu0.b32.cont [9/16] 0.0, 128
  %4895 = vxpose.xlu0.b32.cont [10/16] 0.0, 128
  %4896 = vxpose.xlu0.b32.cont [11/16] 0.0, 128
  %4897 = vxpose.xlu0.b32.cont [12/16] 0.0, 128
  %4898 = vxpose.xlu0.b32.cont [13/16] 0.0, 128
  %4899 = vxpose.xlu0.b32.cont [14/16] 0.0, 128
  %4900 = vxpose.xlu0.b32.cont [15/16] 0.0, 128
  %4901 = vxpose.xlu0.b32.end [16/16] 0.0, 128
  %v4902 = vpop.trf.xlu0
  %v4903 = vpop.trf.xlu0
  %v4904 = vpop.trf.xlu0
  %v4905 = vpop.trf.xlu0
  %v4906 = vpop.trf.xlu0
  %v4907 = vpop.trf.xlu0
  %v4908 = vpop.trf.xlu0
  %v4909 = vpop.trf.xlu0
  %v4910 = vpop.trf.xlu0
  %v4911 = vpop.trf.xlu0
  %v4912 = vpop.trf.xlu0
  %v4913 = vpop.trf.xlu0
  %v4914 = vpop.trf.xlu0
  %v4915 = vpop.trf.xlu0
  %v4916 = vpop.trf.xlu0
  %v4917 = vpop.trf.xlu0
  %v4918 = vpack.c.bf16 %v4902, %v4902
  %4919 = vrot.lane.b32.xlu0 %v4700, 112
  %v4920 = vpop.permute.xlu0 %4919
  %v4922 = vsel %vm276, %v4920, 0
  %v4925 = vsel %vm280, %v4918, 0
  %4927 = vmatpush.bf16.msra.mxu0 0
  %4928 = vmatpush.bf16.msra.mxu0 0
  %4929 = vmatpush.bf16.msra.mxu0 0
  %4930 = vmatpush.bf16.msra.mxu0 0
  %4931 = vmatpush.bf16.msra.mxu0 0
  %4932 = vmatpush.bf16.msra.mxu0 0
  %4933 = vmatpush.bf16.msra.mxu0 0
  %4934 = vmatpush.bf16.msra.mxu0 %v4925
  %4935 = vmatmul.bf16.gmra.mxu0 %v4922
  %v4936 = vpop.f32.mrf.mxu0
  %v4937 = vadd.f32 0.0, %v4936
  %v4938 = vpop.f32.mrf.mxu0
  %4939 = vdwg.mxu0
  %v4940 = vsel %vm276, %v4937, -inf
  %4941 = vmax.xlane.f32.xlu0 %v4940
  %v4942 = vpop.xlane.xlu0 %4941
  %v4943 = vsub.f32 %v4937, %v4942
  %v4944 = vmul.f32 %v4943, 1.442695
  %v4945 = vpow.pop %v4944
  %v4946 = vsel %vm276, %v4945, 0.0
  %4947 = vadd.xlane.f32.xlu0 %v4946
  %v4948 = vpop.xlane.xlu0 %4947
  %v4949 = vrcp.pop %v4948
  %v4950 = vmul.f32 %v4945, %v4949
  %v4951 = vpack.c.bf16 %v4950, %v4950
  %4952 = vrot.lane.b32.xlu0 %v4769, 48
  %v4953 = vpop.permute.xlu0 %4952
  %v4955 = vsel %vm276, %v4951, 0
  %v4958 = vsel %vm280, %v4953, 0
  %4960 = vmatpush.bf16.msra.mxu0 0
  %4961 = vmatpush.bf16.msra.mxu0 0
  %4962 = vmatpush.bf16.msra.mxu0 0
  %4963 = vmatpush.bf16.msra.mxu0 0
  %4964 = vmatpush.bf16.msra.mxu0 0
  %4965 = vmatpush.bf16.msra.mxu0 0
  %4966 = vmatpush.bf16.msra.mxu0 0
  %4967 = vmatpush.bf16.msra.mxu0 %v4958
  %4968 = vmatmul.bf16.gmra.mxu0 %v4955
  %v4969 = vpop.f32.mrf.mxu0
  %v4970 = vadd.f32 0.0, %v4969
  %v4971 = vpop.f32.mrf.mxu0
  %4972 = vdwg.mxu0
  %4973 = vrot.lane.b32.xlu0 %v4318, 72
  %v4974 = vpop.permute.xlu0 %4973
  %4976 = vxpose.xlu0.b32.start [1/16] %v4974, 128
  %4977 = vxpose.xlu0.b32.cont [2/16] 0.0, 128
  %4978 = vxpose.xlu0.b32.cont [3/16] 0.0, 128
  %4979 = vxpose.xlu0.b32.cont [4/16] 0.0, 128
  %4980 = vxpose.xlu0.b32.cont [5/16] 0.0, 128
  %4981 = vxpose.xlu0.b32.cont [6/16] 0.0, 128
  %4982 = vxpose.xlu0.b32.cont [7/16] 0.0, 128
  %4983 = vxpose.xlu0.b32.cont [8/16] 0.0, 128
  %4984 = vxpose.xlu0.b32.cont [9/16] 0.0, 128
  %4985 = vxpose.xlu0.b32.cont [10/16] 0.0, 128
  %4986 = vxpose.xlu0.b32.cont [11/16] 0.0, 128
  %4987 = vxpose.xlu0.b32.cont [12/16] 0.0, 128
  %4988 = vxpose.xlu0.b32.cont [13/16] 0.0, 128
  %4989 = vxpose.xlu0.b32.cont [14/16] 0.0, 128
  %4990 = vxpose.xlu0.b32.cont [15/16] 0.0, 128
  %4991 = vxpose.xlu0.b32.end [16/16] 0.0, 128
  %v4992 = vpop.trf.xlu0
  %v4993 = vpop.trf.xlu0
  %v4994 = vpop.trf.xlu0
  %v4995 = vpop.trf.xlu0
  %v4996 = vpop.trf.xlu0
  %v4997 = vpop.trf.xlu0
  %v4998 = vpop.trf.xlu0
  %v4999 = vpop.trf.xlu0
  %v5000 = vpop.trf.xlu0
  %v5001 = vpop.trf.xlu0
  %v5002 = vpop.trf.xlu0
  %v5003 = vpop.trf.xlu0
  %v5004 = vpop.trf.xlu0
  %v5005 = vpop.trf.xlu0
  %v5006 = vpop.trf.xlu0
  %v5007 = vpop.trf.xlu0
  %v5008 = vpack.c.bf16 %v4992, %v4992
  %5009 = vrot.lane.b32.xlu0 %v4700, 104
  %v5010 = vpop.permute.xlu0 %5009
  %v5012 = vsel %vm276, %v5010, 0
  %v5015 = vsel %vm280, %v5008, 0
  %5017 = vmatpush.bf16.msra.mxu0 0
  %5018 = vmatpush.bf16.msra.mxu0 0
  %5019 = vmatpush.bf16.msra.mxu0 0
  %5020 = vmatpush.bf16.msra.mxu0 0
  %5021 = vmatpush.bf16.msra.mxu0 0
  %5022 = vmatpush.bf16.msra.mxu0 0
  %5023 = vmatpush.bf16.msra.mxu0 0
  %5024 = vmatpush.bf16.msra.mxu0 %v5015
  %5025 = vmatmul.bf16.gmra.mxu0 %v5012
  %v5026 = vpop.f32.mrf.mxu0
  %v5027 = vadd.f32 0.0, %v5026
  %v5028 = vpop.f32.mrf.mxu0
  %5029 = vdwg.mxu0
  %v5030 = vsel %vm276, %v5027, -inf
  %5031 = vmax.xlane.f32.xlu0 %v5030
  %v5032 = vpop.xlane.xlu0 %5031
  %v5033 = vsub.f32 %v5027, %v5032
  %v5034 = vmul.f32 %v5033, 1.442695
  %v5035 = vpow.pop %v5034
  %v5036 = vsel %vm276, %v5035, 0.0
  %5037 = vadd.xlane.f32.xlu0 %v5036
  %v5038 = vpop.xlane.xlu0 %5037
  %v5039 = vrcp.pop %v5038
  %v5040 = vmul.f32 %v5035, %v5039
  %v5041 = vpack.c.bf16 %v5040, %v5040
  %5042 = vrot.lane.b32.xlu0 %v4769, 40
  %v5043 = vpop.permute.xlu0 %5042
  %v5045 = vsel %vm276, %v5041, 0
  %v5048 = vsel %vm280, %v5043, 0
  %5050 = vmatpush.bf16.msra.mxu0 0
  %5051 = vmatpush.bf16.msra.mxu0 0
  %5052 = vmatpush.bf16.msra.mxu0 0
  %5053 = vmatpush.bf16.msra.mxu0 0
  %5054 = vmatpush.bf16.msra.mxu0 0
  %5055 = vmatpush.bf16.msra.mxu0 0
  %5056 = vmatpush.bf16.msra.mxu0 0
  %5057 = vmatpush.bf16.msra.mxu0 %v5048
  %5058 = vmatmul.bf16.gmra.mxu0 %v5045
  %v5059 = vpop.f32.mrf.mxu0
  %v5060 = vadd.f32 0.0, %v5059
  %v5061 = vpop.f32.mrf.mxu0
  %5062 = vdwg.mxu0
  %5064 = vrot.lane.b32.xlu0 %v4880, 8
  %v5065 = vpop.permute.xlu0 %5064
  %5068 = vrot.lane.b32.xlu0 %v4970, 16
  %v5069 = vpop.permute.xlu0 %5068
  %5072 = vrot.lane.b32.xlu0 %v5060, 24
  %v5073 = vpop.permute.xlu0 %5072
  %v5075 = vsel %vm276, %v4789, %v5065
  %v5076 = vsel %vm616, %v5075, %v5069
  %v5077 = vsel %vm618, %v5076, %v5073
  %v5078 = vpack.c.bf16 %v5077, %v4698
  %v5080 = vperm.slane %v4286, 0
  %v5086 = vunpack.c.l.b16 %v4281
  %v5087 = vunpack.c.l.b16 %v4282
  %v5088 = vunpack.c.l.b16 %v4283
  %v5089 = vunpack.c.l.b16 %v4284
  %v5090 = vpack.c.b16 %v5087, %v5086
  %v5091 = vpack.c.b16 %v5089, %v5088
  %v5095 = vsel %vm219, %v5078, 0
  %5097 = vmatpush.bf16.msra.mxu0 0
  %5098 = vmatpush.bf16.msra.mxu0 0
  %5099 = vmatpush.bf16.msra.mxu0 0
  %5100 = vmatpush.bf16.msra.mxu0 0
  %5101 = vmatpush.bf16.msra.mxu0 0
  %5102 = vmatpush.bf16.msra.mxu0 0
  %5103 = vmatpush.bf16.msra.mxu0 %v5091
  %5104 = vmatpush.bf16.msra.mxu0 %v5090
  %5105 = vmatmul.bf16.gmra.mxu0 %v5095
  %v5106 = vpop.f32.mrf.mxu0
  %v5107 = vadd.f32 %v5080, %v5106
  %v5108 = vpop.f32.mrf.mxu0
  %v5109 = vadd.f32 %v5080, %v5108
  %5110 = vdwg.mxu0
  %v5111 = vadd.f32 %v4271, %v5107
  %v5112 = vadd.f32 %v4272, %v5109
  %s5113 = scalar_lea.vmem %s41, 1
  %v5114 = vld [vmem:[%s5113] sm:$0x1]
  %s5115 = scalar_lea.vmem %s43, 1
  %v5116 = vld [vmem:[%s5115] sm:$0x1]
  %v5117 = vsel %vm219, %v5111, 0.0
  %5118 = vadd.xlane.f32.xlu0 %v5117
  %v5119 = vpop.xlane.xlu0 %5118
  %v5120 = vsel %vm219, %v5112, 0.0
  %5121 = vadd.xlane.f32.xlu0 %v5120
  %v5122 = vpop.xlane.xlu0 %5121
  %v5123 = vmul.f32 %v5119, %v1048
  %v5124 = vmul.f32 %v5122, %v1048
  %v5125 = vsub.f32 %v5111, %v5123
  %v5126 = vsub.f32 %v5112, %v5124
  %v5127 = vmul.f32 %v5125, %v5125
  %v5128 = vmul.f32 %v5126, %v5126
  %v5129 = vsel %vm219, %v5127, 0.0
  %5130 = vadd.xlane.f32.xlu0 %v5129
  %v5131 = vpop.xlane.xlu0 %5130
  %v5132 = vsel %vm219, %v5128, 0.0
  %5133 = vadd.xlane.f32.xlu0 %v5132
  %v5134 = vpop.xlane.xlu0 %5133
  %v5135 = vmul.f32 %v5131, %v1048
  %v5136 = vmul.f32 %v5134, %v1048
  %v5137 = vadd.f32 %v5135, 1e-05
  %v5138 = vadd.f32 %v5136, 1e-05
  %v5139 = vrsqrt.pop %v5137
  %v5140 = vmul.f32 %v5139, %v5137
  %v5141 = vmul.f32 %v5140, %v5139
  %v5142 = vmul.f32 0.5, %v5141
  %v5143 = vsub.f32 1.5, %v5142
  %v5144 = vmul.f32 %v5139, %v5143
  %vm5145 = vweird.f32 %v5137
  %vm5146 = vweird.f32 %v5139
  %vm5147 = vmor %vm5145, %vm5146
  %v5148 = vsel %vm5147, %v5139, %v5144
  %v5149 = vrsqrt.pop %v5138
  %v5150 = vmul.f32 %v5149, %v5138
  %v5151 = vmul.f32 %v5150, %v5149
  %v5152 = vmul.f32 0.5, %v5151
  %v5153 = vsub.f32 1.5, %v5152
  %v5154 = vmul.f32 %v5149, %v5153
  %vm5155 = vweird.f32 %v5138
  %vm5156 = vweird.f32 %v5149
  %vm5157 = vmor %vm5155, %vm5156
  %v5158 = vsel %vm5157, %v5149, %v5154
  %v5159 = vmul.f32 %v5125, %v5148
  %v5160 = vmul.f32 %v5126, %v5158
  %v5162 = vperm.slane %v5114, 0
  %v5164 = vmul.f32 %v5159, %v5162
  %v5165 = vmul.f32 %v5160, %v5162
  %v5167 = vperm.slane %v5116, 0
  %v5169 = vadd.f32 %v5164, %v5167
  %v5170 = vadd.f32 %v5165, %v5167
  %s5171 = scalar_lea.vmem %s45, 16
  %v5172 = vld [vmem:[%s5171] sm:$0xf]
  %v5173 = vld [vmem:[%s5171 + $0x4] sm:$0xf]
  %v5174 = vld [vmem:[%s5171 + $0x8] sm:$0xf]
  %v5175 = vld [vmem:[%s5171 + $0xc] sm:$0xf]
  %s5176 = scalar_lea.vmem %s47, 1
  %v5177 = vld [vmem:[%s5176] sm:$0x1]
  %s5178 = scalar_lea.vmem %s49, 16
  %v5179 = vld [vmem:[%s5178] sm:$0xf]
  %v5180 = vld [vmem:[%s5178 + $0x4] sm:$0xf]
  %v5181 = vld [vmem:[%s5178 + $0x8] sm:$0xf]
  %v5182 = vld [vmem:[%s5178 + $0xc] sm:$0xf]
  %s5183 = scalar_lea.vmem %s51, 1
  %v5184 = vld [vmem:[%s5183] sm:$0x1]
  %s5185 = scalar_lea.vmem %s53, 16
  %v5186 = vld [vmem:[%s5185] sm:$0xf]
  %v5187 = vld [vmem:[%s5185 + $0x4] sm:$0xf]
  %v5188 = vld [vmem:[%s5185 + $0x8] sm:$0xf]
  %v5189 = vld [vmem:[%s5185 + $0xc] sm:$0xf]
  %s5190 = scalar_lea.vmem %s55, 1
  %v5191 = vld [vmem:[%s5190] sm:$0x1]
  %v5192 = vpack.c.bf16 %v5170, %v5169
  %v5194 = vperm.slane %v5177, 0
  %v5200 = vunpack.c.l.b16 %v5172
  %v5201 = vunpack.c.l.b16 %v5173
  %v5202 = vunpack.c.l.b16 %v5174
  %v5203 = vunpack.c.l.b16 %v5175
  %v5204 = vpack.c.b16 %v5201, %v5200
  %v5205 = vpack.c.b16 %v5203, %v5202
  %v5209 = vsel %vm219, %v5192, 0
  %5211 = vmatpush.bf16.msra.mxu0 0
  %5212 = vmatpush.bf16.msra.mxu0 0
  %5213 = vmatpush.bf16.msra.mxu0 0
  %5214 = vmatpush.bf16.msra.mxu0 0
  %5215 = vmatpush.bf16.msra.mxu0 0
  %5216 = vmatpush.bf16.msra.mxu0 0
  %5217 = vmatpush.bf16.msra.mxu0 %v5205
  %5218 = vmatpush.bf16.msra.mxu0 %v5204
  %5219 = vmatmul.bf16.gmra.mxu0 %v5209
  %v5220 = vpop.f32.mrf.mxu0
  %v5221 = vadd.f32 %v5194, %v5220
  %v5222 = vpop.f32.mrf.mxu0
  %v5223 = vadd.f32 %v5194, %v5222
  %5224 = vdwg.mxu0
  %v5226 = vperm.slane %v5184, 0
  %v5232 = vunpack.c.l.b16 %v5179
  %v5233 = vunpack.c.l.b16 %v5180
  %v5234 = vunpack.c.l.b16 %v5181
  %v5235 = vunpack.c.l.b16 %v5182
  %v5236 = vpack.c.b16 %v5233, %v5232
  %v5237 = vpack.c.b16 %v5235, %v5234
  %5240 = vmatpush.bf16.msra.mxu0 0
  %5241 = vmatpush.bf16.msra.mxu0 0
  %5242 = vmatpush.bf16.msra.mxu0 0
  %5243 = vmatpush.bf16.msra.mxu0 0
  %5244 = vmatpush.bf16.msra.mxu0 0
  %5245 = vmatpush.bf16.msra.mxu0 0
  %5246 = vmatpush.bf16.msra.mxu0 %v5237
  %5247 = vmatpush.bf16.msra.mxu0 %v5236
  %5248 = vmatmul.bf16.gmra.mxu0 %v3262
  %v5249 = vpop.f32.mrf.mxu0
  %v5250 = vadd.f32 %v5226, %v5249
  %v5251 = vpop.f32.mrf.mxu0
  %v5252 = vadd.f32 %v5226, %v5251
  %5253 = vdwg.mxu0
  %v5254 = vmul.f32 %v5221, 0.35355338
  %v5255 = vpack.c.bf16 %v5254, %v5254
  %5256 = vxpose.xlu0.b32.start [1/16] %v5250, 128
  %5257 = vxpose.xlu0.b32.cont [2/16] 0.0, 128
  %5258 = vxpose.xlu0.b32.cont [3/16] 0.0, 128
  %5259 = vxpose.xlu0.b32.cont [4/16] 0.0, 128
  %5260 = vxpose.xlu0.b32.cont [5/16] 0.0, 128
  %5261 = vxpose.xlu0.b32.cont [6/16] 0.0, 128
  %5262 = vxpose.xlu0.b32.cont [7/16] 0.0, 128
  %5263 = vxpose.xlu0.b32.cont [8/16] 0.0, 128
  %5264 = vxpose.xlu0.b32.cont [9/16] 0.0, 128
  %5265 = vxpose.xlu0.b32.cont [10/16] 0.0, 128
  %5266 = vxpose.xlu0.b32.cont [11/16] 0.0, 128
  %5267 = vxpose.xlu0.b32.cont [12/16] 0.0, 128
  %5268 = vxpose.xlu0.b32.cont [13/16] 0.0, 128
  %5269 = vxpose.xlu0.b32.cont [14/16] 0.0, 128
  %5270 = vxpose.xlu0.b32.cont [15/16] 0.0, 128
  %5271 = vxpose.xlu0.b32.end [16/16] 0.0, 128
  %v5272 = vpop.trf.xlu0
  %v5273 = vpop.trf.xlu0
  %v5274 = vpop.trf.xlu0
  %v5275 = vpop.trf.xlu0
  %v5276 = vpop.trf.xlu0
  %v5277 = vpop.trf.xlu0
  %v5278 = vpop.trf.xlu0
  %v5279 = vpop.trf.xlu0
  %v5280 = vpop.trf.xlu0
  %v5281 = vpop.trf.xlu0
  %v5282 = vpop.trf.xlu0
  %v5283 = vpop.trf.xlu0
  %v5284 = vpop.trf.xlu0
  %v5285 = vpop.trf.xlu0
  %v5286 = vpop.trf.xlu0
  %v5287 = vpop.trf.xlu0
  %v5288 = vpack.c.bf16 %v5272, %v5272
  %v5290 = vsel %vm276, %v5255, 0
  %v5293 = vsel %vm280, %v5288, 0
  %5295 = vmatpush.bf16.msra.mxu0 0
  %5296 = vmatpush.bf16.msra.mxu0 0
  %5297 = vmatpush.bf16.msra.mxu0 0
  %5298 = vmatpush.bf16.msra.mxu0 0
  %5299 = vmatpush.bf16.msra.mxu0 0
  %5300 = vmatpush.bf16.msra.mxu0 0
  %5301 = vmatpush.bf16.msra.mxu0 0
  %5302 = vmatpush.bf16.msra.mxu0 %v5293
  %5303 = vmatmul.bf16.gmra.mxu0 %v5290
  %v5304 = vpop.f32.mrf.mxu0
  %v5305 = vadd.f32 0.0, %v5304
  %v5306 = vpop.f32.mrf.mxu0
  %5307 = vdwg.mxu0
  %v5308 = vsel %vm276, %v5305, -inf
  %5309 = vmax.xlane.f32.xlu0 %v5308
  %v5310 = vpop.xlane.xlu0 %5309
  %v5311 = vsub.f32 %v5305, %v5310
  %v5312 = vmul.f32 %v5311, 1.442695
  %v5313 = vpow.pop %v5312
  %v5314 = vsel %vm276, %v5313, 0.0
  %5315 = vadd.xlane.f32.xlu0 %v5314
  %v5316 = vpop.xlane.xlu0 %5315
  %v5317 = vrcp.pop %v5316
  %v5318 = vmul.f32 %v5313, %v5317
  %v5319 = vpack.c.bf16 %v5318, %v5318
  %v5320 = vpack.c.bf16 %v5250, %v5250
  %5322 = vrot.lane.b32.xlu0 %v5320, 96
  %v5323 = vpop.permute.xlu0 %5322
  %v5325 = vsel %vm276, %v5319, 0
  %v5328 = vsel %vm280, %v5323, 0
  %5330 = vmatpush.bf16.msra.mxu0 0
  %5331 = vmatpush.bf16.msra.mxu0 0
  %5332 = vmatpush.bf16.msra.mxu0 0
  %5333 = vmatpush.bf16.msra.mxu0 0
  %5334 = vmatpush.bf16.msra.mxu0 0
  %5335 = vmatpush.bf16.msra.mxu0 0
  %5336 = vmatpush.bf16.msra.mxu0 0
  %5337 = vmatpush.bf16.msra.mxu0 %v5328
  %5338 = vmatmul.bf16.gmra.mxu0 %v5325
  %v5339 = vpop.f32.mrf.mxu0
  %v5340 = vadd.f32 0.0, %v5339
  %v5341 = vpop.f32.mrf.mxu0
  %5342 = vdwg.mxu0
  %5344 = vrot.lane.b32.xlu0 %v5250, 120
  %v5345 = vpop.permute.xlu0 %5344
  %5347 = vxpose.xlu0.b32.start [1/16] %v5345, 128
  %5348 = vxpose.xlu0.b32.cont [2/16] 0.0, 128
  %5349 = vxpose.xlu0.b32.cont [3/16] 0.0, 128
  %5350 = vxpose.xlu0.b32.cont [4/16] 0.0, 128
  %5351 = vxpose.xlu0.b32.cont [5/16] 0.0, 128
  %5352 = vxpose.xlu0.b32.cont [6/16] 0.0, 128
  %5353 = vxpose.xlu0.b32.cont [7/16] 0.0, 128
  %5354 = vxpose.xlu0.b32.cont [8/16] 0.0, 128
  %5355 = vxpose.xlu0.b32.cont [9/16] 0.0, 128
  %5356 = vxpose.xlu0.b32.cont [10/16] 0.0, 128
  %5357 = vxpose.xlu0.b32.cont [11/16] 0.0, 128
  %5358 = vxpose.xlu0.b32.cont [12/16] 0.0, 128
  %5359 = vxpose.xlu0.b32.cont [13/16] 0.0, 128
  %5360 = vxpose.xlu0.b32.cont [14/16] 0.0, 128
  %5361 = vxpose.xlu0.b32.cont [15/16] 0.0, 128
  %5362 = vxpose.xlu0.b32.end [16/16] 0.0, 128
  %v5363 = vpop.trf.xlu0
  %v5364 = vpop.trf.xlu0
  %v5365 = vpop.trf.xlu0
  %v5366 = vpop.trf.xlu0
  %v5367 = vpop.trf.xlu0
  %v5368 = vpop.trf.xlu0
  %v5369 = vpop.trf.xlu0
  %v5370 = vpop.trf.xlu0
  %v5371 = vpop.trf.xlu0
  %v5372 = vpop.trf.xlu0
  %v5373 = vpop.trf.xlu0
  %v5374 = vpop.trf.xlu0
  %v5375 = vpop.trf.xlu0
  %v5376 = vpop.trf.xlu0
  %v5377 = vpop.trf.xlu0
  %v5378 = vpop.trf.xlu0
  %v5379 = vpack.c.bf16 %v5363, %v5363
  %5381 = vrot.lane.b32.xlu0 %v5255, 120
  %v5382 = vpop.permute.xlu0 %5381
  %v5384 = vsel %vm276, %v5382, 0
  %v5387 = vsel %vm280, %v5379, 0
  %5389 = vmatpush.bf16.msra.mxu0 0
  %5390 = vmatpush.bf16.msra.mxu0 0
  %5391 = vmatpush.bf16.msra.mxu0 0
  %5392 = vmatpush.bf16.msra.mxu0 0
  %5393 = vmatpush.bf16.msra.mxu0 0
  %5394 = vmatpush.bf16.msra.mxu0 0
  %5395 = vmatpush.bf16.msra.mxu0 0
  %5396 = vmatpush.bf16.msra.mxu0 %v5387
  %5397 = vmatmul.bf16.gmra.mxu0 %v5384
  %v5398 = vpop.f32.mrf.mxu0
  %v5399 = vadd.f32 0.0, %v5398
  %v5400 = vpop.f32.mrf.mxu0
  %5401 = vdwg.mxu0
  %v5402 = vsel %vm276, %v5399, -inf
  %5403 = vmax.xlane.f32.xlu0 %v5402
  %v5404 = vpop.xlane.xlu0 %5403
  %v5405 = vsub.f32 %v5399, %v5404
  %v5406 = vmul.f32 %v5405, 1.442695
  %v5407 = vpow.pop %v5406
  %v5408 = vsel %vm276, %v5407, 0.0
  %5409 = vadd.xlane.f32.xlu0 %v5408
  %v5410 = vpop.xlane.xlu0 %5409
  %v5411 = vrcp.pop %v5410
  %v5412 = vmul.f32 %v5407, %v5411
  %v5413 = vpack.c.bf16 %v5412, %v5412
  %5414 = vrot.lane.b32.xlu0 %v5320, 88
  %v5415 = vpop.permute.xlu0 %5414
  %v5417 = vsel %vm276, %v5413, 0
  %v5420 = vsel %vm280, %v5415, 0
  %5422 = vmatpush.bf16.msra.mxu0 0
  %5423 = vmatpush.bf16.msra.mxu0 0
  %5424 = vmatpush.bf16.msra.mxu0 0
  %5425 = vmatpush.bf16.msra.mxu0 0
  %5426 = vmatpush.bf16.msra.mxu0 0
  %5427 = vmatpush.bf16.msra.mxu0 0
  %5428 = vmatpush.bf16.msra.mxu0 0
  %5429 = vmatpush.bf16.msra.mxu0 %v5420
  %5430 = vmatmul.bf16.gmra.mxu0 %v5417
  %v5431 = vpop.f32.mrf.mxu0
  %v5432 = vadd.f32 0.0, %v5431
  %v5433 = vpop.f32.mrf.mxu0
  %5434 = vdwg.mxu0
  %5435 = vrot.lane.b32.xlu0 %v5250, 112
  %v5436 = vpop.permute.xlu0 %5435
  %5438 = vxpose.xlu0.b32.start [1/16] %v5436, 128
  %5439 = vxpose.xlu0.b32.cont [2/16] 0.0, 128
  %5440 = vxpose.xlu0.b32.cont [3/16] 0.0, 128
  %5441 = vxpose.xlu0.b32.cont [4/16] 0.0, 128
  %5442 = vxpose.xlu0.b32.cont [5/16] 0.0, 128
  %5443 = vxpose.xlu0.b32.cont [6/16] 0.0, 128
  %5444 = vxpose.xlu0.b32.cont [7/16] 0.0, 128
  %5445 = vxpose.xlu0.b32.cont [8/16] 0.0, 128
  %5446 = vxpose.xlu0.b32.cont [9/16] 0.0, 128
  %5447 = vxpose.xlu0.b32.cont [10/16] 0.0, 128
  %5448 = vxpose.xlu0.b32.cont [11/16] 0.0, 128
  %5449 = vxpose.xlu0.b32.cont [12/16] 0.0, 128
  %5450 = vxpose.xlu0.b32.cont [13/16] 0.0, 128
  %5451 = vxpose.xlu0.b32.cont [14/16] 0.0, 128
  %5452 = vxpose.xlu0.b32.cont [15/16] 0.0, 128
  %5453 = vxpose.xlu0.b32.end [16/16] 0.0, 128
  %v5454 = vpop.trf.xlu0
  %v5455 = vpop.trf.xlu0
  %v5456 = vpop.trf.xlu0
  %v5457 = vpop.trf.xlu0
  %v5458 = vpop.trf.xlu0
  %v5459 = vpop.trf.xlu0
  %v5460 = vpop.trf.xlu0
  %v5461 = vpop.trf.xlu0
  %v5462 = vpop.trf.xlu0
  %v5463 = vpop.trf.xlu0
  %v5464 = vpop.trf.xlu0
  %v5465 = vpop.trf.xlu0
  %v5466 = vpop.trf.xlu0
  %v5467 = vpop.trf.xlu0
  %v5468 = vpop.trf.xlu0
  %v5469 = vpop.trf.xlu0
  %v5470 = vpack.c.bf16 %v5454, %v5454
  %5471 = vrot.lane.b32.xlu0 %v5255, 112
  %v5472 = vpop.permute.xlu0 %5471
  %v5474 = vsel %vm276, %v5472, 0
  %v5477 = vsel %vm280, %v5470, 0
  %5479 = vmatpush.bf16.msra.mxu0 0
  %5480 = vmatpush.bf16.msra.mxu0 0
  %5481 = vmatpush.bf16.msra.mxu0 0
  %5482 = vmatpush.bf16.msra.mxu0 0
  %5483 = vmatpush.bf16.msra.mxu0 0
  %5484 = vmatpush.bf16.msra.mxu0 0
  %5485 = vmatpush.bf16.msra.mxu0 0
  %5486 = vmatpush.bf16.msra.mxu0 %v5477
  %5487 = vmatmul.bf16.gmra.mxu0 %v5474
  %v5488 = vpop.f32.mrf.mxu0
  %v5489 = vadd.f32 0.0, %v5488
  %v5490 = vpop.f32.mrf.mxu0
  %5491 = vdwg.mxu0
  %v5492 = vsel %vm276, %v5489, -inf
  %5493 = vmax.xlane.f32.xlu0 %v5492
  %v5494 = vpop.xlane.xlu0 %5493
  %v5495 = vsub.f32 %v5489, %v5494
  %v5496 = vmul.f32 %v5495, 1.442695
  %v5497 = vpow.pop %v5496
  %v5498 = vsel %vm276, %v5497, 0.0
  %5499 = vadd.xlane.f32.xlu0 %v5498
  %v5500 = vpop.xlane.xlu0 %5499
  %v5501 = vrcp.pop %v5500
  %v5502 = vmul.f32 %v5497, %v5501
  %v5503 = vpack.c.bf16 %v5502, %v5502
  %5504 = vrot.lane.b32.xlu0 %v5320, 80
  %v5505 = vpop.permute.xlu0 %5504
  %v5507 = vsel %vm276, %v5503, 0
  %v5510 = vsel %vm280, %v5505, 0
  %5512 = vmatpush.bf16.msra.mxu0 0
  %5513 = vmatpush.bf16.msra.mxu0 0
  %5514 = vmatpush.bf16.msra.mxu0 0
  %5515 = vmatpush.bf16.msra.mxu0 0
  %5516 = vmatpush.bf16.msra.mxu0 0
  %5517 = vmatpush.bf16.msra.mxu0 0
  %5518 = vmatpush.bf16.msra.mxu0 0
  %5519 = vmatpush.bf16.msra.mxu0 %v5510
  %5520 = vmatmul.bf16.gmra.mxu0 %v5507
  %v5521 = vpop.f32.mrf.mxu0
  %v5522 = vadd.f32 0.0, %v5521
  %v5523 = vpop.f32.mrf.mxu0
  %5524 = vdwg.mxu0
  %5525 = vrot.lane.b32.xlu0 %v5250, 104
  %v5526 = vpop.permute.xlu0 %5525
  %5528 = vxpose.xlu0.b32.start [1/16] %v5526, 128
  %5529 = vxpose.xlu0.b32.cont [2/16] 0.0, 128
  %5530 = vxpose.xlu0.b32.cont [3/16] 0.0, 128
  %5531 = vxpose.xlu0.b32.cont [4/16] 0.0, 128
  %5532 = vxpose.xlu0.b32.cont [5/16] 0.0, 128
  %5533 = vxpose.xlu0.b32.cont [6/16] 0.0, 128
  %5534 = vxpose.xlu0.b32.cont [7/16] 0.0, 128
  %5535 = vxpose.xlu0.b32.cont [8/16] 0.0, 128
  %5536 = vxpose.xlu0.b32.cont [9/16] 0.0, 128
  %5537 = vxpose.xlu0.b32.cont [10/16] 0.0, 128
  %5538 = vxpose.xlu0.b32.cont [11/16] 0.0, 128
  %5539 = vxpose.xlu0.b32.cont [12/16] 0.0, 128
  %5540 = vxpose.xlu0.b32.cont [13/16] 0.0, 128
  %5541 = vxpose.xlu0.b32.cont [14/16] 0.0, 128
  %5542 = vxpose.xlu0.b32.cont [15/16] 0.0, 128
  %5543 = vxpose.xlu0.b32.end [16/16] 0.0, 128
  %v5544 = vpop.trf.xlu0
  %v5545 = vpop.trf.xlu0
  %v5546 = vpop.trf.xlu0
  %v5547 = vpop.trf.xlu0
  %v5548 = vpop.trf.xlu0
  %v5549 = vpop.trf.xlu0
  %v5550 = vpop.trf.xlu0
  %v5551 = vpop.trf.xlu0
  %v5552 = vpop.trf.xlu0
  %v5553 = vpop.trf.xlu0
  %v5554 = vpop.trf.xlu0
  %v5555 = vpop.trf.xlu0
  %v5556 = vpop.trf.xlu0
  %v5557 = vpop.trf.xlu0
  %v5558 = vpop.trf.xlu0
  %v5559 = vpop.trf.xlu0
  %v5560 = vpack.c.bf16 %v5544, %v5544
  %5561 = vrot.lane.b32.xlu0 %v5255, 104
  %v5562 = vpop.permute.xlu0 %5561
  %v5564 = vsel %vm276, %v5562, 0
  %v5567 = vsel %vm280, %v5560, 0
  %5569 = vmatpush.bf16.msra.mxu0 0
  %5570 = vmatpush.bf16.msra.mxu0 0
  %5571 = vmatpush.bf16.msra.mxu0 0
  %5572 = vmatpush.bf16.msra.mxu0 0
  %5573 = vmatpush.bf16.msra.mxu0 0
  %5574 = vmatpush.bf16.msra.mxu0 0
  %5575 = vmatpush.bf16.msra.mxu0 0
  %5576 = vmatpush.bf16.msra.mxu0 %v5567
  %5577 = vmatmul.bf16.gmra.mxu0 %v5564
  %v5578 = vpop.f32.mrf.mxu0
  %v5579 = vadd.f32 0.0, %v5578
  %v5580 = vpop.f32.mrf.mxu0
  %5581 = vdwg.mxu0
  %v5582 = vsel %vm276, %v5579, -inf
  %5583 = vmax.xlane.f32.xlu0 %v5582
  %v5584 = vpop.xlane.xlu0 %5583
  %v5585 = vsub.f32 %v5579, %v5584
  %v5586 = vmul.f32 %v5585, 1.442695
  %v5587 = vpow.pop %v5586
  %v5588 = vsel %vm276, %v5587, 0.0
  %5589 = vadd.xlane.f32.xlu0 %v5588
  %v5590 = vpop.xlane.xlu0 %5589
  %v5591 = vrcp.pop %v5590
  %v5592 = vmul.f32 %v5587, %v5591
  %v5593 = vpack.c.bf16 %v5592, %v5592
  %5594 = vrot.lane.b32.xlu0 %v5320, 72
  %v5595 = vpop.permute.xlu0 %5594
  %v5597 = vsel %vm276, %v5593, 0
  %v5600 = vsel %vm280, %v5595, 0
  %5602 = vmatpush.bf16.msra.mxu0 0
  %5603 = vmatpush.bf16.msra.mxu0 0
  %5604 = vmatpush.bf16.msra.mxu0 0
  %5605 = vmatpush.bf16.msra.mxu0 0
  %5606 = vmatpush.bf16.msra.mxu0 0
  %5607 = vmatpush.bf16.msra.mxu0 0
  %5608 = vmatpush.bf16.msra.mxu0 0
  %5609 = vmatpush.bf16.msra.mxu0 %v5600
  %5610 = vmatmul.bf16.gmra.mxu0 %v5597
  %v5611 = vpop.f32.mrf.mxu0
  %v5612 = vadd.f32 0.0, %v5611
  %v5613 = vpop.f32.mrf.mxu0
  %5614 = vdwg.mxu0
  %5616 = vrot.lane.b32.xlu0 %v5432, 8
  %v5617 = vpop.permute.xlu0 %5616
  %5620 = vrot.lane.b32.xlu0 %v5522, 16
  %v5621 = vpop.permute.xlu0 %5620
  %5624 = vrot.lane.b32.xlu0 %v5612, 24
  %v5625 = vpop.permute.xlu0 %5624
  %v5627 = vsel %vm276, %v5340, %v5617
  %v5628 = vsel %vm616, %v5627, %v5621
  %v5629 = vsel %vm618, %v5628, %v5625
  %v5630 = vmul.f32 %v5223, 0.35355338
  %v5631 = vpack.c.bf16 %v5630, %v5630
  %5632 = vxpose.xlu0.b32.start [1/16] %v5252, 128
  %5633 = vxpose.xlu0.b32.cont [2/16] 0.0, 128
  %5634 = vxpose.xlu0.b32.cont [3/16] 0.0, 128
  %5635 = vxpose.xlu0.b32.cont [4/16] 0.0, 128
  %5636 = vxpose.xlu0.b32.cont [5/16] 0.0, 128
  %5637 = vxpose.xlu0.b32.cont [6/16] 0.0, 128
  %5638 = vxpose.xlu0.b32.cont [7/16] 0.0, 128
  %5639 = vxpose.xlu0.b32.cont [8/16] 0.0, 128
  %5640 = vxpose.xlu0.b32.cont [9/16] 0.0, 128
  %5641 = vxpose.xlu0.b32.cont [10/16] 0.0, 128
  %5642 = vxpose.xlu0.b32.cont [11/16] 0.0, 128
  %5643 = vxpose.xlu0.b32.cont [12/16] 0.0, 128
  %5644 = vxpose.xlu0.b32.cont [13/16] 0.0, 128
  %5645 = vxpose.xlu0.b32.cont [14/16] 0.0, 128
  %5646 = vxpose.xlu0.b32.cont [15/16] 0.0, 128
  %5647 = vxpose.xlu0.b32.end [16/16] 0.0, 128
  %v5648 = vpop.trf.xlu0
  %v5649 = vpop.trf.xlu0
  %v5650 = vpop.trf.xlu0
  %v5651 = vpop.trf.xlu0
  %v5652 = vpop.trf.xlu0
  %v5653 = vpop.trf.xlu0
  %v5654 = vpop.trf.xlu0
  %v5655 = vpop.trf.xlu0
  %v5656 = vpop.trf.xlu0
  %v5657 = vpop.trf.xlu0
  %v5658 = vpop.trf.xlu0
  %v5659 = vpop.trf.xlu0
  %v5660 = vpop.trf.xlu0
  %v5661 = vpop.trf.xlu0
  %v5662 = vpop.trf.xlu0
  %v5663 = vpop.trf.xlu0
  %v5664 = vpack.c.bf16 %v5648, %v5648
  %v5666 = vsel %vm276, %v5631, 0
  %v5669 = vsel %vm280, %v5664, 0
  %5671 = vmatpush.bf16.msra.mxu0 0
  %5672 = vmatpush.bf16.msra.mxu0 0
  %5673 = vmatpush.bf16.msra.mxu0 0
  %5674 = vmatpush.bf16.msra.mxu0 0
  %5675 = vmatpush.bf16.msra.mxu0 0
  %5676 = vmatpush.bf16.msra.mxu0 0
  %5677 = vmatpush.bf16.msra.mxu0 0
  %5678 = vmatpush.bf16.msra.mxu0 %v5669
  %5679 = vmatmul.bf16.gmra.mxu0 %v5666
  %v5680 = vpop.f32.mrf.mxu0
  %v5681 = vadd.f32 0.0, %v5680
  %v5682 = vpop.f32.mrf.mxu0
  %5683 = vdwg.mxu0
  %v5684 = vsel %vm276, %v5681, -inf
  %5685 = vmax.xlane.f32.xlu0 %v5684
  %v5686 = vpop.xlane.xlu0 %5685
  %v5687 = vsub.f32 %v5681, %v5686
  %v5688 = vmul.f32 %v5687, 1.442695
  %v5689 = vpow.pop %v5688
  %v5690 = vsel %vm276, %v5689, 0.0
  %5691 = vadd.xlane.f32.xlu0 %v5690
  %v5692 = vpop.xlane.xlu0 %5691
  %v5693 = vrcp.pop %v5692
  %v5694 = vmul.f32 %v5689, %v5693
  %v5695 = vpack.c.bf16 %v5694, %v5694
  %v5696 = vpack.c.bf16 %v5252, %v5252
  %5698 = vrot.lane.b32.xlu0 %v5696, 96
  %v5699 = vpop.permute.xlu0 %5698
  %v5701 = vsel %vm276, %v5695, 0
  %v5704 = vsel %vm280, %v5699, 0
  %5706 = vmatpush.bf16.msra.mxu0 0
  %5707 = vmatpush.bf16.msra.mxu0 0
  %5708 = vmatpush.bf16.msra.mxu0 0
  %5709 = vmatpush.bf16.msra.mxu0 0
  %5710 = vmatpush.bf16.msra.mxu0 0
  %5711 = vmatpush.bf16.msra.mxu0 0
  %5712 = vmatpush.bf16.msra.mxu0 0
  %5713 = vmatpush.bf16.msra.mxu0 %v5704
  %5714 = vmatmul.bf16.gmra.mxu0 %v5701
  %v5715 = vpop.f32.mrf.mxu0
  %v5716 = vadd.f32 0.0, %v5715
  %v5717 = vpop.f32.mrf.mxu0
  %5718 = vdwg.mxu0
  %5720 = vrot.lane.b32.xlu0 %v5252, 120
  %v5721 = vpop.permute.xlu0 %5720
  %5723 = vxpose.xlu0.b32.start [1/16] %v5721, 128
  %5724 = vxpose.xlu0.b32.cont [2/16] 0.0, 128
  %5725 = vxpose.xlu0.b32.cont [3/16] 0.0, 128
  %5726 = vxpose.xlu0.b32.cont [4/16] 0.0, 128
  %5727 = vxpose.xlu0.b32.cont [5/16] 0.0, 128
  %5728 = vxpose.xlu0.b32.cont [6/16] 0.0, 128
  %5729 = vxpose.xlu0.b32.cont [7/16] 0.0, 128
  %5730 = vxpose.xlu0.b32.cont [8/16] 0.0, 128
  %5731 = vxpose.xlu0.b32.cont [9/16] 0.0, 128
  %5732 = vxpose.xlu0.b32.cont [10/16] 0.0, 128
  %5733 = vxpose.xlu0.b32.cont [11/16] 0.0, 128
  %5734 = vxpose.xlu0.b32.cont [12/16] 0.0, 128
  %5735 = vxpose.xlu0.b32.cont [13/16] 0.0, 128
  %5736 = vxpose.xlu0.b32.cont [14/16] 0.0, 128
  %5737 = vxpose.xlu0.b32.cont [15/16] 0.0, 128
  %5738 = vxpose.xlu0.b32.end [16/16] 0.0, 128
  %v5739 = vpop.trf.xlu0
  %v5740 = vpop.trf.xlu0
  %v5741 = vpop.trf.xlu0
  %v5742 = vpop.trf.xlu0
  %v5743 = vpop.trf.xlu0
  %v5744 = vpop.trf.xlu0
  %v5745 = vpop.trf.xlu0
  %v5746 = vpop.trf.xlu0
  %v5747 = vpop.trf.xlu0
  %v5748 = vpop.trf.xlu0
  %v5749 = vpop.trf.xlu0
  %v5750 = vpop.trf.xlu0
  %v5751 = vpop.trf.xlu0
  %v5752 = vpop.trf.xlu0
  %v5753 = vpop.trf.xlu0
  %v5754 = vpop.trf.xlu0
  %v5755 = vpack.c.bf16 %v5739, %v5739
  %5757 = vrot.lane.b32.xlu0 %v5631, 120
  %v5758 = vpop.permute.xlu0 %5757
  %v5760 = vsel %vm276, %v5758, 0
  %v5763 = vsel %vm280, %v5755, 0
  %5765 = vmatpush.bf16.msra.mxu0 0
  %5766 = vmatpush.bf16.msra.mxu0 0
  %5767 = vmatpush.bf16.msra.mxu0 0
  %5768 = vmatpush.bf16.msra.mxu0 0
  %5769 = vmatpush.bf16.msra.mxu0 0
  %5770 = vmatpush.bf16.msra.mxu0 0
  %5771 = vmatpush.bf16.msra.mxu0 0
  %5772 = vmatpush.bf16.msra.mxu0 %v5763
  %5773 = vmatmul.bf16.gmra.mxu0 %v5760
  %v5774 = vpop.f32.mrf.mxu0
  %v5775 = vadd.f32 0.0, %v5774
  %v5776 = vpop.f32.mrf.mxu0
  %5777 = vdwg.mxu0
  %v5778 = vsel %vm276, %v5775, -inf
  %5779 = vmax.xlane.f32.xlu0 %v5778
  %v5780 = vpop.xlane.xlu0 %5779
  %v5781 = vsub.f32 %v5775, %v5780
  %v5782 = vmul.f32 %v5781, 1.442695
  %v5783 = vpow.pop %v5782
  %v5784 = vsel %vm276, %v5783, 0.0
  %5785 = vadd.xlane.f32.xlu0 %v5784
  %v5786 = vpop.xlane.xlu0 %5785
  %v5787 = vrcp.pop %v5786
  %v5788 = vmul.f32 %v5783, %v5787
  %v5789 = vpack.c.bf16 %v5788, %v5788
  %5790 = vrot.lane.b32.xlu0 %v5696, 88
  %v5791 = vpop.permute.xlu0 %5790
  %v5793 = vsel %vm276, %v5789, 0
  %v5796 = vsel %vm280, %v5791, 0
  %5798 = vmatpush.bf16.msra.mxu0 0
  %5799 = vmatpush.bf16.msra.mxu0 0
  %5800 = vmatpush.bf16.msra.mxu0 0
  %5801 = vmatpush.bf16.msra.mxu0 0
  %5802 = vmatpush.bf16.msra.mxu0 0
  %5803 = vmatpush.bf16.msra.mxu0 0
  %5804 = vmatpush.bf16.msra.mxu0 0
  %5805 = vmatpush.bf16.msra.mxu0 %v5796
  %5806 = vmatmul.bf16.gmra.mxu0 %v5793
  %v5807 = vpop.f32.mrf.mxu0
  %v5808 = vadd.f32 0.0, %v5807
  %v5809 = vpop.f32.mrf.mxu0
  %5810 = vdwg.mxu0
  %5811 = vrot.lane.b32.xlu0 %v5252, 112
  %v5812 = vpop.permute.xlu0 %5811
  %5814 = vxpose.xlu0.b32.start [1/16] %v5812, 128
  %5815 = vxpose.xlu0.b32.cont [2/16] 0.0, 128
  %5816 = vxpose.xlu0.b32.cont [3/16] 0.0, 128
  %5817 = vxpose.xlu0.b32.cont [4/16] 0.0, 128
  %5818 = vxpose.xlu0.b32.cont [5/16] 0.0, 128
  %5819 = vxpose.xlu0.b32.cont [6/16] 0.0, 128
  %5820 = vxpose.xlu0.b32.cont [7/16] 0.0, 128
  %5821 = vxpose.xlu0.b32.cont [8/16] 0.0, 128
  %5822 = vxpose.xlu0.b32.cont [9/16] 0.0, 128
  %5823 = vxpose.xlu0.b32.cont [10/16] 0.0, 128
  %5824 = vxpose.xlu0.b32.cont [11/16] 0.0, 128
  %5825 = vxpose.xlu0.b32.cont [12/16] 0.0, 128
  %5826 = vxpose.xlu0.b32.cont [13/16] 0.0, 128
  %5827 = vxpose.xlu0.b32.cont [14/16] 0.0, 128
  %5828 = vxpose.xlu0.b32.cont [15/16] 0.0, 128
  %5829 = vxpose.xlu0.b32.end [16/16] 0.0, 128
  %v5830 = vpop.trf.xlu0
  %v5831 = vpop.trf.xlu0
  %v5832 = vpop.trf.xlu0
  %v5833 = vpop.trf.xlu0
  %v5834 = vpop.trf.xlu0
  %v5835 = vpop.trf.xlu0
  %v5836 = vpop.trf.xlu0
  %v5837 = vpop.trf.xlu0
  %v5838 = vpop.trf.xlu0
  %v5839 = vpop.trf.xlu0
  %v5840 = vpop.trf.xlu0
  %v5841 = vpop.trf.xlu0
  %v5842 = vpop.trf.xlu0
  %v5843 = vpop.trf.xlu0
  %v5844 = vpop.trf.xlu0
  %v5845 = vpop.trf.xlu0
  %v5846 = vpack.c.bf16 %v5830, %v5830
  %5847 = vrot.lane.b32.xlu0 %v5631, 112
  %v5848 = vpop.permute.xlu0 %5847
  %v5850 = vsel %vm276, %v5848, 0
  %v5853 = vsel %vm280, %v5846, 0
  %5855 = vmatpush.bf16.msra.mxu0 0
  %5856 = vmatpush.bf16.msra.mxu0 0
  %5857 = vmatpush.bf16.msra.mxu0 0
  %5858 = vmatpush.bf16.msra.mxu0 0
  %5859 = vmatpush.bf16.msra.mxu0 0
  %5860 = vmatpush.bf16.msra.mxu0 0
  %5861 = vmatpush.bf16.msra.mxu0 0
  %5862 = vmatpush.bf16.msra.mxu0 %v5853
  %5863 = vmatmul.bf16.gmra.mxu0 %v5850
  %v5864 = vpop.f32.mrf.mxu0
  %v5865 = vadd.f32 0.0, %v5864
  %v5866 = vpop.f32.mrf.mxu0
  %5867 = vdwg.mxu0
  %v5868 = vsel %vm276, %v5865, -inf
  %5869 = vmax.xlane.f32.xlu0 %v5868
  %v5870 = vpop.xlane.xlu0 %5869
  %v5871 = vsub.f32 %v5865, %v5870
  %v5872 = vmul.f32 %v5871, 1.442695
  %v5873 = vpow.pop %v5872
  %v5874 = vsel %vm276, %v5873, 0.0
  %5875 = vadd.xlane.f32.xlu0 %v5874
  %v5876 = vpop.xlane.xlu0 %5875
  %v5877 = vrcp.pop %v5876
  %v5878 = vmul.f32 %v5873, %v5877
  %v5879 = vpack.c.bf16 %v5878, %v5878
  %5880 = vrot.lane.b32.xlu0 %v5696, 80
  %v5881 = vpop.permute.xlu0 %5880
  %v5883 = vsel %vm276, %v5879, 0
  %v5886 = vsel %vm280, %v5881, 0
  %5888 = vmatpush.bf16.msra.mxu0 0
  %5889 = vmatpush.bf16.msra.mxu0 0
  %5890 = vmatpush.bf16.msra.mxu0 0
  %5891 = vmatpush.bf16.msra.mxu0 0
  %5892 = vmatpush.bf16.msra.mxu0 0
  %5893 = vmatpush.bf16.msra.mxu0 0
  %5894 = vmatpush.bf16.msra.mxu0 0
  %5895 = vmatpush.bf16.msra.mxu0 %v5886
  %5896 = vmatmul.bf16.gmra.mxu0 %v5883
  %v5897 = vpop.f32.mrf.mxu0
  %v5898 = vadd.f32 0.0, %v5897
  %v5899 = vpop.f32.mrf.mxu0
  %5900 = vdwg.mxu0
  %5901 = vrot.lane.b32.xlu0 %v5252, 104
  %v5902 = vpop.permute.xlu0 %5901
  %5904 = vxpose.xlu0.b32.start [1/16] %v5902, 128
  %5905 = vxpose.xlu0.b32.cont [2/16] 0.0, 128
  %5906 = vxpose.xlu0.b32.cont [3/16] 0.0, 128
  %5907 = vxpose.xlu0.b32.cont [4/16] 0.0, 128
  %5908 = vxpose.xlu0.b32.cont [5/16] 0.0, 128
  %5909 = vxpose.xlu0.b32.cont [6/16] 0.0, 128
  %5910 = vxpose.xlu0.b32.cont [7/16] 0.0, 128
  %5911 = vxpose.xlu0.b32.cont [8/16] 0.0, 128
  %5912 = vxpose.xlu0.b32.cont [9/16] 0.0, 128
  %5913 = vxpose.xlu0.b32.cont [10/16] 0.0, 128
  %5914 = vxpose.xlu0.b32.cont [11/16] 0.0, 128
  %5915 = vxpose.xlu0.b32.cont [12/16] 0.0, 128
  %5916 = vxpose.xlu0.b32.cont [13/16] 0.0, 128
  %5917 = vxpose.xlu0.b32.cont [14/16] 0.0, 128
  %5918 = vxpose.xlu0.b32.cont [15/16] 0.0, 128
  %5919 = vxpose.xlu0.b32.end [16/16] 0.0, 128
  %v5920 = vpop.trf.xlu0
  %v5921 = vpop.trf.xlu0
  %v5922 = vpop.trf.xlu0
  %v5923 = vpop.trf.xlu0
  %v5924 = vpop.trf.xlu0
  %v5925 = vpop.trf.xlu0
  %v5926 = vpop.trf.xlu0
  %v5927 = vpop.trf.xlu0
  %v5928 = vpop.trf.xlu0
  %v5929 = vpop.trf.xlu0
  %v5930 = vpop.trf.xlu0
  %v5931 = vpop.trf.xlu0
  %v5932 = vpop.trf.xlu0
  %v5933 = vpop.trf.xlu0
  %v5934 = vpop.trf.xlu0
  %v5935 = vpop.trf.xlu0
  %v5936 = vpack.c.bf16 %v5920, %v5920
  %5937 = vrot.lane.b32.xlu0 %v5631, 104
  %v5938 = vpop.permute.xlu0 %5937
  %v5940 = vsel %vm276, %v5938, 0
  %v5943 = vsel %vm280, %v5936, 0
  %5945 = vmatpush.bf16.msra.mxu0 0
  %5946 = vmatpush.bf16.msra.mxu0 0
  %5947 = vmatpush.bf16.msra.mxu0 0
  %5948 = vmatpush.bf16.msra.mxu0 0
  %5949 = vmatpush.bf16.msra.mxu0 0
  %5950 = vmatpush.bf16.msra.mxu0 0
  %5951 = vmatpush.bf16.msra.mxu0 0
  %5952 = vmatpush.bf16.msra.mxu0 %v5943
  %5953 = vmatmul.bf16.gmra.mxu0 %v5940
  %v5954 = vpop.f32.mrf.mxu0
  %v5955 = vadd.f32 0.0, %v5954
  %v5956 = vpop.f32.mrf.mxu0
  %5957 = vdwg.mxu0
  %v5958 = vsel %vm276, %v5955, -inf
  %5959 = vmax.xlane.f32.xlu0 %v5958
  %v5960 = vpop.xlane.xlu0 %5959
  %v5961 = vsub.f32 %v5955, %v5960
  %v5962 = vmul.f32 %v5961, 1.442695
  %v5963 = vpow.pop %v5962
  %v5964 = vsel %vm276, %v5963, 0.0
  %5965 = vadd.xlane.f32.xlu0 %v5964
  %v5966 = vpop.xlane.xlu0 %5965
  %v5967 = vrcp.pop %v5966
  %v5968 = vmul.f32 %v5963, %v5967
  %v5969 = vpack.c.bf16 %v5968, %v5968
  %5970 = vrot.lane.b32.xlu0 %v5696, 72
  %v5971 = vpop.permute.xlu0 %5970
  %v5973 = vsel %vm276, %v5969, 0
  %v5976 = vsel %vm280, %v5971, 0
  %5978 = vmatpush.bf16.msra.mxu0 0
  %5979 = vmatpush.bf16.msra.mxu0 0
  %5980 = vmatpush.bf16.msra.mxu0 0
  %5981 = vmatpush.bf16.msra.mxu0 0
  %5982 = vmatpush.bf16.msra.mxu0 0
  %5983 = vmatpush.bf16.msra.mxu0 0
  %5984 = vmatpush.bf16.msra.mxu0 0
  %5985 = vmatpush.bf16.msra.mxu0 %v5976
  %5986 = vmatmul.bf16.gmra.mxu0 %v5973
  %v5987 = vpop.f32.mrf.mxu0
  %v5988 = vadd.f32 0.0, %v5987
  %v5989 = vpop.f32.mrf.mxu0
  %5990 = vdwg.mxu0
  %5992 = vrot.lane.b32.xlu0 %v5808, 8
  %v5993 = vpop.permute.xlu0 %5992
  %5996 = vrot.lane.b32.xlu0 %v5898, 16
  %v5997 = vpop.permute.xlu0 %5996
  %6000 = vrot.lane.b32.xlu0 %v5988, 24
  %v6001 = vpop.permute.xlu0 %6000
  %v6003 = vsel %vm276, %v5716, %v5993
  %v6004 = vsel %vm616, %v6003, %v5997
  %v6005 = vsel %vm618, %v6004, %v6001
  %v6006 = vpack.c.bf16 %v6005, %v5629
  %v6008 = vperm.slane %v5191, 0
  %v6014 = vunpack.c.l.b16 %v5186
  %v6015 = vunpack.c.l.b16 %v5187
  %v6016 = vunpack.c.l.b16 %v5188
  %v6017 = vunpack.c.l.b16 %v5189
  %v6018 = vpack.c.b16 %v6015, %v6014
  %v6019 = vpack.c.b16 %v6017, %v6016
  %v6023 = vsel %vm219, %v6006, 0
  %6025 = vmatpush.bf16.msra.mxu0 0
  %6026 = vmatpush.bf16.msra.mxu0 0
  %6027 = vmatpush.bf16.msra.mxu0 0
  %6028 = vmatpush.bf16.msra.mxu0 0
  %6029 = vmatpush.bf16.msra.mxu0 0
  %6030 = vmatpush.bf16.msra.mxu0 0
  %6031 = vmatpush.bf16.msra.mxu0 %v6019
  %6032 = vmatpush.bf16.msra.mxu0 %v6018
  %6033 = vmatmul.bf16.gmra.mxu0 %v6023
  %v6034 = vpop.f32.mrf.mxu0
  %v6035 = vadd.f32 %v6008, %v6034
  %v6036 = vpop.f32.mrf.mxu0
  %v6037 = vadd.f32 %v6008, %v6036
  %6038 = vdwg.mxu0
  %v6039 = vadd.f32 %v5169, %v6035
  %v6040 = vadd.f32 %v5170, %v6037
  %s6041 = scalar_lea.vmem %s57, 1
  %v6042 = vld [vmem:[%s6041] sm:$0x1]
  %s6043 = scalar_lea.vmem %s59, 1
  %v6044 = vld [vmem:[%s6043] sm:$0x1]
  %v6045 = vsel %vm219, %v6039, 0.0
  %6046 = vadd.xlane.f32.xlu0 %v6045
  %v6047 = vpop.xlane.xlu0 %6046
  %v6048 = vsel %vm219, %v6040, 0.0
  %6049 = vadd.xlane.f32.xlu0 %v6048
  %v6050 = vpop.xlane.xlu0 %6049
  %v6051 = vmul.f32 %v6047, %v1048
  %v6052 = vmul.f32 %v6050, %v1048
  %v6053 = vsub.f32 %v6039, %v6051
  %v6054 = vsub.f32 %v6040, %v6052
  %v6055 = vmul.f32 %v6053, %v6053
  %v6056 = vmul.f32 %v6054, %v6054
  %v6057 = vsel %vm219, %v6055, 0.0
  %6058 = vadd.xlane.f32.xlu0 %v6057
  %v6059 = vpop.xlane.xlu0 %6058
  %v6060 = vsel %vm219, %v6056, 0.0
  %6061 = vadd.xlane.f32.xlu0 %v6060
  %v6062 = vpop.xlane.xlu0 %6061
  %v6063 = vmul.f32 %v6059, %v1048
  %v6064 = vmul.f32 %v6062, %v1048
  %v6065 = vadd.f32 %v6063, 1e-05
  %v6066 = vadd.f32 %v6064, 1e-05
  %v6067 = vrsqrt.pop %v6065
  %v6068 = vmul.f32 %v6067, %v6065
  %v6069 = vmul.f32 %v6068, %v6067
  %v6070 = vmul.f32 0.5, %v6069
  %v6071 = vsub.f32 1.5, %v6070
  %v6072 = vmul.f32 %v6067, %v6071
  %vm6073 = vweird.f32 %v6065
  %vm6074 = vweird.f32 %v6067
  %vm6075 = vmor %vm6073, %vm6074
  %v6076 = vsel %vm6075, %v6067, %v6072
  %v6077 = vrsqrt.pop %v6066
  %v6078 = vmul.f32 %v6077, %v6066
  %v6079 = vmul.f32 %v6078, %v6077
  %v6080 = vmul.f32 0.5, %v6079
  %v6081 = vsub.f32 1.5, %v6080
  %v6082 = vmul.f32 %v6077, %v6081
  %vm6083 = vweird.f32 %v6066
  %vm6084 = vweird.f32 %v6077
  %vm6085 = vmor %vm6083, %vm6084
  %v6086 = vsel %vm6085, %v6077, %v6082
  %v6087 = vmul.f32 %v6053, %v6076
  %v6088 = vmul.f32 %v6054, %v6086
  %v6090 = vperm.slane %v6042, 0
  %v6092 = vmul.f32 %v6087, %v6090
  %v6093 = vmul.f32 %v6088, %v6090
  %v6095 = vperm.slane %v6044, 0
  %v6097 = vadd.f32 %v6092, %v6095
  %v6098 = vadd.f32 %v6093, %v6095
  %s6099 = scalar_lea.vmem %s61, 16
  %v6100 = vld [vmem:[%s6099] sm:$0xf]
  %v6101 = vld [vmem:[%s6099 + $0x4] sm:$0xf]
  %v6102 = vld [vmem:[%s6099 + $0x8] sm:$0xf]
  %v6103 = vld [vmem:[%s6099 + $0xc] sm:$0xf]
  %s6104 = scalar_lea.vmem %s63, 1
  %v6105 = vld [vmem:[%s6104] sm:$0x1]
  %s6106 = scalar_lea.vmem %s65, 32
  %v6107 = vld [vmem:[%s6106] sm:$0xf]
  %v6108 = vld [vmem:[%s6106 + $0x4] sm:$0xf]
  %v6109 = vld [vmem:[%s6106 + $0x8] sm:$0xf]
  %v6110 = vld [vmem:[%s6106 + $0xc] sm:$0xf]
  %v6111 = vld [vmem:[%s6106 + $0x10] sm:$0xf]
  %v6112 = vld [vmem:[%s6106 + $0x14] sm:$0xf]
  %v6113 = vld [vmem:[%s6106 + $0x18] sm:$0xf]
  %v6114 = vld [vmem:[%s6106 + $0x1c] sm:$0xf]
  %s6115 = scalar_lea.vmem %s67, 1
  %v6116 = vld [vmem:[%s6115] sm:$0x1]
  %v6117 = vpack.c.bf16 %v6098, %v6097
  %v6119 = vperm.slane %v6105, 0
  %v6125 = vunpack.c.l.b16 %v6100
  %v6126 = vunpack.c.l.b16 %v6101
  %v6127 = vunpack.c.l.b16 %v6102
  %v6128 = vunpack.c.l.b16 %v6103
  %v6129 = vpack.c.b16 %v6126, %v6125
  %v6130 = vpack.c.b16 %v6128, %v6127
  %v6134 = vsel %vm219, %v6117, 0
  %6136 = vmatpush.bf16.msra.mxu0 0
  %6137 = vmatpush.bf16.msra.mxu0 0
  %6138 = vmatpush.bf16.msra.mxu0 0
  %6139 = vmatpush.bf16.msra.mxu0 0
  %6140 = vmatpush.bf16.msra.mxu0 0
  %6141 = vmatpush.bf16.msra.mxu0 0
  %6142 = vmatpush.bf16.msra.mxu0 %v6130
  %6143 = vmatpush.bf16.msra.mxu0 %v6129
  %6144 = vmatmul.bf16.gmra.mxu0 %v6134
  %v6145 = vpop.f32.mrf.mxu0
  %v6146 = vadd.f32 %v6119, %v6145
  %v6147 = vpop.f32.mrf.mxu0
  %v6148 = vadd.f32 %v6119, %v6147
  %6149 = vdwg.mxu0
  %v6150 = vmax.f32 %v6146, 0.0
  %v6151 = vmax.f32 %v6148, 0.0
  %v6152 = vpack.c.bf16 %v6151, %v6150
  %v6154 = vperm.slane %v6116, 0
  %v6164 = vunpack.c.l.b16 %v6107
  %v6165 = vunpack.c.l.b16 %v6108
  %v6166 = vunpack.c.l.b16 %v6109
  %v6167 = vunpack.c.l.b16 %v6110
  %v6168 = vunpack.c.l.b16 %v6111
  %v6169 = vunpack.c.l.b16 %v6112
  %v6170 = vunpack.c.l.b16 %v6113
  %v6171 = vunpack.c.l.b16 %v6114
  %v6172 = vpack.c.b16 %v6165, %v6164
  %v6173 = vpack.c.b16 %v6167, %v6166
  %v6174 = vpack.c.b16 %v6169, %v6168
  %v6175 = vpack.c.b16 %v6171, %v6170
  %v6181 = vsel %vm1174, %v6152, 0
  %6183 = vmatpush.bf16.msra.mxu0 0
  %6184 = vmatpush.bf16.msra.mxu0 0
  %6185 = vmatpush.bf16.msra.mxu0 0
  %6186 = vmatpush.bf16.msra.mxu0 0
  %6187 = vmatpush.bf16.msra.mxu0 %v6175
  %6188 = vmatpush.bf16.msra.mxu0 %v6174
  %6189 = vmatpush.bf16.msra.mxu0 %v6173
  %6190 = vmatpush.bf16.msra.mxu0 %v6172
  %6191 = vmatmul.bf16.gmra.mxu0 %v6181
  %v6192 = vpop.f32.mrf.mxu0
  %v6193 = vadd.f32 %v6154, %v6192
  %v6194 = vpop.f32.mrf.mxu0
  %v6195 = vadd.f32 %v6154, %v6194
  %6196 = vdwg.mxu0
  %v6197 = vadd.f32 %v6097, %v6193
  %v6198 = vadd.f32 %v6098, %v6195
  %s6199 = scalar_lea.vmem %s69, 1
  %v6200 = vld [vmem:[%s6199] sm:$0x1]
  %s6201 = scalar_lea.vmem %s71, 1
  %v6202 = vld [vmem:[%s6201] sm:$0x1]
  %v6203 = vsel %vm219, %v6197, 0.0
  %6204 = vadd.xlane.f32.xlu0 %v6203
  %v6205 = vpop.xlane.xlu0 %6204
  %v6206 = vsel %vm219, %v6198, 0.0
  %6207 = vadd.xlane.f32.xlu0 %v6206
  %v6208 = vpop.xlane.xlu0 %6207
  %v6209 = vmul.f32 %v6205, %v1048
  %v6210 = vmul.f32 %v6208, %v1048
  %v6211 = vsub.f32 %v6197, %v6209
  %v6212 = vsub.f32 %v6198, %v6210
  %v6213 = vmul.f32 %v6211, %v6211
  %v6214 = vmul.f32 %v6212, %v6212
  %v6215 = vsel %vm219, %v6213, 0.0
  %6216 = vadd.xlane.f32.xlu0 %v6215
  %v6217 = vpop.xlane.xlu0 %6216
  %v6218 = vsel %vm219, %v6214, 0.0
  %6219 = vadd.xlane.f32.xlu0 %v6218
  %v6220 = vpop.xlane.xlu0 %6219
  %v6221 = vmul.f32 %v6217, %v1048
  %v6222 = vmul.f32 %v6220, %v1048
  %v6223 = vadd.f32 %v6221, 1e-05
  %v6224 = vadd.f32 %v6222, 1e-05
  %v6225 = vrsqrt.pop %v6223
  %v6226 = vmul.f32 %v6225, %v6223
  %v6227 = vmul.f32 %v6226, %v6225
  %v6228 = vmul.f32 0.5, %v6227
  %v6229 = vsub.f32 1.5, %v6228
  %v6230 = vmul.f32 %v6225, %v6229
  %vm6231 = vweird.f32 %v6223
  %vm6232 = vweird.f32 %v6225
  %vm6233 = vmor %vm6231, %vm6232
  %v6234 = vsel %vm6233, %v6225, %v6230
  %v6235 = vrsqrt.pop %v6224
  %v6236 = vmul.f32 %v6235, %v6224
  %v6237 = vmul.f32 %v6236, %v6235
  %v6238 = vmul.f32 0.5, %v6237
  %v6239 = vsub.f32 1.5, %v6238
  %v6240 = vmul.f32 %v6235, %v6239
  %vm6241 = vweird.f32 %v6224
  %vm6242 = vweird.f32 %v6235
  %vm6243 = vmor %vm6241, %vm6242
  %v6244 = vsel %vm6243, %v6235, %v6240
  %v6245 = vmul.f32 %v6211, %v6234
  %v6246 = vmul.f32 %v6212, %v6244
  %v6248 = vperm.slane %v6200, 0
  %v6250 = vmul.f32 %v6245, %v6248
  %v6251 = vmul.f32 %v6246, %v6248
  %v6253 = vperm.slane %v6202, 0
  %v6255 = vadd.f32 %v6250, %v6253
  %v6256 = vadd.f32 %v6251, %v6253
  %v6257 = vld [vmem:[%s73] sm:$0xf]
  %v6258 = vld [vmem:[%s73 + $0x4] sm:$0xf]
  %v6259 = vld [vmem:[%s73 + $0x8] sm:$0xf]
  %v6260 = vld [vmem:[%s73 + $0xc] sm:$0xf]
  %v6261 = vpack.c.bf16 %v6256, %v6255
  %v6262 = vld [vmem:[%s75] sm:$0x1]
  %v6264 = vperm.slane %v6262, 0
  %v6270 = vunpack.c.l.b16 %v6257
  %v6271 = vunpack.c.l.b16 %v6258
  %v6272 = vunpack.c.l.b16 %v6259
  %v6273 = vunpack.c.l.b16 %v6260
  %v6274 = vpack.c.b16 %v6271, %v6270
  %v6275 = vpack.c.b16 %v6273, %v6272
  %v6279 = vsel %vm219, %v6261, 0
  %6281 = vmatpush.bf16.msra.mxu0 0
  %6282 = vmatpush.bf16.msra.mxu0 0
  %6283 = vmatpush.bf16.msra.mxu0 0
  %6284 = vmatpush.bf16.msra.mxu0 0
  %6285 = vmatpush.bf16.msra.mxu0 0
  %6286 = vmatpush.bf16.msra.mxu0 0
  %6287 = vmatpush.bf16.msra.mxu0 %v6275
  %6288 = vmatpush.bf16.msra.mxu0 %v6274
  %6289 = vmatmul.bf16.gmra.mxu0 %v6279
  %v6290 = vpop.f32.mrf.mxu0
  %v6291 = vadd.f32 %v6264, %v6290
  %v6292 = vpop.f32.mrf.mxu0
  %v6293 = vadd.f32 %v6264, %v6292
  %6294 = vdwg.mxu0
  %6295 = vst [vmem:[%s77] sm:$0xff] %v6291
  %6296 = vst [vmem:[%s77 + $0x8] sm:$0xff] %v6293
  // Predicated region
  $region154: #{transformer_forward.1} parent=0 // pred_check
    _
  $region155: #{transformer_forward.1} parent=0 // pred_check_branch
    %6298 = sbr.rel (0) target = $region157
  $region156: #{transformer_forward.1} parent=0 // pred_region
    _
  $region157: #{transformer_forward.1} parent=0 // pred_fallthru
    _
  // Predicated region
  $region158: #{transformer_forward.1} parent=0 // pred_check
    _
  $region159: #{transformer_forward.1} parent=0 // pred_check_branch
    %6300 = sbr.rel (0) target = $region161
  $region160: #{transformer_forward.1} parent=0 // pred_region
    _
  $region161: #{transformer_forward.1} parent=0 // pred_fallthru
    _

</llo_original>
